<compile_context>
chip_gen: v7x
topology: tpu7x:2x2x1
jax: 0.10.0
libtpu: 0.0.40
codegen_flags: <defaults>
</compile_context>

<pallas_src>
import jax
import jax.numpy as jnp
from jax.experimental import pallas as pl
from jax.experimental.pallas import tpu as pltpu

D_IN = 225
D_HID = 1024
LANE = 128          # lane width: layer-3 output block columns
TILE_B_MAX = 512    # sweep point from the review (256/512); 512 halves grid
                    # step overhead vs 256 while keeping VMEM ~13 MiB


def _round_up(n, m):
    return ((n + m - 1) // m) * m


def _pick_tile_b(B):
    """Batch tile: multiple of 128, capped at TILE_B_MAX, chosen so the grid
    has >= 2 (and usually an even number of) steps so v7x megacore sharding
    keeps both TensorCores busy."""
    if B <= 128:
        return 128                      # single tile; nothing worth splitting
    n_tiles = max(2, 2 * pl.cdiv(B, 2 * TILE_B_MAX))
    return min(TILE_B_MAX, _round_up(pl.cdiv(B, n_tiles), 128))


def _sigmoid(z):
    # sigmoid(z) == 0.5*(tanh(z/2)+1): a single EUP tanh + one VPU mul/add,
    # instead of exp + exact reciprocal (VALU Newton/divide chain).
    return 0.5 * jnp.tanh(0.5 * z) + 0.5


def _mlp_kernel(x_ref, w1_ref, b1_ref, w2_ref, b2_ref, w3_ref, b3_ref, o_ref):
    # Layer 1: (TB, 225) @ (225, 1024), bf16 inputs / f32 accumulation.
    h = _sigmoid(
        jnp.dot(x_ref[...].astype(jnp.bfloat16), w1_ref[...],
                preferred_element_type=jnp.float32) + b1_ref[...])
    # Layer 2: (TB, 1024) @ (1024, 1024).
    h = _sigmoid(
        jnp.dot(h.astype(jnp.bfloat16), w2_ref[...],
                preferred_element_type=jnp.float32) + b2_ref[...])
    # Layer 3: (TB, 1024) @ (1024, 128) against zero-padded w3 -> only column 0
    # is meaningful; writing the full 128-lane block keeps the store unmasked
    # and lane-dense. Wrapper slices column 0.
    z = jnp.dot(h.astype(jnp.bfloat16), w3_ref[...],
                preferred_element_type=jnp.float32) + b3_ref[...]
    o_ref[...] = _sigmoid(z)


def prepare_params(w1, b1, w2, b2, w3, b3):
    """One-time packing (hoisted out of the per-call path): cast matmul weights
    to bf16 and zero-pad the (1, 1024) w3 row into a (1024, 128) column block
    so layer 3 runs on the MXU with a lane-dense output. Biases stay f32."""
    w1_bf = w1.astype(jnp.bfloat16)                                  # (225, 1024)
    w2_bf = w2.astype(jnp.bfloat16)                                  # (1024, 1024)
    w3_col = jnp.zeros((D_HID, LANE), jnp.bfloat16)
    w3_col = w3_col.at[:, 0].set(w3[0].astype(jnp.bfloat16))         # (1024, 128)
    return w1_bf, b1, w2_bf, b2, w3_col, b3


def supervised_neuro_struct(x, w1_bf, b1, w2_bf, b2, w3_col, b3):
    """x: (B, 225) f32. Prepared params from prepare_params(). Returns (B, 1) f32."""
    B = x.shape[0]
    tile_b = _pick_tile_b(B)
    grid = (pl.cdiv(B, tile_b),)   # ragged last tile handled by Pallas

    out = pl.pallas_call(
        _mlp_kernel,
        out_shape=jax.ShapeDtypeStruct((B, LANE), jnp.float32),
        grid=grid,
        in_specs=[
            pl.BlockSpec((tile_b, D_IN), lambda i: (i, 0)),   # x tile (f32 in HBM)
            pl.BlockSpec((D_IN, D_HID), lambda i: (0, 0)),    # w1 bf16 (resident)
            pl.BlockSpec((1, D_HID), lambda i: (0, 0)),       # b1 f32
            pl.BlockSpec((D_HID, D_HID), lambda i: (0, 0)),   # w2 bf16 (resident)
            pl.BlockSpec((1, D_HID), lambda i: (0, 0)),       # b2 f32
            pl.BlockSpec((D_HID, LANE), lambda i: (0, 0)),    # w3 column block bf16
            pl.BlockSpec((1, 1), lambda i: (0, 0)),           # b3 f32
        ],
        out_specs=pl.BlockSpec((tile_b, LANE), lambda i: (i, 0)),
        compiler_params=pltpu.CompilerParams(
            dimension_semantics=("parallel",),   # megacore sharding on v7x
            vmem_limit_bytes=32 << 20,           # ~13 MiB actual footprint
        ),
    )(x, w1_bf, b1, w2_bf, b2, w3_col, b3)
    return out[:, :1]


def init_params(key):
    """Parameter init matching the PyTorch module's shapes.

    nn.Linear stores weight as (out, in); forward computes x @ W.T + b.
    Weights drawn uniform(-1, 1) as in nn.init.uniform_, transposed to
    (in, out) for the kernel (w3 kept as a (1, 1024) row). Biases follow
    PyTorch's default Linear init: uniform(-1/sqrt(in), 1/sqrt(in))."""
    k = jax.random.split(key, 6)
    w1 = jax.random.uniform(k[0], (D_HID, D_IN), jnp.float32, -1.0, 1.0).T
    w2 = jax.random.uniform(k[1], (D_HID, D_HID), jnp.float32, -1.0, 1.0).T
    w3 = jax.random.uniform(k[2], (1, D_HID), jnp.float32, -1.0, 1.0)
    b1 = jax.random.uniform(k[3], (1, D_HID), jnp.float32,
                            -1.0 / jnp.sqrt(225.0), 1.0 / jnp.sqrt(225.0))
    b2 = jax.random.uniform(k[4], (1, D_HID), jnp.float32,
                            -1.0 / jnp.sqrt(1024.0), 1.0 / jnp.sqrt(1024.0))
    b3 = jax.random.uniform(k[5], (1, 1), jnp.float32,
                            -1.0 / jnp.sqrt(1024.0), 1.0 / jnp.sqrt(1024.0))
    return w1, b1, w2, b2, w3, b3


if __name__ == "__main__":
    key = jax.random.PRNGKey(0)
    k_x, k_p = jax.random.split(key)

    # B=384 -> tile_b=256, 2 grid steps (both v7x cores) with a ragged last tile.
    B = 384
    x = jax.random.normal(k_x, (B, D_IN), jnp.float32)
    w1, b1, w2, b2, w3, b3 = init_params(k_p)
    params = prepare_params(w1, b1, w2, b2, w3, b3)

    fn = jax.jit(supervised_neuro_struct)
    out = jax.block_until_ready(fn(x, *params))
    assert out.shape == (B, 1)

    # Tight check vs. a matched-precision reference (bf16 matmul inputs,
    # f32 accumulation, same tanh-based sigmoid).
    sg = lambda z: 0.5 * jnp.tanh(0.5 * z) + 0.5
    w1_bf, _, w2_bf, _, w3_col, _ = params
    h = sg(jnp.dot(x.astype(jnp.bfloat16), w1_bf,
                   preferred_element_type=jnp.float32) + b1)
    h = sg(jnp.dot(h.astype(jnp.bfloat16), w2_bf,
                   preferred_element_type=jnp.float32) + b2)
    ref_bf = sg(jnp.dot(h.astype(jnp.bfloat16), w3_col,
                        preferred_element_type=jnp.float32) + b3)[:, :1]
    assert jnp.allclose(out, ref_bf, atol=2e-3), \
        float(jnp.max(jnp.abs(out - ref_bf)))

    # Sanity bound vs. exact-f32 semantics: the bf16-input matmuls are a
    # deliberate accuracy/perf trade (per review); drift shows up only near
    # sigmoid zero-crossings, hence the intentionally loose tolerance.
    hp = jax.lax.Precision.HIGHEST
    h = jax.nn.sigmoid(jnp.dot(x, w1, precision=hp) + b1)
    h = jax.nn.sigmoid(jnp.dot(h, w2, precision=hp) + b2)
    ref_f32 = jax.nn.sigmoid(jnp.dot(h, w3.T, precision=hp) + b3)
    assert jnp.allclose(out, ref_f32, atol=0.15), \
        float(jnp.max(jnp.abs(out - ref_f32)))

    print("KERNEL_OK")
</pallas_src>

<mosaic_0001>
module attributes {stable_mosaic.version = 11 : i64} {
  func.func @_mlp_kernel(%arg0: i32, %arg1: memref<256x225xf32, #tpu.memory_space<vmem>>, %arg2: memref<225x1024xbf16, #tpu.memory_space<vmem>>, %arg3: memref<1x1024xf32, #tpu.memory_space<vmem>>, %arg4: memref<1024x1024xbf16, #tpu.memory_space<vmem>>, %arg5: memref<1x1024xf32, #tpu.memory_space<vmem>>, %arg6: memref<1024x128xbf16, #tpu.memory_space<vmem>>, %arg7: memref<1x1xf32, #tpu.memory_space<vmem>>, %arg8: memref<256x128xf32, #tpu.memory_space<vmem>>) attributes {dimension_semantics = [#tpu.dimension_semantics<parallel>], iteration_bounds = array<i64: 2>, scalar_prefetch = 0 : i64, scratch_operands = 0 : i64, tpu.core_type = #tpu.core_type<tc>, window_params = [{transform_indices = @transform_0, window_bounds = array<i64: 256, 225>}, {pipeline_mode = #tpu.pipeline_mode<synchronous>, transform_indices = @transform_1, window_bounds = array<i64: 225, 1024>}, {pipeline_mode = #tpu.pipeline_mode<synchronous>, transform_indices = @transform_2, window_bounds = array<i64: 1, 1024>}, {pipeline_mode = #tpu.pipeline_mode<synchronous>, transform_indices = @transform_3, window_bounds = array<i64: 1024, 1024>}, {pipeline_mode = #tpu.pipeline_mode<synchronous>, transform_indices = @transform_4, window_bounds = array<i64: 1, 1024>}, {pipeline_mode = #tpu.pipeline_mode<synchronous>, transform_indices = @transform_5, window_bounds = array<i64: 1024, 128>}, {pipeline_mode = #tpu.pipeline_mode<synchronous>, transform_indices = @transform_6, window_bounds = array<i64: 1, 1>}, {transform_indices = @transform_7, window_bounds = array<i64: 256, 128>}]} {
    %c0 = arith.constant 0 : index
    %c0_0 = arith.constant 0 : index
    %0 = vector.load %arg1[%c0, %c0_0] : memref<256x225xf32, #tpu.memory_space<vmem>>, vector<256x225xf32>
    %1 = arith.truncf %0 : vector<256x225xf32> to vector<256x225xbf16>
    %c0_1 = arith.constant 0 : index
    %c0_2 = arith.constant 0 : index
    %2 = vector.load %arg2[%c0_1, %c0_2] : memref<225x1024xbf16, #tpu.memory_space<vmem>>, vector<225x1024xbf16>
    %cst = arith.constant dense<0.000000e+00> : vector<256x1024xf32>
    %3 = tpu.matmul %1, %2, %cst {dimension_numbers = #tpu.dot_dimension_numbers<[1], [0], [0], [1], [0, 0, 1, 1], [], []>} : vector<256x225xbf16>, vector<225x1024xbf16>, vector<256x1024xf32> -> vector<256x1024xf32>
    %c0_3 = arith.constant 0 : index
    %c0_4 = arith.constant 0 : index
    %4 = vector.load %arg3[%c0_3, %c0_4] : memref<1x1024xf32, #tpu.memory_space<vmem>>, vector<1x1024xf32>
    %5 = vector.broadcast %4 : vector<1x1024xf32> to vector<256x1024xf32>
    %6 = arith.addf %3, %5 : vector<256x1024xf32>
    %cst_5 = arith.constant 5.000000e-01 : f32
    %7 = vector.broadcast %cst_5 : f32 to vector<256x1024xf32>
    %8 = arith.mulf %7, %6 : vector<256x1024xf32>
    %9 = math.tanh %8 : vector<256x1024xf32>
    %cst_6 = arith.constant 5.000000e-01 : f32
    %10 = vector.broadcast %cst_6 : f32 to vector<256x1024xf32>
    %11 = arith.mulf %10, %9 : vector<256x1024xf32>
    %cst_7 = arith.constant 5.000000e-01 : f32
    %12 = vector.broadcast %cst_7 : f32 to vector<256x1024xf32>
    %13 = arith.addf %11, %12 : vector<256x1024xf32>
    %14 = arith.truncf %13 : vector<256x1024xf32> to vector<256x1024xbf16>
    %c0_8 = arith.constant 0 : index
    %c0_9 = arith.constant 0 : index
    %15 = vector.load %arg4[%c0_8, %c0_9] : memref<1024x1024xbf16, #tpu.memory_space<vmem>>, vector<1024x1024xbf16>
    %cst_10 = arith.constant dense<0.000000e+00> : vector<256x1024xf32>
    %16 = tpu.matmul %14, %15, %cst_10 {dimension_numbers = #tpu.dot_dimension_numbers<[1], [0], [0], [1], [0, 0, 1, 1], [], []>} : vector<256x1024xbf16>, vector<1024x1024xbf16>, vector<256x1024xf32> -> vector<256x1024xf32>
    %c0_11 = arith.constant 0 : index
    %c0_12 = arith.constant 0 : index
    %17 = vector.load %arg5[%c0_11, %c0_12] : memref<1x1024xf32, #tpu.memory_space<vmem>>, vector<1x1024xf32>
    %18 = vector.broadcast %17 : vector<1x1024xf32> to vector<256x1024xf32>
    %19 = arith.addf %16, %18 : vector<256x1024xf32>
    %cst_13 = arith.constant 5.000000e-01 : f32
    %20 = vector.broadcast %cst_13 : f32 to vector<256x1024xf32>
    %21 = arith.mulf %20, %19 : vector<256x1024xf32>
    %22 = math.tanh %21 : vector<256x1024xf32>
    %cst_14 = arith.constant 5.000000e-01 : f32
    %23 = vector.broadcast %cst_14 : f32 to vector<256x1024xf32>
    %24 = arith.mulf %23, %22 : vector<256x1024xf32>
    %cst_15 = arith.constant 5.000000e-01 : f32
    %25 = vector.broadcast %cst_15 : f32 to vector<256x1024xf32>
    %26 = arith.addf %24, %25 : vector<256x1024xf32>
    %27 = arith.truncf %26 : vector<256x1024xf32> to vector<256x1024xbf16>
    %c0_16 = arith.constant 0 : index
    %c0_17 = arith.constant 0 : index
    %28 = vector.load %arg6[%c0_16, %c0_17] : memref<1024x128xbf16, #tpu.memory_space<vmem>>, vector<1024x128xbf16>
    %cst_18 = arith.constant dense<0.000000e+00> : vector<256x128xf32>
    %29 = tpu.matmul %27, %28, %cst_18 {dimension_numbers = #tpu.dot_dimension_numbers<[1], [0], [0], [1], [0, 0, 1, 1], [], []>} : vector<256x1024xbf16>, vector<1024x128xbf16>, vector<256x128xf32> -> vector<256x128xf32>
    %c0_19 = arith.constant 0 : index
    %c0_20 = arith.constant 0 : index
    %30 = vector.load %arg7[%c0_19, %c0_20] : memref<1x1xf32, #tpu.memory_space<vmem>>, vector<1x1xf32>
    %31 = vector.broadcast %30 : vector<1x1xf32> to vector<256x128xf32>
    %32 = arith.addf %29, %31 : vector<256x128xf32>
    %cst_21 = arith.constant 5.000000e-01 : f32
    %33 = vector.broadcast %cst_21 : f32 to vector<256x128xf32>
    %34 = arith.mulf %33, %32 : vector<256x128xf32>
    %35 = math.tanh %34 : vector<256x128xf32>
    %cst_22 = arith.constant 5.000000e-01 : f32
    %36 = vector.broadcast %cst_22 : f32 to vector<256x128xf32>
    %37 = arith.mulf %36, %35 : vector<256x128xf32>
    %cst_23 = arith.constant 5.000000e-01 : f32
    %38 = vector.broadcast %cst_23 : f32 to vector<256x128xf32>
    %39 = arith.addf %37, %38 : vector<256x128xf32>
    %c0_24 = arith.constant 0 : index
    %c0_25 = arith.constant 0 : index
    %40 = vector.load %arg8[%c0_24, %c0_25] : memref<256x128xf32, #tpu.memory_space<vmem>>, vector<256x128xf32>
    tpu.vector_store %arg8[%c0_24, %c0_25], %39 {strides = array<i32>} : memref<256x128xf32, #tpu.memory_space<vmem>>, vector<256x128xf32>,
    return
  }
  func.func @transform_0(%arg0: i32) -> (i32, i32) {
    %c0_i32 = arith.constant 0 : i32
    %c0_i32_0 = arith.constant 0 : i32
    return %arg0, %c0_i32 : i32, i32
  }
  func.func @transform_1(%arg0: i32) -> (i32, i32) {
    %c0_i32 = arith.constant 0 : i32
    %c0_i32_0 = arith.constant 0 : i32
    %c0_i32_1 = arith.constant 0 : i32
    return %c0_i32, %c0_i32_0 : i32, i32
  }
  func.func @transform_2(%arg0: i32) -> (i32, i32) {
    %c0_i32 = arith.constant 0 : i32
    %c0_i32_0 = arith.constant 0 : i32
    %c0_i32_1 = arith.constant 0 : i32
    return %c0_i32, %c0_i32_0 : i32, i32
  }
  func.func @transform_3(%arg0: i32) -> (i32, i32) {
    %c0_i32 = arith.constant 0 : i32
    %c0_i32_0 = arith.constant 0 : i32
    %c0_i32_1 = arith.constant 0 : i32
    return %c0_i32, %c0_i32_0 : i32, i32
  }
  func.func @transform_4(%arg0: i32) -> (i32, i32) {
    %c0_i32 = arith.constant 0 : i32
    %c0_i32_0 = arith.constant 0 : i32
    %c0_i32_1 = arith.constant 0 : i32
    return %c0_i32, %c0_i32_0 : i32, i32
  }
  func.func @transform_5(%arg0: i32) -> (i32, i32) {
    %c0_i32 = arith.constant 0 : i32
    %c0_i32_0 = arith.constant 0 : i32
    %c0_i32_1 = arith.constant 0 : i32
    return %c0_i32, %c0_i32_0 : i32, i32
  }
  func.func @transform_6(%arg0: i32) -> (i32, i32) {
    %c0_i32 = arith.constant 0 : i32
    %c0_i32_0 = arith.constant 0 : i32
    %c0_i32_1 = arith.constant 0 : i32
    return %c0_i32, %c0_i32_0 : i32, i32
  }
  func.func @transform_7(%arg0: i32) -> (i32, i32) {
    %c0_i32 = arith.constant 0 : i32
    %c0_i32_0 = arith.constant 0 : i32
    return %arg0, %c0_i32 : i32, i32
  }
}

</mosaic_0001>

<llo_original>
// kernel: supervised_neuro_struct.1
$region0: #{supervised_neuro_struct.1}
  #allocation0 [shape = 'u32[]', space=smem, size = 0x4, offset = 0x4, fixed_abs, tag = 'smem constant byte address 0x4 - core index']
  #allocation1 [shape = 'u32[144,128]{1,0:T(1,128)}', space=vmem, size = 0x12000, scoped, tag = 'internal scratch']
  #allocation2 [shape = 'f32[1,1]{1,0:T(1,128)S(1)}', space=vmem, size = 0x200, scoped, tag = 'scoped memory for supervised_neuro_struct.1']
  %s0 = inlined_call_operand.vmem [shape: f32[384,225], index: 0, kind: input, shape index: {}]
  %s1 = inlined_call_operand.hbm [shape: bf16[225,1024], index: 1, kind: input, shape index: {}]
  %s2 = inlined_call_operand.hbm [shape: f32[1,1024], index: 2, kind: input, shape index: {}]
  %s3 = inlined_call_operand.hbm [shape: bf16[1024,1024], index: 3, kind: input, shape index: {}]
  %s4 = inlined_call_operand.hbm [shape: f32[1,1024], index: 4, kind: input, shape index: {}]
  %s5 = inlined_call_operand.hbm [shape: bf16[1024,128], index: 5, kind: input, shape index: {}]
  %s6 = inlined_call_operand.<no memory space> [shape: f32[1,1], index: 6, kind: input, shape index: {}]
  %s7 = inlined_call_operand.vmem [shape: f32[384,128], index: 7, kind: output, shape index: {}]
  %s8 = sld [smem:[#allocation0]]
  $region129: #{supervised_neuro_struct.1} parent=0
    _
  %s10 = ssub.s32 1, %s8
  %s11 = scalar_select 0, %s10, %s8
  %v12 = vstv %s6
  %13 = vst [vmem:[#allocation2] sm:$0x1] %v12
  $region1: #{supervised_neuro_struct.1} parent=0
    #allocation3 [shape = 'u8[475136]{0}', space=vmem, size = 0x74000, scoped, tag = 'input window, operand 1, single buffered']
    #allocation4 [shape = 's32[2]{0}', space=sflag, size = 0x8, scoped, tag = 'scoped memory for supervised_neuro_struct.1']
    #allocation5 [shape = 'u8[4096]{0}', space=vmem, size = 0x1000, scoped, tag = 'input window, operand 2, single buffered']
    #allocation6 [shape = 's32[1]{0}', space=sflag, size = 0x4, scoped, tag = 'scoped memory for supervised_neuro_struct.1']
    #allocation7 [shape = 'u8[2097152]{0}', space=vmem, size = 0x200000, scoped, tag = 'input window, operand 3, single buffered']
    #allocation8 [shape = 'u8[4096]{0}', space=vmem, size = 0x1000, scoped, tag = 'input window, operand 4, single buffered']
    #allocation9 [shape = 's32[1]{0}', space=sflag, size = 0x4, scoped, tag = 'scoped memory for supervised_neuro_struct.1']
    #allocation10 [shape = 'u8[262144]{0}', space=vmem, size = 0x40000, scoped, tag = 'input window, operand 5, single buffered']
    #allocation11 [shape = 'u8[262144]{0}', space=vmem, size = 0x40000, scoped, tag = 'output window, operand 0']
    %14 = vsyncpa [#allocation4], 0
    %15 = vsyncpa [#allocation6], 0
    %16 = vsyncpa [#allocation9], 0
    loop: start=0, step=1, limit=4
    $region2: #{supervised_neuro_struct.1} parent=1 // loop_pre_header
      _
    $region3: #{supervised_neuro_struct.1} parent=1 // loop_header
      %s18 = sphi 0, %s22
      %p19 = scmp.ge.s32.totalorder %s18, 4
      %s28 = sphi 0, %s30
      %s31 = sphi 0, %s28
      %s32 = sphi 0, %s31
      %s48 = sphi 0, %s32
      %s52 = sphi 0, %s52
      %s54 = sphi 0, %s52
      %s55 = sphi 0, %s54
      %s69 = sphi 0, %s55
      %s73 = sphi 0, %s73
      %s75 = sphi 0, %s73
      %s76 = sphi 0, %s75
      %s90 = sphi 0, %s76
      %s94 = sphi 0, %s94
      %s96 = sphi 0, %s94
      %s97 = sphi 0, %s96
      %s111 = sphi 0, %s97
      %s115 = sphi 0, %s115
      %s117 = sphi 0, %s115
      %s118 = sphi 0, %s117
      %s132 = sphi 0, %s118
      %s136 = sphi 0, %s136
      %s138 = sphi 0, %s136
      %s139 = sphi 0, %s138
      %s153 = sphi 0, %s139
      %s157 = sphi 0, %s157
      %s159 = sphi 0, %s157
      %s160 = sphi 0, %s159
      %s174 = sphi 0, %s160
      %s180 = sphi 0, %s182
      %s183 = sphi 0, %s180
      %s184 = sphi 0, %s183
      %s200 = sphi 0, %s184
    $region4: #{supervised_neuro_struct.1} parent=1 // loop_header_branch
      %21 = sbr.rel (%p19) target = $region8
    $region5: #{supervised_neuro_struct.1} parent=1 // loop_body
      %s23 = ssub.s32 %s18, 1
      %s24 = ssub.s32 %s18, 2
      %s25 = sadd.s32 %s18, 1
      %s26 = ssub.s32 %s18, %s25
      %p27 = scmp.eq.s32.totalorder %s26, 0
      %s29 = sadd.s32 %s28, 1
      %s30 = scalar_select %p27, %s28, %s29
      %p33 = pneg %p27
      %p34 = scmp.eq.s32.totalorder %s18, 1
      %p35 = por %p33, %p34
      %p36 = scmp.ne.s32.totalorder %s28, %s31
      %p37 = scmp.eq.s32.totalorder %s18, 0
      %p38 = por %p36, %p37
      %p39 = scmp.ne.s32.totalorder %s28, %s31
      %p40 = scmp.eq.s32.totalorder %s23, 1
      %p41 = por %p39, %p40
      %p42 = scmp.ne.s32.totalorder %s31, %s32
      %p43 = scmp.eq.s32.totalorder %s23, 0
      %p44 = por %p42, %p43
      %p45 = scmp.ne.s32.totalorder %s31, %s32
      %p46 = scmp.eq.s32.totalorder %s24, 1
      %p47 = por %p45, %p46
      %p49 = scmp.ne.s32.totalorder %s32, %s48
      %p50 = scmp.eq.s32.totalorder %s24, 0
      %p51 = por %p49, %p50
      %s53 = sadd.s32 %s52, 1
      %p56 = scmp.eq.s32.totalorder %s18, 1
      %p57 = scmp.ne.s32.totalorder %s52, %s54
      %p58 = scmp.eq.s32.totalorder %s18, 0
      %p59 = por %p57, %p58
      %p60 = scmp.ne.s32.totalorder %s52, %s54
      %p61 = scmp.eq.s32.totalorder %s23, 1
      %p62 = por %p60, %p61
      %p63 = scmp.ne.s32.totalorder %s54, %s55
      %p64 = scmp.eq.s32.totalorder %s23, 0
      %p65 = por %p63, %p64
      %p66 = scmp.ne.s32.totalorder %s54, %s55
      %p67 = scmp.eq.s32.totalorder %s24, 1
      %p68 = por %p66, %p67
      %p70 = scmp.ne.s32.totalorder %s55, %s69
      %p71 = scmp.eq.s32.totalorder %s24, 0
      %p72 = por %p70, %p71
      %s74 = sadd.s32 %s73, 1
      %p77 = scmp.eq.s32.totalorder %s18, 1
      %p78 = scmp.ne.s32.totalorder %s73, %s75
      %p79 = scmp.eq.s32.totalorder %s18, 0
      %p80 = por %p78, %p79
      %p81 = scmp.ne.s32.totalorder %s73, %s75
      %p82 = scmp.eq.s32.totalorder %s23, 1
      %p83 = por %p81, %p82
      %p84 = scmp.ne.s32.totalorder %s75, %s76
      %p85 = scmp.eq.s32.totalorder %s23, 0
      %p86 = por %p84, %p85
      %p87 = scmp.ne.s32.totalorder %s75, %s76
      %p88 = scmp.eq.s32.totalorder %s24, 1
      %p89 = por %p87, %p88
      %p91 = scmp.ne.s32.totalorder %s76, %s90
      %p92 = scmp.eq.s32.totalorder %s24, 0
      %p93 = por %p91, %p92
      %s95 = sadd.s32 %s94, 1
      %p98 = scmp.eq.s32.totalorder %s18, 1
      %p99 = scmp.ne.s32.totalorder %s94, %s96
      %p100 = scmp.eq.s32.totalorder %s18, 0
      %p101 = por %p99, %p100
      %p102 = scmp.ne.s32.totalorder %s94, %s96
      %p103 = scmp.eq.s32.totalorder %s23, 1
      %p104 = por %p102, %p103
      %p105 = scmp.ne.s32.totalorder %s96, %s97
      %p106 = scmp.eq.s32.totalorder %s23, 0
      %p107 = por %p105, %p106
      %p108 = scmp.ne.s32.totalorder %s96, %s97
      %p109 = scmp.eq.s32.totalorder %s24, 1
      %p110 = por %p108, %p109
      %p112 = scmp.ne.s32.totalorder %s97, %s111
      %p113 = scmp.eq.s32.totalorder %s24, 0
      %p114 = por %p112, %p113
      %s116 = sadd.s32 %s115, 1
      %p119 = scmp.eq.s32.totalorder %s18, 1
      %p120 = scmp.ne.s32.totalorder %s115, %s117
      %p121 = scmp.eq.s32.totalorder %s18, 0
      %p122 = por %p120, %p121
      %p123 = scmp.ne.s32.totalorder %s115, %s117
      %p124 = scmp.eq.s32.totalorder %s23, 1
      %p125 = por %p123, %p124
      %p126 = scmp.ne.s32.totalorder %s117, %s118
      %p127 = scmp.eq.s32.totalorder %s23, 0
      %p128 = por %p126, %p127
      %p129 = scmp.ne.s32.totalorder %s117, %s118
      %p130 = scmp.eq.s32.totalorder %s24, 1
      %p131 = por %p129, %p130
      %p133 = scmp.ne.s32.totalorder %s118, %s132
      %p134 = scmp.eq.s32.totalorder %s24, 0
      %p135 = por %p133, %p134
      %s137 = sadd.s32 %s136, 1
      %p140 = scmp.eq.s32.totalorder %s18, 1
      %p141 = scmp.ne.s32.totalorder %s136, %s138
      %p142 = scmp.eq.s32.totalorder %s18, 0
      %p143 = por %p141, %p142
      %p144 = scmp.ne.s32.totalorder %s136, %s138
      %p145 = scmp.eq.s32.totalorder %s23, 1
      %p146 = por %p144, %p145
      %p147 = scmp.ne.s32.totalorder %s138, %s139
      %p148 = scmp.eq.s32.totalorder %s23, 0
      %p149 = por %p147, %p148
      %p150 = scmp.ne.s32.totalorder %s138, %s139
      %p151 = scmp.eq.s32.totalorder %s24, 1
      %p152 = por %p150, %p151
      %p154 = scmp.ne.s32.totalorder %s139, %s153
      %p155 = scmp.eq.s32.totalorder %s24, 0
      %p156 = por %p154, %p155
      %s158 = sadd.s32 %s157, 1
      %p161 = scmp.eq.s32.totalorder %s18, 1
      %p162 = scmp.ne.s32.totalorder %s157, %s159
      %p163 = scmp.eq.s32.totalorder %s18, 0
      %p164 = por %p162, %p163
      %p165 = scmp.ne.s32.totalorder %s157, %s159
      %p166 = scmp.eq.s32.totalorder %s23, 1
      %p167 = por %p165, %p166
      %p168 = scmp.ne.s32.totalorder %s159, %s160
      %p169 = scmp.eq.s32.totalorder %s23, 0
      %p170 = por %p168, %p169
      %p171 = scmp.ne.s32.totalorder %s159, %s160
      %p172 = scmp.eq.s32.totalorder %s24, 1
      %p173 = por %p171, %p172
      %p175 = scmp.ne.s32.totalorder %s160, %s174
      %p176 = scmp.eq.s32.totalorder %s24, 0
      %p177 = por %p175, %p176
      %s178 = ssub.s32 %s18, %s25
      %p179 = scmp.eq.s32.totalorder %s178, 0
      %s181 = sadd.s32 %s180, 1
      %s182 = scalar_select %p179, %s180, %s181
      %p185 = pneg %p179
      %p186 = scmp.eq.s32.totalorder %s18, 1
      %p187 = por %p185, %p186
      %p188 = scmp.ne.s32.totalorder %s180, %s183
      %p189 = scmp.eq.s32.totalorder %s18, 0
      %p190 = por %p188, %p189
      %p191 = scmp.ne.s32.totalorder %s180, %s183
      %p192 = scmp.eq.s32.totalorder %s23, 1
      %p193 = por %p191, %p192
      %p194 = scmp.ne.s32.totalorder %s183, %s184
      %p195 = scmp.eq.s32.totalorder %s23, 0
      %p196 = por %p194, %p195
      %p197 = scmp.ne.s32.totalorder %s183, %s184
      %p198 = scmp.eq.s32.totalorder %s24, 1
      %p199 = por %p197, %p198
      %p201 = scmp.ne.s32.totalorder %s184, %s200
      %p202 = scmp.eq.s32.totalorder %s24, 0
      %p203 = por %p201, %p202
      %p204 = scmp.le.s32.totalorder 1, %s18
      %p205 = scmp.lt.s32.totalorder %s18, 3
      %p206 = pnand %p204, %p205
      %p207 = pneg %p206
      // Predicated region
      $region9: #{supervised_neuro_struct.1} parent=5 // pred_check
        _
      $region10: #{supervised_neuro_struct.1} parent=5 // pred_check_branch
        %209 = sbr.rel (%p206) target = $region12
      $region11: #{supervised_neuro_struct.1} parent=5 // pred_region
        %s210 = ssub.s32 %s18, 1
        // Predicated region
        $region13: #{supervised_neuro_struct.1} parent=11 // pred_check
          %p211 = pneg %p65
        $region14: #{supervised_neuro_struct.1} parent=11 // pred_check_branch
          %213 = sbr.rel (%p211) target = $region16
        $region15: #{supervised_neuro_struct.1} parent=11 // pred_region
          %s215 = ssub.s32 14848, 14848
          %216 = vsyncadd [#allocation4], %s215
          %s217 = sshll.u32 [#allocation3], 4
          %s218 = int_to_ptr.vmem [resolvable:$true] %s217
          %223 = dma.hbm_to_vmem [thread:$0]  %s1, 14848, %s218, [#allocation4], 512, 512, 32
        $region16: #{supervised_neuro_struct.1} parent=11 // pred_fallthru
          _
        // Predicated region
        $region17: #{supervised_neuro_struct.1} parent=11 // pred_check
          %p224 = pneg %p86
        $region18: #{supervised_neuro_struct.1} parent=11 // pred_check_branch
          %226 = sbr.rel (%p224) target = $region20
        $region19: #{supervised_neuro_struct.1} parent=11 // pred_region
          %s228 = ssub.s32 128, 128
          %229 = vsyncadd [#allocation6], %s228
          %s231 = sshll.u32 [#allocation5], 4
          %s232 = int_to_ptr.vmem [resolvable:$true] %s231
          %234 = dma.hbm_to_vmem [thread:$0]  %s2, 128, %s232, [#allocation6]
        $region20: #{supervised_neuro_struct.1} parent=11 // pred_fallthru
          _
        // Predicated region
        $region21: #{supervised_neuro_struct.1} parent=11 // pred_check
          %p235 = pneg %p107
        $region22: #{supervised_neuro_struct.1} parent=11 // pred_check_branch
          %237 = sbr.rel (%p235) target = $region24
        $region23: #{supervised_neuro_struct.1} parent=11 // pred_region
          %s239 = ssub.s32 65536, 65536
          %240 = vsyncadd [#allocation6], %s239
          %s241 = sshll.u32 [#allocation7], 4
          %s242 = int_to_ptr.vmem [resolvable:$true] %s241
          %247 = dma.hbm_to_vmem [thread:$0]  %s3, 65536, %s242, [#allocation6], 512, 512, 32
        $region24: #{supervised_neuro_struct.1} parent=11 // pred_fallthru
          _
        // Predicated region
        $region25: #{supervised_neuro_struct.1} parent=11 // pred_check
          %p248 = pneg %p128
        $region26: #{supervised_neuro_struct.1} parent=11 // pred_check_branch
          %250 = sbr.rel (%p248) target = $region28
        $region27: #{supervised_neuro_struct.1} parent=11 // pred_region
          %s252 = ssub.s32 128, 128
          %253 = vsyncadd [#allocation9], %s252
          %s255 = sshll.u32 [#allocation8], 4
          %s256 = int_to_ptr.vmem [resolvable:$true] %s255
          %258 = dma.hbm_to_vmem [thread:$0]  %s4, 128, %s256, [#allocation9]
        $region28: #{supervised_neuro_struct.1} parent=11 // pred_fallthru
          _
        // Predicated region
        $region29: #{supervised_neuro_struct.1} parent=11 // pred_check
          %p259 = pneg %p149
        $region30: #{supervised_neuro_struct.1} parent=11 // pred_check_branch
          %261 = sbr.rel (%p259) target = $region32
        $region31: #{supervised_neuro_struct.1} parent=11 // pred_region
          %s263 = ssub.s32 8192, 8192
          %264 = vsyncadd [#allocation9], %s263
          %s265 = sshll.u32 [#allocation10], 4
          %s266 = int_to_ptr.vmem [resolvable:$true] %s265
          %271 = dma.hbm_to_vmem [thread:$0]  %s5, 8192, %s266, [#allocation9], 64, 64, 4
        $region32: #{supervised_neuro_struct.1} parent=11 // pred_fallthru
          _
        // Predicated region
        $region33: #{supervised_neuro_struct.1} parent=11 // pred_check
          %p272 = pneg %p170
        $region34: #{supervised_neuro_struct.1} parent=11 // pred_check_branch
          %274 = sbr.rel (%p272) target = $region36
        $region35: #{supervised_neuro_struct.1} parent=11 // pred_region
          _
        $region36: #{supervised_neuro_struct.1} parent=11 // pred_fallthru
          _
      $region12: #{supervised_neuro_struct.1} parent=5 // pred_fallthru
        _
      %p275 = scmp.lt.s32.totalorder %s18, 2
      // Predicated region
      $region37: #{supervised_neuro_struct.1} parent=5 // pred_check
        %p276 = pneg %p275
      $region38: #{supervised_neuro_struct.1} parent=5 // pred_check_branch
        %278 = sbr.rel (%p276) target = $region40
      $region39: #{supervised_neuro_struct.1} parent=5 // pred_region
        // Predicated region
        $region41: #{supervised_neuro_struct.1} parent=39 // pred_check
          %p279 = pneg %p38
        $region42: #{supervised_neuro_struct.1} parent=39 // pred_check_branch
          %281 = sbr.rel (%p279) target = $region44
        $region43: #{supervised_neuro_struct.1} parent=39 // pred_region
          %s282 = smul.u32 32, %s18
          %s283 = ssub.s32 48, %s282
          %p284 = scmp.lt.s32.totalorder %s283, 32
          %s285 = scalar_select %p284, %s283, 32
          %s286 = smul.u32 128, %s285
          %s287 = smul.u32 %s286, 2
          %p288 = scmp.lt.s32.totalorder %s282, 47
          %s289 = scalar_select %p288, %s282, 47
          %s290 = smul.addr %s289, 2
          %s291 = smul.addr %s290, 8
          %s292 = scalar_lea.vmem %s0, %s291
          %s293 = smul.u32 32, %s18
          %s294 = ssub.s32 48, %s293
          %p295 = scmp.lt.s32.totalorder %s294, 32
          %s296 = scalar_select %p295, %s294, 32
          %s297 = smul.u32 128, %s296
          %s298 = smul.u32 %s297, 2
        $region44: #{supervised_neuro_struct.1} parent=39 // pred_fallthru
          _
      $region40: #{supervised_neuro_struct.1} parent=5 // pred_fallthru
        _
      %p299 = scmp.le.s32.totalorder 1, %s18
      %p300 = scmp.lt.s32.totalorder %s18, 3
      %p301 = pnand %p299, %p300
      %p302 = pneg %p301
      // Predicated region
      $region45: #{supervised_neuro_struct.1} parent=5 // pred_check
        _
      $region46: #{supervised_neuro_struct.1} parent=5 // pred_check_branch
        %304 = sbr.rel (%p301) target = $region48
      $region47: #{supervised_neuro_struct.1} parent=5 // pred_region
        %s305 = ssub.s32 %s18, 1
        // Predicated region
        $region49: #{supervised_neuro_struct.1} parent=47 // pred_check
          %p306 = pneg %p65
        $region50: #{supervised_neuro_struct.1} parent=47 // pred_check_branch
          %308 = sbr.rel (%p306) target = $region52
        $region51: #{supervised_neuro_struct.1} parent=47 // pred_region
          %309 = dma.done [#allocation4], 14848
        $region52: #{supervised_neuro_struct.1} parent=47 // pred_fallthru
          _
        // Predicated region
        $region53: #{supervised_neuro_struct.1} parent=47 // pred_check
          %p310 = pneg %p86
        $region54: #{supervised_neuro_struct.1} parent=47 // pred_check_branch
          %312 = sbr.rel (%p310) target = $region56
        $region55: #{supervised_neuro_struct.1} parent=47 // pred_region
          %313 = dma.done [#allocation6], 128
        $region56: #{supervised_neuro_struct.1} parent=47 // pred_fallthru
          _
        // Predicated region
        $region57: #{supervised_neuro_struct.1} parent=47 // pred_check
          %p314 = pneg %p107
        $region58: #{supervised_neuro_struct.1} parent=47 // pred_check_branch
          %316 = sbr.rel (%p314) target = $region60
        $region59: #{supervised_neuro_struct.1} parent=47 // pred_region
          %317 = dma.done [#allocation6], 65536
        $region60: #{supervised_neuro_struct.1} parent=47 // pred_fallthru
          _
        // Predicated region
        $region61: #{supervised_neuro_struct.1} parent=47 // pred_check
          %p318 = pneg %p128
        $region62: #{supervised_neuro_struct.1} parent=47 // pred_check_branch
          %320 = sbr.rel (%p318) target = $region64
        $region63: #{supervised_neuro_struct.1} parent=47 // pred_region
          %321 = dma.done [#allocation9], 128
        $region64: #{supervised_neuro_struct.1} parent=47 // pred_fallthru
          _
        // Predicated region
        $region65: #{supervised_neuro_struct.1} parent=47 // pred_check
          %p322 = pneg %p149
        $region66: #{supervised_neuro_struct.1} parent=47 // pred_check_branch
          %324 = sbr.rel (%p322) target = $region68
        $region67: #{supervised_neuro_struct.1} parent=47 // pred_region
          %325 = dma.done [#allocation9], 8192
        $region68: #{supervised_neuro_struct.1} parent=47 // pred_fallthru
          _
        %s326 = smul.u32 32, %s23
        %s327 = ssub.s32 48, %s326
        %p328 = scmp.lt.s32.totalorder %s327, 32
        %s329 = scalar_select %p328, %s327, 32
        %s330 = smul.u32 128, %s329
        %s331 = smul.u32 %s330, 2
        %p332 = scmp.lt.s32.totalorder %s326, 47
        %s333 = scalar_select %p332, %s326, 47
        %s334 = smul.addr %s333, 2
        %s335 = smul.addr %s334, 8
        %s336 = scalar_lea.vmem %s0, %s335
        %p337 = pneg %p44
        %p338 = pneg %p41
        %p339 = pneg %p65
        %p340 = pneg %p62
        %p341 = pneg %p86
        %p342 = pneg %p83
        %p343 = pneg %p107
        %p344 = pneg %p104
        %p345 = pneg %p128
        %p346 = pneg %p125
        %p347 = pneg %p149
        %p348 = pneg %p146
        %p349 = pneg %p170
        %p350 = pneg %p167
        %p351 = pneg %p196
        %p352 = pneg %p193
        %s353 = sand.u32 %s183, 1
        %s354 = sand.u32 %s183, 1
        %s355 = smul.addr %s354, 256
        %s356 = scalar_lea.vmem [#allocation11], %s355
        %s357 = smul.u32 32, %s23
        %s358 = ssub.s32 48, %s357
        %p359 = scmp.lt.s32.totalorder %s358, 32
        %s360 = scalar_select %p359, %s358, 32
        %s361 = smul.u32 128, %s360
        %s362 = smul.u32 %s361, 2
        %p363 = scmp.lt.s32.totalorder %s357, 47
        %s364 = scalar_select %p363, %s357, 47
        %s365 = smul.addr %s364, 2
        %s366 = smul.addr %s365, 8
        %s367 = scalar_lea.vmem %s0, %s366
        %s368 = smul.u32 32, %s23
        %s369 = ssub.s32 48, %s368
        %p370 = scmp.lt.s32.totalorder %s369, 32
        %s371 = scalar_select %p370, %s369, 32
        %s372 = smul.u32 128, %s371
        %s373 = smul.u32 %s372, 2
        %s374 = smul.u32 32, %s23
        %s375 = ssub.s32 48, %s374
        %p376 = scmp.lt.s32.totalorder %s375, 32
        %s377 = scalar_select %p376, %s375, 32
        %s378 = smul.u32 128, %s377
        %v380 = vld [vmem:[%s367] sm:$0xff]
        %v381 = vld [vmem:[%s367 + $0x8] sm:$0xff]
        %v382 = vld [vmem:[%s367 + $0x10] sm:$0xff]
        %v383 = vld [vmem:[%s367 + $0x18] sm:$0xff]
        %v384 = vld [vmem:[%s367 + $0x20] sm:$0xff]
        %v385 = vld [vmem:[%s367 + $0x28] sm:$0xff]
        %v386 = vld [vmem:[%s367 + $0x30] sm:$0xff]
        %v387 = vld [vmem:[%s367 + $0x38] sm:$0xff]
        %v388 = vld [vmem:[%s367 + $0x40] sm:$0xff]
        %v389 = vld [vmem:[%s367 + $0x48] sm:$0xff]
        %v390 = vld [vmem:[%s367 + $0x50] sm:$0xff]
        %v391 = vld [vmem:[%s367 + $0x58] sm:$0xff]
        %v392 = vld [vmem:[%s367 + $0x60] sm:$0xff]
        %v393 = vld [vmem:[%s367 + $0x68] sm:$0xff]
        %v394 = vld [vmem:[%s367 + $0x70] sm:$0xff]
        %v395 = vld [vmem:[%s367 + $0x78] sm:$0xff]
        %v396 = vld [vmem:[%s367 + $0x80] sm:$0xff]
        %v397 = vld [vmem:[%s367 + $0x88] sm:$0xff]
        %v398 = vld [vmem:[%s367 + $0x90] sm:$0xff]
        %v399 = vld [vmem:[%s367 + $0x98] sm:$0xff]
        %v400 = vld [vmem:[%s367 + $0xa0] sm:$0xff]
        %v401 = vld [vmem:[%s367 + $0xa8] sm:$0xff]
        %v402 = vld [vmem:[%s367 + $0xb0] sm:$0xff]
        %v403 = vld [vmem:[%s367 + $0xb8] sm:$0xff]
        %v404 = vld [vmem:[%s367 + $0xc0] sm:$0xff]
        %v405 = vld [vmem:[%s367 + $0xc8] sm:$0xff]
        %v406 = vld [vmem:[%s367 + $0xd0] sm:$0xff]
        %v407 = vld [vmem:[%s367 + $0xd8] sm:$0xff]
        %v408 = vld [vmem:[%s367 + $0xe0] sm:$0xff]
        %v409 = vld [vmem:[%s367 + $0xe8] sm:$0xff]
        %v410 = vld [vmem:[%s367 + $0xf0] sm:$0xff]
        %v411 = vld [vmem:[%s367 + $0xf8] sm:$0xff]
        %v412 = vld [vmem:[%s367 + $0x100] sm:$0xff]
        %v413 = vld [vmem:[%s367 + $0x108] sm:$0xff]
        %v414 = vld [vmem:[%s367 + $0x110] sm:$0xff]
        %v415 = vld [vmem:[%s367 + $0x118] sm:$0xff]
        %v416 = vld [vmem:[%s367 + $0x120] sm:$0xff]
        %v417 = vld [vmem:[%s367 + $0x128] sm:$0xff]
        %v418 = vld [vmem:[%s367 + $0x130] sm:$0xff]
        %v419 = vld [vmem:[%s367 + $0x138] sm:$0xff]
        %v420 = vld [vmem:[%s367 + $0x140] sm:$0xff]
        %v421 = vld [vmem:[%s367 + $0x148] sm:$0xff]
        %v422 = vld [vmem:[%s367 + $0x150] sm:$0xff]
        %v423 = vld [vmem:[%s367 + $0x158] sm:$0xff]
        %v424 = vld [vmem:[%s367 + $0x160] sm:$0xff]
        %v425 = vld [vmem:[%s367 + $0x168] sm:$0xff]
        %v426 = vld [vmem:[%s367 + $0x170] sm:$0xff]
        %v427 = vld [vmem:[%s367 + $0x178] sm:$0xff]
        %v428 = vld [vmem:[%s367 + $0x180] sm:$0xff]
        %v429 = vld [vmem:[%s367 + $0x188] sm:$0xff]
        %v430 = vld [vmem:[%s367 + $0x190] sm:$0xff]
        %v431 = vld [vmem:[%s367 + $0x198] sm:$0xff]
        %v432 = vld [vmem:[%s367 + $0x1a0] sm:$0xff]
        %v433 = vld [vmem:[%s367 + $0x1a8] sm:$0xff]
        %v434 = vld [vmem:[%s367 + $0x1b0] sm:$0xff]
        %v435 = vld [vmem:[%s367 + $0x1b8] sm:$0xff]
        %v436 = vld [vmem:[%s367 + $0x1c0] sm:$0xff]
        %v437 = vld [vmem:[%s367 + $0x1c8] sm:$0xff]
        %v438 = vld [vmem:[%s367 + $0x1d0] sm:$0xff]
        %v439 = vld [vmem:[%s367 + $0x1d8] sm:$0xff]
        %v440 = vld [vmem:[%s367 + $0x1e0] sm:$0xff]
        %v441 = vld [vmem:[%s367 + $0x1e8] sm:$0xff]
        %v442 = vld [vmem:[%s367 + $0x1f0] sm:$0xff]
        %v443 = vld [vmem:[%s367 + $0x1f8] sm:$0xff]
        %v444 = vpack.c.bf16 %v382, %v380
        %v445 = vpack.c.bf16 %v383, %v381
        %v446 = vpack.c.bf16 %v386, %v384
        %v447 = vpack.c.bf16 %v387, %v385
        %v448 = vpack.c.bf16 %v390, %v388
        %v449 = vpack.c.bf16 %v391, %v389
        %v450 = vpack.c.bf16 %v394, %v392
        %v451 = vpack.c.bf16 %v395, %v393
        %v452 = vpack.c.bf16 %v398, %v396
        %v453 = vpack.c.bf16 %v399, %v397
        %v454 = vpack.c.bf16 %v402, %v400
        %v455 = vpack.c.bf16 %v403, %v401
        %v456 = vpack.c.bf16 %v406, %v404
        %v457 = vpack.c.bf16 %v407, %v405
        %v458 = vpack.c.bf16 %v410, %v408
        %v459 = vpack.c.bf16 %v411, %v409
        %v460 = vpack.c.bf16 %v414, %v412
        %v461 = vpack.c.bf16 %v415, %v413
        %v462 = vpack.c.bf16 %v418, %v416
        %v463 = vpack.c.bf16 %v419, %v417
        %v464 = vpack.c.bf16 %v422, %v420
        %v465 = vpack.c.bf16 %v423, %v421
        %v466 = vpack.c.bf16 %v426, %v424
        %v467 = vpack.c.bf16 %v427, %v425
        %v468 = vpack.c.bf16 %v430, %v428
        %v469 = vpack.c.bf16 %v431, %v429
        %v470 = vpack.c.bf16 %v434, %v432
        %v471 = vpack.c.bf16 %v435, %v433
        %v472 = vpack.c.bf16 %v438, %v436
        %v473 = vpack.c.bf16 %v439, %v437
        %v474 = vpack.c.bf16 %v442, %v440
        %v475 = vpack.c.bf16 %v443, %v441
        %v476 = vld [vmem:[#allocation3] sm:$0xff]
        %v477 = vld [vmem:[#allocation3 + $0x8] sm:$0xff]
        %v478 = vld [vmem:[#allocation3 + $0x10] sm:$0xff]
        %v479 = vld [vmem:[#allocation3 + $0x18] sm:$0xff]
        %v480 = vld [vmem:[#allocation3 + $0x20] sm:$0xff]
        %v481 = vld [vmem:[#allocation3 + $0x28] sm:$0xff]
        %v482 = vld [vmem:[#allocation3 + $0x30] sm:$0xff]
        %v483 = vld [vmem:[#allocation3 + $0x38] sm:$0xff]
        %v484 = vld [vmem:[#allocation3 + $0x40] sm:$0xff]
        %v485 = vld [vmem:[#allocation3 + $0x48] sm:$0xff]
        %v486 = vld [vmem:[#allocation3 + $0x50] sm:$0xff]
        %v487 = vld [vmem:[#allocation3 + $0x58] sm:$0xff]
        %v488 = vld [vmem:[#allocation3 + $0x60] sm:$0xff]
        %v489 = vld [vmem:[#allocation3 + $0x68] sm:$0xff]
        %v490 = vld [vmem:[#allocation3 + $0x70] sm:$0xff]
        %v491 = vld [vmem:[#allocation3 + $0x78] sm:$0xff]
        %v492 = vld [vmem:[#allocation3 + $0x80] sm:$0xff]
        %v493 = vld [vmem:[#allocation3 + $0x88] sm:$0xff]
        %v494 = vld [vmem:[#allocation3 + $0x90] sm:$0xff]
        %v495 = vld [vmem:[#allocation3 + $0x98] sm:$0xff]
        %v496 = vld [vmem:[#allocation3 + $0xa0] sm:$0xff]
        %v497 = vld [vmem:[#allocation3 + $0xa8] sm:$0xff]
        %v498 = vld [vmem:[#allocation3 + $0xb0] sm:$0xff]
        %v499 = vld [vmem:[#allocation3 + $0xb8] sm:$0xff]
        %v500 = vld [vmem:[#allocation3 + $0xc0] sm:$0xff]
        %v501 = vld [vmem:[#allocation3 + $0xc8] sm:$0xff]
        %v502 = vld [vmem:[#allocation3 + $0xd0] sm:$0xff]
        %v503 = vld [vmem:[#allocation3 + $0xd8] sm:$0xff]
        %v504 = vld [vmem:[#allocation3 + $0xe0] sm:$0xff]
        %v505 = vld [vmem:[#allocation3 + $0xe8] sm:$0xff]
        %v506 = vld [vmem:[#allocation3 + $0xf0] sm:$0xff]
        %v507 = vld [vmem:[#allocation3 + $0xf8] sm:$0xff]
        %v508 = vld [vmem:[#allocation3 + $0x100] sm:$0xff]
        %v509 = vld [vmem:[#allocation3 + $0x108] sm:$0xff]
        %v510 = vld [vmem:[#allocation3 + $0x110] sm:$0xff]
        %v511 = vld [vmem:[#allocation3 + $0x118] sm:$0xff]
        %v512 = vld [vmem:[#allocation3 + $0x120] sm:$0xff]
        %v513 = vld [vmem:[#allocation3 + $0x128] sm:$0xff]
        %v514 = vld [vmem:[#allocation3 + $0x130] sm:$0xff]
        %v515 = vld [vmem:[#allocation3 + $0x138] sm:$0xff]
        %v516 = vld [vmem:[#allocation3 + $0x140] sm:$0xff]
        %v517 = vld [vmem:[#allocation3 + $0x148] sm:$0xff]
        %v518 = vld [vmem:[#allocation3 + $0x150] sm:$0xff]
        %v519 = vld [vmem:[#allocation3 + $0x158] sm:$0xff]
        %v520 = vld [vmem:[#allocation3 + $0x160] sm:$0xff]
        %v521 = vld [vmem:[#allocation3 + $0x168] sm:$0xff]
        %v522 = vld [vmem:[#allocation3 + $0x170] sm:$0xff]
        %v523 = vld [vmem:[#allocation3 + $0x178] sm:$0xff]
        %v524 = vld [vmem:[#allocation3 + $0x180] sm:$0xff]
        %v525 = vld [vmem:[#allocation3 + $0x188] sm:$0xff]
        %v526 = vld [vmem:[#allocation3 + $0x190] sm:$0xff]
        %v527 = vld [vmem:[#allocation3 + $0x198] sm:$0xff]
        %v528 = vld [vmem:[#allocation3 + $0x1a0] sm:$0xff]
        %v529 = vld [vmem:[#allocation3 + $0x1a8] sm:$0xff]
        %v530 = vld [vmem:[#allocation3 + $0x1b0] sm:$0xff]
        %v531 = vld [vmem:[#allocation3 + $0x1b8] sm:$0xff]
        %v532 = vld [vmem:[#allocation3 + $0x1c0] sm:$0xff]
        %v533 = vld [vmem:[#allocation3 + $0x1c8] sm:$0xff]
        %v534 = vld [vmem:[#allocation3 + $0x1d0] sm:$0xff]
        %v535 = vld [vmem:[#allocation3 + $0x1d8] sm:$0xff]
        %v536 = vld [vmem:[#allocation3 + $0x1e0] sm:$0xff]
        %v537 = vld [vmem:[#allocation3 + $0x1e8] sm:$0xff]
        %v538 = vld [vmem:[#allocation3 + $0x1f0] sm:$0xff]
        %v539 = vld [vmem:[#allocation3 + $0x1f8] sm:$0xff]
        %v540 = vld [vmem:[#allocation3 + $0x200] sm:$0xff]
        %v541 = vld [vmem:[#allocation3 + $0x208] sm:$0xff]
        %v542 = vld [vmem:[#allocation3 + $0x210] sm:$0xff]
        %v543 = vld [vmem:[#allocation3 + $0x218] sm:$0xff]
        %v544 = vld [vmem:[#allocation3 + $0x220] sm:$0xff]
        %v545 = vld [vmem:[#allocation3 + $0x228] sm:$0xff]
        %v546 = vld [vmem:[#allocation3 + $0x230] sm:$0xff]
        %v547 = vld [vmem:[#allocation3 + $0x238] sm:$0xff]
        %v548 = vld [vmem:[#allocation3 + $0x240] sm:$0xff]
        %v549 = vld [vmem:[#allocation3 + $0x248] sm:$0xff]
        %v550 = vld [vmem:[#allocation3 + $0x250] sm:$0xff]
        %v551 = vld [vmem:[#allocation3 + $0x258] sm:$0xff]
        %v552 = vld [vmem:[#allocation3 + $0x260] sm:$0xff]
        %v553 = vld [vmem:[#allocation3 + $0x268] sm:$0xff]
        %v554 = vld [vmem:[#allocation3 + $0x270] sm:$0xff]
        %v555 = vld [vmem:[#allocation3 + $0x278] sm:$0xff]
        %v556 = vld [vmem:[#allocation3 + $0x280] sm:$0xff]
        %v557 = vld [vmem:[#allocation3 + $0x288] sm:$0xff]
        %v558 = vld [vmem:[#allocation3 + $0x290] sm:$0xff]
        %v559 = vld [vmem:[#allocation3 + $0x298] sm:$0xff]
        %v560 = vld [vmem:[#allocation3 + $0x2a0] sm:$0xff]
        %v561 = vld [vmem:[#allocation3 + $0x2a8] sm:$0xff]
        %v562 = vld [vmem:[#allocation3 + $0x2b0] sm:$0xff]
        %v563 = vld [vmem:[#allocation3 + $0x2b8] sm:$0xff]
        %v564 = vld [vmem:[#allocation3 + $0x2c0] sm:$0xff]
        %v565 = vld [vmem:[#allocation3 + $0x2c8] sm:$0xff]
        %v566 = vld [vmem:[#allocation3 + $0x2d0] sm:$0xff]
        %v567 = vld [vmem:[#allocation3 + $0x2d8] sm:$0xff]
        %v568 = vld [vmem:[#allocation3 + $0x2e0] sm:$0xff]
        %v569 = vld [vmem:[#allocation3 + $0x2e8] sm:$0xff]
        %v570 = vld [vmem:[#allocation3 + $0x2f0] sm:$0xff]
        %v571 = vld [vmem:[#allocation3 + $0x2f8] sm:$0xff]
        %v572 = vld [vmem:[#allocation3 + $0x300] sm:$0xff]
        %v573 = vld [vmem:[#allocation3 + $0x308] sm:$0xff]
        %v574 = vld [vmem:[#allocation3 + $0x310] sm:$0xff]
        %v575 = vld [vmem:[#allocation3 + $0x318] sm:$0xff]
        %v576 = vld [vmem:[#allocation3 + $0x320] sm:$0xff]
        %v577 = vld [vmem:[#allocation3 + $0x328] sm:$0xff]
        %v578 = vld [vmem:[#allocation3 + $0x330] sm:$0xff]
        %v579 = vld [vmem:[#allocation3 + $0x338] sm:$0xff]
        %v580 = vld [vmem:[#allocation3 + $0x340] sm:$0xff]
        %v581 = vld [vmem:[#allocation3 + $0x348] sm:$0xff]
        %v582 = vld [vmem:[#allocation3 + $0x350] sm:$0xff]
        %v583 = vld [vmem:[#allocation3 + $0x358] sm:$0xff]
        %v584 = vld [vmem:[#allocation3 + $0x360] sm:$0xff]
        %v585 = vld [vmem:[#allocation3 + $0x368] sm:$0xff]
        %v586 = vld [vmem:[#allocation3 + $0x370] sm:$0xff]
        %v587 = vld [vmem:[#allocation3 + $0x378] sm:$0xff]
        %v588 = vld [vmem:[#allocation3 + $0x380] sm:$0x11]
        %v589 = vld [vmem:[#allocation3 + $0x388] sm:$0x11]
        %v590 = vld [vmem:[#allocation3 + $0x390] sm:$0x11]
        %v591 = vld [vmem:[#allocation3 + $0x398] sm:$0x11]
        %v592 = vld [vmem:[#allocation5] sm:$0xff]
        %v594 = vlaneseq
        %v595 = vshrl.u32 %v594, 7
        %v596 = vsub.s32 0, %v595
        %v597 = vrot.slane %v592, %v596
        %v598 = vlaneseq
        %v599 = vshrl.u32 %v598, 7
        %v600 = vsub.s32 1, %v599
        %v601 = vrot.slane %v592, %v600
        %v602 = vlaneseq
        %v603 = vshrl.u32 %v602, 7
        %v604 = vsub.s32 2, %v603
        %v605 = vrot.slane %v592, %v604
        %v606 = vlaneseq
        %v607 = vshrl.u32 %v606, 7
        %v608 = vsub.s32 3, %v607
        %v609 = vrot.slane %v592, %v608
        %v610 = vlaneseq
        %v611 = vshrl.u32 %v610, 7
        %v612 = vsub.s32 4, %v611
        %v613 = vrot.slane %v592, %v612
        %v614 = vlaneseq
        %v615 = vshrl.u32 %v614, 7
        %v616 = vsub.s32 5, %v615
        %v617 = vrot.slane %v592, %v616
        %v618 = vlaneseq
        %v619 = vshrl.u32 %v618, 7
        %v620 = vsub.s32 6, %v619
        %v621 = vrot.slane %v592, %v620
        %v622 = vlaneseq
        %v623 = vshrl.u32 %v622, 7
        %v624 = vsub.s32 7, %v623
        %v625 = vrot.slane %v592, %v624
        %v750 = vunpack.c.l.b16 %v476
        %v751 = vunpack.c.h.b16 %v476
        %v752 = vunpack.c.l.b16 %v477
        %v753 = vunpack.c.h.b16 %v477
        %v754 = vunpack.c.l.b16 %v478
        %v755 = vunpack.c.h.b16 %v478
        %v756 = vunpack.c.l.b16 %v479
        %v757 = vunpack.c.h.b16 %v479
        %v758 = vunpack.c.l.b16 %v480
        %v759 = vunpack.c.h.b16 %v480
        %v760 = vunpack.c.l.b16 %v481
        %v761 = vunpack.c.h.b16 %v481
        %v762 = vunpack.c.l.b16 %v482
        %v763 = vunpack.c.h.b16 %v482
        %v764 = vunpack.c.l.b16 %v483
        %v765 = vunpack.c.h.b16 %v483
        %v766 = vunpack.c.l.b16 %v484
        %v767 = vunpack.c.h.b16 %v484
        %v768 = vunpack.c.l.b16 %v485
        %v769 = vunpack.c.h.b16 %v485
        %v770 = vunpack.c.l.b16 %v486
        %v771 = vunpack.c.h.b16 %v486
        %v772 = vunpack.c.l.b16 %v487
        %v773 = vunpack.c.h.b16 %v487
        %v774 = vunpack.c.l.b16 %v488
        %v775 = vunpack.c.h.b16 %v488
        %v776 = vunpack.c.l.b16 %v489
        %v777 = vunpack.c.h.b16 %v489
        %v778 = vunpack.c.l.b16 %v490
        %v779 = vunpack.c.h.b16 %v490
        %v780 = vunpack.c.l.b16 %v491
        %v781 = vunpack.c.h.b16 %v491
        %v782 = vunpack.c.l.b16 %v492
        %v783 = vunpack.c.h.b16 %v492
        %v784 = vunpack.c.l.b16 %v493
        %v785 = vunpack.c.h.b16 %v493
        %v786 = vunpack.c.l.b16 %v494
        %v787 = vunpack.c.h.b16 %v494
        %v788 = vunpack.c.l.b16 %v495
        %v789 = vunpack.c.h.b16 %v495
        %v790 = vunpack.c.l.b16 %v496
        %v791 = vunpack.c.h.b16 %v496
        %v792 = vunpack.c.l.b16 %v497
        %v793 = vunpack.c.h.b16 %v497
        %v794 = vunpack.c.l.b16 %v498
        %v795 = vunpack.c.h.b16 %v498
        %v796 = vunpack.c.l.b16 %v499
        %v797 = vunpack.c.h.b16 %v499
        %v798 = vunpack.c.l.b16 %v500
        %v799 = vunpack.c.h.b16 %v500
        %v800 = vunpack.c.l.b16 %v501
        %v801 = vunpack.c.h.b16 %v501
        %v802 = vunpack.c.l.b16 %v502
        %v803 = vunpack.c.h.b16 %v502
        %v804 = vunpack.c.l.b16 %v503
        %v805 = vunpack.c.h.b16 %v503
        %v806 = vunpack.c.l.b16 %v504
        %v807 = vunpack.c.h.b16 %v504
        %v808 = vunpack.c.l.b16 %v505
        %v809 = vunpack.c.h.b16 %v505
        %v810 = vunpack.c.l.b16 %v506
        %v811 = vunpack.c.h.b16 %v506
        %v812 = vunpack.c.l.b16 %v507
        %v813 = vunpack.c.h.b16 %v507
        %v814 = vunpack.c.l.b16 %v508
        %v815 = vunpack.c.h.b16 %v508
        %v816 = vunpack.c.l.b16 %v509
        %v817 = vunpack.c.h.b16 %v509
        %v818 = vunpack.c.l.b16 %v510
        %v819 = vunpack.c.h.b16 %v510
        %v820 = vunpack.c.l.b16 %v511
        %v821 = vunpack.c.h.b16 %v511
        %v822 = vunpack.c.l.b16 %v512
        %v823 = vunpack.c.h.b16 %v512
        %v824 = vunpack.c.l.b16 %v513
        %v825 = vunpack.c.h.b16 %v513
        %v826 = vunpack.c.l.b16 %v514
        %v827 = vunpack.c.h.b16 %v514
        %v828 = vunpack.c.l.b16 %v515
        %v829 = vunpack.c.h.b16 %v515
        %v830 = vunpack.c.l.b16 %v516
        %v831 = vunpack.c.h.b16 %v516
        %v832 = vunpack.c.l.b16 %v517
        %v833 = vunpack.c.h.b16 %v517
        %v834 = vunpack.c.l.b16 %v518
        %v835 = vunpack.c.h.b16 %v518
        %v836 = vunpack.c.l.b16 %v519
        %v837 = vunpack.c.h.b16 %v519
        %v838 = vunpack.c.l.b16 %v520
        %v839 = vunpack.c.h.b16 %v520
        %v840 = vunpack.c.l.b16 %v521
        %v841 = vunpack.c.h.b16 %v521
        %v842 = vunpack.c.l.b16 %v522
        %v843 = vunpack.c.h.b16 %v522
        %v844 = vunpack.c.l.b16 %v523
        %v845 = vunpack.c.h.b16 %v523
        %v846 = vunpack.c.l.b16 %v524
        %v847 = vunpack.c.h.b16 %v524
        %v848 = vunpack.c.l.b16 %v525
        %v849 = vunpack.c.h.b16 %v525
        %v850 = vunpack.c.l.b16 %v526
        %v851 = vunpack.c.h.b16 %v526
        %v852 = vunpack.c.l.b16 %v527
        %v853 = vunpack.c.h.b16 %v527
        %v854 = vunpack.c.l.b16 %v528
        %v855 = vunpack.c.h.b16 %v528
        %v856 = vunpack.c.l.b16 %v529
        %v857 = vunpack.c.h.b16 %v529
        %v858 = vunpack.c.l.b16 %v530
        %v859 = vunpack.c.h.b16 %v530
        %v860 = vunpack.c.l.b16 %v531
        %v861 = vunpack.c.h.b16 %v531
        %v862 = vunpack.c.l.b16 %v532
        %v863 = vunpack.c.h.b16 %v532
        %v864 = vunpack.c.l.b16 %v533
        %v865 = vunpack.c.h.b16 %v533
        %v866 = vunpack.c.l.b16 %v534
        %v867 = vunpack.c.h.b16 %v534
        %v868 = vunpack.c.l.b16 %v535
        %v869 = vunpack.c.h.b16 %v535
        %v870 = vunpack.c.l.b16 %v536
        %v871 = vunpack.c.h.b16 %v536
        %v872 = vunpack.c.l.b16 %v537
        %v873 = vunpack.c.h.b16 %v537
        %v874 = vunpack.c.l.b16 %v538
        %v875 = vunpack.c.h.b16 %v538
        %v876 = vunpack.c.l.b16 %v539
        %v877 = vunpack.c.h.b16 %v539
        %v878 = vunpack.c.l.b16 %v540
        %v879 = vunpack.c.h.b16 %v540
        %v880 = vunpack.c.l.b16 %v541
        %v881 = vunpack.c.h.b16 %v541
        %v882 = vunpack.c.l.b16 %v542
        %v883 = vunpack.c.h.b16 %v542
        %v884 = vunpack.c.l.b16 %v543
        %v885 = vunpack.c.h.b16 %v543
        %v886 = vunpack.c.l.b16 %v544
        %v887 = vunpack.c.h.b16 %v544
        %v888 = vunpack.c.l.b16 %v545
        %v889 = vunpack.c.h.b16 %v545
        %v890 = vunpack.c.l.b16 %v546
        %v891 = vunpack.c.h.b16 %v546
        %v892 = vunpack.c.l.b16 %v547
        %v893 = vunpack.c.h.b16 %v547
        %v894 = vunpack.c.l.b16 %v548
        %v895 = vunpack.c.h.b16 %v548
        %v896 = vunpack.c.l.b16 %v549
        %v897 = vunpack.c.h.b16 %v549
        %v898 = vunpack.c.l.b16 %v550
        %v899 = vunpack.c.h.b16 %v550
        %v900 = vunpack.c.l.b16 %v551
        %v901 = vunpack.c.h.b16 %v551
        %v902 = vunpack.c.l.b16 %v552
        %v903 = vunpack.c.h.b16 %v552
        %v904 = vunpack.c.l.b16 %v553
        %v905 = vunpack.c.h.b16 %v553
        %v906 = vunpack.c.l.b16 %v554
        %v907 = vunpack.c.h.b16 %v554
        %v908 = vunpack.c.l.b16 %v555
        %v909 = vunpack.c.h.b16 %v555
        %v910 = vunpack.c.l.b16 %v556
        %v911 = vunpack.c.h.b16 %v556
        %v912 = vunpack.c.l.b16 %v557
        %v913 = vunpack.c.h.b16 %v557
        %v914 = vunpack.c.l.b16 %v558
        %v915 = vunpack.c.h.b16 %v558
        %v916 = vunpack.c.l.b16 %v559
        %v917 = vunpack.c.h.b16 %v559
        %v918 = vunpack.c.l.b16 %v560
        %v919 = vunpack.c.h.b16 %v560
        %v920 = vunpack.c.l.b16 %v561
        %v921 = vunpack.c.h.b16 %v561
        %v922 = vunpack.c.l.b16 %v562
        %v923 = vunpack.c.h.b16 %v562
        %v924 = vunpack.c.l.b16 %v563
        %v925 = vunpack.c.h.b16 %v563
        %v926 = vunpack.c.l.b16 %v564
        %v927 = vunpack.c.h.b16 %v564
        %v928 = vunpack.c.l.b16 %v565
        %v929 = vunpack.c.h.b16 %v565
        %v930 = vunpack.c.l.b16 %v566
        %v931 = vunpack.c.h.b16 %v566
        %v932 = vunpack.c.l.b16 %v567
        %v933 = vunpack.c.h.b16 %v567
        %v934 = vunpack.c.l.b16 %v568
        %v935 = vunpack.c.h.b16 %v568
        %v936 = vunpack.c.l.b16 %v569
        %v937 = vunpack.c.h.b16 %v569
        %v938 = vunpack.c.l.b16 %v570
        %v939 = vunpack.c.h.b16 %v570
        %v940 = vunpack.c.l.b16 %v571
        %v941 = vunpack.c.h.b16 %v571
        %v942 = vunpack.c.l.b16 %v572
        %v943 = vunpack.c.h.b16 %v572
        %v944 = vunpack.c.l.b16 %v573
        %v945 = vunpack.c.h.b16 %v573
        %v946 = vunpack.c.l.b16 %v574
        %v947 = vunpack.c.h.b16 %v574
        %v948 = vunpack.c.l.b16 %v575
        %v949 = vunpack.c.h.b16 %v575
        %v950 = vunpack.c.l.b16 %v576
        %v951 = vunpack.c.h.b16 %v576
        %v952 = vunpack.c.l.b16 %v577
        %v953 = vunpack.c.h.b16 %v577
        %v954 = vunpack.c.l.b16 %v578
        %v955 = vunpack.c.h.b16 %v578
        %v956 = vunpack.c.l.b16 %v579
        %v957 = vunpack.c.h.b16 %v579
        %v958 = vunpack.c.l.b16 %v580
        %v959 = vunpack.c.h.b16 %v580
        %v960 = vunpack.c.l.b16 %v581
        %v961 = vunpack.c.h.b16 %v581
        %v962 = vunpack.c.l.b16 %v582
        %v963 = vunpack.c.h.b16 %v582
        %v964 = vunpack.c.l.b16 %v583
        %v965 = vunpack.c.h.b16 %v583
        %v966 = vunpack.c.l.b16 %v584
        %v967 = vunpack.c.h.b16 %v584
        %v968 = vunpack.c.l.b16 %v585
        %v969 = vunpack.c.h.b16 %v585
        %v970 = vunpack.c.l.b16 %v586
        %v971 = vunpack.c.h.b16 %v586
        %v972 = vunpack.c.l.b16 %v587
        %v973 = vunpack.c.h.b16 %v587
        %v974 = vunpack.c.l.b16 %v588
        %v975 = vunpack.c.h.b16 %v588
        %v976 = vunpack.c.l.b16 %v589
        %v977 = vunpack.c.h.b16 %v589
        %v978 = vunpack.c.l.b16 %v590
        %v979 = vunpack.c.h.b16 %v590
        %v980 = vunpack.c.l.b16 %v591
        %v981 = vunpack.c.h.b16 %v591
        %v982 = vpack.c.b16 %v758, %v750
        %v983 = vpack.c.b16 %v759, %v751
        %v984 = vpack.c.b16 %v760, %v752
        %v985 = vpack.c.b16 %v761, %v753
        %v986 = vpack.c.b16 %v762, %v754
        %v987 = vpack.c.b16 %v763, %v755
        %v988 = vpack.c.b16 %v764, %v756
        %v989 = vpack.c.b16 %v765, %v757
        %v990 = vpack.c.b16 %v774, %v766
        %v991 = vpack.c.b16 %v775, %v767
        %v992 = vpack.c.b16 %v776, %v768
        %v993 = vpack.c.b16 %v777, %v769
        %v994 = vpack.c.b16 %v778, %v770
        %v995 = vpack.c.b16 %v779, %v771
        %v996 = vpack.c.b16 %v780, %v772
        %v997 = vpack.c.b16 %v781, %v773
        %v998 = vpack.c.b16 %v790, %v782
        %v999 = vpack.c.b16 %v791, %v783
        %v1000 = vpack.c.b16 %v792, %v784
        %v1001 = vpack.c.b16 %v793, %v785
        %v1002 = vpack.c.b16 %v794, %v786
        %v1003 = vpack.c.b16 %v795, %v787
        %v1004 = vpack.c.b16 %v796, %v788
        %v1005 = vpack.c.b16 %v797, %v789
        %v1006 = vpack.c.b16 %v806, %v798
        %v1007 = vpack.c.b16 %v807, %v799
        %v1008 = vpack.c.b16 %v808, %v800
        %v1009 = vpack.c.b16 %v809, %v801
        %v1010 = vpack.c.b16 %v810, %v802
        %v1011 = vpack.c.b16 %v811, %v803
        %v1012 = vpack.c.b16 %v812, %v804
        %v1013 = vpack.c.b16 %v813, %v805
        %v1014 = vpack.c.b16 %v822, %v814
        %v1015 = vpack.c.b16 %v823, %v815
        %v1016 = vpack.c.b16 %v824, %v816
        %v1017 = vpack.c.b16 %v825, %v817
        %v1018 = vpack.c.b16 %v826, %v818
        %v1019 = vpack.c.b16 %v827, %v819
        %v1020 = vpack.c.b16 %v828, %v820
        %v1021 = vpack.c.b16 %v829, %v821
        %v1022 = vpack.c.b16 %v838, %v830
        %v1023 = vpack.c.b16 %v839, %v831
        %v1024 = vpack.c.b16 %v840, %v832
        %v1025 = vpack.c.b16 %v841, %v833
        %v1026 = vpack.c.b16 %v842, %v834
        %v1027 = vpack.c.b16 %v843, %v835
        %v1028 = vpack.c.b16 %v844, %v836
        %v1029 = vpack.c.b16 %v845, %v837
        %v1030 = vpack.c.b16 %v854, %v846
        %v1031 = vpack.c.b16 %v855, %v847
        %v1032 = vpack.c.b16 %v856, %v848
        %v1033 = vpack.c.b16 %v857, %v849
        %v1034 = vpack.c.b16 %v858, %v850
        %v1035 = vpack.c.b16 %v859, %v851
        %v1036 = vpack.c.b16 %v860, %v852
        %v1037 = vpack.c.b16 %v861, %v853
        %v1038 = vpack.c.b16 %v870, %v862
        %v1039 = vpack.c.b16 %v871, %v863
        %v1040 = vpack.c.b16 %v872, %v864
        %v1041 = vpack.c.b16 %v873, %v865
        %v1042 = vpack.c.b16 %v874, %v866
        %v1043 = vpack.c.b16 %v875, %v867
        %v1044 = vpack.c.b16 %v876, %v868
        %v1045 = vpack.c.b16 %v877, %v869
        %v1046 = vpack.c.b16 %v886, %v878
        %v1047 = vpack.c.b16 %v887, %v879
        %v1048 = vpack.c.b16 %v888, %v880
        %v1049 = vpack.c.b16 %v889, %v881
        %v1050 = vpack.c.b16 %v890, %v882
        %v1051 = vpack.c.b16 %v891, %v883
        %v1052 = vpack.c.b16 %v892, %v884
        %v1053 = vpack.c.b16 %v893, %v885
        %v1054 = vpack.c.b16 %v902, %v894
        %v1055 = vpack.c.b16 %v903, %v895
        %v1056 = vpack.c.b16 %v904, %v896
        %v1057 = vpack.c.b16 %v905, %v897
        %v1058 = vpack.c.b16 %v906, %v898
        %v1059 = vpack.c.b16 %v907, %v899
        %v1060 = vpack.c.b16 %v908, %v900
        %v1061 = vpack.c.b16 %v909, %v901
        %v1062 = vpack.c.b16 %v918, %v910
        %v1063 = vpack.c.b16 %v919, %v911
        %v1064 = vpack.c.b16 %v920, %v912
        %v1065 = vpack.c.b16 %v921, %v913
        %v1066 = vpack.c.b16 %v922, %v914
        %v1067 = vpack.c.b16 %v923, %v915
        %v1068 = vpack.c.b16 %v924, %v916
        %v1069 = vpack.c.b16 %v925, %v917
        %v1070 = vpack.c.b16 %v934, %v926
        %v1071 = vpack.c.b16 %v935, %v927
        %v1072 = vpack.c.b16 %v936, %v928
        %v1073 = vpack.c.b16 %v937, %v929
        %v1074 = vpack.c.b16 %v938, %v930
        %v1075 = vpack.c.b16 %v939, %v931
        %v1076 = vpack.c.b16 %v940, %v932
        %v1077 = vpack.c.b16 %v941, %v933
        %v1078 = vpack.c.b16 %v950, %v942
        %v1079 = vpack.c.b16 %v951, %v943
        %v1080 = vpack.c.b16 %v952, %v944
        %v1081 = vpack.c.b16 %v953, %v945
        %v1082 = vpack.c.b16 %v954, %v946
        %v1083 = vpack.c.b16 %v955, %v947
        %v1084 = vpack.c.b16 %v956, %v948
        %v1085 = vpack.c.b16 %v957, %v949
        %v1086 = vpack.c.b16 %v966, %v958
        %v1087 = vpack.c.b16 %v967, %v959
        %v1088 = vpack.c.b16 %v968, %v960
        %v1089 = vpack.c.b16 %v969, %v961
        %v1090 = vpack.c.b16 %v970, %v962
        %v1091 = vpack.c.b16 %v971, %v963
        %v1092 = vpack.c.b16 %v972, %v964
        %v1093 = vpack.c.b16 %v973, %v965
        %v1094 = vpack.c.b16 %v974, %v974
        %v1095 = vpack.c.b16 %v975, %v975
        %v1096 = vpack.c.b16 %v976, %v976
        %v1097 = vpack.c.b16 %v977, %v977
        %v1098 = vpack.c.b16 %v978, %v978
        %v1099 = vpack.c.b16 %v979, %v979
        %v1100 = vpack.c.b16 %v980, %v980
        %v1101 = vpack.c.b16 %v981, %v981
        %vm1214 = vcmask 793600
        %v1216 = vsel %vm1214, %v445, 0
        %v1219 = vsel %vm1214, %v447, 0
        %v1222 = vsel %vm1214, %v449, 0
        %v1225 = vsel %vm1214, %v451, 0
        %v1228 = vsel %vm1214, %v453, 0
        %v1231 = vsel %vm1214, %v455, 0
        %v1234 = vsel %vm1214, %v457, 0
        %v1237 = vsel %vm1214, %v459, 0
        %v1240 = vsel %vm1214, %v461, 0
        %v1243 = vsel %vm1214, %v463, 0
        %v1246 = vsel %vm1214, %v465, 0
        %v1249 = vsel %vm1214, %v467, 0
        %v1252 = vsel %vm1214, %v469, 0
        %v1255 = vsel %vm1214, %v471, 0
        %v1258 = vsel %vm1214, %v473, 0
        %v1261 = vsel %vm1214, %v475, 0
        %vm1263 = vcmask 1040384
        %v1264 = vsel 0, 4294967295, 65535
        %v1265 = vsel %vm1263, %v1264, 0
        %v1267 = vand.u32 %v1094, %v1265
        %v1270 = vand.u32 %v1095, %v1265
        %v1273 = vand.u32 %v1096, %v1265
        %v1276 = vand.u32 %v1097, %v1265
        %v1279 = vand.u32 %v1098, %v1265
        %v1282 = vand.u32 %v1099, %v1265
        %v1285 = vand.u32 %v1100, %v1265
        %v1288 = vand.u32 %v1101, %v1265
        %1290 = vmatprep.subr.bf16.mxu0 %v983
        %1291 = vmatpush1.bf16.msra.mxu0 %v982
        %1292 = vmatprep.subr.bf16.mxu0 %v991
        %1293 = vmatpush1.bf16.msra.mxu0 %v990
        %1294 = vmatprep.subr.bf16.mxu0 %v999
        %1295 = vmatpush1.bf16.msra.mxu0 %v998
        %1296 = vmatprep.subr.bf16.mxu0 %v1007
        %1297 = vmatpush1.bf16.msra.mxu0 %v1006
        %1298 = vmatprep.subr.bf16.mxu0 %v1015
        %1299 = vmatpush1.bf16.msra.mxu0 %v1014
        %1300 = vmatprep.subr.bf16.mxu0 %v1023
        %1301 = vmatpush1.bf16.msra.mxu0 %v1022
        %1302 = vmatprep.subr.bf16.mxu0 %v1031
        %1303 = vmatpush1.bf16.msra.mxu0 %v1030
        %1304 = vmatprep.subr.bf16.mxu0 %v1039
        %1305 = vmatpush1.bf16.msra.mxu0 %v1038
        %1306 = vmatprep.subr.bf16.mxu0 %v1047
        %1307 = vmatpush1.bf16.msra.mxu0 %v1046
        %1308 = vmatprep.subr.bf16.mxu0 %v1055
        %1309 = vmatpush1.bf16.msra.mxu0 %v1054
        %1310 = vmatprep.subr.bf16.mxu0 %v1063
        %1311 = vmatpush1.bf16.msra.mxu0 %v1062
        %1312 = vmatprep.subr.bf16.mxu0 %v1071
        %1313 = vmatpush1.bf16.msra.mxu0 %v1070
        %1314 = vmatprep.subr.bf16.mxu0 %v1079
        %1315 = vmatpush1.bf16.msra.mxu0 %v1078
        %1316 = vmatprep.subr.bf16.mxu0 %v1087
        %1317 = vmatpush1.bf16.msra.mxu0 %v1086
        %1318 = vmatprep.subr.bf16.mxu0 %v1270
        %1319 = vmatpush1.bf16.msra.mxu0 %v1267
        %1320 = vmatprep.subr.bf16.mxu0 0
        %1321 = vmatpush1.bf16.msra.mxu0 0
        %1322 = vmatprep.mubr.bf16.mxu0 %v1216
        %1323 = vmatmul.mubr.bf16.gmra.mrb[0].mxu0 %v444
        %v1324 = vpop.f32.mrb[0].mxu0
        %v1325 = vadd.f32 %v597, %v1324
        %v1326 = vpop.f32.mrb[0].mxu0
        %v1327 = vadd.f32 %v601, %v1326
        %v1328 = vpop.f32.mrb[0].mxu0
        %v1329 = vadd.f32 %v597, %v1328
        %v1330 = vpop.f32.mrb[0].mxu0
        %v1331 = vadd.f32 %v601, %v1330
        %1332 = vmatprep.mubr.bf16.mxu0 %v1219
        %1333 = vmatmul.mubr.bf16.gmra.mrb[0].mxu0 %v446
        %v1334 = vpop.f32.mrb[0].mxu0
        %v1335 = vadd.f32 %v597, %v1334
        %v1336 = vpop.f32.mrb[0].mxu0
        %v1337 = vadd.f32 %v601, %v1336
        %v1338 = vpop.f32.mrb[0].mxu0
        %v1339 = vadd.f32 %v597, %v1338
        %v1340 = vpop.f32.mrb[0].mxu0
        %v1341 = vadd.f32 %v601, %v1340
        %1342 = vmatprep.mubr.bf16.mxu0 %v1222
        %1343 = vmatmul.mubr.bf16.gmra.mrb[0].mxu0 %v448
        %v1344 = vpop.f32.mrb[0].mxu0
        %v1345 = vadd.f32 %v597, %v1344
        %v1346 = vpop.f32.mrb[0].mxu0
        %v1347 = vadd.f32 %v601, %v1346
        %v1348 = vpop.f32.mrb[0].mxu0
        %v1349 = vadd.f32 %v597, %v1348
        %v1350 = vpop.f32.mrb[0].mxu0
        %v1351 = vadd.f32 %v601, %v1350
        %1352 = vmatprep.mubr.bf16.mxu0 %v1225
        %1353 = vmatmul.mubr.bf16.gmra.mrb[0].mxu0 %v450
        %v1354 = vpop.f32.mrb[0].mxu0
        %v1355 = vadd.f32 %v597, %v1354
        %v1356 = vpop.f32.mrb[0].mxu0
        %v1357 = vadd.f32 %v601, %v1356
        %v1358 = vpop.f32.mrb[0].mxu0
        %v1359 = vadd.f32 %v597, %v1358
        %v1360 = vpop.f32.mrb[0].mxu0
        %v1361 = vadd.f32 %v601, %v1360
        %1362 = vmatprep.mubr.bf16.mxu0 %v1228
        %1363 = vmatmul.mubr.bf16.gmra.mrb[0].mxu0 %v452
        %v1364 = vpop.f32.mrb[0].mxu0
        %v1365 = vadd.f32 %v597, %v1364
        %v1366 = vpop.f32.mrb[0].mxu0
        %v1367 = vadd.f32 %v601, %v1366
        %v1368 = vpop.f32.mrb[0].mxu0
        %v1369 = vadd.f32 %v597, %v1368
        %v1370 = vpop.f32.mrb[0].mxu0
        %v1371 = vadd.f32 %v601, %v1370
        %1372 = vmatprep.mubr.bf16.mxu0 %v1231
        %1373 = vmatmul.mubr.bf16.gmra.mrb[0].mxu0 %v454
        %v1374 = vpop.f32.mrb[0].mxu0
        %v1375 = vadd.f32 %v597, %v1374
        %v1376 = vpop.f32.mrb[0].mxu0
        %v1377 = vadd.f32 %v601, %v1376
        %v1378 = vpop.f32.mrb[0].mxu0
        %v1379 = vadd.f32 %v597, %v1378
        %v1380 = vpop.f32.mrb[0].mxu0
        %v1381 = vadd.f32 %v601, %v1380
        %1382 = vmatprep.mubr.bf16.mxu0 %v1234
        %1383 = vmatmul.mubr.bf16.gmra.mrb[0].mxu0 %v456
        %v1384 = vpop.f32.mrb[0].mxu0
        %v1385 = vadd.f32 %v597, %v1384
        %v1386 = vpop.f32.mrb[0].mxu0
        %v1387 = vadd.f32 %v601, %v1386
        %v1388 = vpop.f32.mrb[0].mxu0
        %v1389 = vadd.f32 %v597, %v1388
        %v1390 = vpop.f32.mrb[0].mxu0
        %v1391 = vadd.f32 %v601, %v1390
        %1392 = vmatprep.mubr.bf16.mxu0 %v1237
        %1393 = vmatmul.mubr.bf16.gmra.mrb[0].mxu0 %v458
        %v1394 = vpop.f32.mrb[0].mxu0
        %v1395 = vadd.f32 %v597, %v1394
        %v1396 = vpop.f32.mrb[0].mxu0
        %v1397 = vadd.f32 %v601, %v1396
        %v1398 = vpop.f32.mrb[0].mxu0
        %v1399 = vadd.f32 %v597, %v1398
        %v1400 = vpop.f32.mrb[0].mxu0
        %v1401 = vadd.f32 %v601, %v1400
        %1402 = vmatprep.mubr.bf16.mxu0 %v1240
        %1403 = vmatmul.mubr.bf16.gmra.mrb[0].mxu0 %v460
        %v1404 = vpop.f32.mrb[0].mxu0
        %v1405 = vadd.f32 %v597, %v1404
        %v1406 = vpop.f32.mrb[0].mxu0
        %v1407 = vadd.f32 %v601, %v1406
        %v1408 = vpop.f32.mrb[0].mxu0
        %v1409 = vadd.f32 %v597, %v1408
        %v1410 = vpop.f32.mrb[0].mxu0
        %v1411 = vadd.f32 %v601, %v1410
        %1412 = vmatprep.mubr.bf16.mxu0 %v1243
        %1413 = vmatmul.mubr.bf16.gmra.mrb[0].mxu0 %v462
        %v1414 = vpop.f32.mrb[0].mxu0
        %v1415 = vadd.f32 %v597, %v1414
        %v1416 = vpop.f32.mrb[0].mxu0
        %v1417 = vadd.f32 %v601, %v1416
        %v1418 = vpop.f32.mrb[0].mxu0
        %v1419 = vadd.f32 %v597, %v1418
        %v1420 = vpop.f32.mrb[0].mxu0
        %v1421 = vadd.f32 %v601, %v1420
        %1422 = vmatprep.mubr.bf16.mxu0 %v1246
        %1423 = vmatmul.mubr.bf16.gmra.mrb[0].mxu0 %v464
        %v1424 = vpop.f32.mrb[0].mxu0
        %v1425 = vadd.f32 %v597, %v1424
        %v1426 = vpop.f32.mrb[0].mxu0
        %v1427 = vadd.f32 %v601, %v1426
        %v1428 = vpop.f32.mrb[0].mxu0
        %v1429 = vadd.f32 %v597, %v1428
        %v1430 = vpop.f32.mrb[0].mxu0
        %v1431 = vadd.f32 %v601, %v1430
        %1432 = vmatprep.mubr.bf16.mxu0 %v1249
        %1433 = vmatmul.mubr.bf16.gmra.mrb[0].mxu0 %v466
        %v1434 = vpop.f32.mrb[0].mxu0
        %v1435 = vadd.f32 %v597, %v1434
        %v1436 = vpop.f32.mrb[0].mxu0
        %v1437 = vadd.f32 %v601, %v1436
        %v1438 = vpop.f32.mrb[0].mxu0
        %v1439 = vadd.f32 %v597, %v1438
        %v1440 = vpop.f32.mrb[0].mxu0
        %v1441 = vadd.f32 %v601, %v1440
        %1442 = vmatprep.mubr.bf16.mxu0 %v1252
        %1443 = vmatmul.mubr.bf16.gmra.mrb[0].mxu0 %v468
        %v1444 = vpop.f32.mrb[0].mxu0
        %v1445 = vadd.f32 %v597, %v1444
        %v1446 = vpop.f32.mrb[0].mxu0
        %v1447 = vadd.f32 %v601, %v1446
        %v1448 = vpop.f32.mrb[0].mxu0
        %v1449 = vadd.f32 %v597, %v1448
        %v1450 = vpop.f32.mrb[0].mxu0
        %v1451 = vadd.f32 %v601, %v1450
        %1452 = vmatprep.mubr.bf16.mxu0 %v1255
        %1453 = vmatmul.mubr.bf16.gmra.mrb[0].mxu0 %v470
        %v1454 = vpop.f32.mrb[0].mxu0
        %v1455 = vadd.f32 %v597, %v1454
        %v1456 = vpop.f32.mrb[0].mxu0
        %v1457 = vadd.f32 %v601, %v1456
        %v1458 = vpop.f32.mrb[0].mxu0
        %v1459 = vadd.f32 %v597, %v1458
        %v1460 = vpop.f32.mrb[0].mxu0
        %v1461 = vadd.f32 %v601, %v1460
        %1462 = vmatprep.mubr.bf16.mxu0 %v1258
        %1463 = vmatmul.mubr.bf16.gmra.mrb[0].mxu0 %v472
        %v1464 = vpop.f32.mrb[0].mxu0
        %v1465 = vadd.f32 %v597, %v1464
        %v1466 = vpop.f32.mrb[0].mxu0
        %v1467 = vadd.f32 %v601, %v1466
        %v1468 = vpop.f32.mrb[0].mxu0
        %v1469 = vadd.f32 %v597, %v1468
        %v1470 = vpop.f32.mrb[0].mxu0
        %v1471 = vadd.f32 %v601, %v1470
        %1472 = vmatprep.mubr.bf16.mxu0 %v1261
        %1473 = vmatmul.mubr.bf16.gmra.mrb[0].mxu0 %v474
        %v1474 = vpop.f32.mrb[0].mxu0
        %v1475 = vadd.f32 %v597, %v1474
        %v1476 = vpop.f32.mrb[0].mxu0
        %v1477 = vadd.f32 %v601, %v1476
        %v1478 = vpop.f32.mrb[0].mxu0
        %v1479 = vadd.f32 %v597, %v1478
        %v1480 = vpop.f32.mrb[0].mxu0
        %v1481 = vadd.f32 %v601, %v1480
        %1482 = vdwg.mxu0
        %1483 = vmatprep.subr.bf16.mxu0 %v985
        %1484 = vmatpush1.bf16.msra.mxu0 %v984
        %1485 = vmatprep.subr.bf16.mxu0 %v993
        %1486 = vmatpush1.bf16.msra.mxu0 %v992
        %1487 = vmatprep.subr.bf16.mxu0 %v1001
        %1488 = vmatpush1.bf16.msra.mxu0 %v1000
        %1489 = vmatprep.subr.bf16.mxu0 %v1009
        %1490 = vmatpush1.bf16.msra.mxu0 %v1008
        %1491 = vmatprep.subr.bf16.mxu0 %v1017
        %1492 = vmatpush1.bf16.msra.mxu0 %v1016
        %1493 = vmatprep.subr.bf16.mxu0 %v1025
        %1494 = vmatpush1.bf16.msra.mxu0 %v1024
        %1495 = vmatprep.subr.bf16.mxu0 %v1033
        %1496 = vmatpush1.bf16.msra.mxu0 %v1032
        %1497 = vmatprep.subr.bf16.mxu0 %v1041
        %1498 = vmatpush1.bf16.msra.mxu0 %v1040
        %1499 = vmatprep.subr.bf16.mxu0 %v1049
        %1500 = vmatpush1.bf16.msra.mxu0 %v1048
        %1501 = vmatprep.subr.bf16.mxu0 %v1057
        %1502 = vmatpush1.bf16.msra.mxu0 %v1056
        %1503 = vmatprep.subr.bf16.mxu0 %v1065
        %1504 = vmatpush1.bf16.msra.mxu0 %v1064
        %1505 = vmatprep.subr.bf16.mxu0 %v1073
        %1506 = vmatpush1.bf16.msra.mxu0 %v1072
        %1507 = vmatprep.subr.bf16.mxu0 %v1081
        %1508 = vmatpush1.bf16.msra.mxu0 %v1080
        %1509 = vmatprep.subr.bf16.mxu0 %v1089
        %1510 = vmatpush1.bf16.msra.mxu0 %v1088
        %1511 = vmatprep.subr.bf16.mxu0 %v1276
        %1512 = vmatpush1.bf16.msra.mxu0 %v1273
        %1513 = vmatprep.subr.bf16.mxu0 0
        %1514 = vmatpush1.bf16.msra.mxu0 0
        %1515 = vmatprep.mubr.bf16.mxu0 %v1216
        %1516 = vmatmul.mubr.bf16.gmra.mrb[0].mxu0 %v444
        %v1517 = vpop.f32.mrb[0].mxu0
        %v1518 = vadd.f32 %v605, %v1517
        %v1519 = vpop.f32.mrb[0].mxu0
        %v1520 = vadd.f32 %v609, %v1519
        %v1521 = vpop.f32.mrb[0].mxu0
        %v1522 = vadd.f32 %v605, %v1521
        %v1523 = vpop.f32.mrb[0].mxu0
        %v1524 = vadd.f32 %v609, %v1523
        %1525 = vmatprep.mubr.bf16.mxu0 %v1219
        %1526 = vmatmul.mubr.bf16.gmra.mrb[0].mxu0 %v446
        %v1527 = vpop.f32.mrb[0].mxu0
        %v1528 = vadd.f32 %v605, %v1527
        %v1529 = vpop.f32.mrb[0].mxu0
        %v1530 = vadd.f32 %v609, %v1529
        %v1531 = vpop.f32.mrb[0].mxu0
        %v1532 = vadd.f32 %v605, %v1531
        %v1533 = vpop.f32.mrb[0].mxu0
        %v1534 = vadd.f32 %v609, %v1533
        %1535 = vmatprep.mubr.bf16.mxu0 %v1222
        %1536 = vmatmul.mubr.bf16.gmra.mrb[0].mxu0 %v448
        %v1537 = vpop.f32.mrb[0].mxu0
        %v1538 = vadd.f32 %v605, %v1537
        %v1539 = vpop.f32.mrb[0].mxu0
        %v1540 = vadd.f32 %v609, %v1539
        %v1541 = vpop.f32.mrb[0].mxu0
        %v1542 = vadd.f32 %v605, %v1541
        %v1543 = vpop.f32.mrb[0].mxu0
        %v1544 = vadd.f32 %v609, %v1543
        %1545 = vmatprep.mubr.bf16.mxu0 %v1225
        %1546 = vmatmul.mubr.bf16.gmra.mrb[0].mxu0 %v450
        %v1547 = vpop.f32.mrb[0].mxu0
        %v1548 = vadd.f32 %v605, %v1547
        %v1549 = vpop.f32.mrb[0].mxu0
        %v1550 = vadd.f32 %v609, %v1549
        %v1551 = vpop.f32.mrb[0].mxu0
        %v1552 = vadd.f32 %v605, %v1551
        %v1553 = vpop.f32.mrb[0].mxu0
        %v1554 = vadd.f32 %v609, %v1553
        %1555 = vmatprep.mubr.bf16.mxu0 %v1228
        %1556 = vmatmul.mubr.bf16.gmra.mrb[0].mxu0 %v452
        %v1557 = vpop.f32.mrb[0].mxu0
        %v1558 = vadd.f32 %v605, %v1557
        %v1559 = vpop.f32.mrb[0].mxu0
        %v1560 = vadd.f32 %v609, %v1559
        %v1561 = vpop.f32.mrb[0].mxu0
        %v1562 = vadd.f32 %v605, %v1561
        %v1563 = vpop.f32.mrb[0].mxu0
        %v1564 = vadd.f32 %v609, %v1563
        %1565 = vmatprep.mubr.bf16.mxu0 %v1231
        %1566 = vmatmul.mubr.bf16.gmra.mrb[0].mxu0 %v454
        %v1567 = vpop.f32.mrb[0].mxu0
        %v1568 = vadd.f32 %v605, %v1567
        %v1569 = vpop.f32.mrb[0].mxu0
        %v1570 = vadd.f32 %v609, %v1569
        %v1571 = vpop.f32.mrb[0].mxu0
        %v1572 = vadd.f32 %v605, %v1571
        %v1573 = vpop.f32.mrb[0].mxu0
        %v1574 = vadd.f32 %v609, %v1573
        %1575 = vmatprep.mubr.bf16.mxu0 %v1234
        %1576 = vmatmul.mubr.bf16.gmra.mrb[0].mxu0 %v456
        %v1577 = vpop.f32.mrb[0].mxu0
        %v1578 = vadd.f32 %v605, %v1577
        %v1579 = vpop.f32.mrb[0].mxu0
        %v1580 = vadd.f32 %v609, %v1579
        %v1581 = vpop.f32.mrb[0].mxu0
        %v1582 = vadd.f32 %v605, %v1581
        %v1583 = vpop.f32.mrb[0].mxu0
        %v1584 = vadd.f32 %v609, %v1583
        %1585 = vmatprep.mubr.bf16.mxu0 %v1237
        %1586 = vmatmul.mubr.bf16.gmra.mrb[0].mxu0 %v458
        %v1587 = vpop.f32.mrb[0].mxu0
        %v1588 = vadd.f32 %v605, %v1587
        %v1589 = vpop.f32.mrb[0].mxu0
        %v1590 = vadd.f32 %v609, %v1589
        %v1591 = vpop.f32.mrb[0].mxu0
        %v1592 = vadd.f32 %v605, %v1591
        %v1593 = vpop.f32.mrb[0].mxu0
        %v1594 = vadd.f32 %v609, %v1593
        %1595 = vmatprep.mubr.bf16.mxu0 %v1240
        %1596 = vmatmul.mubr.bf16.gmra.mrb[0].mxu0 %v460
        %v1597 = vpop.f32.mrb[0].mxu0
        %v1598 = vadd.f32 %v605, %v1597
        %v1599 = vpop.f32.mrb[0].mxu0
        %v1600 = vadd.f32 %v609, %v1599
        %v1601 = vpop.f32.mrb[0].mxu0
        %v1602 = vadd.f32 %v605, %v1601
        %v1603 = vpop.f32.mrb[0].mxu0
        %v1604 = vadd.f32 %v609, %v1603
        %1605 = vmatprep.mubr.bf16.mxu0 %v1243
        %1606 = vmatmul.mubr.bf16.gmra.mrb[0].mxu0 %v462
        %v1607 = vpop.f32.mrb[0].mxu0
        %v1608 = vadd.f32 %v605, %v1607
        %v1609 = vpop.f32.mrb[0].mxu0
        %v1610 = vadd.f32 %v609, %v1609
        %v1611 = vpop.f32.mrb[0].mxu0
        %v1612 = vadd.f32 %v605, %v1611
        %v1613 = vpop.f32.mrb[0].mxu0
        %v1614 = vadd.f32 %v609, %v1613
        %1615 = vmatprep.mubr.bf16.mxu0 %v1246
        %1616 = vmatmul.mubr.bf16.gmra.mrb[0].mxu0 %v464
        %v1617 = vpop.f32.mrb[0].mxu0
        %v1618 = vadd.f32 %v605, %v1617
        %v1619 = vpop.f32.mrb[0].mxu0
        %v1620 = vadd.f32 %v609, %v1619
        %v1621 = vpop.f32.mrb[0].mxu0
        %v1622 = vadd.f32 %v605, %v1621
        %v1623 = vpop.f32.mrb[0].mxu0
        %v1624 = vadd.f32 %v609, %v1623
        %1625 = vmatprep.mubr.bf16.mxu0 %v1249
        %1626 = vmatmul.mubr.bf16.gmra.mrb[0].mxu0 %v466
        %v1627 = vpop.f32.mrb[0].mxu0
        %v1628 = vadd.f32 %v605, %v1627
        %v1629 = vpop.f32.mrb[0].mxu0
        %v1630 = vadd.f32 %v609, %v1629
        %v1631 = vpop.f32.mrb[0].mxu0
        %v1632 = vadd.f32 %v605, %v1631
        %v1633 = vpop.f32.mrb[0].mxu0
        %v1634 = vadd.f32 %v609, %v1633
        %1635 = vmatprep.mubr.bf16.mxu0 %v1252
        %1636 = vmatmul.mubr.bf16.gmra.mrb[0].mxu0 %v468
        %v1637 = vpop.f32.mrb[0].mxu0
        %v1638 = vadd.f32 %v605, %v1637
        %v1639 = vpop.f32.mrb[0].mxu0
        %v1640 = vadd.f32 %v609, %v1639
        %v1641 = vpop.f32.mrb[0].mxu0
        %v1642 = vadd.f32 %v605, %v1641
        %v1643 = vpop.f32.mrb[0].mxu0
        %v1644 = vadd.f32 %v609, %v1643
        %1645 = vmatprep.mubr.bf16.mxu0 %v1255
        %1646 = vmatmul.mubr.bf16.gmra.mrb[0].mxu0 %v470
        %v1647 = vpop.f32.mrb[0].mxu0
        %v1648 = vadd.f32 %v605, %v1647
        %v1649 = vpop.f32.mrb[0].mxu0
        %v1650 = vadd.f32 %v609, %v1649
        %v1651 = vpop.f32.mrb[0].mxu0
        %v1652 = vadd.f32 %v605, %v1651
        %v1653 = vpop.f32.mrb[0].mxu0
        %v1654 = vadd.f32 %v609, %v1653
        %1655 = vmatprep.mubr.bf16.mxu0 %v1258
        %1656 = vmatmul.mubr.bf16.gmra.mrb[0].mxu0 %v472
        %v1657 = vpop.f32.mrb[0].mxu0
        %v1658 = vadd.f32 %v605, %v1657
        %v1659 = vpop.f32.mrb[0].mxu0
        %v1660 = vadd.f32 %v609, %v1659
        %v1661 = vpop.f32.mrb[0].mxu0
        %v1662 = vadd.f32 %v605, %v1661
        %v1663 = vpop.f32.mrb[0].mxu0
        %v1664 = vadd.f32 %v609, %v1663
        %1665 = vmatprep.mubr.bf16.mxu0 %v1261
        %1666 = vmatmul.mubr.bf16.gmra.mrb[0].mxu0 %v474
        %v1667 = vpop.f32.mrb[0].mxu0
        %v1668 = vadd.f32 %v605, %v1667
        %v1669 = vpop.f32.mrb[0].mxu0
        %v1670 = vadd.f32 %v609, %v1669
        %v1671 = vpop.f32.mrb[0].mxu0
        %v1672 = vadd.f32 %v605, %v1671
        %v1673 = vpop.f32.mrb[0].mxu0
        %v1674 = vadd.f32 %v609, %v1673
        %1675 = vdwg.mxu0
        %1676 = vmatprep.subr.bf16.mxu0 %v987
        %1677 = vmatpush1.bf16.msra.mxu0 %v986
        %1678 = vmatprep.subr.bf16.mxu0 %v995
        %1679 = vmatpush1.bf16.msra.mxu0 %v994
        %1680 = vmatprep.subr.bf16.mxu0 %v1003
        %1681 = vmatpush1.bf16.msra.mxu0 %v1002
        %1682 = vmatprep.subr.bf16.mxu0 %v1011
        %1683 = vmatpush1.bf16.msra.mxu0 %v1010
        %1684 = vmatprep.subr.bf16.mxu0 %v1019
        %1685 = vmatpush1.bf16.msra.mxu0 %v1018
        %1686 = vmatprep.subr.bf16.mxu0 %v1027
        %1687 = vmatpush1.bf16.msra.mxu0 %v1026
        %1688 = vmatprep.subr.bf16.mxu0 %v1035
        %1689 = vmatpush1.bf16.msra.mxu0 %v1034
        %1690 = vmatprep.subr.bf16.mxu0 %v1043
        %1691 = vmatpush1.bf16.msra.mxu0 %v1042
        %1692 = vmatprep.subr.bf16.mxu0 %v1051
        %1693 = vmatpush1.bf16.msra.mxu0 %v1050
        %1694 = vmatprep.subr.bf16.mxu0 %v1059
        %1695 = vmatpush1.bf16.msra.mxu0 %v1058
        %1696 = vmatprep.subr.bf16.mxu0 %v1067
        %1697 = vmatpush1.bf16.msra.mxu0 %v1066
        %1698 = vmatprep.subr.bf16.mxu0 %v1075
        %1699 = vmatpush1.bf16.msra.mxu0 %v1074
        %1700 = vmatprep.subr.bf16.mxu0 %v1083
        %1701 = vmatpush1.bf16.msra.mxu0 %v1082
        %1702 = vmatprep.subr.bf16.mxu0 %v1091
        %1703 = vmatpush1.bf16.msra.mxu0 %v1090
        %1704 = vmatprep.subr.bf16.mxu0 %v1282
        %1705 = vmatpush1.bf16.msra.mxu0 %v1279
        %1706 = vmatprep.subr.bf16.mxu0 0
        %1707 = vmatpush1.bf16.msra.mxu0 0
        %1708 = vmatprep.mubr.bf16.mxu0 %v1216
        %1709 = vmatmul.mubr.bf16.gmra.mrb[0].mxu0 %v444
        %v1710 = vpop.f32.mrb[0].mxu0
        %v1711 = vadd.f32 %v613, %v1710
        %v1712 = vpop.f32.mrb[0].mxu0
        %v1713 = vadd.f32 %v617, %v1712
        %v1714 = vpop.f32.mrb[0].mxu0
        %v1715 = vadd.f32 %v613, %v1714
        %v1716 = vpop.f32.mrb[0].mxu0
        %v1717 = vadd.f32 %v617, %v1716
        %1718 = vmatprep.mubr.bf16.mxu0 %v1219
        %1719 = vmatmul.mubr.bf16.gmra.mrb[0].mxu0 %v446
        %v1720 = vpop.f32.mrb[0].mxu0
        %v1721 = vadd.f32 %v613, %v1720
        %v1722 = vpop.f32.mrb[0].mxu0
        %v1723 = vadd.f32 %v617, %v1722
        %v1724 = vpop.f32.mrb[0].mxu0
        %v1725 = vadd.f32 %v613, %v1724
        %v1726 = vpop.f32.mrb[0].mxu0
        %v1727 = vadd.f32 %v617, %v1726
        %1728 = vmatprep.mubr.bf16.mxu0 %v1222
        %1729 = vmatmul.mubr.bf16.gmra.mrb[0].mxu0 %v448
        %v1730 = vpop.f32.mrb[0].mxu0
        %v1731 = vadd.f32 %v613, %v1730
        %v1732 = vpop.f32.mrb[0].mxu0
        %v1733 = vadd.f32 %v617, %v1732
        %v1734 = vpop.f32.mrb[0].mxu0
        %v1735 = vadd.f32 %v613, %v1734
        %v1736 = vpop.f32.mrb[0].mxu0
        %v1737 = vadd.f32 %v617, %v1736
        %1738 = vmatprep.mubr.bf16.mxu0 %v1225
        %1739 = vmatmul.mubr.bf16.gmra.mrb[0].mxu0 %v450
        %v1740 = vpop.f32.mrb[0].mxu0
        %v1741 = vadd.f32 %v613, %v1740
        %v1742 = vpop.f32.mrb[0].mxu0
        %v1743 = vadd.f32 %v617, %v1742
        %v1744 = vpop.f32.mrb[0].mxu0
        %v1745 = vadd.f32 %v613, %v1744
        %v1746 = vpop.f32.mrb[0].mxu0
        %v1747 = vadd.f32 %v617, %v1746
        %1748 = vmatprep.mubr.bf16.mxu0 %v1228
        %1749 = vmatmul.mubr.bf16.gmra.mrb[0].mxu0 %v452
        %v1750 = vpop.f32.mrb[0].mxu0
        %v1751 = vadd.f32 %v613, %v1750
        %v1752 = vpop.f32.mrb[0].mxu0
        %v1753 = vadd.f32 %v617, %v1752
        %v1754 = vpop.f32.mrb[0].mxu0
        %v1755 = vadd.f32 %v613, %v1754
        %v1756 = vpop.f32.mrb[0].mxu0
        %v1757 = vadd.f32 %v617, %v1756
        %1758 = vmatprep.mubr.bf16.mxu0 %v1231
        %1759 = vmatmul.mubr.bf16.gmra.mrb[0].mxu0 %v454
        %v1760 = vpop.f32.mrb[0].mxu0
        %v1761 = vadd.f32 %v613, %v1760
        %v1762 = vpop.f32.mrb[0].mxu0
        %v1763 = vadd.f32 %v617, %v1762
        %v1764 = vpop.f32.mrb[0].mxu0
        %v1765 = vadd.f32 %v613, %v1764
        %v1766 = vpop.f32.mrb[0].mxu0
        %v1767 = vadd.f32 %v617, %v1766
        %1768 = vmatprep.mubr.bf16.mxu0 %v1234
        %1769 = vmatmul.mubr.bf16.gmra.mrb[0].mxu0 %v456
        %v1770 = vpop.f32.mrb[0].mxu0
        %v1771 = vadd.f32 %v613, %v1770
        %v1772 = vpop.f32.mrb[0].mxu0
        %v1773 = vadd.f32 %v617, %v1772
        %v1774 = vpop.f32.mrb[0].mxu0
        %v1775 = vadd.f32 %v613, %v1774
        %v1776 = vpop.f32.mrb[0].mxu0
        %v1777 = vadd.f32 %v617, %v1776
        %1778 = vmatprep.mubr.bf16.mxu0 %v1237
        %1779 = vmatmul.mubr.bf16.gmra.mrb[0].mxu0 %v458
        %v1780 = vpop.f32.mrb[0].mxu0
        %v1781 = vadd.f32 %v613, %v1780
        %v1782 = vpop.f32.mrb[0].mxu0
        %v1783 = vadd.f32 %v617, %v1782
        %v1784 = vpop.f32.mrb[0].mxu0
        %v1785 = vadd.f32 %v613, %v1784
        %v1786 = vpop.f32.mrb[0].mxu0
        %v1787 = vadd.f32 %v617, %v1786
        %1788 = vmatprep.mubr.bf16.mxu0 %v1240
        %1789 = vmatmul.mubr.bf16.gmra.mrb[0].mxu0 %v460
        %v1790 = vpop.f32.mrb[0].mxu0
        %v1791 = vadd.f32 %v613, %v1790
        %v1792 = vpop.f32.mrb[0].mxu0
        %v1793 = vadd.f32 %v617, %v1792
        %v1794 = vpop.f32.mrb[0].mxu0
        %v1795 = vadd.f32 %v613, %v1794
        %v1796 = vpop.f32.mrb[0].mxu0
        %v1797 = vadd.f32 %v617, %v1796
        %1798 = vmatprep.mubr.bf16.mxu0 %v1243
        %1799 = vmatmul.mubr.bf16.gmra.mrb[0].mxu0 %v462
        %v1800 = vpop.f32.mrb[0].mxu0
        %v1801 = vadd.f32 %v613, %v1800
        %v1802 = vpop.f32.mrb[0].mxu0
        %v1803 = vadd.f32 %v617, %v1802
        %v1804 = vpop.f32.mrb[0].mxu0
        %v1805 = vadd.f32 %v613, %v1804
        %v1806 = vpop.f32.mrb[0].mxu0
        %v1807 = vadd.f32 %v617, %v1806
        %1808 = vmatprep.mubr.bf16.mxu0 %v1246
        %1809 = vmatmul.mubr.bf16.gmra.mrb[0].mxu0 %v464
        %v1810 = vpop.f32.mrb[0].mxu0
        %v1811 = vadd.f32 %v613, %v1810
        %v1812 = vpop.f32.mrb[0].mxu0
        %v1813 = vadd.f32 %v617, %v1812
        %v1814 = vpop.f32.mrb[0].mxu0
        %v1815 = vadd.f32 %v613, %v1814
        %v1816 = vpop.f32.mrb[0].mxu0
        %v1817 = vadd.f32 %v617, %v1816
        %1818 = vmatprep.mubr.bf16.mxu0 %v1249
        %1819 = vmatmul.mubr.bf16.gmra.mrb[0].mxu0 %v466
        %v1820 = vpop.f32.mrb[0].mxu0
        %v1821 = vadd.f32 %v613, %v1820
        %v1822 = vpop.f32.mrb[0].mxu0
        %v1823 = vadd.f32 %v617, %v1822
        %v1824 = vpop.f32.mrb[0].mxu0
        %v1825 = vadd.f32 %v613, %v1824
        %v1826 = vpop.f32.mrb[0].mxu0
        %v1827 = vadd.f32 %v617, %v1826
        %1828 = vmatprep.mubr.bf16.mxu0 %v1252
        %1829 = vmatmul.mubr.bf16.gmra.mrb[0].mxu0 %v468
        %v1830 = vpop.f32.mrb[0].mxu0
        %v1831 = vadd.f32 %v613, %v1830
        %v1832 = vpop.f32.mrb[0].mxu0
        %v1833 = vadd.f32 %v617, %v1832
        %v1834 = vpop.f32.mrb[0].mxu0
        %v1835 = vadd.f32 %v613, %v1834
        %v1836 = vpop.f32.mrb[0].mxu0
        %v1837 = vadd.f32 %v617, %v1836
        %1838 = vmatprep.mubr.bf16.mxu0 %v1255
        %1839 = vmatmul.mubr.bf16.gmra.mrb[0].mxu0 %v470
        %v1840 = vpop.f32.mrb[0].mxu0
        %v1841 = vadd.f32 %v613, %v1840
        %v1842 = vpop.f32.mrb[0].mxu0
        %v1843 = vadd.f32 %v617, %v1842
        %v1844 = vpop.f32.mrb[0].mxu0
        %v1845 = vadd.f32 %v613, %v1844
        %v1846 = vpop.f32.mrb[0].mxu0
        %v1847 = vadd.f32 %v617, %v1846
        %1848 = vmatprep.mubr.bf16.mxu0 %v1258
        %1849 = vmatmul.mubr.bf16.gmra.mrb[0].mxu0 %v472
        %v1850 = vpop.f32.mrb[0].mxu0
        %v1851 = vadd.f32 %v613, %v1850
        %v1852 = vpop.f32.mrb[0].mxu0
        %v1853 = vadd.f32 %v617, %v1852
        %v1854 = vpop.f32.mrb[0].mxu0
        %v1855 = vadd.f32 %v613, %v1854
        %v1856 = vpop.f32.mrb[0].mxu0
        %v1857 = vadd.f32 %v617, %v1856
        %1858 = vmatprep.mubr.bf16.mxu0 %v1261
        %1859 = vmatmul.mubr.bf16.gmra.mrb[0].mxu0 %v474
        %v1860 = vpop.f32.mrb[0].mxu0
        %v1861 = vadd.f32 %v613, %v1860
        %v1862 = vpop.f32.mrb[0].mxu0
        %v1863 = vadd.f32 %v617, %v1862
        %v1864 = vpop.f32.mrb[0].mxu0
        %v1865 = vadd.f32 %v613, %v1864
        %v1866 = vpop.f32.mrb[0].mxu0
        %v1867 = vadd.f32 %v617, %v1866
        %1868 = vdwg.mxu0
        %1869 = vmatprep.subr.bf16.mxu0 %v989
        %1870 = vmatpush1.bf16.msra.mxu0 %v988
        %1871 = vmatprep.subr.bf16.mxu0 %v997
        %1872 = vmatpush1.bf16.msra.mxu0 %v996
        %1873 = vmatprep.subr.bf16.mxu0 %v1005
        %1874 = vmatpush1.bf16.msra.mxu0 %v1004
        %1875 = vmatprep.subr.bf16.mxu0 %v1013
        %1876 = vmatpush1.bf16.msra.mxu0 %v1012
        %1877 = vmatprep.subr.bf16.mxu0 %v1021
        %1878 = vmatpush1.bf16.msra.mxu0 %v1020
        %1879 = vmatprep.subr.bf16.mxu0 %v1029
        %1880 = vmatpush1.bf16.msra.mxu0 %v1028
        %1881 = vmatprep.subr.bf16.mxu0 %v1037
        %1882 = vmatpush1.bf16.msra.mxu0 %v1036
        %1883 = vmatprep.subr.bf16.mxu0 %v1045
        %1884 = vmatpush1.bf16.msra.mxu0 %v1044
        %1885 = vmatprep.subr.bf16.mxu0 %v1053
        %1886 = vmatpush1.bf16.msra.mxu0 %v1052
        %1887 = vmatprep.subr.bf16.mxu0 %v1061
        %1888 = vmatpush1.bf16.msra.mxu0 %v1060
        %1889 = vmatprep.subr.bf16.mxu0 %v1069
        %1890 = vmatpush1.bf16.msra.mxu0 %v1068
        %1891 = vmatprep.subr.bf16.mxu0 %v1077
        %1892 = vmatpush1.bf16.msra.mxu0 %v1076
        %1893 = vmatprep.subr.bf16.mxu0 %v1085
        %1894 = vmatpush1.bf16.msra.mxu0 %v1084
        %1895 = vmatprep.subr.bf16.mxu0 %v1093
        %1896 = vmatpush1.bf16.msra.mxu0 %v1092
        %1897 = vmatprep.subr.bf16.mxu0 %v1288
        %1898 = vmatpush1.bf16.msra.mxu0 %v1285
        %1899 = vmatprep.subr.bf16.mxu0 0
        %1900 = vmatpush1.bf16.msra.mxu0 0
        %1901 = vmatprep.mubr.bf16.mxu0 %v1216
        %1902 = vmatmul.mubr.bf16.gmra.mrb[0].mxu0 %v444
        %v1903 = vpop.f32.mrb[0].mxu0
        %v1904 = vadd.f32 %v621, %v1903
        %v1905 = vpop.f32.mrb[0].mxu0
        %v1906 = vadd.f32 %v625, %v1905
        %v1907 = vpop.f32.mrb[0].mxu0
        %v1908 = vadd.f32 %v621, %v1907
        %v1909 = vpop.f32.mrb[0].mxu0
        %v1910 = vadd.f32 %v625, %v1909
        %1911 = vmatprep.mubr.bf16.mxu0 %v1219
        %1912 = vmatmul.mubr.bf16.gmra.mrb[0].mxu0 %v446
        %v1913 = vpop.f32.mrb[0].mxu0
        %v1914 = vadd.f32 %v621, %v1913
        %v1915 = vpop.f32.mrb[0].mxu0
        %v1916 = vadd.f32 %v625, %v1915
        %v1917 = vpop.f32.mrb[0].mxu0
        %v1918 = vadd.f32 %v621, %v1917
        %v1919 = vpop.f32.mrb[0].mxu0
        %v1920 = vadd.f32 %v625, %v1919
        %1921 = vmatprep.mubr.bf16.mxu0 %v1222
        %1922 = vmatmul.mubr.bf16.gmra.mrb[0].mxu0 %v448
        %v1923 = vpop.f32.mrb[0].mxu0
        %v1924 = vadd.f32 %v621, %v1923
        %v1925 = vpop.f32.mrb[0].mxu0
        %v1926 = vadd.f32 %v625, %v1925
        %v1927 = vpop.f32.mrb[0].mxu0
        %v1928 = vadd.f32 %v621, %v1927
        %v1929 = vpop.f32.mrb[0].mxu0
        %v1930 = vadd.f32 %v625, %v1929
        %1931 = vmatprep.mubr.bf16.mxu0 %v1225
        %1932 = vmatmul.mubr.bf16.gmra.mrb[0].mxu0 %v450
        %v1933 = vpop.f32.mrb[0].mxu0
        %v1934 = vadd.f32 %v621, %v1933
        %v1935 = vpop.f32.mrb[0].mxu0
        %v1936 = vadd.f32 %v625, %v1935
        %v1937 = vpop.f32.mrb[0].mxu0
        %v1938 = vadd.f32 %v621, %v1937
        %v1939 = vpop.f32.mrb[0].mxu0
        %v1940 = vadd.f32 %v625, %v1939
        %1941 = vmatprep.mubr.bf16.mxu0 %v1228
        %1942 = vmatmul.mubr.bf16.gmra.mrb[0].mxu0 %v452
        %v1943 = vpop.f32.mrb[0].mxu0
        %v1944 = vadd.f32 %v621, %v1943
        %v1945 = vpop.f32.mrb[0].mxu0
        %v1946 = vadd.f32 %v625, %v1945
        %v1947 = vpop.f32.mrb[0].mxu0
        %v1948 = vadd.f32 %v621, %v1947
        %v1949 = vpop.f32.mrb[0].mxu0
        %v1950 = vadd.f32 %v625, %v1949
        %1951 = vmatprep.mubr.bf16.mxu0 %v1231
        %1952 = vmatmul.mubr.bf16.gmra.mrb[0].mxu0 %v454
        %v1953 = vpop.f32.mrb[0].mxu0
        %v1954 = vadd.f32 %v621, %v1953
        %v1955 = vpop.f32.mrb[0].mxu0
        %v1956 = vadd.f32 %v625, %v1955
        %v1957 = vpop.f32.mrb[0].mxu0
        %v1958 = vadd.f32 %v621, %v1957
        %v1959 = vpop.f32.mrb[0].mxu0
        %v1960 = vadd.f32 %v625, %v1959
        %1961 = vmatprep.mubr.bf16.mxu0 %v1234
        %1962 = vmatmul.mubr.bf16.gmra.mrb[0].mxu0 %v456
        %v1963 = vpop.f32.mrb[0].mxu0
        %v1964 = vadd.f32 %v621, %v1963
        %v1965 = vpop.f32.mrb[0].mxu0
        %v1966 = vadd.f32 %v625, %v1965
        %v1967 = vpop.f32.mrb[0].mxu0
        %v1968 = vadd.f32 %v621, %v1967
        %v1969 = vpop.f32.mrb[0].mxu0
        %v1970 = vadd.f32 %v625, %v1969
        %1971 = vmatprep.mubr.bf16.mxu0 %v1237
        %1972 = vmatmul.mubr.bf16.gmra.mrb[0].mxu0 %v458
        %v1973 = vpop.f32.mrb[0].mxu0
        %v1974 = vadd.f32 %v621, %v1973
        %v1975 = vpop.f32.mrb[0].mxu0
        %v1976 = vadd.f32 %v625, %v1975
        %v1977 = vpop.f32.mrb[0].mxu0
        %v1978 = vadd.f32 %v621, %v1977
        %v1979 = vpop.f32.mrb[0].mxu0
        %v1980 = vadd.f32 %v625, %v1979
        %1981 = vmatprep.mubr.bf16.mxu0 %v1240
        %1982 = vmatmul.mubr.bf16.gmra.mrb[0].mxu0 %v460
        %v1983 = vpop.f32.mrb[0].mxu0
        %v1984 = vadd.f32 %v621, %v1983
        %v1985 = vpop.f32.mrb[0].mxu0
        %v1986 = vadd.f32 %v625, %v1985
        %v1987 = vpop.f32.mrb[0].mxu0
        %v1988 = vadd.f32 %v621, %v1987
        %v1989 = vpop.f32.mrb[0].mxu0
        %v1990 = vadd.f32 %v625, %v1989
        %1991 = vmatprep.mubr.bf16.mxu0 %v1243
        %1992 = vmatmul.mubr.bf16.gmra.mrb[0].mxu0 %v462
        %v1993 = vpop.f32.mrb[0].mxu0
        %v1994 = vadd.f32 %v621, %v1993
        %v1995 = vpop.f32.mrb[0].mxu0
        %v1996 = vadd.f32 %v625, %v1995
        %v1997 = vpop.f32.mrb[0].mxu0
        %v1998 = vadd.f32 %v621, %v1997
        %v1999 = vpop.f32.mrb[0].mxu0
        %v2000 = vadd.f32 %v625, %v1999
        %2001 = vmatprep.mubr.bf16.mxu0 %v1246
        %2002 = vmatmul.mubr.bf16.gmra.mrb[0].mxu0 %v464
        %v2003 = vpop.f32.mrb[0].mxu0
        %v2004 = vadd.f32 %v621, %v2003
        %v2005 = vpop.f32.mrb[0].mxu0
        %v2006 = vadd.f32 %v625, %v2005
        %v2007 = vpop.f32.mrb[0].mxu0
        %v2008 = vadd.f32 %v621, %v2007
        %v2009 = vpop.f32.mrb[0].mxu0
        %v2010 = vadd.f32 %v625, %v2009
        %2011 = vmatprep.mubr.bf16.mxu0 %v1249
        %2012 = vmatmul.mubr.bf16.gmra.mrb[0].mxu0 %v466
        %v2013 = vpop.f32.mrb[0].mxu0
        %v2014 = vadd.f32 %v621, %v2013
        %v2015 = vpop.f32.mrb[0].mxu0
        %v2016 = vadd.f32 %v625, %v2015
        %v2017 = vpop.f32.mrb[0].mxu0
        %v2018 = vadd.f32 %v621, %v2017
        %v2019 = vpop.f32.mrb[0].mxu0
        %v2020 = vadd.f32 %v625, %v2019
        %2021 = vmatprep.mubr.bf16.mxu0 %v1252
        %2022 = vmatmul.mubr.bf16.gmra.mrb[0].mxu0 %v468
        %v2023 = vpop.f32.mrb[0].mxu0
        %v2024 = vadd.f32 %v621, %v2023
        %v2025 = vpop.f32.mrb[0].mxu0
        %v2026 = vadd.f32 %v625, %v2025
        %v2027 = vpop.f32.mrb[0].mxu0
        %v2028 = vadd.f32 %v621, %v2027
        %v2029 = vpop.f32.mrb[0].mxu0
        %v2030 = vadd.f32 %v625, %v2029
        %2031 = vmatprep.mubr.bf16.mxu0 %v1255
        %2032 = vmatmul.mubr.bf16.gmra.mrb[0].mxu0 %v470
        %v2033 = vpop.f32.mrb[0].mxu0
        %v2034 = vadd.f32 %v621, %v2033
        %v2035 = vpop.f32.mrb[0].mxu0
        %v2036 = vadd.f32 %v625, %v2035
        %v2037 = vpop.f32.mrb[0].mxu0
        %v2038 = vadd.f32 %v621, %v2037
        %v2039 = vpop.f32.mrb[0].mxu0
        %v2040 = vadd.f32 %v625, %v2039
        %2041 = vmatprep.mubr.bf16.mxu0 %v1258
        %2042 = vmatmul.mubr.bf16.gmra.mrb[0].mxu0 %v472
        %v2043 = vpop.f32.mrb[0].mxu0
        %v2044 = vadd.f32 %v621, %v2043
        %v2045 = vpop.f32.mrb[0].mxu0
        %v2046 = vadd.f32 %v625, %v2045
        %v2047 = vpop.f32.mrb[0].mxu0
        %v2048 = vadd.f32 %v621, %v2047
        %v2049 = vpop.f32.mrb[0].mxu0
        %v2050 = vadd.f32 %v625, %v2049
        %2051 = vmatprep.mubr.bf16.mxu0 %v1261
        %2052 = vmatmul.mubr.bf16.gmra.mrb[0].mxu0 %v474
        %v2053 = vpop.f32.mrb[0].mxu0
        %v2054 = vadd.f32 %v621, %v2053
        %v2055 = vpop.f32.mrb[0].mxu0
        %v2056 = vadd.f32 %v625, %v2055
        %v2057 = vpop.f32.mrb[0].mxu0
        %v2058 = vadd.f32 %v621, %v2057
        %v2059 = vpop.f32.mrb[0].mxu0
        %v2060 = vadd.f32 %v625, %v2059
        %2061 = vdwg.mxu0
        %v2062 = vmul.f32 %v1325, 0.5
        %v2063 = vmul.f32 %v1327, 0.5
        %v2064 = vmul.f32 %v1518, 0.5
        %v2065 = vmul.f32 %v1520, 0.5
        %v2066 = vmul.f32 %v1711, 0.5
        %v2067 = vmul.f32 %v1713, 0.5
        %v2068 = vmul.f32 %v1904, 0.5
        %v2069 = vmul.f32 %v1906, 0.5
        %v2070 = vmul.f32 %v1329, 0.5
        %v2071 = vmul.f32 %v1331, 0.5
        %v2072 = vmul.f32 %v1522, 0.5
        %v2073 = vmul.f32 %v1524, 0.5
        %v2074 = vmul.f32 %v1715, 0.5
        %v2075 = vmul.f32 %v1717, 0.5
        %v2076 = vmul.f32 %v1908, 0.5
        %v2077 = vmul.f32 %v1910, 0.5
        %v2078 = vmul.f32 %v1335, 0.5
        %v2079 = vmul.f32 %v1337, 0.5
        %v2080 = vmul.f32 %v1528, 0.5
        %v2081 = vmul.f32 %v1530, 0.5
        %v2082 = vmul.f32 %v1721, 0.5
        %v2083 = vmul.f32 %v1723, 0.5
        %v2084 = vmul.f32 %v1914, 0.5
        %v2085 = vmul.f32 %v1916, 0.5
        %v2086 = vmul.f32 %v1339, 0.5
        %v2087 = vmul.f32 %v1341, 0.5
        %v2088 = vmul.f32 %v1532, 0.5
        %v2089 = vmul.f32 %v1534, 0.5
        %v2090 = vmul.f32 %v1725, 0.5
        %v2091 = vmul.f32 %v1727, 0.5
        %v2092 = vmul.f32 %v1918, 0.5
        %v2093 = vmul.f32 %v1920, 0.5
        %v2094 = vmul.f32 %v1345, 0.5
        %v2095 = vmul.f32 %v1347, 0.5
        %v2096 = vmul.f32 %v1538, 0.5
        %v2097 = vmul.f32 %v1540, 0.5
        %v2098 = vmul.f32 %v1731, 0.5
        %v2099 = vmul.f32 %v1733, 0.5
        %v2100 = vmul.f32 %v1924, 0.5
        %v2101 = vmul.f32 %v1926, 0.5
        %v2102 = vmul.f32 %v1349, 0.5
        %v2103 = vmul.f32 %v1351, 0.5
        %v2104 = vmul.f32 %v1542, 0.5
        %v2105 = vmul.f32 %v1544, 0.5
        %v2106 = vmul.f32 %v1735, 0.5
        %v2107 = vmul.f32 %v1737, 0.5
        %v2108 = vmul.f32 %v1928, 0.5
        %v2109 = vmul.f32 %v1930, 0.5
        %v2110 = vmul.f32 %v1355, 0.5
        %v2111 = vmul.f32 %v1357, 0.5
        %v2112 = vmul.f32 %v1548, 0.5
        %v2113 = vmul.f32 %v1550, 0.5
        %v2114 = vmul.f32 %v1741, 0.5
        %v2115 = vmul.f32 %v1743, 0.5
        %v2116 = vmul.f32 %v1934, 0.5
        %v2117 = vmul.f32 %v1936, 0.5
        %v2118 = vmul.f32 %v1359, 0.5
        %v2119 = vmul.f32 %v1361, 0.5
        %v2120 = vmul.f32 %v1552, 0.5
        %v2121 = vmul.f32 %v1554, 0.5
        %v2122 = vmul.f32 %v1745, 0.5
        %v2123 = vmul.f32 %v1747, 0.5
        %v2124 = vmul.f32 %v1938, 0.5
        %v2125 = vmul.f32 %v1940, 0.5
        %v2126 = vmul.f32 %v1365, 0.5
        %v2127 = vmul.f32 %v1367, 0.5
        %v2128 = vmul.f32 %v1558, 0.5
        %v2129 = vmul.f32 %v1560, 0.5
        %v2130 = vmul.f32 %v1751, 0.5
        %v2131 = vmul.f32 %v1753, 0.5
        %v2132 = vmul.f32 %v1944, 0.5
        %v2133 = vmul.f32 %v1946, 0.5
        %v2134 = vmul.f32 %v1369, 0.5
        %v2135 = vmul.f32 %v1371, 0.5
        %v2136 = vmul.f32 %v1562, 0.5
        %v2137 = vmul.f32 %v1564, 0.5
        %v2138 = vmul.f32 %v1755, 0.5
        %v2139 = vmul.f32 %v1757, 0.5
        %v2140 = vmul.f32 %v1948, 0.5
        %v2141 = vmul.f32 %v1950, 0.5
        %v2142 = vmul.f32 %v1375, 0.5
        %v2143 = vmul.f32 %v1377, 0.5
        %v2144 = vmul.f32 %v1568, 0.5
        %v2145 = vmul.f32 %v1570, 0.5
        %v2146 = vmul.f32 %v1761, 0.5
        %v2147 = vmul.f32 %v1763, 0.5
        %v2148 = vmul.f32 %v1954, 0.5
        %v2149 = vmul.f32 %v1956, 0.5
        %v2150 = vmul.f32 %v1379, 0.5
        %v2151 = vmul.f32 %v1381, 0.5
        %v2152 = vmul.f32 %v1572, 0.5
        %v2153 = vmul.f32 %v1574, 0.5
        %v2154 = vmul.f32 %v1765, 0.5
        %v2155 = vmul.f32 %v1767, 0.5
        %v2156 = vmul.f32 %v1958, 0.5
        %v2157 = vmul.f32 %v1960, 0.5
        %v2158 = vmul.f32 %v1385, 0.5
        %v2159 = vmul.f32 %v1387, 0.5
        %v2160 = vmul.f32 %v1578, 0.5
        %v2161 = vmul.f32 %v1580, 0.5
        %v2162 = vmul.f32 %v1771, 0.5
        %v2163 = vmul.f32 %v1773, 0.5
        %v2164 = vmul.f32 %v1964, 0.5
        %v2165 = vmul.f32 %v1966, 0.5
        %v2166 = vmul.f32 %v1389, 0.5
        %v2167 = vmul.f32 %v1391, 0.5
        %v2168 = vmul.f32 %v1582, 0.5
        %v2169 = vmul.f32 %v1584, 0.5
        %v2170 = vmul.f32 %v1775, 0.5
        %v2171 = vmul.f32 %v1777, 0.5
        %v2172 = vmul.f32 %v1968, 0.5
        %v2173 = vmul.f32 %v1970, 0.5
        %v2174 = vmul.f32 %v1395, 0.5
        %v2175 = vmul.f32 %v1397, 0.5
        %v2176 = vmul.f32 %v1588, 0.5
        %v2177 = vmul.f32 %v1590, 0.5
        %v2178 = vmul.f32 %v1781, 0.5
        %v2179 = vmul.f32 %v1783, 0.5
        %v2180 = vmul.f32 %v1974, 0.5
        %v2181 = vmul.f32 %v1976, 0.5
        %v2182 = vmul.f32 %v1399, 0.5
        %v2183 = vmul.f32 %v1401, 0.5
        %v2184 = vmul.f32 %v1592, 0.5
        %v2185 = vmul.f32 %v1594, 0.5
        %v2186 = vmul.f32 %v1785, 0.5
        %v2187 = vmul.f32 %v1787, 0.5
        %v2188 = vmul.f32 %v1978, 0.5
        %v2189 = vmul.f32 %v1980, 0.5
        %v2190 = vmul.f32 %v1405, 0.5
        %v2191 = vmul.f32 %v1407, 0.5
        %v2192 = vmul.f32 %v1598, 0.5
        %v2193 = vmul.f32 %v1600, 0.5
        %v2194 = vmul.f32 %v1791, 0.5
        %v2195 = vmul.f32 %v1793, 0.5
        %v2196 = vmul.f32 %v1984, 0.5
        %v2197 = vmul.f32 %v1986, 0.5
        %v2198 = vmul.f32 %v1409, 0.5
        %v2199 = vmul.f32 %v1411, 0.5
        %v2200 = vmul.f32 %v1602, 0.5
        %v2201 = vmul.f32 %v1604, 0.5
        %v2202 = vmul.f32 %v1795, 0.5
        %v2203 = vmul.f32 %v1797, 0.5
        %v2204 = vmul.f32 %v1988, 0.5
        %v2205 = vmul.f32 %v1990, 0.5
        %v2206 = vmul.f32 %v1415, 0.5
        %v2207 = vmul.f32 %v1417, 0.5
        %v2208 = vmul.f32 %v1608, 0.5
        %v2209 = vmul.f32 %v1610, 0.5
        %v2210 = vmul.f32 %v1801, 0.5
        %v2211 = vmul.f32 %v1803, 0.5
        %v2212 = vmul.f32 %v1994, 0.5
        %v2213 = vmul.f32 %v1996, 0.5
        %v2214 = vmul.f32 %v1419, 0.5
        %v2215 = vmul.f32 %v1421, 0.5
        %v2216 = vmul.f32 %v1612, 0.5
        %v2217 = vmul.f32 %v1614, 0.5
        %v2218 = vmul.f32 %v1805, 0.5
        %v2219 = vmul.f32 %v1807, 0.5
        %v2220 = vmul.f32 %v1998, 0.5
        %v2221 = vmul.f32 %v2000, 0.5
        %v2222 = vmul.f32 %v1425, 0.5
        %v2223 = vmul.f32 %v1427, 0.5
        %v2224 = vmul.f32 %v1618, 0.5
        %v2225 = vmul.f32 %v1620, 0.5
        %v2226 = vmul.f32 %v1811, 0.5
        %v2227 = vmul.f32 %v1813, 0.5
        %v2228 = vmul.f32 %v2004, 0.5
        %v2229 = vmul.f32 %v2006, 0.5
        %v2230 = vmul.f32 %v1429, 0.5
        %v2231 = vmul.f32 %v1431, 0.5
        %v2232 = vmul.f32 %v1622, 0.5
        %v2233 = vmul.f32 %v1624, 0.5
        %v2234 = vmul.f32 %v1815, 0.5
        %v2235 = vmul.f32 %v1817, 0.5
        %v2236 = vmul.f32 %v2008, 0.5
        %v2237 = vmul.f32 %v2010, 0.5
        %v2238 = vmul.f32 %v1435, 0.5
        %v2239 = vmul.f32 %v1437, 0.5
        %v2240 = vmul.f32 %v1628, 0.5
        %v2241 = vmul.f32 %v1630, 0.5
        %v2242 = vmul.f32 %v1821, 0.5
        %v2243 = vmul.f32 %v1823, 0.5
        %v2244 = vmul.f32 %v2014, 0.5
        %v2245 = vmul.f32 %v2016, 0.5
        %v2246 = vmul.f32 %v1439, 0.5
        %v2247 = vmul.f32 %v1441, 0.5
        %v2248 = vmul.f32 %v1632, 0.5
        %v2249 = vmul.f32 %v1634, 0.5
        %v2250 = vmul.f32 %v1825, 0.5
        %v2251 = vmul.f32 %v1827, 0.5
        %v2252 = vmul.f32 %v2018, 0.5
        %v2253 = vmul.f32 %v2020, 0.5
        %v2254 = vmul.f32 %v1445, 0.5
        %v2255 = vmul.f32 %v1447, 0.5
        %v2256 = vmul.f32 %v1638, 0.5
        %v2257 = vmul.f32 %v1640, 0.5
        %v2258 = vmul.f32 %v1831, 0.5
        %v2259 = vmul.f32 %v1833, 0.5
        %v2260 = vmul.f32 %v2024, 0.5
        %v2261 = vmul.f32 %v2026, 0.5
        %v2262 = vmul.f32 %v1449, 0.5
        %v2263 = vmul.f32 %v1451, 0.5
        %v2264 = vmul.f32 %v1642, 0.5
        %v2265 = vmul.f32 %v1644, 0.5
        %v2266 = vmul.f32 %v1835, 0.5
        %v2267 = vmul.f32 %v1837, 0.5
        %v2268 = vmul.f32 %v2028, 0.5
        %v2269 = vmul.f32 %v2030, 0.5
        %v2270 = vmul.f32 %v1455, 0.5
        %v2271 = vmul.f32 %v1457, 0.5
        %v2272 = vmul.f32 %v1648, 0.5
        %v2273 = vmul.f32 %v1650, 0.5
        %v2274 = vmul.f32 %v1841, 0.5
        %v2275 = vmul.f32 %v1843, 0.5
        %v2276 = vmul.f32 %v2034, 0.5
        %v2277 = vmul.f32 %v2036, 0.5
        %v2278 = vmul.f32 %v1459, 0.5
        %v2279 = vmul.f32 %v1461, 0.5
        %v2280 = vmul.f32 %v1652, 0.5
        %v2281 = vmul.f32 %v1654, 0.5
        %v2282 = vmul.f32 %v1845, 0.5
        %v2283 = vmul.f32 %v1847, 0.5
        %v2284 = vmul.f32 %v2038, 0.5
        %v2285 = vmul.f32 %v2040, 0.5
        %v2286 = vmul.f32 %v1465, 0.5
        %v2287 = vmul.f32 %v1467, 0.5
        %v2288 = vmul.f32 %v1658, 0.5
        %v2289 = vmul.f32 %v1660, 0.5
        %v2290 = vmul.f32 %v1851, 0.5
        %v2291 = vmul.f32 %v1853, 0.5
        %v2292 = vmul.f32 %v2044, 0.5
        %v2293 = vmul.f32 %v2046, 0.5
        %v2294 = vmul.f32 %v1469, 0.5
        %v2295 = vmul.f32 %v1471, 0.5
        %v2296 = vmul.f32 %v1662, 0.5
        %v2297 = vmul.f32 %v1664, 0.5
        %v2298 = vmul.f32 %v1855, 0.5
        %v2299 = vmul.f32 %v1857, 0.5
        %v2300 = vmul.f32 %v2048, 0.5
        %v2301 = vmul.f32 %v2050, 0.5
        %v2302 = vmul.f32 %v1475, 0.5
        %v2303 = vmul.f32 %v1477, 0.5
        %v2304 = vmul.f32 %v1668, 0.5
        %v2305 = vmul.f32 %v1670, 0.5
        %v2306 = vmul.f32 %v1861, 0.5
        %v2307 = vmul.f32 %v1863, 0.5
        %v2308 = vmul.f32 %v2054, 0.5
        %v2309 = vmul.f32 %v2056, 0.5
        %v2310 = vmul.f32 %v1479, 0.5
        %v2311 = vmul.f32 %v1481, 0.5
        %v2312 = vmul.f32 %v1672, 0.5
        %v2313 = vmul.f32 %v1674, 0.5
        %v2314 = vmul.f32 %v1865, 0.5
        %v2315 = vmul.f32 %v1867, 0.5
        %v2316 = vmul.f32 %v2058, 0.5
        %v2317 = vmul.f32 %v2060, 0.5
        %v2318 = vtanh.pop %v2062
        %v2319 = vtanh.pop %v2063
        %v2320 = vtanh.pop %v2064
        %v2321 = vtanh.pop %v2065
        %v2322 = vtanh.pop %v2066
        %v2323 = vtanh.pop %v2067
        %v2324 = vtanh.pop %v2068
        %v2325 = vtanh.pop %v2069
        %v2326 = vtanh.pop %v2070
        %v2327 = vtanh.pop %v2071
        %v2328 = vtanh.pop %v2072
        %v2329 = vtanh.pop %v2073
        %v2330 = vtanh.pop %v2074
        %v2331 = vtanh.pop %v2075
        %v2332 = vtanh.pop %v2076
        %v2333 = vtanh.pop %v2077
        %v2334 = vtanh.pop %v2078
        %v2335 = vtanh.pop %v2079
        %v2336 = vtanh.pop %v2080
        %v2337 = vtanh.pop %v2081
        %v2338 = vtanh.pop %v2082
        %v2339 = vtanh.pop %v2083
        %v2340 = vtanh.pop %v2084
        %v2341 = vtanh.pop %v2085
        %v2342 = vtanh.pop %v2086
        %v2343 = vtanh.pop %v2087
        %v2344 = vtanh.pop %v2088
        %v2345 = vtanh.pop %v2089
        %v2346 = vtanh.pop %v2090
        %v2347 = vtanh.pop %v2091
        %v2348 = vtanh.pop %v2092
        %v2349 = vtanh.pop %v2093
        %v2350 = vtanh.pop %v2094
        %v2351 = vtanh.pop %v2095
        %v2352 = vtanh.pop %v2096
        %v2353 = vtanh.pop %v2097
        %v2354 = vtanh.pop %v2098
        %v2355 = vtanh.pop %v2099
        %v2356 = vtanh.pop %v2100
        %v2357 = vtanh.pop %v2101
        %v2358 = vtanh.pop %v2102
        %v2359 = vtanh.pop %v2103
        %v2360 = vtanh.pop %v2104
        %v2361 = vtanh.pop %v2105
        %v2362 = vtanh.pop %v2106
        %v2363 = vtanh.pop %v2107
        %v2364 = vtanh.pop %v2108
        %v2365 = vtanh.pop %v2109
        %v2366 = vtanh.pop %v2110
        %v2367 = vtanh.pop %v2111
        %v2368 = vtanh.pop %v2112
        %v2369 = vtanh.pop %v2113
        %v2370 = vtanh.pop %v2114
        %v2371 = vtanh.pop %v2115
        %v2372 = vtanh.pop %v2116
        %v2373 = vtanh.pop %v2117
        %v2374 = vtanh.pop %v2118
        %v2375 = vtanh.pop %v2119
        %v2376 = vtanh.pop %v2120
        %v2377 = vtanh.pop %v2121
        %v2378 = vtanh.pop %v2122
        %v2379 = vtanh.pop %v2123
        %v2380 = vtanh.pop %v2124
        %v2381 = vtanh.pop %v2125
        %v2382 = vtanh.pop %v2126
        %v2383 = vtanh.pop %v2127
        %v2384 = vtanh.pop %v2128
        %v2385 = vtanh.pop %v2129
        %v2386 = vtanh.pop %v2130
        %v2387 = vtanh.pop %v2131
        %v2388 = vtanh.pop %v2132
        %v2389 = vtanh.pop %v2133
        %v2390 = vtanh.pop %v2134
        %v2391 = vtanh.pop %v2135
        %v2392 = vtanh.pop %v2136
        %v2393 = vtanh.pop %v2137
        %v2394 = vtanh.pop %v2138
        %v2395 = vtanh.pop %v2139
        %v2396 = vtanh.pop %v2140
        %v2397 = vtanh.pop %v2141
        %v2398 = vtanh.pop %v2142
        %v2399 = vtanh.pop %v2143
        %v2400 = vtanh.pop %v2144
        %v2401 = vtanh.pop %v2145
        %v2402 = vtanh.pop %v2146
        %v2403 = vtanh.pop %v2147
        %v2404 = vtanh.pop %v2148
        %v2405 = vtanh.pop %v2149
        %v2406 = vtanh.pop %v2150
        %v2407 = vtanh.pop %v2151
        %v2408 = vtanh.pop %v2152
        %v2409 = vtanh.pop %v2153
        %v2410 = vtanh.pop %v2154
        %v2411 = vtanh.pop %v2155
        %v2412 = vtanh.pop %v2156
        %v2413 = vtanh.pop %v2157
        %v2414 = vtanh.pop %v2158
        %v2415 = vtanh.pop %v2159
        %v2416 = vtanh.pop %v2160
        %v2417 = vtanh.pop %v2161
        %v2418 = vtanh.pop %v2162
        %v2419 = vtanh.pop %v2163
        %v2420 = vtanh.pop %v2164
        %v2421 = vtanh.pop %v2165
        %v2422 = vtanh.pop %v2166
        %v2423 = vtanh.pop %v2167
        %v2424 = vtanh.pop %v2168
        %v2425 = vtanh.pop %v2169
        %v2426 = vtanh.pop %v2170
        %v2427 = vtanh.pop %v2171
        %v2428 = vtanh.pop %v2172
        %v2429 = vtanh.pop %v2173
        %v2430 = vtanh.pop %v2174
        %v2431 = vtanh.pop %v2175
        %v2432 = vtanh.pop %v2176
        %v2433 = vtanh.pop %v2177
        %v2434 = vtanh.pop %v2178
        %v2435 = vtanh.pop %v2179
        %v2436 = vtanh.pop %v2180
        %v2437 = vtanh.pop %v2181
        %v2438 = vtanh.pop %v2182
        %v2439 = vtanh.pop %v2183
        %v2440 = vtanh.pop %v2184
        %v2441 = vtanh.pop %v2185
        %v2442 = vtanh.pop %v2186
        %v2443 = vtanh.pop %v2187
        %v2444 = vtanh.pop %v2188
        %v2445 = vtanh.pop %v2189
        %v2446 = vtanh.pop %v2190
        %v2447 = vtanh.pop %v2191
        %v2448 = vtanh.pop %v2192
        %v2449 = vtanh.pop %v2193
        %v2450 = vtanh.pop %v2194
        %v2451 = vtanh.pop %v2195
        %v2452 = vtanh.pop %v2196
        %v2453 = vtanh.pop %v2197
        %v2454 = vtanh.pop %v2198
        %v2455 = vtanh.pop %v2199
        %v2456 = vtanh.pop %v2200
        %v2457 = vtanh.pop %v2201
        %v2458 = vtanh.pop %v2202
        %v2459 = vtanh.pop %v2203
        %v2460 = vtanh.pop %v2204
        %v2461 = vtanh.pop %v2205
        %v2462 = vtanh.pop %v2206
        %v2463 = vtanh.pop %v2207
        %v2464 = vtanh.pop %v2208
        %v2465 = vtanh.pop %v2209
        %v2466 = vtanh.pop %v2210
        %v2467 = vtanh.pop %v2211
        %v2468 = vtanh.pop %v2212
        %v2469 = vtanh.pop %v2213
        %v2470 = vtanh.pop %v2214
        %v2471 = vtanh.pop %v2215
        %v2472 = vtanh.pop %v2216
        %v2473 = vtanh.pop %v2217
        %v2474 = vtanh.pop %v2218
        %v2475 = vtanh.pop %v2219
        %v2476 = vtanh.pop %v2220
        %v2477 = vtanh.pop %v2221
        %v2478 = vtanh.pop %v2222
        %v2479 = vtanh.pop %v2223
        %v2480 = vtanh.pop %v2224
        %v2481 = vtanh.pop %v2225
        %v2482 = vtanh.pop %v2226
        %v2483 = vtanh.pop %v2227
        %v2484 = vtanh.pop %v2228
        %v2485 = vtanh.pop %v2229
        %v2486 = vtanh.pop %v2230
        %v2487 = vtanh.pop %v2231
        %v2488 = vtanh.pop %v2232
        %v2489 = vtanh.pop %v2233
        %v2490 = vtanh.pop %v2234
        %v2491 = vtanh.pop %v2235
        %v2492 = vtanh.pop %v2236
        %v2493 = vtanh.pop %v2237
        %v2494 = vtanh.pop %v2238
        %v2495 = vtanh.pop %v2239
        %v2496 = vtanh.pop %v2240
        %v2497 = vtanh.pop %v2241
        %v2498 = vtanh.pop %v2242
        %v2499 = vtanh.pop %v2243
        %v2500 = vtanh.pop %v2244
        %v2501 = vtanh.pop %v2245
        %v2502 = vtanh.pop %v2246
        %v2503 = vtanh.pop %v2247
        %v2504 = vtanh.pop %v2248
        %v2505 = vtanh.pop %v2249
        %v2506 = vtanh.pop %v2250
        %v2507 = vtanh.pop %v2251
        %v2508 = vtanh.pop %v2252
        %v2509 = vtanh.pop %v2253
        %v2510 = vtanh.pop %v2254
        %v2511 = vtanh.pop %v2255
        %v2512 = vtanh.pop %v2256
        %v2513 = vtanh.pop %v2257
        %v2514 = vtanh.pop %v2258
        %v2515 = vtanh.pop %v2259
        %v2516 = vtanh.pop %v2260
        %v2517 = vtanh.pop %v2261
        %v2518 = vtanh.pop %v2262
        %v2519 = vtanh.pop %v2263
        %v2520 = vtanh.pop %v2264
        %v2521 = vtanh.pop %v2265
        %v2522 = vtanh.pop %v2266
        %v2523 = vtanh.pop %v2267
        %v2524 = vtanh.pop %v2268
        %v2525 = vtanh.pop %v2269
        %v2526 = vtanh.pop %v2270
        %v2527 = vtanh.pop %v2271
        %v2528 = vtanh.pop %v2272
        %v2529 = vtanh.pop %v2273
        %v2530 = vtanh.pop %v2274
        %v2531 = vtanh.pop %v2275
        %v2532 = vtanh.pop %v2276
        %v2533 = vtanh.pop %v2277
        %v2534 = vtanh.pop %v2278
        %v2535 = vtanh.pop %v2279
        %v2536 = vtanh.pop %v2280
        %v2537 = vtanh.pop %v2281
        %v2538 = vtanh.pop %v2282
        %v2539 = vtanh.pop %v2283
        %v2540 = vtanh.pop %v2284
        %v2541 = vtanh.pop %v2285
        %v2542 = vtanh.pop %v2286
        %v2543 = vtanh.pop %v2287
        %v2544 = vtanh.pop %v2288
        %v2545 = vtanh.pop %v2289
        %v2546 = vtanh.pop %v2290
        %v2547 = vtanh.pop %v2291
        %v2548 = vtanh.pop %v2292
        %v2549 = vtanh.pop %v2293
        %v2550 = vtanh.pop %v2294
        %v2551 = vtanh.pop %v2295
        %v2552 = vtanh.pop %v2296
        %v2553 = vtanh.pop %v2297
        %v2554 = vtanh.pop %v2298
        %v2555 = vtanh.pop %v2299
        %v2556 = vtanh.pop %v2300
        %v2557 = vtanh.pop %v2301
        %v2558 = vtanh.pop %v2302
        %v2559 = vtanh.pop %v2303
        %v2560 = vtanh.pop %v2304
        %v2561 = vtanh.pop %v2305
        %v2562 = vtanh.pop %v2306
        %v2563 = vtanh.pop %v2307
        %v2564 = vtanh.pop %v2308
        %v2565 = vtanh.pop %v2309
        %v2566 = vtanh.pop %v2310
        %v2567 = vtanh.pop %v2311
        %v2568 = vtanh.pop %v2312
        %v2569 = vtanh.pop %v2313
        %v2570 = vtanh.pop %v2314
        %v2571 = vtanh.pop %v2315
        %v2572 = vtanh.pop %v2316
        %v2573 = vtanh.pop %v2317
        %v2574 = vmul.f32 %v2318, 0.5
        %v2575 = vmul.f32 %v2319, 0.5
        %v2576 = vmul.f32 %v2320, 0.5
        %v2577 = vmul.f32 %v2321, 0.5
        %v2578 = vmul.f32 %v2322, 0.5
        %v2579 = vmul.f32 %v2323, 0.5
        %v2580 = vmul.f32 %v2324, 0.5
        %v2581 = vmul.f32 %v2325, 0.5
        %v2582 = vmul.f32 %v2326, 0.5
        %v2583 = vmul.f32 %v2327, 0.5
        %v2584 = vmul.f32 %v2328, 0.5
        %v2585 = vmul.f32 %v2329, 0.5
        %v2586 = vmul.f32 %v2330, 0.5
        %v2587 = vmul.f32 %v2331, 0.5
        %v2588 = vmul.f32 %v2332, 0.5
        %v2589 = vmul.f32 %v2333, 0.5
        %v2590 = vmul.f32 %v2334, 0.5
        %v2591 = vmul.f32 %v2335, 0.5
        %v2592 = vmul.f32 %v2336, 0.5
        %v2593 = vmul.f32 %v2337, 0.5
        %v2594 = vmul.f32 %v2338, 0.5
        %v2595 = vmul.f32 %v2339, 0.5
        %v2596 = vmul.f32 %v2340, 0.5
        %v2597 = vmul.f32 %v2341, 0.5
        %v2598 = vmul.f32 %v2342, 0.5
        %v2599 = vmul.f32 %v2343, 0.5
        %v2600 = vmul.f32 %v2344, 0.5
        %v2601 = vmul.f32 %v2345, 0.5
        %v2602 = vmul.f32 %v2346, 0.5
        %v2603 = vmul.f32 %v2347, 0.5
        %v2604 = vmul.f32 %v2348, 0.5
        %v2605 = vmul.f32 %v2349, 0.5
        %v2606 = vmul.f32 %v2350, 0.5
        %v2607 = vmul.f32 %v2351, 0.5
        %v2608 = vmul.f32 %v2352, 0.5
        %v2609 = vmul.f32 %v2353, 0.5
        %v2610 = vmul.f32 %v2354, 0.5
        %v2611 = vmul.f32 %v2355, 0.5
        %v2612 = vmul.f32 %v2356, 0.5
        %v2613 = vmul.f32 %v2357, 0.5
        %v2614 = vmul.f32 %v2358, 0.5
        %v2615 = vmul.f32 %v2359, 0.5
        %v2616 = vmul.f32 %v2360, 0.5
        %v2617 = vmul.f32 %v2361, 0.5
        %v2618 = vmul.f32 %v2362, 0.5
        %v2619 = vmul.f32 %v2363, 0.5
        %v2620 = vmul.f32 %v2364, 0.5
        %v2621 = vmul.f32 %v2365, 0.5
        %v2622 = vmul.f32 %v2366, 0.5
        %v2623 = vmul.f32 %v2367, 0.5
        %v2624 = vmul.f32 %v2368, 0.5
        %v2625 = vmul.f32 %v2369, 0.5
        %v2626 = vmul.f32 %v2370, 0.5
        %v2627 = vmul.f32 %v2371, 0.5
        %v2628 = vmul.f32 %v2372, 0.5
        %v2629 = vmul.f32 %v2373, 0.5
        %v2630 = vmul.f32 %v2374, 0.5
        %v2631 = vmul.f32 %v2375, 0.5
        %v2632 = vmul.f32 %v2376, 0.5
        %v2633 = vmul.f32 %v2377, 0.5
        %v2634 = vmul.f32 %v2378, 0.5
        %v2635 = vmul.f32 %v2379, 0.5
        %v2636 = vmul.f32 %v2380, 0.5
        %v2637 = vmul.f32 %v2381, 0.5
        %v2638 = vmul.f32 %v2382, 0.5
        %v2639 = vmul.f32 %v2383, 0.5
        %v2640 = vmul.f32 %v2384, 0.5
        %v2641 = vmul.f32 %v2385, 0.5
        %v2642 = vmul.f32 %v2386, 0.5
        %v2643 = vmul.f32 %v2387, 0.5
        %v2644 = vmul.f32 %v2388, 0.5
        %v2645 = vmul.f32 %v2389, 0.5
        %v2646 = vmul.f32 %v2390, 0.5
        %v2647 = vmul.f32 %v2391, 0.5
        %v2648 = vmul.f32 %v2392, 0.5
        %v2649 = vmul.f32 %v2393, 0.5
        %v2650 = vmul.f32 %v2394, 0.5
        %v2651 = vmul.f32 %v2395, 0.5
        %v2652 = vmul.f32 %v2396, 0.5
        %v2653 = vmul.f32 %v2397, 0.5
        %v2654 = vmul.f32 %v2398, 0.5
        %v2655 = vmul.f32 %v2399, 0.5
        %v2656 = vmul.f32 %v2400, 0.5
        %v2657 = vmul.f32 %v2401, 0.5
        %v2658 = vmul.f32 %v2402, 0.5
        %v2659 = vmul.f32 %v2403, 0.5
        %v2660 = vmul.f32 %v2404, 0.5
        %v2661 = vmul.f32 %v2405, 0.5
        %v2662 = vmul.f32 %v2406, 0.5
        %v2663 = vmul.f32 %v2407, 0.5
        %v2664 = vmul.f32 %v2408, 0.5
        %v2665 = vmul.f32 %v2409, 0.5
        %v2666 = vmul.f32 %v2410, 0.5
        %v2667 = vmul.f32 %v2411, 0.5
        %v2668 = vmul.f32 %v2412, 0.5
        %v2669 = vmul.f32 %v2413, 0.5
        %v2670 = vmul.f32 %v2414, 0.5
        %v2671 = vmul.f32 %v2415, 0.5
        %v2672 = vmul.f32 %v2416, 0.5
        %v2673 = vmul.f32 %v2417, 0.5
        %v2674 = vmul.f32 %v2418, 0.5
        %v2675 = vmul.f32 %v2419, 0.5
        %v2676 = vmul.f32 %v2420, 0.5
        %v2677 = vmul.f32 %v2421, 0.5
        %v2678 = vmul.f32 %v2422, 0.5
        %v2679 = vmul.f32 %v2423, 0.5
        %v2680 = vmul.f32 %v2424, 0.5
        %v2681 = vmul.f32 %v2425, 0.5
        %v2682 = vmul.f32 %v2426, 0.5
        %v2683 = vmul.f32 %v2427, 0.5
        %v2684 = vmul.f32 %v2428, 0.5
        %v2685 = vmul.f32 %v2429, 0.5
        %v2686 = vmul.f32 %v2430, 0.5
        %v2687 = vmul.f32 %v2431, 0.5
        %v2688 = vmul.f32 %v2432, 0.5
        %v2689 = vmul.f32 %v2433, 0.5
        %v2690 = vmul.f32 %v2434, 0.5
        %v2691 = vmul.f32 %v2435, 0.5
        %v2692 = vmul.f32 %v2436, 0.5
        %v2693 = vmul.f32 %v2437, 0.5
        %v2694 = vmul.f32 %v2438, 0.5
        %v2695 = vmul.f32 %v2439, 0.5
        %v2696 = vmul.f32 %v2440, 0.5
        %v2697 = vmul.f32 %v2441, 0.5
        %v2698 = vmul.f32 %v2442, 0.5
        %v2699 = vmul.f32 %v2443, 0.5
        %v2700 = vmul.f32 %v2444, 0.5
        %v2701 = vmul.f32 %v2445, 0.5
        %v2702 = vmul.f32 %v2446, 0.5
        %v2703 = vmul.f32 %v2447, 0.5
        %v2704 = vmul.f32 %v2448, 0.5
        %v2705 = vmul.f32 %v2449, 0.5
        %v2706 = vmul.f32 %v2450, 0.5
        %v2707 = vmul.f32 %v2451, 0.5
        %v2708 = vmul.f32 %v2452, 0.5
        %v2709 = vmul.f32 %v2453, 0.5
        %v2710 = vmul.f32 %v2454, 0.5
        %v2711 = vmul.f32 %v2455, 0.5
        %v2712 = vmul.f32 %v2456, 0.5
        %v2713 = vmul.f32 %v2457, 0.5
        %v2714 = vmul.f32 %v2458, 0.5
        %v2715 = vmul.f32 %v2459, 0.5
        %v2716 = vmul.f32 %v2460, 0.5
        %v2717 = vmul.f32 %v2461, 0.5
        %v2718 = vmul.f32 %v2462, 0.5
        %v2719 = vmul.f32 %v2463, 0.5
        %v2720 = vmul.f32 %v2464, 0.5
        %v2721 = vmul.f32 %v2465, 0.5
        %v2722 = vmul.f32 %v2466, 0.5
        %v2723 = vmul.f32 %v2467, 0.5
        %v2724 = vmul.f32 %v2468, 0.5
        %v2725 = vmul.f32 %v2469, 0.5
        %v2726 = vmul.f32 %v2470, 0.5
        %v2727 = vmul.f32 %v2471, 0.5
        %v2728 = vmul.f32 %v2472, 0.5
        %v2729 = vmul.f32 %v2473, 0.5
        %v2730 = vmul.f32 %v2474, 0.5
        %v2731 = vmul.f32 %v2475, 0.5
        %v2732 = vmul.f32 %v2476, 0.5
        %v2733 = vmul.f32 %v2477, 0.5
        %v2734 = vmul.f32 %v2478, 0.5
        %v2735 = vmul.f32 %v2479, 0.5
        %v2736 = vmul.f32 %v2480, 0.5
        %v2737 = vmul.f32 %v2481, 0.5
        %v2738 = vmul.f32 %v2482, 0.5
        %v2739 = vmul.f32 %v2483, 0.5
        %v2740 = vmul.f32 %v2484, 0.5
        %v2741 = vmul.f32 %v2485, 0.5
        %v2742 = vmul.f32 %v2486, 0.5
        %v2743 = vmul.f32 %v2487, 0.5
        %v2744 = vmul.f32 %v2488, 0.5
        %v2745 = vmul.f32 %v2489, 0.5
        %v2746 = vmul.f32 %v2490, 0.5
        %v2747 = vmul.f32 %v2491, 0.5
        %v2748 = vmul.f32 %v2492, 0.5
        %v2749 = vmul.f32 %v2493, 0.5
        %v2750 = vmul.f32 %v2494, 0.5
        %v2751 = vmul.f32 %v2495, 0.5
        %v2752 = vmul.f32 %v2496, 0.5
        %v2753 = vmul.f32 %v2497, 0.5
        %v2754 = vmul.f32 %v2498, 0.5
        %v2755 = vmul.f32 %v2499, 0.5
        %v2756 = vmul.f32 %v2500, 0.5
        %v2757 = vmul.f32 %v2501, 0.5
        %v2758 = vmul.f32 %v2502, 0.5
        %v2759 = vmul.f32 %v2503, 0.5
        %v2760 = vmul.f32 %v2504, 0.5
        %v2761 = vmul.f32 %v2505, 0.5
        %v2762 = vmul.f32 %v2506, 0.5
        %v2763 = vmul.f32 %v2507, 0.5
        %v2764 = vmul.f32 %v2508, 0.5
        %v2765 = vmul.f32 %v2509, 0.5
        %v2766 = vmul.f32 %v2510, 0.5
        %v2767 = vmul.f32 %v2511, 0.5
        %v2768 = vmul.f32 %v2512, 0.5
        %v2769 = vmul.f32 %v2513, 0.5
        %v2770 = vmul.f32 %v2514, 0.5
        %v2771 = vmul.f32 %v2515, 0.5
        %v2772 = vmul.f32 %v2516, 0.5
        %v2773 = vmul.f32 %v2517, 0.5
        %v2774 = vmul.f32 %v2518, 0.5
        %v2775 = vmul.f32 %v2519, 0.5
        %v2776 = vmul.f32 %v2520, 0.5
        %v2777 = vmul.f32 %v2521, 0.5
        %v2778 = vmul.f32 %v2522, 0.5
        %v2779 = vmul.f32 %v2523, 0.5
        %v2780 = vmul.f32 %v2524, 0.5
        %v2781 = vmul.f32 %v2525, 0.5
        %v2782 = vmul.f32 %v2526, 0.5
        %v2783 = vmul.f32 %v2527, 0.5
        %v2784 = vmul.f32 %v2528, 0.5
        %v2785 = vmul.f32 %v2529, 0.5
        %v2786 = vmul.f32 %v2530, 0.5
        %v2787 = vmul.f32 %v2531, 0.5
        %v2788 = vmul.f32 %v2532, 0.5
        %v2789 = vmul.f32 %v2533, 0.5
        %v2790 = vmul.f32 %v2534, 0.5
        %v2791 = vmul.f32 %v2535, 0.5
        %v2792 = vmul.f32 %v2536, 0.5
        %v2793 = vmul.f32 %v2537, 0.5
        %v2794 = vmul.f32 %v2538, 0.5
        %v2795 = vmul.f32 %v2539, 0.5
        %v2796 = vmul.f32 %v2540, 0.5
        %v2797 = vmul.f32 %v2541, 0.5
        %v2798 = vmul.f32 %v2542, 0.5
        %v2799 = vmul.f32 %v2543, 0.5
        %v2800 = vmul.f32 %v2544, 0.5
        %v2801 = vmul.f32 %v2545, 0.5
        %v2802 = vmul.f32 %v2546, 0.5
        %v2803 = vmul.f32 %v2547, 0.5
        %v2804 = vmul.f32 %v2548, 0.5
        %v2805 = vmul.f32 %v2549, 0.5
        %v2806 = vmul.f32 %v2550, 0.5
        %v2807 = vmul.f32 %v2551, 0.5
        %v2808 = vmul.f32 %v2552, 0.5
        %v2809 = vmul.f32 %v2553, 0.5
        %v2810 = vmul.f32 %v2554, 0.5
        %v2811 = vmul.f32 %v2555, 0.5
        %v2812 = vmul.f32 %v2556, 0.5
        %v2813 = vmul.f32 %v2557, 0.5
        %v2814 = vmul.f32 %v2558, 0.5
        %v2815 = vmul.f32 %v2559, 0.5
        %v2816 = vmul.f32 %v2560, 0.5
        %v2817 = vmul.f32 %v2561, 0.5
        %v2818 = vmul.f32 %v2562, 0.5
        %v2819 = vmul.f32 %v2563, 0.5
        %v2820 = vmul.f32 %v2564, 0.5
        %v2821 = vmul.f32 %v2565, 0.5
        %v2822 = vmul.f32 %v2566, 0.5
        %v2823 = vmul.f32 %v2567, 0.5
        %v2824 = vmul.f32 %v2568, 0.5
        %v2825 = vmul.f32 %v2569, 0.5
        %v2826 = vmul.f32 %v2570, 0.5
        %v2827 = vmul.f32 %v2571, 0.5
        %v2828 = vmul.f32 %v2572, 0.5
        %v2829 = vmul.f32 %v2573, 0.5
        %v2830 = vadd.f32 %v2574, 0.5
        %v2831 = vadd.f32 %v2575, 0.5
        %v2832 = vadd.f32 %v2576, 0.5
        %v2833 = vadd.f32 %v2577, 0.5
        %v2834 = vadd.f32 %v2578, 0.5
        %v2835 = vadd.f32 %v2579, 0.5
        %v2836 = vadd.f32 %v2580, 0.5
        %v2837 = vadd.f32 %v2581, 0.5
        %v2838 = vadd.f32 %v2582, 0.5
        %v2839 = vadd.f32 %v2583, 0.5
        %v2840 = vadd.f32 %v2584, 0.5
        %v2841 = vadd.f32 %v2585, 0.5
        %v2842 = vadd.f32 %v2586, 0.5
        %v2843 = vadd.f32 %v2587, 0.5
        %v2844 = vadd.f32 %v2588, 0.5
        %v2845 = vadd.f32 %v2589, 0.5
        %v2846 = vadd.f32 %v2590, 0.5
        %v2847 = vadd.f32 %v2591, 0.5
        %v2848 = vadd.f32 %v2592, 0.5
        %v2849 = vadd.f32 %v2593, 0.5
        %v2850 = vadd.f32 %v2594, 0.5
        %v2851 = vadd.f32 %v2595, 0.5
        %v2852 = vadd.f32 %v2596, 0.5
        %v2853 = vadd.f32 %v2597, 0.5
        %v2854 = vadd.f32 %v2598, 0.5
        %v2855 = vadd.f32 %v2599, 0.5
        %v2856 = vadd.f32 %v2600, 0.5
        %v2857 = vadd.f32 %v2601, 0.5
        %v2858 = vadd.f32 %v2602, 0.5
        %v2859 = vadd.f32 %v2603, 0.5
        %v2860 = vadd.f32 %v2604, 0.5
        %v2861 = vadd.f32 %v2605, 0.5
        %v2862 = vadd.f32 %v2606, 0.5
        %v2863 = vadd.f32 %v2607, 0.5
        %v2864 = vadd.f32 %v2608, 0.5
        %v2865 = vadd.f32 %v2609, 0.5
        %v2866 = vadd.f32 %v2610, 0.5
        %v2867 = vadd.f32 %v2611, 0.5
        %v2868 = vadd.f32 %v2612, 0.5
        %v2869 = vadd.f32 %v2613, 0.5
        %v2870 = vadd.f32 %v2614, 0.5
        %v2871 = vadd.f32 %v2615, 0.5
        %v2872 = vadd.f32 %v2616, 0.5
        %v2873 = vadd.f32 %v2617, 0.5
        %v2874 = vadd.f32 %v2618, 0.5
        %v2875 = vadd.f32 %v2619, 0.5
        %v2876 = vadd.f32 %v2620, 0.5
        %v2877 = vadd.f32 %v2621, 0.5
        %v2878 = vadd.f32 %v2622, 0.5
        %v2879 = vadd.f32 %v2623, 0.5
        %v2880 = vadd.f32 %v2624, 0.5
        %v2881 = vadd.f32 %v2625, 0.5
        %v2882 = vadd.f32 %v2626, 0.5
        %v2883 = vadd.f32 %v2627, 0.5
        %v2884 = vadd.f32 %v2628, 0.5
        %v2885 = vadd.f32 %v2629, 0.5
        %v2886 = vadd.f32 %v2630, 0.5
        %v2887 = vadd.f32 %v2631, 0.5
        %v2888 = vadd.f32 %v2632, 0.5
        %v2889 = vadd.f32 %v2633, 0.5
        %v2890 = vadd.f32 %v2634, 0.5
        %v2891 = vadd.f32 %v2635, 0.5
        %v2892 = vadd.f32 %v2636, 0.5
        %v2893 = vadd.f32 %v2637, 0.5
        %v2894 = vadd.f32 %v2638, 0.5
        %v2895 = vadd.f32 %v2639, 0.5
        %v2896 = vadd.f32 %v2640, 0.5
        %v2897 = vadd.f32 %v2641, 0.5
        %v2898 = vadd.f32 %v2642, 0.5
        %v2899 = vadd.f32 %v2643, 0.5
        %v2900 = vadd.f32 %v2644, 0.5
        %v2901 = vadd.f32 %v2645, 0.5
        %v2902 = vadd.f32 %v2646, 0.5
        %v2903 = vadd.f32 %v2647, 0.5
        %v2904 = vadd.f32 %v2648, 0.5
        %v2905 = vadd.f32 %v2649, 0.5
        %v2906 = vadd.f32 %v2650, 0.5
        %v2907 = vadd.f32 %v2651, 0.5
        %v2908 = vadd.f32 %v2652, 0.5
        %v2909 = vadd.f32 %v2653, 0.5
        %v2910 = vadd.f32 %v2654, 0.5
        %v2911 = vadd.f32 %v2655, 0.5
        %v2912 = vadd.f32 %v2656, 0.5
        %v2913 = vadd.f32 %v2657, 0.5
        %v2914 = vadd.f32 %v2658, 0.5
        %v2915 = vadd.f32 %v2659, 0.5
        %v2916 = vadd.f32 %v2660, 0.5
        %v2917 = vadd.f32 %v2661, 0.5
        %v2918 = vadd.f32 %v2662, 0.5
        %v2919 = vadd.f32 %v2663, 0.5
        %v2920 = vadd.f32 %v2664, 0.5
        %v2921 = vadd.f32 %v2665, 0.5
        %v2922 = vadd.f32 %v2666, 0.5
        %v2923 = vadd.f32 %v2667, 0.5
        %v2924 = vadd.f32 %v2668, 0.5
        %v2925 = vadd.f32 %v2669, 0.5
        %v2926 = vadd.f32 %v2670, 0.5
        %v2927 = vadd.f32 %v2671, 0.5
        %v2928 = vadd.f32 %v2672, 0.5
        %v2929 = vadd.f32 %v2673, 0.5
        %v2930 = vadd.f32 %v2674, 0.5
        %v2931 = vadd.f32 %v2675, 0.5
        %v2932 = vadd.f32 %v2676, 0.5
        %v2933 = vadd.f32 %v2677, 0.5
        %v2934 = vadd.f32 %v2678, 0.5
        %v2935 = vadd.f32 %v2679, 0.5
        %v2936 = vadd.f32 %v2680, 0.5
        %v2937 = vadd.f32 %v2681, 0.5
        %v2938 = vadd.f32 %v2682, 0.5
        %v2939 = vadd.f32 %v2683, 0.5
        %v2940 = vadd.f32 %v2684, 0.5
        %v2941 = vadd.f32 %v2685, 0.5
        %v2942 = vadd.f32 %v2686, 0.5
        %v2943 = vadd.f32 %v2687, 0.5
        %v2944 = vadd.f32 %v2688, 0.5
        %v2945 = vadd.f32 %v2689, 0.5
        %v2946 = vadd.f32 %v2690, 0.5
        %v2947 = vadd.f32 %v2691, 0.5
        %v2948 = vadd.f32 %v2692, 0.5
        %v2949 = vadd.f32 %v2693, 0.5
        %v2950 = vadd.f32 %v2694, 0.5
        %v2951 = vadd.f32 %v2695, 0.5
        %v2952 = vadd.f32 %v2696, 0.5
        %v2953 = vadd.f32 %v2697, 0.5
        %v2954 = vadd.f32 %v2698, 0.5
        %v2955 = vadd.f32 %v2699, 0.5
        %v2956 = vadd.f32 %v2700, 0.5
        %v2957 = vadd.f32 %v2701, 0.5
        %v2958 = vadd.f32 %v2702, 0.5
        %v2959 = vadd.f32 %v2703, 0.5
        %v2960 = vadd.f32 %v2704, 0.5
        %v2961 = vadd.f32 %v2705, 0.5
        %v2962 = vadd.f32 %v2706, 0.5
        %v2963 = vadd.f32 %v2707, 0.5
        %v2964 = vadd.f32 %v2708, 0.5
        %v2965 = vadd.f32 %v2709, 0.5
        %v2966 = vadd.f32 %v2710, 0.5
        %v2967 = vadd.f32 %v2711, 0.5
        %v2968 = vadd.f32 %v2712, 0.5
        %v2969 = vadd.f32 %v2713, 0.5
        %v2970 = vadd.f32 %v2714, 0.5
        %v2971 = vadd.f32 %v2715, 0.5
        %v2972 = vadd.f32 %v2716, 0.5
        %v2973 = vadd.f32 %v2717, 0.5
        %v2974 = vadd.f32 %v2718, 0.5
        %v2975 = vadd.f32 %v2719, 0.5
        %v2976 = vadd.f32 %v2720, 0.5
        %v2977 = vadd.f32 %v2721, 0.5
        %v2978 = vadd.f32 %v2722, 0.5
        %v2979 = vadd.f32 %v2723, 0.5
        %v2980 = vadd.f32 %v2724, 0.5
        %v2981 = vadd.f32 %v2725, 0.5
        %v2982 = vadd.f32 %v2726, 0.5
        %v2983 = vadd.f32 %v2727, 0.5
        %v2984 = vadd.f32 %v2728, 0.5
        %v2985 = vadd.f32 %v2729, 0.5
        %v2986 = vadd.f32 %v2730, 0.5
        %v2987 = vadd.f32 %v2731, 0.5
        %v2988 = vadd.f32 %v2732, 0.5
        %v2989 = vadd.f32 %v2733, 0.5
        %v2990 = vadd.f32 %v2734, 0.5
        %v2991 = vadd.f32 %v2735, 0.5
        %v2992 = vadd.f32 %v2736, 0.5
        %v2993 = vadd.f32 %v2737, 0.5
        %v2994 = vadd.f32 %v2738, 0.5
        %v2995 = vadd.f32 %v2739, 0.5
        %v2996 = vadd.f32 %v2740, 0.5
        %v2997 = vadd.f32 %v2741, 0.5
        %v2998 = vadd.f32 %v2742, 0.5
        %v2999 = vadd.f32 %v2743, 0.5
        %v3000 = vadd.f32 %v2744, 0.5
        %v3001 = vadd.f32 %v2745, 0.5
        %v3002 = vadd.f32 %v2746, 0.5
        %v3003 = vadd.f32 %v2747, 0.5
        %v3004 = vadd.f32 %v2748, 0.5
        %v3005 = vadd.f32 %v2749, 0.5
        %v3006 = vadd.f32 %v2750, 0.5
        %v3007 = vadd.f32 %v2751, 0.5
        %v3008 = vadd.f32 %v2752, 0.5
        %v3009 = vadd.f32 %v2753, 0.5
        %v3010 = vadd.f32 %v2754, 0.5
        %v3011 = vadd.f32 %v2755, 0.5
        %v3012 = vadd.f32 %v2756, 0.5
        %v3013 = vadd.f32 %v2757, 0.5
        %v3014 = vadd.f32 %v2758, 0.5
        %v3015 = vadd.f32 %v2759, 0.5
        %v3016 = vadd.f32 %v2760, 0.5
        %v3017 = vadd.f32 %v2761, 0.5
        %v3018 = vadd.f32 %v2762, 0.5
        %v3019 = vadd.f32 %v2763, 0.5
        %v3020 = vadd.f32 %v2764, 0.5
        %v3021 = vadd.f32 %v2765, 0.5
        %v3022 = vadd.f32 %v2766, 0.5
        %v3023 = vadd.f32 %v2767, 0.5
        %v3024 = vadd.f32 %v2768, 0.5
        %v3025 = vadd.f32 %v2769, 0.5
        %v3026 = vadd.f32 %v2770, 0.5
        %v3027 = vadd.f32 %v2771, 0.5
        %v3028 = vadd.f32 %v2772, 0.5
        %v3029 = vadd.f32 %v2773, 0.5
        %v3030 = vadd.f32 %v2774, 0.5
        %v3031 = vadd.f32 %v2775, 0.5
        %v3032 = vadd.f32 %v2776, 0.5
        %v3033 = vadd.f32 %v2777, 0.5
        %v3034 = vadd.f32 %v2778, 0.5
        %v3035 = vadd.f32 %v2779, 0.5
        %v3036 = vadd.f32 %v2780, 0.5
        %v3037 = vadd.f32 %v2781, 0.5
        %v3038 = vadd.f32 %v2782, 0.5
        %v3039 = vadd.f32 %v2783, 0.5
        %v3040 = vadd.f32 %v2784, 0.5
        %v3041 = vadd.f32 %v2785, 0.5
        %v3042 = vadd.f32 %v2786, 0.5
        %v3043 = vadd.f32 %v2787, 0.5
        %v3044 = vadd.f32 %v2788, 0.5
        %v3045 = vadd.f32 %v2789, 0.5
        %v3046 = vadd.f32 %v2790, 0.5
        %v3047 = vadd.f32 %v2791, 0.5
        %v3048 = vadd.f32 %v2792, 0.5
        %v3049 = vadd.f32 %v2793, 0.5
        %v3050 = vadd.f32 %v2794, 0.5
        %v3051 = vadd.f32 %v2795, 0.5
        %v3052 = vadd.f32 %v2796, 0.5
        %v3053 = vadd.f32 %v2797, 0.5
        %v3054 = vadd.f32 %v2798, 0.5
        %v3055 = vadd.f32 %v2799, 0.5
        %v3056 = vadd.f32 %v2800, 0.5
        %v3057 = vadd.f32 %v2801, 0.5
        %v3058 = vadd.f32 %v2802, 0.5
        %v3059 = vadd.f32 %v2803, 0.5
        %v3060 = vadd.f32 %v2804, 0.5
        %v3061 = vadd.f32 %v2805, 0.5
        %v3062 = vadd.f32 %v2806, 0.5
        %v3063 = vadd.f32 %v2807, 0.5
        %v3064 = vadd.f32 %v2808, 0.5
        %v3065 = vadd.f32 %v2809, 0.5
        %v3066 = vadd.f32 %v2810, 0.5
        %v3067 = vadd.f32 %v2811, 0.5
        %v3068 = vadd.f32 %v2812, 0.5
        %v3069 = vadd.f32 %v2813, 0.5
        %v3070 = vadd.f32 %v2814, 0.5
        %v3071 = vadd.f32 %v2815, 0.5
        %v3072 = vadd.f32 %v2816, 0.5
        %v3073 = vadd.f32 %v2817, 0.5
        %v3074 = vadd.f32 %v2818, 0.5
        %v3075 = vadd.f32 %v2819, 0.5
        %v3076 = vadd.f32 %v2820, 0.5
        %v3077 = vadd.f32 %v2821, 0.5
        %v3078 = vadd.f32 %v2822, 0.5
        %v3079 = vadd.f32 %v2823, 0.5
        %v3080 = vadd.f32 %v2824, 0.5
        %v3081 = vadd.f32 %v2825, 0.5
        %v3082 = vadd.f32 %v2826, 0.5
        %v3083 = vadd.f32 %v2827, 0.5
        %v3084 = vadd.f32 %v2828, 0.5
        %v3085 = vadd.f32 %v2829, 0.5
        %v3086 = vpack.c.bf16 %v2838, %v2830
        %v3087 = vpack.c.bf16 %v2839, %v2831
        %v3088 = vpack.c.bf16 %v2840, %v2832
        %v3089 = vpack.c.bf16 %v2841, %v2833
        %v3090 = vpack.c.bf16 %v2842, %v2834
        %v3091 = vpack.c.bf16 %v2843, %v2835
        %v3092 = vpack.c.bf16 %v2844, %v2836
        %v3093 = vpack.c.bf16 %v2845, %v2837
        %v3094 = vpack.c.bf16 %v2854, %v2846
        %v3095 = vpack.c.bf16 %v2855, %v2847
        %v3096 = vpack.c.bf16 %v2856, %v2848
        %v3097 = vpack.c.bf16 %v2857, %v2849
        %v3098 = vpack.c.bf16 %v2858, %v2850
        %v3099 = vpack.c.bf16 %v2859, %v2851
        %v3100 = vpack.c.bf16 %v2860, %v2852
        %v3101 = vpack.c.bf16 %v2861, %v2853
        %v3102 = vpack.c.bf16 %v2870, %v2862
        %v3103 = vpack.c.bf16 %v2871, %v2863
        %v3104 = vpack.c.bf16 %v2872, %v2864
        %v3105 = vpack.c.bf16 %v2873, %v2865
        %v3106 = vpack.c.bf16 %v2874, %v2866
        %v3107 = vpack.c.bf16 %v2875, %v2867
        %v3108 = vpack.c.bf16 %v2876, %v2868
        %v3109 = vpack.c.bf16 %v2877, %v2869
        %v3110 = vpack.c.bf16 %v2886, %v2878
        %v3111 = vpack.c.bf16 %v2887, %v2879
        %v3112 = vpack.c.bf16 %v2888, %v2880
        %v3113 = vpack.c.bf16 %v2889, %v2881
        %v3114 = vpack.c.bf16 %v2890, %v2882
        %v3115 = vpack.c.bf16 %v2891, %v2883
        %v3116 = vpack.c.bf16 %v2892, %v2884
        %v3117 = vpack.c.bf16 %v2893, %v2885
        %v3118 = vpack.c.bf16 %v2902, %v2894
        %v3119 = vpack.c.bf16 %v2903, %v2895
        %v3120 = vpack.c.bf16 %v2904, %v2896
        %v3121 = vpack.c.bf16 %v2905, %v2897
        %v3122 = vpack.c.bf16 %v2906, %v2898
        %v3123 = vpack.c.bf16 %v2907, %v2899
        %v3124 = vpack.c.bf16 %v2908, %v2900
        %v3125 = vpack.c.bf16 %v2909, %v2901
        %v3126 = vpack.c.bf16 %v2918, %v2910
        %v3127 = vpack.c.bf16 %v2919, %v2911
        %v3128 = vpack.c.bf16 %v2920, %v2912
        %v3129 = vpack.c.bf16 %v2921, %v2913
        %v3130 = vpack.c.bf16 %v2922, %v2914
        %v3131 = vpack.c.bf16 %v2923, %v2915
        %v3132 = vpack.c.bf16 %v2924, %v2916
        %v3133 = vpack.c.bf16 %v2925, %v2917
        %v3134 = vpack.c.bf16 %v2934, %v2926
        %v3135 = vpack.c.bf16 %v2935, %v2927
        %v3136 = vpack.c.bf16 %v2936, %v2928
        %v3137 = vpack.c.bf16 %v2937, %v2929
        %v3138 = vpack.c.bf16 %v2938, %v2930
        %v3139 = vpack.c.bf16 %v2939, %v2931
        %v3140 = vpack.c.bf16 %v2940, %v2932
        %v3141 = vpack.c.bf16 %v2941, %v2933
        %v3142 = vpack.c.bf16 %v2950, %v2942
        %v3143 = vpack.c.bf16 %v2951, %v2943
        %v3144 = vpack.c.bf16 %v2952, %v2944
        %v3145 = vpack.c.bf16 %v2953, %v2945
        %v3146 = vpack.c.bf16 %v2954, %v2946
        %v3147 = vpack.c.bf16 %v2955, %v2947
        %v3148 = vpack.c.bf16 %v2956, %v2948
        %v3149 = vpack.c.bf16 %v2957, %v2949
        %v3150 = vpack.c.bf16 %v2966, %v2958
        %v3151 = vpack.c.bf16 %v2967, %v2959
        %v3152 = vpack.c.bf16 %v2968, %v2960
        %v3153 = vpack.c.bf16 %v2969, %v2961
        %v3154 = vpack.c.bf16 %v2970, %v2962
        %v3155 = vpack.c.bf16 %v2971, %v2963
        %v3156 = vpack.c.bf16 %v2972, %v2964
        %v3157 = vpack.c.bf16 %v2973, %v2965
        %v3158 = vpack.c.bf16 %v2982, %v2974
        %v3159 = vpack.c.bf16 %v2983, %v2975
        %v3160 = vpack.c.bf16 %v2984, %v2976
        %v3161 = vpack.c.bf16 %v2985, %v2977
        %v3162 = vpack.c.bf16 %v2986, %v2978
        %v3163 = vpack.c.bf16 %v2987, %v2979
        %v3164 = vpack.c.bf16 %v2988, %v2980
        %v3165 = vpack.c.bf16 %v2989, %v2981
        %v3166 = vpack.c.bf16 %v2998, %v2990
        %v3167 = vpack.c.bf16 %v2999, %v2991
        %v3168 = vpack.c.bf16 %v3000, %v2992
        %v3169 = vpack.c.bf16 %v3001, %v2993
        %v3170 = vpack.c.bf16 %v3002, %v2994
        %v3171 = vpack.c.bf16 %v3003, %v2995
        %v3172 = vpack.c.bf16 %v3004, %v2996
        %v3173 = vpack.c.bf16 %v3005, %v2997
        %v3174 = vpack.c.bf16 %v3014, %v3006
        %v3175 = vpack.c.bf16 %v3015, %v3007
        %v3176 = vpack.c.bf16 %v3016, %v3008
        %v3177 = vpack.c.bf16 %v3017, %v3009
        %v3178 = vpack.c.bf16 %v3018, %v3010
        %v3179 = vpack.c.bf16 %v3019, %v3011
        %v3180 = vpack.c.bf16 %v3020, %v3012
        %v3181 = vpack.c.bf16 %v3021, %v3013
        %v3182 = vpack.c.bf16 %v3030, %v3022
        %v3183 = vpack.c.bf16 %v3031, %v3023
        %v3184 = vpack.c.bf16 %v3032, %v3024
        %v3185 = vpack.c.bf16 %v3033, %v3025
        %v3186 = vpack.c.bf16 %v3034, %v3026
        %v3187 = vpack.c.bf16 %v3035, %v3027
        %v3188 = vpack.c.bf16 %v3036, %v3028
        %v3189 = vpack.c.bf16 %v3037, %v3029
        %v3190 = vpack.c.bf16 %v3046, %v3038
        %v3191 = vpack.c.bf16 %v3047, %v3039
        %v3192 = vpack.c.bf16 %v3048, %v3040
        %v3193 = vpack.c.bf16 %v3049, %v3041
        %v3194 = vpack.c.bf16 %v3050, %v3042
        %v3195 = vpack.c.bf16 %v3051, %v3043
        %v3196 = vpack.c.bf16 %v3052, %v3044
        %v3197 = vpack.c.bf16 %v3053, %v3045
        %v3198 = vpack.c.bf16 %v3062, %v3054
        %v3199 = vpack.c.bf16 %v3063, %v3055
        %v3200 = vpack.c.bf16 %v3064, %v3056
        %v3201 = vpack.c.bf16 %v3065, %v3057
        %v3202 = vpack.c.bf16 %v3066, %v3058
        %v3203 = vpack.c.bf16 %v3067, %v3059
        %v3204 = vpack.c.bf16 %v3068, %v3060
        %v3205 = vpack.c.bf16 %v3069, %v3061
        %v3206 = vpack.c.bf16 %v3078, %v3070
        %v3207 = vpack.c.bf16 %v3079, %v3071
        %v3208 = vpack.c.bf16 %v3080, %v3072
        %v3209 = vpack.c.bf16 %v3081, %v3073
        %v3210 = vpack.c.bf16 %v3082, %v3074
        %v3211 = vpack.c.bf16 %v3083, %v3075
        %v3212 = vpack.c.bf16 %v3084, %v3076
        %v3213 = vpack.c.bf16 %v3085, %v3077
        %v3214 = vld [vmem:[#allocation7] sm:$0xff]
        %v3215 = vld [vmem:[#allocation7 + $0x8] sm:$0xff]
        %v3216 = vld [vmem:[#allocation7 + $0x10] sm:$0xff]
        %v3217 = vld [vmem:[#allocation7 + $0x18] sm:$0xff]
        %v3218 = vld [vmem:[#allocation7 + $0x20] sm:$0xff]
        %v3219 = vld [vmem:[#allocation7 + $0x28] sm:$0xff]
        %v3220 = vld [vmem:[#allocation7 + $0x30] sm:$0xff]
        %v3221 = vld [vmem:[#allocation7 + $0x38] sm:$0xff]
        %v3222 = vld [vmem:[#allocation7 + $0x40] sm:$0xff]
        %v3223 = vld [vmem:[#allocation7 + $0x48] sm:$0xff]
        %v3224 = vld [vmem:[#allocation7 + $0x50] sm:$0xff]
        %v3225 = vld [vmem:[#allocation7 + $0x58] sm:$0xff]
        %v3226 = vld [vmem:[#allocation7 + $0x60] sm:$0xff]
        %v3227 = vld [vmem:[#allocation7 + $0x68] sm:$0xff]
        %v3228 = vld [vmem:[#allocation7 + $0x70] sm:$0xff]
        %v3229 = vld [vmem:[#allocation7 + $0x78] sm:$0xff]
        %v3230 = vld [vmem:[#allocation7 + $0x80] sm:$0xff]
        %v3231 = vld [vmem:[#allocation7 + $0x88] sm:$0xff]
        %v3232 = vld [vmem:[#allocation7 + $0x90] sm:$0xff]
        %v3233 = vld [vmem:[#allocation7 + $0x98] sm:$0xff]
        %v3234 = vld [vmem:[#allocation7 + $0xa0] sm:$0xff]
        %v3235 = vld [vmem:[#allocation7 + $0xa8] sm:$0xff]
        %v3236 = vld [vmem:[#allocation7 + $0xb0] sm:$0xff]
        %v3237 = vld [vmem:[#allocation7 + $0xb8] sm:$0xff]
        %v3238 = vld [vmem:[#allocation7 + $0xc0] sm:$0xff]
        %v3239 = vld [vmem:[#allocation7 + $0xc8] sm:$0xff]
        %v3240 = vld [vmem:[#allocation7 + $0xd0] sm:$0xff]
        %v3241 = vld [vmem:[#allocation7 + $0xd8] sm:$0xff]
        %v3242 = vld [vmem:[#allocation7 + $0xe0] sm:$0xff]
        %v3243 = vld [vmem:[#allocation7 + $0xe8] sm:$0xff]
        %v3244 = vld [vmem:[#allocation7 + $0xf0] sm:$0xff]
        %v3245 = vld [vmem:[#allocation7 + $0xf8] sm:$0xff]
        %v3246 = vld [vmem:[#allocation7 + $0x100] sm:$0xff]
        %v3247 = vld [vmem:[#allocation7 + $0x108] sm:$0xff]
        %v3248 = vld [vmem:[#allocation7 + $0x110] sm:$0xff]
        %v3249 = vld [vmem:[#allocation7 + $0x118] sm:$0xff]
        %v3250 = vld [vmem:[#allocation7 + $0x120] sm:$0xff]
        %v3251 = vld [vmem:[#allocation7 + $0x128] sm:$0xff]
        %v3252 = vld [vmem:[#allocation7 + $0x130] sm:$0xff]
        %v3253 = vld [vmem:[#allocation7 + $0x138] sm:$0xff]
        %v3254 = vld [vmem:[#allocation7 + $0x140] sm:$0xff]
        %v3255 = vld [vmem:[#allocation7 + $0x148] sm:$0xff]
        %v3256 = vld [vmem:[#allocation7 + $0x150] sm:$0xff]
        %v3257 = vld [vmem:[#allocation7 + $0x158] sm:$0xff]
        %v3258 = vld [vmem:[#allocation7 + $0x160] sm:$0xff]
        %v3259 = vld [vmem:[#allocation7 + $0x168] sm:$0xff]
        %v3260 = vld [vmem:[#allocation7 + $0x170] sm:$0xff]
        %v3261 = vld [vmem:[#allocation7 + $0x178] sm:$0xff]
        %v3262 = vld [vmem:[#allocation7 + $0x180] sm:$0xff]
        %v3263 = vld [vmem:[#allocation7 + $0x188] sm:$0xff]
        %v3264 = vld [vmem:[#allocation7 + $0x190] sm:$0xff]
        %v3265 = vld [vmem:[#allocation7 + $0x198] sm:$0xff]
        %v3266 = vld [vmem:[#allocation7 + $0x1a0] sm:$0xff]
        %v3267 = vld [vmem:[#allocation7 + $0x1a8] sm:$0xff]
        %v3268 = vld [vmem:[#allocation7 + $0x1b0] sm:$0xff]
        %v3269 = vld [vmem:[#allocation7 + $0x1b8] sm:$0xff]
        %v3270 = vld [vmem:[#allocation7 + $0x1c0] sm:$0xff]
        %v3271 = vld [vmem:[#allocation7 + $0x1c8] sm:$0xff]
        %v3272 = vld [vmem:[#allocation7 + $0x1d0] sm:$0xff]
        %v3273 = vld [vmem:[#allocation7 + $0x1d8] sm:$0xff]
        %v3274 = vld [vmem:[#allocation7 + $0x1e0] sm:$0xff]
        %v3275 = vld [vmem:[#allocation7 + $0x1e8] sm:$0xff]
        %v3276 = vld [vmem:[#allocation7 + $0x1f0] sm:$0xff]
        %v3277 = vld [vmem:[#allocation7 + $0x1f8] sm:$0xff]
        %v3278 = vld [vmem:[#allocation7 + $0x200] sm:$0xff]
        %v3279 = vld [vmem:[#allocation7 + $0x208] sm:$0xff]
        %v3280 = vld [vmem:[#allocation7 + $0x210] sm:$0xff]
        %v3281 = vld [vmem:[#allocation7 + $0x218] sm:$0xff]
        %v3282 = vld [vmem:[#allocation7 + $0x220] sm:$0xff]
        %v3283 = vld [vmem:[#allocation7 + $0x228] sm:$0xff]
        %v3284 = vld [vmem:[#allocation7 + $0x230] sm:$0xff]
        %v3285 = vld [vmem:[#allocation7 + $0x238] sm:$0xff]
        %v3286 = vld [vmem:[#allocation7 + $0x240] sm:$0xff]
        %v3287 = vld [vmem:[#allocation7 + $0x248] sm:$0xff]
        %v3288 = vld [vmem:[#allocation7 + $0x250] sm:$0xff]
        %v3289 = vld [vmem:[#allocation7 + $0x258] sm:$0xff]
        %v3290 = vld [vmem:[#allocation7 + $0x260] sm:$0xff]
        %v3291 = vld [vmem:[#allocation7 + $0x268] sm:$0xff]
        %v3292 = vld [vmem:[#allocation7 + $0x270] sm:$0xff]
        %v3293 = vld [vmem:[#allocation7 + $0x278] sm:$0xff]
        %v3294 = vld [vmem:[#allocation7 + $0x280] sm:$0xff]
        %v3295 = vld [vmem:[#allocation7 + $0x288] sm:$0xff]
        %v3296 = vld [vmem:[#allocation7 + $0x290] sm:$0xff]
        %v3297 = vld [vmem:[#allocation7 + $0x298] sm:$0xff]
        %v3298 = vld [vmem:[#allocation7 + $0x2a0] sm:$0xff]
        %v3299 = vld [vmem:[#allocation7 + $0x2a8] sm:$0xff]
        %v3300 = vld [vmem:[#allocation7 + $0x2b0] sm:$0xff]
        %v3301 = vld [vmem:[#allocation7 + $0x2b8] sm:$0xff]
        %v3302 = vld [vmem:[#allocation7 + $0x2c0] sm:$0xff]
        %v3303 = vld [vmem:[#allocation7 + $0x2c8] sm:$0xff]
        %v3304 = vld [vmem:[#allocation7 + $0x2d0] sm:$0xff]
        %v3305 = vld [vmem:[#allocation7 + $0x2d8] sm:$0xff]
        %v3306 = vld [vmem:[#allocation7 + $0x2e0] sm:$0xff]
        %v3307 = vld [vmem:[#allocation7 + $0x2e8] sm:$0xff]
        %v3308 = vld [vmem:[#allocation7 + $0x2f0] sm:$0xff]
        %v3309 = vld [vmem:[#allocation7 + $0x2f8] sm:$0xff]
        %v3310 = vld [vmem:[#allocation7 + $0x300] sm:$0xff]
        %v3311 = vld [vmem:[#allocation7 + $0x308] sm:$0xff]
        %v3312 = vld [vmem:[#allocation7 + $0x310] sm:$0xff]
        %v3313 = vld [vmem:[#allocation7 + $0x318] sm:$0xff]
        %v3314 = vld [vmem:[#allocation7 + $0x320] sm:$0xff]
        %v3315 = vld [vmem:[#allocation7 + $0x328] sm:$0xff]
        %v3316 = vld [vmem:[#allocation7 + $0x330] sm:$0xff]
        %v3317 = vld [vmem:[#allocation7 + $0x338] sm:$0xff]
        %v3318 = vld [vmem:[#allocation7 + $0x340] sm:$0xff]
        %v3319 = vld [vmem:[#allocation7 + $0x348] sm:$0xff]
        %v3320 = vld [vmem:[#allocation7 + $0x350] sm:$0xff]
        %v3321 = vld [vmem:[#allocation7 + $0x358] sm:$0xff]
        %v3322 = vld [vmem:[#allocation7 + $0x360] sm:$0xff]
        %v3323 = vld [vmem:[#allocation7 + $0x368] sm:$0xff]
        %v3324 = vld [vmem:[#allocation7 + $0x370] sm:$0xff]
        %v3325 = vld [vmem:[#allocation7 + $0x378] sm:$0xff]
        %v3326 = vld [vmem:[#allocation7 + $0x380] sm:$0xff]
        %v3327 = vld [vmem:[#allocation7 + $0x388] sm:$0xff]
        %v3328 = vld [vmem:[#allocation7 + $0x390] sm:$0xff]
        %v3329 = vld [vmem:[#allocation7 + $0x398] sm:$0xff]
        %v3330 = vld [vmem:[#allocation7 + $0x3a0] sm:$0xff]
        %v3331 = vld [vmem:[#allocation7 + $0x3a8] sm:$0xff]
        %v3332 = vld [vmem:[#allocation7 + $0x3b0] sm:$0xff]
        %v3333 = vld [vmem:[#allocation7 + $0x3b8] sm:$0xff]
        %v3334 = vld [vmem:[#allocation7 + $0x3c0] sm:$0xff]
        %v3335 = vld [vmem:[#allocation7 + $0x3c8] sm:$0xff]
        %v3336 = vld [vmem:[#allocation7 + $0x3d0] sm:$0xff]
        %v3337 = vld [vmem:[#allocation7 + $0x3d8] sm:$0xff]
        %v3338 = vld [vmem:[#allocation7 + $0x3e0] sm:$0xff]
        %v3339 = vld [vmem:[#allocation7 + $0x3e8] sm:$0xff]
        %v3340 = vld [vmem:[#allocation7 + $0x3f0] sm:$0xff]
        %v3341 = vld [vmem:[#allocation7 + $0x3f8] sm:$0xff]
        %v3342 = vld [vmem:[#allocation7 + $0x400] sm:$0xff]
        %v3343 = vld [vmem:[#allocation7 + $0x408] sm:$0xff]
        %v3344 = vld [vmem:[#allocation7 + $0x410] sm:$0xff]
        %v3345 = vld [vmem:[#allocation7 + $0x418] sm:$0xff]
        %v3346 = vld [vmem:[#allocation7 + $0x420] sm:$0xff]
        %v3347 = vld [vmem:[#allocation7 + $0x428] sm:$0xff]
        %v3348 = vld [vmem:[#allocation7 + $0x430] sm:$0xff]
        %v3349 = vld [vmem:[#allocation7 + $0x438] sm:$0xff]
        %v3350 = vld [vmem:[#allocation7 + $0x440] sm:$0xff]
        %v3351 = vld [vmem:[#allocation7 + $0x448] sm:$0xff]
        %v3352 = vld [vmem:[#allocation7 + $0x450] sm:$0xff]
        %v3353 = vld [vmem:[#allocation7 + $0x458] sm:$0xff]
        %v3354 = vld [vmem:[#allocation7 + $0x460] sm:$0xff]
        %v3355 = vld [vmem:[#allocation7 + $0x468] sm:$0xff]
        %v3356 = vld [vmem:[#allocation7 + $0x470] sm:$0xff]
        %v3357 = vld [vmem:[#allocation7 + $0x478] sm:$0xff]
        %v3358 = vld [vmem:[#allocation7 + $0x480] sm:$0xff]
        %v3359 = vld [vmem:[#allocation7 + $0x488] sm:$0xff]
        %v3360 = vld [vmem:[#allocation7 + $0x490] sm:$0xff]
        %v3361 = vld [vmem:[#allocation7 + $0x498] sm:$0xff]
        %v3362 = vld [vmem:[#allocation7 + $0x4a0] sm:$0xff]
        %v3363 = vld [vmem:[#allocation7 + $0x4a8] sm:$0xff]
        %v3364 = vld [vmem:[#allocation7 + $0x4b0] sm:$0xff]
        %v3365 = vld [vmem:[#allocation7 + $0x4b8] sm:$0xff]
        %v3366 = vld [vmem:[#allocation7 + $0x4c0] sm:$0xff]
        %v3367 = vld [vmem:[#allocation7 + $0x4c8] sm:$0xff]
        %v3368 = vld [vmem:[#allocation7 + $0x4d0] sm:$0xff]
        %v3369 = vld [vmem:[#allocation7 + $0x4d8] sm:$0xff]
        %v3370 = vld [vmem:[#allocation7 + $0x4e0] sm:$0xff]
        %v3371 = vld [vmem:[#allocation7 + $0x4e8] sm:$0xff]
        %v3372 = vld [vmem:[#allocation7 + $0x4f0] sm:$0xff]
        %v3373 = vld [vmem:[#allocation7 + $0x4f8] sm:$0xff]
        %v3374 = vld [vmem:[#allocation7 + $0x500] sm:$0xff]
        %v3375 = vld [vmem:[#allocation7 + $0x508] sm:$0xff]
        %v3376 = vld [vmem:[#allocation7 + $0x510] sm:$0xff]
        %v3377 = vld [vmem:[#allocation7 + $0x518] sm:$0xff]
        %v3378 = vld [vmem:[#allocation7 + $0x520] sm:$0xff]
        %v3379 = vld [vmem:[#allocation7 + $0x528] sm:$0xff]
        %v3380 = vld [vmem:[#allocation7 + $0x530] sm:$0xff]
        %v3381 = vld [vmem:[#allocation7 + $0x538] sm:$0xff]
        %v3382 = vld [vmem:[#allocation7 + $0x540] sm:$0xff]
        %v3383 = vld [vmem:[#allocation7 + $0x548] sm:$0xff]
        %v3384 = vld [vmem:[#allocation7 + $0x550] sm:$0xff]
        %v3385 = vld [vmem:[#allocation7 + $0x558] sm:$0xff]
        %v3386 = vld [vmem:[#allocation7 + $0x560] sm:$0xff]
        %v3387 = vld [vmem:[#allocation7 + $0x568] sm:$0xff]
        %v3388 = vld [vmem:[#allocation7 + $0x570] sm:$0xff]
        %v3389 = vld [vmem:[#allocation7 + $0x578] sm:$0xff]
        %v3390 = vld [vmem:[#allocation7 + $0x580] sm:$0xff]
        %v3391 = vld [vmem:[#allocation7 + $0x588] sm:$0xff]
        %v3392 = vld [vmem:[#allocation7 + $0x590] sm:$0xff]
        %v3393 = vld [vmem:[#allocation7 + $0x598] sm:$0xff]
        %v3394 = vld [vmem:[#allocation7 + $0x5a0] sm:$0xff]
        %v3395 = vld [vmem:[#allocation7 + $0x5a8] sm:$0xff]
        %v3396 = vld [vmem:[#allocation7 + $0x5b0] sm:$0xff]
        %v3397 = vld [vmem:[#allocation7 + $0x5b8] sm:$0xff]
        %v3398 = vld [vmem:[#allocation7 + $0x5c0] sm:$0xff]
        %v3399 = vld [vmem:[#allocation7 + $0x5c8] sm:$0xff]
        %v3400 = vld [vmem:[#allocation7 + $0x5d0] sm:$0xff]
        %v3401 = vld [vmem:[#allocation7 + $0x5d8] sm:$0xff]
        %v3402 = vld [vmem:[#allocation7 + $0x5e0] sm:$0xff]
        %v3403 = vld [vmem:[#allocation7 + $0x5e8] sm:$0xff]
        %v3404 = vld [vmem:[#allocation7 + $0x5f0] sm:$0xff]
        %v3405 = vld [vmem:[#allocation7 + $0x5f8] sm:$0xff]
        %v3406 = vld [vmem:[#allocation7 + $0x600] sm:$0xff]
        %v3407 = vld [vmem:[#allocation7 + $0x608] sm:$0xff]
        %v3408 = vld [vmem:[#allocation7 + $0x610] sm:$0xff]
        %v3409 = vld [vmem:[#allocation7 + $0x618] sm:$0xff]
        %v3410 = vld [vmem:[#allocation7 + $0x620] sm:$0xff]
        %v3411 = vld [vmem:[#allocation7 + $0x628] sm:$0xff]
        %v3412 = vld [vmem:[#allocation7 + $0x630] sm:$0xff]
        %v3413 = vld [vmem:[#allocation7 + $0x638] sm:$0xff]
        %v3414 = vld [vmem:[#allocation7 + $0x640] sm:$0xff]
        %v3415 = vld [vmem:[#allocation7 + $0x648] sm:$0xff]
        %v3416 = vld [vmem:[#allocation7 + $0x650] sm:$0xff]
        %v3417 = vld [vmem:[#allocation7 + $0x658] sm:$0xff]
        %v3418 = vld [vmem:[#allocation7 + $0x660] sm:$0xff]
        %v3419 = vld [vmem:[#allocation7 + $0x668] sm:$0xff]
        %v3420 = vld [vmem:[#allocation7 + $0x670] sm:$0xff]
        %v3421 = vld [vmem:[#allocation7 + $0x678] sm:$0xff]
        %v3422 = vld [vmem:[#allocation7 + $0x680] sm:$0xff]
        %v3423 = vld [vmem:[#allocation7 + $0x688] sm:$0xff]
        %v3424 = vld [vmem:[#allocation7 + $0x690] sm:$0xff]
        %v3425 = vld [vmem:[#allocation7 + $0x698] sm:$0xff]
        %v3426 = vld [vmem:[#allocation7 + $0x6a0] sm:$0xff]
        %v3427 = vld [vmem:[#allocation7 + $0x6a8] sm:$0xff]
        %v3428 = vld [vmem:[#allocation7 + $0x6b0] sm:$0xff]
        %v3429 = vld [vmem:[#allocation7 + $0x6b8] sm:$0xff]
        %v3430 = vld [vmem:[#allocation7 + $0x6c0] sm:$0xff]
        %v3431 = vld [vmem:[#allocation7 + $0x6c8] sm:$0xff]
        %v3432 = vld [vmem:[#allocation7 + $0x6d0] sm:$0xff]
        %v3433 = vld [vmem:[#allocation7 + $0x6d8] sm:$0xff]
        %v3434 = vld [vmem:[#allocation7 + $0x6e0] sm:$0xff]
        %v3435 = vld [vmem:[#allocation7 + $0x6e8] sm:$0xff]
        %v3436 = vld [vmem:[#allocation7 + $0x6f0] sm:$0xff]
        %v3437 = vld [vmem:[#allocation7 + $0x6f8] sm:$0xff]
        %v3438 = vld [vmem:[#allocation7 + $0x700] sm:$0xff]
        %v3439 = vld [vmem:[#allocation7 + $0x708] sm:$0xff]
        %v3440 = vld [vmem:[#allocation7 + $0x710] sm:$0xff]
        %v3441 = vld [vmem:[#allocation7 + $0x718] sm:$0xff]
        %v3442 = vld [vmem:[#allocation7 + $0x720] sm:$0xff]
        %v3443 = vld [vmem:[#allocation7 + $0x728] sm:$0xff]
        %v3444 = vld [vmem:[#allocation7 + $0x730] sm:$0xff]
        %v3445 = vld [vmem:[#allocation7 + $0x738] sm:$0xff]
        %v3446 = vld [vmem:[#allocation7 + $0x740] sm:$0xff]
        %v3447 = vld [vmem:[#allocation7 + $0x748] sm:$0xff]
        %v3448 = vld [vmem:[#allocation7 + $0x750] sm:$0xff]
        %v3449 = vld [vmem:[#allocation7 + $0x758] sm:$0xff]
        %v3450 = vld [vmem:[#allocation7 + $0x760] sm:$0xff]
        %v3451 = vld [vmem:[#allocation7 + $0x768] sm:$0xff]
        %v3452 = vld [vmem:[#allocation7 + $0x770] sm:$0xff]
        %v3453 = vld [vmem:[#allocation7 + $0x778] sm:$0xff]
        %v3454 = vld [vmem:[#allocation7 + $0x780] sm:$0xff]
        %v3455 = vld [vmem:[#allocation7 + $0x788] sm:$0xff]
        %v3456 = vld [vmem:[#allocation7 + $0x790] sm:$0xff]
        %v3457 = vld [vmem:[#allocation7 + $0x798] sm:$0xff]
        %v3458 = vld [vmem:[#allocation7 + $0x7a0] sm:$0xff]
        %v3459 = vld [vmem:[#allocation7 + $0x7a8] sm:$0xff]
        %v3460 = vld [vmem:[#allocation7 + $0x7b0] sm:$0xff]
        %v3461 = vld [vmem:[#allocation7 + $0x7b8] sm:$0xff]
        %v3462 = vld [vmem:[#allocation7 + $0x7c0] sm:$0xff]
        %v3463 = vld [vmem:[#allocation7 + $0x7c8] sm:$0xff]
        %v3464 = vld [vmem:[#allocation7 + $0x7d0] sm:$0xff]
        %v3465 = vld [vmem:[#allocation7 + $0x7d8] sm:$0xff]
        %v3466 = vld [vmem:[#allocation7 + $0x7e0] sm:$0xff]
        %v3467 = vld [vmem:[#allocation7 + $0x7e8] sm:$0xff]
        %v3468 = vld [vmem:[#allocation7 + $0x7f0] sm:$0xff]
        %v3469 = vld [vmem:[#allocation7 + $0x7f8] sm:$0xff]
        %v3470 = vld [vmem:[#allocation7 + $0x800] sm:$0xff]
        %v3471 = vld [vmem:[#allocation7 + $0x808] sm:$0xff]
        %v3472 = vld [vmem:[#allocation7 + $0x810] sm:$0xff]
        %v3473 = vld [vmem:[#allocation7 + $0x818] sm:$0xff]
        %v3474 = vld [vmem:[#allocation7 + $0x820] sm:$0xff]
        %v3475 = vld [vmem:[#allocation7 + $0x828] sm:$0xff]
        %v3476 = vld [vmem:[#allocation7 + $0x830] sm:$0xff]
        %v3477 = vld [vmem:[#allocation7 + $0x838] sm:$0xff]
        %v3478 = vld [vmem:[#allocation7 + $0x840] sm:$0xff]
        %v3479 = vld [vmem:[#allocation7 + $0x848] sm:$0xff]
        %v3480 = vld [vmem:[#allocation7 + $0x850] sm:$0xff]
        %v3481 = vld [vmem:[#allocation7 + $0x858] sm:$0xff]
        %v3482 = vld [vmem:[#allocation7 + $0x860] sm:$0xff]
        %v3483 = vld [vmem:[#allocation7 + $0x868] sm:$0xff]
        %v3484 = vld [vmem:[#allocation7 + $0x870] sm:$0xff]
        %v3485 = vld [vmem:[#allocation7 + $0x878] sm:$0xff]
        %v3486 = vld [vmem:[#allocation7 + $0x880] sm:$0xff]
        %v3487 = vld [vmem:[#allocation7 + $0x888] sm:$0xff]
        %v3488 = vld [vmem:[#allocation7 + $0x890] sm:$0xff]
        %v3489 = vld [vmem:[#allocation7 + $0x898] sm:$0xff]
        %v3490 = vld [vmem:[#allocation7 + $0x8a0] sm:$0xff]
        %v3491 = vld [vmem:[#allocation7 + $0x8a8] sm:$0xff]
        %v3492 = vld [vmem:[#allocation7 + $0x8b0] sm:$0xff]
        %v3493 = vld [vmem:[#allocation7 + $0x8b8] sm:$0xff]
        %v3494 = vld [vmem:[#allocation7 + $0x8c0] sm:$0xff]
        %v3495 = vld [vmem:[#allocation7 + $0x8c8] sm:$0xff]
        %v3496 = vld [vmem:[#allocation7 + $0x8d0] sm:$0xff]
        %v3497 = vld [vmem:[#allocation7 + $0x8d8] sm:$0xff]
        %v3498 = vld [vmem:[#allocation7 + $0x8e0] sm:$0xff]
        %v3499 = vld [vmem:[#allocation7 + $0x8e8] sm:$0xff]
        %v3500 = vld [vmem:[#allocation7 + $0x8f0] sm:$0xff]
        %v3501 = vld [vmem:[#allocation7 + $0x8f8] sm:$0xff]
        %v3502 = vld [vmem:[#allocation7 + $0x900] sm:$0xff]
        %v3503 = vld [vmem:[#allocation7 + $0x908] sm:$0xff]
        %v3504 = vld [vmem:[#allocation7 + $0x910] sm:$0xff]
        %v3505 = vld [vmem:[#allocation7 + $0x918] sm:$0xff]
        %v3506 = vld [vmem:[#allocation7 + $0x920] sm:$0xff]
        %v3507 = vld [vmem:[#allocation7 + $0x928] sm:$0xff]
        %v3508 = vld [vmem:[#allocation7 + $0x930] sm:$0xff]
        %v3509 = vld [vmem:[#allocation7 + $0x938] sm:$0xff]
        %v3510 = vld [vmem:[#allocation7 + $0x940] sm:$0xff]
        %v3511 = vld [vmem:[#allocation7 + $0x948] sm:$0xff]
        %v3512 = vld [vmem:[#allocation7 + $0x950] sm:$0xff]
        %v3513 = vld [vmem:[#allocation7 + $0x958] sm:$0xff]
        %v3514 = vld [vmem:[#allocation7 + $0x960] sm:$0xff]
        %v3515 = vld [vmem:[#allocation7 + $0x968] sm:$0xff]
        %v3516 = vld [vmem:[#allocation7 + $0x970] sm:$0xff]
        %v3517 = vld [vmem:[#allocation7 + $0x978] sm:$0xff]
        %v3518 = vld [vmem:[#allocation7 + $0x980] sm:$0xff]
        %v3519 = vld [vmem:[#allocation7 + $0x988] sm:$0xff]
        %v3520 = vld [vmem:[#allocation7 + $0x990] sm:$0xff]
        %v3521 = vld [vmem:[#allocation7 + $0x998] sm:$0xff]
        %v3522 = vld [vmem:[#allocation7 + $0x9a0] sm:$0xff]
        %v3523 = vld [vmem:[#allocation7 + $0x9a8] sm:$0xff]
        %v3524 = vld [vmem:[#allocation7 + $0x9b0] sm:$0xff]
        %v3525 = vld [vmem:[#allocation7 + $0x9b8] sm:$0xff]
        %v3526 = vld [vmem:[#allocation7 + $0x9c0] sm:$0xff]
        %v3527 = vld [vmem:[#allocation7 + $0x9c8] sm:$0xff]
        %v3528 = vld [vmem:[#allocation7 + $0x9d0] sm:$0xff]
        %v3529 = vld [vmem:[#allocation7 + $0x9d8] sm:$0xff]
        %v3530 = vld [vmem:[#allocation7 + $0x9e0] sm:$0xff]
        %v3531 = vld [vmem:[#allocation7 + $0x9e8] sm:$0xff]
        %v3532 = vld [vmem:[#allocation7 + $0x9f0] sm:$0xff]
        %v3533 = vld [vmem:[#allocation7 + $0x9f8] sm:$0xff]
        %v3534 = vld [vmem:[#allocation7 + $0xa00] sm:$0xff]
        %v3535 = vld [vmem:[#allocation7 + $0xa08] sm:$0xff]
        %v3536 = vld [vmem:[#allocation7 + $0xa10] sm:$0xff]
        %v3537 = vld [vmem:[#allocation7 + $0xa18] sm:$0xff]
        %v3538 = vld [vmem:[#allocation7 + $0xa20] sm:$0xff]
        %v3539 = vld [vmem:[#allocation7 + $0xa28] sm:$0xff]
        %v3540 = vld [vmem:[#allocation7 + $0xa30] sm:$0xff]
        %v3541 = vld [vmem:[#allocation7 + $0xa38] sm:$0xff]
        %v3542 = vld [vmem:[#allocation7 + $0xa40] sm:$0xff]
        %v3543 = vld [vmem:[#allocation7 + $0xa48] sm:$0xff]
        %v3544 = vld [vmem:[#allocation7 + $0xa50] sm:$0xff]
        %v3545 = vld [vmem:[#allocation7 + $0xa58] sm:$0xff]
        %v3546 = vld [vmem:[#allocation7 + $0xa60] sm:$0xff]
        %v3547 = vld [vmem:[#allocation7 + $0xa68] sm:$0xff]
        %v3548 = vld [vmem:[#allocation7 + $0xa70] sm:$0xff]
        %v3549 = vld [vmem:[#allocation7 + $0xa78] sm:$0xff]
        %v3550 = vld [vmem:[#allocation7 + $0xa80] sm:$0xff]
        %v3551 = vld [vmem:[#allocation7 + $0xa88] sm:$0xff]
        %v3552 = vld [vmem:[#allocation7 + $0xa90] sm:$0xff]
        %v3553 = vld [vmem:[#allocation7 + $0xa98] sm:$0xff]
        %v3554 = vld [vmem:[#allocation7 + $0xaa0] sm:$0xff]
        %v3555 = vld [vmem:[#allocation7 + $0xaa8] sm:$0xff]
        %v3556 = vld [vmem:[#allocation7 + $0xab0] sm:$0xff]
        %v3557 = vld [vmem:[#allocation7 + $0xab8] sm:$0xff]
        %v3558 = vld [vmem:[#allocation7 + $0xac0] sm:$0xff]
        %v3559 = vld [vmem:[#allocation7 + $0xac8] sm:$0xff]
        %v3560 = vld [vmem:[#allocation7 + $0xad0] sm:$0xff]
        %v3561 = vld [vmem:[#allocation7 + $0xad8] sm:$0xff]
        %v3562 = vld [vmem:[#allocation7 + $0xae0] sm:$0xff]
        %v3563 = vld [vmem:[#allocation7 + $0xae8] sm:$0xff]
        %v3564 = vld [vmem:[#allocation7 + $0xaf0] sm:$0xff]
        %v3565 = vld [vmem:[#allocation7 + $0xaf8] sm:$0xff]
        %v3566 = vld [vmem:[#allocation7 + $0xb00] sm:$0xff]
        %v3567 = vld [vmem:[#allocation7 + $0xb08] sm:$0xff]
        %v3568 = vld [vmem:[#allocation7 + $0xb10] sm:$0xff]
        %v3569 = vld [vmem:[#allocation7 + $0xb18] sm:$0xff]
        %v3570 = vld [vmem:[#allocation7 + $0xb20] sm:$0xff]
        %v3571 = vld [vmem:[#allocation7 + $0xb28] sm:$0xff]
        %v3572 = vld [vmem:[#allocation7 + $0xb30] sm:$0xff]
        %v3573 = vld [vmem:[#allocation7 + $0xb38] sm:$0xff]
        %v3574 = vld [vmem:[#allocation7 + $0xb40] sm:$0xff]
        %v3575 = vld [vmem:[#allocation7 + $0xb48] sm:$0xff]
        %v3576 = vld [vmem:[#allocation7 + $0xb50] sm:$0xff]
        %v3577 = vld [vmem:[#allocation7 + $0xb58] sm:$0xff]
        %v3578 = vld [vmem:[#allocation7 + $0xb60] sm:$0xff]
        %v3579 = vld [vmem:[#allocation7 + $0xb68] sm:$0xff]
        %v3580 = vld [vmem:[#allocation7 + $0xb70] sm:$0xff]
        %v3581 = vld [vmem:[#allocation7 + $0xb78] sm:$0xff]
        %v3582 = vld [vmem:[#allocation7 + $0xb80] sm:$0xff]
        %v3583 = vld [vmem:[#allocation7 + $0xb88] sm:$0xff]
        %v3584 = vld [vmem:[#allocation7 + $0xb90] sm:$0xff]
        %v3585 = vld [vmem:[#allocation7 + $0xb98] sm:$0xff]
        %v3586 = vld [vmem:[#allocation7 + $0xba0] sm:$0xff]
        %v3587 = vld [vmem:[#allocation7 + $0xba8] sm:$0xff]
        %v3588 = vld [vmem:[#allocation7 + $0xbb0] sm:$0xff]
        %v3589 = vld [vmem:[#allocation7 + $0xbb8] sm:$0xff]
        %v3590 = vld [vmem:[#allocation7 + $0xbc0] sm:$0xff]
        %v3591 = vld [vmem:[#allocation7 + $0xbc8] sm:$0xff]
        %v3592 = vld [vmem:[#allocation7 + $0xbd0] sm:$0xff]
        %v3593 = vld [vmem:[#allocation7 + $0xbd8] sm:$0xff]
        %v3594 = vld [vmem:[#allocation7 + $0xbe0] sm:$0xff]
        %v3595 = vld [vmem:[#allocation7 + $0xbe8] sm:$0xff]
        %v3596 = vld [vmem:[#allocation7 + $0xbf0] sm:$0xff]
        %v3597 = vld [vmem:[#allocation7 + $0xbf8] sm:$0xff]
        %v3598 = vld [vmem:[#allocation7 + $0xc00] sm:$0xff]
        %v3599 = vld [vmem:[#allocation7 + $0xc08] sm:$0xff]
        %v3600 = vld [vmem:[#allocation7 + $0xc10] sm:$0xff]
        %v3601 = vld [vmem:[#allocation7 + $0xc18] sm:$0xff]
        %v3602 = vld [vmem:[#allocation7 + $0xc20] sm:$0xff]
        %v3603 = vld [vmem:[#allocation7 + $0xc28] sm:$0xff]
        %v3604 = vld [vmem:[#allocation7 + $0xc30] sm:$0xff]
        %v3605 = vld [vmem:[#allocation7 + $0xc38] sm:$0xff]
        %v3606 = vld [vmem:[#allocation7 + $0xc40] sm:$0xff]
        %v3607 = vld [vmem:[#allocation7 + $0xc48] sm:$0xff]
        %v3608 = vld [vmem:[#allocation7 + $0xc50] sm:$0xff]
        %v3609 = vld [vmem:[#allocation7 + $0xc58] sm:$0xff]
        %v3610 = vld [vmem:[#allocation7 + $0xc60] sm:$0xff]
        %v3611 = vld [vmem:[#allocation7 + $0xc68] sm:$0xff]
        %v3612 = vld [vmem:[#allocation7 + $0xc70] sm:$0xff]
        %v3613 = vld [vmem:[#allocation7 + $0xc78] sm:$0xff]
        %v3614 = vld [vmem:[#allocation7 + $0xc80] sm:$0xff]
        %v3615 = vld [vmem:[#allocation7 + $0xc88] sm:$0xff]
        %v3616 = vld [vmem:[#allocation7 + $0xc90] sm:$0xff]
        %v3617 = vld [vmem:[#allocation7 + $0xc98] sm:$0xff]
        %v3618 = vld [vmem:[#allocation7 + $0xca0] sm:$0xff]
        %v3619 = vld [vmem:[#allocation7 + $0xca8] sm:$0xff]
        %v3620 = vld [vmem:[#allocation7 + $0xcb0] sm:$0xff]
        %v3621 = vld [vmem:[#allocation7 + $0xcb8] sm:$0xff]
        %v3622 = vld [vmem:[#allocation7 + $0xcc0] sm:$0xff]
        %v3623 = vld [vmem:[#allocation7 + $0xcc8] sm:$0xff]
        %v3624 = vld [vmem:[#allocation7 + $0xcd0] sm:$0xff]
        %v3625 = vld [vmem:[#allocation7 + $0xcd8] sm:$0xff]
        %v3626 = vld [vmem:[#allocation7 + $0xce0] sm:$0xff]
        %v3627 = vld [vmem:[#allocation7 + $0xce8] sm:$0xff]
        %v3628 = vld [vmem:[#allocation7 + $0xcf0] sm:$0xff]
        %v3629 = vld [vmem:[#allocation7 + $0xcf8] sm:$0xff]
        %v3630 = vld [vmem:[#allocation7 + $0xd00] sm:$0xff]
        %v3631 = vld [vmem:[#allocation7 + $0xd08] sm:$0xff]
        %v3632 = vld [vmem:[#allocation7 + $0xd10] sm:$0xff]
        %v3633 = vld [vmem:[#allocation7 + $0xd18] sm:$0xff]
        %v3634 = vld [vmem:[#allocation7 + $0xd20] sm:$0xff]
        %v3635 = vld [vmem:[#allocation7 + $0xd28] sm:$0xff]
        %v3636 = vld [vmem:[#allocation7 + $0xd30] sm:$0xff]
        %v3637 = vld [vmem:[#allocation7 + $0xd38] sm:$0xff]
        %v3638 = vld [vmem:[#allocation7 + $0xd40] sm:$0xff]
        %v3639 = vld [vmem:[#allocation7 + $0xd48] sm:$0xff]
        %v3640 = vld [vmem:[#allocation7 + $0xd50] sm:$0xff]
        %v3641 = vld [vmem:[#allocation7 + $0xd58] sm:$0xff]
        %v3642 = vld [vmem:[#allocation7 + $0xd60] sm:$0xff]
        %v3643 = vld [vmem:[#allocation7 + $0xd68] sm:$0xff]
        %v3644 = vld [vmem:[#allocation7 + $0xd70] sm:$0xff]
        %v3645 = vld [vmem:[#allocation7 + $0xd78] sm:$0xff]
        %v3646 = vld [vmem:[#allocation7 + $0xd80] sm:$0xff]
        %v3647 = vld [vmem:[#allocation7 + $0xd88] sm:$0xff]
        %v3648 = vld [vmem:[#allocation7 + $0xd90] sm:$0xff]
        %v3649 = vld [vmem:[#allocation7 + $0xd98] sm:$0xff]
        %v3650 = vld [vmem:[#allocation7 + $0xda0] sm:$0xff]
        %v3651 = vld [vmem:[#allocation7 + $0xda8] sm:$0xff]
        %v3652 = vld [vmem:[#allocation7 + $0xdb0] sm:$0xff]
        %v3653 = vld [vmem:[#allocation7 + $0xdb8] sm:$0xff]
        %v3654 = vld [vmem:[#allocation7 + $0xdc0] sm:$0xff]
        %v3655 = vld [vmem:[#allocation7 + $0xdc8] sm:$0xff]
        %v3656 = vld [vmem:[#allocation7 + $0xdd0] sm:$0xff]
        %v3657 = vld [vmem:[#allocation7 + $0xdd8] sm:$0xff]
        %v3658 = vld [vmem:[#allocation7 + $0xde0] sm:$0xff]
        %v3659 = vld [vmem:[#allocation7 + $0xde8] sm:$0xff]
        %v3660 = vld [vmem:[#allocation7 + $0xdf0] sm:$0xff]
        %v3661 = vld [vmem:[#allocation7 + $0xdf8] sm:$0xff]
        %v3662 = vld [vmem:[#allocation7 + $0xe00] sm:$0xff]
        %v3663 = vld [vmem:[#allocation7 + $0xe08] sm:$0xff]
        %v3664 = vld [vmem:[#allocation7 + $0xe10] sm:$0xff]
        %v3665 = vld [vmem:[#allocation7 + $0xe18] sm:$0xff]
        %v3666 = vld [vmem:[#allocation7 + $0xe20] sm:$0xff]
        %v3667 = vld [vmem:[#allocation7 + $0xe28] sm:$0xff]
        %v3668 = vld [vmem:[#allocation7 + $0xe30] sm:$0xff]
        %v3669 = vld [vmem:[#allocation7 + $0xe38] sm:$0xff]
        %v3670 = vld [vmem:[#allocation7 + $0xe40] sm:$0xff]
        %v3671 = vld [vmem:[#allocation7 + $0xe48] sm:$0xff]
        %v3672 = vld [vmem:[#allocation7 + $0xe50] sm:$0xff]
        %v3673 = vld [vmem:[#allocation7 + $0xe58] sm:$0xff]
        %v3674 = vld [vmem:[#allocation7 + $0xe60] sm:$0xff]
        %v3675 = vld [vmem:[#allocation7 + $0xe68] sm:$0xff]
        %v3676 = vld [vmem:[#allocation7 + $0xe70] sm:$0xff]
        %v3677 = vld [vmem:[#allocation7 + $0xe78] sm:$0xff]
        %v3678 = vld [vmem:[#allocation7 + $0xe80] sm:$0xff]
        %v3679 = vld [vmem:[#allocation7 + $0xe88] sm:$0xff]
        %v3680 = vld [vmem:[#allocation7 + $0xe90] sm:$0xff]
        %v3681 = vld [vmem:[#allocation7 + $0xe98] sm:$0xff]
        %v3682 = vld [vmem:[#allocation7 + $0xea0] sm:$0xff]
        %v3683 = vld [vmem:[#allocation7 + $0xea8] sm:$0xff]
        %v3684 = vld [vmem:[#allocation7 + $0xeb0] sm:$0xff]
        %v3685 = vld [vmem:[#allocation7 + $0xeb8] sm:$0xff]
        %v3686 = vld [vmem:[#allocation7 + $0xec0] sm:$0xff]
        %v3687 = vld [vmem:[#allocation7 + $0xec8] sm:$0xff]
        %v3688 = vld [vmem:[#allocation7 + $0xed0] sm:$0xff]
        %v3689 = vld [vmem:[#allocation7 + $0xed8] sm:$0xff]
        %v3690 = vld [vmem:[#allocation7 + $0xee0] sm:$0xff]
        %v3691 = vld [vmem:[#allocation7 + $0xee8] sm:$0xff]
        %v3692 = vld [vmem:[#allocation7 + $0xef0] sm:$0xff]
        %v3693 = vld [vmem:[#allocation7 + $0xef8] sm:$0xff]
        %v3694 = vld [vmem:[#allocation7 + $0xf00] sm:$0xff]
        %v3695 = vld [vmem:[#allocation7 + $0xf08] sm:$0xff]
        %v3696 = vld [vmem:[#allocation7 + $0xf10] sm:$0xff]
        %v3697 = vld [vmem:[#allocation7 + $0xf18] sm:$0xff]
        %v3698 = vld [vmem:[#allocation7 + $0xf20] sm:$0xff]
        %v3699 = vld [vmem:[#allocation7 + $0xf28] sm:$0xff]
        %v3700 = vld [vmem:[#allocation7 + $0xf30] sm:$0xff]
        %v3701 = vld [vmem:[#allocation7 + $0xf38] sm:$0xff]
        %v3702 = vld [vmem:[#allocation7 + $0xf40] sm:$0xff]
        %v3703 = vld [vmem:[#allocation7 + $0xf48] sm:$0xff]
        %v3704 = vld [vmem:[#allocation7 + $0xf50] sm:$0xff]
        %v3705 = vld [vmem:[#allocation7 + $0xf58] sm:$0xff]
        %v3706 = vld [vmem:[#allocation7 + $0xf60] sm:$0xff]
        %v3707 = vld [vmem:[#allocation7 + $0xf68] sm:$0xff]
        %v3708 = vld [vmem:[#allocation7 + $0xf70] sm:$0xff]
        %v3709 = vld [vmem:[#allocation7 + $0xf78] sm:$0xff]
        %v3710 = vld [vmem:[#allocation7 + $0xf80] sm:$0xff]
        %v3711 = vld [vmem:[#allocation7 + $0xf88] sm:$0xff]
        %v3712 = vld [vmem:[#allocation7 + $0xf90] sm:$0xff]
        %v3713 = vld [vmem:[#allocation7 + $0xf98] sm:$0xff]
        %v3714 = vld [vmem:[#allocation7 + $0xfa0] sm:$0xff]
        %v3715 = vld [vmem:[#allocation7 + $0xfa8] sm:$0xff]
        %v3716 = vld [vmem:[#allocation7 + $0xfb0] sm:$0xff]
        %v3717 = vld [vmem:[#allocation7 + $0xfb8] sm:$0xff]
        %v3718 = vld [vmem:[#allocation7 + $0xfc0] sm:$0xff]
        %v3719 = vld [vmem:[#allocation7 + $0xfc8] sm:$0xff]
        %v3720 = vld [vmem:[#allocation7 + $0xfd0] sm:$0xff]
        %v3721 = vld [vmem:[#allocation7 + $0xfd8] sm:$0xff]
        %v3722 = vld [vmem:[#allocation7 + $0xfe0] sm:$0xff]
        %v3723 = vld [vmem:[#allocation7 + $0xfe8] sm:$0xff]
        %v3724 = vld [vmem:[#allocation7 + $0xff0] sm:$0xff]
        %v3725 = vld [vmem:[#allocation7 + $0xff8] sm:$0xff]
        %v3726 = vld [vmem:[#allocation8] sm:$0xff]
        %v3728 = vlaneseq
        %v3729 = vshrl.u32 %v3728, 7
        %v3730 = vsub.s32 0, %v3729
        %v3731 = vrot.slane %v3726, %v3730
        %v3732 = vlaneseq
        %v3733 = vshrl.u32 %v3732, 7
        %v3734 = vsub.s32 1, %v3733
        %v3735 = vrot.slane %v3726, %v3734
        %v3736 = vlaneseq
        %v3737 = vshrl.u32 %v3736, 7
        %v3738 = vsub.s32 2, %v3737
        %v3739 = vrot.slane %v3726, %v3738
        %v3740 = vlaneseq
        %v3741 = vshrl.u32 %v3740, 7
        %v3742 = vsub.s32 3, %v3741
        %v3743 = vrot.slane %v3726, %v3742
        %v3744 = vlaneseq
        %v3745 = vshrl.u32 %v3744, 7
        %v3746 = vsub.s32 4, %v3745
        %v3747 = vrot.slane %v3726, %v3746
        %v3748 = vlaneseq
        %v3749 = vshrl.u32 %v3748, 7
        %v3750 = vsub.s32 5, %v3749
        %v3751 = vrot.slane %v3726, %v3750
        %v3752 = vlaneseq
        %v3753 = vshrl.u32 %v3752, 7
        %v3754 = vsub.s32 6, %v3753
        %v3755 = vrot.slane %v3726, %v3754
        %v3756 = vlaneseq
        %v3757 = vshrl.u32 %v3756, 7
        %v3758 = vsub.s32 7, %v3757
        %v3759 = vrot.slane %v3726, %v3758
        %v4280 = vunpack.c.l.b16 %v3214
        %v4281 = vunpack.c.h.b16 %v3214
        %v4282 = vunpack.c.l.b16 %v3215
        %v4283 = vunpack.c.h.b16 %v3215
        %v4284 = vunpack.c.l.b16 %v3216
        %v4285 = vunpack.c.h.b16 %v3216
        %v4286 = vunpack.c.l.b16 %v3217
        %v4287 = vunpack.c.h.b16 %v3217
        %v4288 = vunpack.c.l.b16 %v3218
        %v4289 = vunpack.c.h.b16 %v3218
        %v4290 = vunpack.c.l.b16 %v3219
        %v4291 = vunpack.c.h.b16 %v3219
        %v4292 = vunpack.c.l.b16 %v3220
        %v4293 = vunpack.c.h.b16 %v3220
        %v4294 = vunpack.c.l.b16 %v3221
        %v4295 = vunpack.c.h.b16 %v3221
        %v4296 = vunpack.c.l.b16 %v3222
        %v4297 = vunpack.c.h.b16 %v3222
        %v4298 = vunpack.c.l.b16 %v3223
        %v4299 = vunpack.c.h.b16 %v3223
        %v4300 = vunpack.c.l.b16 %v3224
        %v4301 = vunpack.c.h.b16 %v3224
        %v4302 = vunpack.c.l.b16 %v3225
        %v4303 = vunpack.c.h.b16 %v3225
        %v4304 = vunpack.c.l.b16 %v3226
        %v4305 = vunpack.c.h.b16 %v3226
        %v4306 = vunpack.c.l.b16 %v3227
        %v4307 = vunpack.c.h.b16 %v3227
        %v4308 = vunpack.c.l.b16 %v3228
        %v4309 = vunpack.c.h.b16 %v3228
        %v4310 = vunpack.c.l.b16 %v3229
        %v4311 = vunpack.c.h.b16 %v3229
        %v4312 = vunpack.c.l.b16 %v3230
        %v4313 = vunpack.c.h.b16 %v3230
        %v4314 = vunpack.c.l.b16 %v3231
        %v4315 = vunpack.c.h.b16 %v3231
        %v4316 = vunpack.c.l.b16 %v3232
        %v4317 = vunpack.c.h.b16 %v3232
        %v4318 = vunpack.c.l.b16 %v3233
        %v4319 = vunpack.c.h.b16 %v3233
        %v4320 = vunpack.c.l.b16 %v3234
        %v4321 = vunpack.c.h.b16 %v3234
        %v4322 = vunpack.c.l.b16 %v3235
        %v4323 = vunpack.c.h.b16 %v3235
        %v4324 = vunpack.c.l.b16 %v3236
        %v4325 = vunpack.c.h.b16 %v3236
        %v4326 = vunpack.c.l.b16 %v3237
        %v4327 = vunpack.c.h.b16 %v3237
        %v4328 = vunpack.c.l.b16 %v3238
        %v4329 = vunpack.c.h.b16 %v3238
        %v4330 = vunpack.c.l.b16 %v3239
        %v4331 = vunpack.c.h.b16 %v3239
        %v4332 = vunpack.c.l.b16 %v3240
        %v4333 = vunpack.c.h.b16 %v3240
        %v4334 = vunpack.c.l.b16 %v3241
        %v4335 = vunpack.c.h.b16 %v3241
        %v4336 = vunpack.c.l.b16 %v3242
        %v4337 = vunpack.c.h.b16 %v3242
        %v4338 = vunpack.c.l.b16 %v3243
        %v4339 = vunpack.c.h.b16 %v3243
        %v4340 = vunpack.c.l.b16 %v3244
        %v4341 = vunpack.c.h.b16 %v3244
        %v4342 = vunpack.c.l.b16 %v3245
        %v4343 = vunpack.c.h.b16 %v3245
        %v4344 = vunpack.c.l.b16 %v3246
        %v4345 = vunpack.c.h.b16 %v3246
        %v4346 = vunpack.c.l.b16 %v3247
        %v4347 = vunpack.c.h.b16 %v3247
        %v4348 = vunpack.c.l.b16 %v3248
        %v4349 = vunpack.c.h.b16 %v3248
        %v4350 = vunpack.c.l.b16 %v3249
        %v4351 = vunpack.c.h.b16 %v3249
        %v4352 = vunpack.c.l.b16 %v3250
        %v4353 = vunpack.c.h.b16 %v3250
        %v4354 = vunpack.c.l.b16 %v3251
        %v4355 = vunpack.c.h.b16 %v3251
        %v4356 = vunpack.c.l.b16 %v3252
        %v4357 = vunpack.c.h.b16 %v3252
        %v4358 = vunpack.c.l.b16 %v3253
        %v4359 = vunpack.c.h.b16 %v3253
        %v4360 = vunpack.c.l.b16 %v3254
        %v4361 = vunpack.c.h.b16 %v3254
        %v4362 = vunpack.c.l.b16 %v3255
        %v4363 = vunpack.c.h.b16 %v3255
        %v4364 = vunpack.c.l.b16 %v3256
        %v4365 = vunpack.c.h.b16 %v3256
        %v4366 = vunpack.c.l.b16 %v3257
        %v4367 = vunpack.c.h.b16 %v3257
        %v4368 = vunpack.c.l.b16 %v3258
        %v4369 = vunpack.c.h.b16 %v3258
        %v4370 = vunpack.c.l.b16 %v3259
        %v4371 = vunpack.c.h.b16 %v3259
        %v4372 = vunpack.c.l.b16 %v3260
        %v4373 = vunpack.c.h.b16 %v3260
        %v4374 = vunpack.c.l.b16 %v3261
        %v4375 = vunpack.c.h.b16 %v3261
        %v4376 = vunpack.c.l.b16 %v3262
        %v4377 = vunpack.c.h.b16 %v3262
        %v4378 = vunpack.c.l.b16 %v3263
        %v4379 = vunpack.c.h.b16 %v3263
        %v4380 = vunpack.c.l.b16 %v3264
        %v4381 = vunpack.c.h.b16 %v3264
        %v4382 = vunpack.c.l.b16 %v3265
        %v4383 = vunpack.c.h.b16 %v3265
        %v4384 = vunpack.c.l.b16 %v3266
        %v4385 = vunpack.c.h.b16 %v3266
        %v4386 = vunpack.c.l.b16 %v3267
        %v4387 = vunpack.c.h.b16 %v3267
        %v4388 = vunpack.c.l.b16 %v3268
        %v4389 = vunpack.c.h.b16 %v3268
        %v4390 = vunpack.c.l.b16 %v3269
        %v4391 = vunpack.c.h.b16 %v3269
        %v4392 = vunpack.c.l.b16 %v3270
        %v4393 = vunpack.c.h.b16 %v3270
        %v4394 = vunpack.c.l.b16 %v3271
        %v4395 = vunpack.c.h.b16 %v3271
        %v4396 = vunpack.c.l.b16 %v3272
        %v4397 = vunpack.c.h.b16 %v3272
        %v4398 = vunpack.c.l.b16 %v3273
        %v4399 = vunpack.c.h.b16 %v3273
        %v4400 = vunpack.c.l.b16 %v3274
        %v4401 = vunpack.c.h.b16 %v3274
        %v4402 = vunpack.c.l.b16 %v3275
        %v4403 = vunpack.c.h.b16 %v3275
        %v4404 = vunpack.c.l.b16 %v3276
        %v4405 = vunpack.c.h.b16 %v3276
        %v4406 = vunpack.c.l.b16 %v3277
        %v4407 = vunpack.c.h.b16 %v3277
        %v4408 = vunpack.c.l.b16 %v3278
        %v4409 = vunpack.c.h.b16 %v3278
        %v4410 = vunpack.c.l.b16 %v3279
        %v4411 = vunpack.c.h.b16 %v3279
        %v4412 = vunpack.c.l.b16 %v3280
        %v4413 = vunpack.c.h.b16 %v3280
        %v4414 = vunpack.c.l.b16 %v3281
        %v4415 = vunpack.c.h.b16 %v3281
        %v4416 = vunpack.c.l.b16 %v3282
        %v4417 = vunpack.c.h.b16 %v3282
        %v4418 = vunpack.c.l.b16 %v3283
        %v4419 = vunpack.c.h.b16 %v3283
        %v4420 = vunpack.c.l.b16 %v3284
        %v4421 = vunpack.c.h.b16 %v3284
        %v4422 = vunpack.c.l.b16 %v3285
        %v4423 = vunpack.c.h.b16 %v3285
        %v4424 = vunpack.c.l.b16 %v3286
        %v4425 = vunpack.c.h.b16 %v3286
        %v4426 = vunpack.c.l.b16 %v3287
        %v4427 = vunpack.c.h.b16 %v3287
        %v4428 = vunpack.c.l.b16 %v3288
        %v4429 = vunpack.c.h.b16 %v3288
        %v4430 = vunpack.c.l.b16 %v3289
        %v4431 = vunpack.c.h.b16 %v3289
        %v4432 = vunpack.c.l.b16 %v3290
        %v4433 = vunpack.c.h.b16 %v3290
        %v4434 = vunpack.c.l.b16 %v3291
        %v4435 = vunpack.c.h.b16 %v3291
        %v4436 = vunpack.c.l.b16 %v3292
        %v4437 = vunpack.c.h.b16 %v3292
        %v4438 = vunpack.c.l.b16 %v3293
        %v4439 = vunpack.c.h.b16 %v3293
        %v4440 = vunpack.c.l.b16 %v3294
        %v4441 = vunpack.c.h.b16 %v3294
        %v4442 = vunpack.c.l.b16 %v3295
        %v4443 = vunpack.c.h.b16 %v3295
        %v4444 = vunpack.c.l.b16 %v3296
        %v4445 = vunpack.c.h.b16 %v3296
        %v4446 = vunpack.c.l.b16 %v3297
        %v4447 = vunpack.c.h.b16 %v3297
        %v4448 = vunpack.c.l.b16 %v3298
        %v4449 = vunpack.c.h.b16 %v3298
        %v4450 = vunpack.c.l.b16 %v3299
        %v4451 = vunpack.c.h.b16 %v3299
        %v4452 = vunpack.c.l.b16 %v3300
        %v4453 = vunpack.c.h.b16 %v3300
        %v4454 = vunpack.c.l.b16 %v3301
        %v4455 = vunpack.c.h.b16 %v3301
        %v4456 = vunpack.c.l.b16 %v3302
        %v4457 = vunpack.c.h.b16 %v3302
        %v4458 = vunpack.c.l.b16 %v3303
        %v4459 = vunpack.c.h.b16 %v3303
        %v4460 = vunpack.c.l.b16 %v3304
        %v4461 = vunpack.c.h.b16 %v3304
        %v4462 = vunpack.c.l.b16 %v3305
        %v4463 = vunpack.c.h.b16 %v3305
        %v4464 = vunpack.c.l.b16 %v3306
        %v4465 = vunpack.c.h.b16 %v3306
        %v4466 = vunpack.c.l.b16 %v3307
        %v4467 = vunpack.c.h.b16 %v3307
        %v4468 = vunpack.c.l.b16 %v3308
        %v4469 = vunpack.c.h.b16 %v3308
        %v4470 = vunpack.c.l.b16 %v3309
        %v4471 = vunpack.c.h.b16 %v3309
        %v4472 = vunpack.c.l.b16 %v3310
        %v4473 = vunpack.c.h.b16 %v3310
        %v4474 = vunpack.c.l.b16 %v3311
        %v4475 = vunpack.c.h.b16 %v3311
        %v4476 = vunpack.c.l.b16 %v3312
        %v4477 = vunpack.c.h.b16 %v3312
        %v4478 = vunpack.c.l.b16 %v3313
        %v4479 = vunpack.c.h.b16 %v3313
        %v4480 = vunpack.c.l.b16 %v3314
        %v4481 = vunpack.c.h.b16 %v3314
        %v4482 = vunpack.c.l.b16 %v3315
        %v4483 = vunpack.c.h.b16 %v3315
        %v4484 = vunpack.c.l.b16 %v3316
        %v4485 = vunpack.c.h.b16 %v3316
        %v4486 = vunpack.c.l.b16 %v3317
        %v4487 = vunpack.c.h.b16 %v3317
        %v4488 = vunpack.c.l.b16 %v3318
        %v4489 = vunpack.c.h.b16 %v3318
        %v4490 = vunpack.c.l.b16 %v3319
        %v4491 = vunpack.c.h.b16 %v3319
        %v4492 = vunpack.c.l.b16 %v3320
        %v4493 = vunpack.c.h.b16 %v3320
        %v4494 = vunpack.c.l.b16 %v3321
        %v4495 = vunpack.c.h.b16 %v3321
        %v4496 = vunpack.c.l.b16 %v3322
        %v4497 = vunpack.c.h.b16 %v3322
        %v4498 = vunpack.c.l.b16 %v3323
        %v4499 = vunpack.c.h.b16 %v3323
        %v4500 = vunpack.c.l.b16 %v3324
        %v4501 = vunpack.c.h.b16 %v3324
        %v4502 = vunpack.c.l.b16 %v3325
        %v4503 = vunpack.c.h.b16 %v3325
        %v4504 = vunpack.c.l.b16 %v3326
        %v4505 = vunpack.c.h.b16 %v3326
        %v4506 = vunpack.c.l.b16 %v3327
        %v4507 = vunpack.c.h.b16 %v3327
        %v4508 = vunpack.c.l.b16 %v3328
        %v4509 = vunpack.c.h.b16 %v3328
        %v4510 = vunpack.c.l.b16 %v3329
        %v4511 = vunpack.c.h.b16 %v3329
        %v4512 = vunpack.c.l.b16 %v3330
        %v4513 = vunpack.c.h.b16 %v3330
        %v4514 = vunpack.c.l.b16 %v3331
        %v4515 = vunpack.c.h.b16 %v3331
        %v4516 = vunpack.c.l.b16 %v3332
        %v4517 = vunpack.c.h.b16 %v3332
        %v4518 = vunpack.c.l.b16 %v3333
        %v4519 = vunpack.c.h.b16 %v3333
        %v4520 = vunpack.c.l.b16 %v3334
        %v4521 = vunpack.c.h.b16 %v3334
        %v4522 = vunpack.c.l.b16 %v3335
        %v4523 = vunpack.c.h.b16 %v3335
        %v4524 = vunpack.c.l.b16 %v3336
        %v4525 = vunpack.c.h.b16 %v3336
        %v4526 = vunpack.c.l.b16 %v3337
        %v4527 = vunpack.c.h.b16 %v3337
        %v4528 = vunpack.c.l.b16 %v3338
        %v4529 = vunpack.c.h.b16 %v3338
        %v4530 = vunpack.c.l.b16 %v3339
        %v4531 = vunpack.c.h.b16 %v3339
        %v4532 = vunpack.c.l.b16 %v3340
        %v4533 = vunpack.c.h.b16 %v3340
        %v4534 = vunpack.c.l.b16 %v3341
        %v4535 = vunpack.c.h.b16 %v3341
        %v4536 = vunpack.c.l.b16 %v3342
        %v4537 = vunpack.c.h.b16 %v3342
        %v4538 = vunpack.c.l.b16 %v3343
        %v4539 = vunpack.c.h.b16 %v3343
        %v4540 = vunpack.c.l.b16 %v3344
        %v4541 = vunpack.c.h.b16 %v3344
        %v4542 = vunpack.c.l.b16 %v3345
        %v4543 = vunpack.c.h.b16 %v3345
        %v4544 = vunpack.c.l.b16 %v3346
        %v4545 = vunpack.c.h.b16 %v3346
        %v4546 = vunpack.c.l.b16 %v3347
        %v4547 = vunpack.c.h.b16 %v3347
        %v4548 = vunpack.c.l.b16 %v3348
        %v4549 = vunpack.c.h.b16 %v3348
        %v4550 = vunpack.c.l.b16 %v3349
        %v4551 = vunpack.c.h.b16 %v3349
        %v4552 = vunpack.c.l.b16 %v3350
        %v4553 = vunpack.c.h.b16 %v3350
        %v4554 = vunpack.c.l.b16 %v3351
        %v4555 = vunpack.c.h.b16 %v3351
        %v4556 = vunpack.c.l.b16 %v3352
        %v4557 = vunpack.c.h.b16 %v3352
        %v4558 = vunpack.c.l.b16 %v3353
        %v4559 = vunpack.c.h.b16 %v3353
        %v4560 = vunpack.c.l.b16 %v3354
        %v4561 = vunpack.c.h.b16 %v3354
        %v4562 = vunpack.c.l.b16 %v3355
        %v4563 = vunpack.c.h.b16 %v3355
        %v4564 = vunpack.c.l.b16 %v3356
        %v4565 = vunpack.c.h.b16 %v3356
        %v4566 = vunpack.c.l.b16 %v3357
        %v4567 = vunpack.c.h.b16 %v3357
        %v4568 = vunpack.c.l.b16 %v3358
        %v4569 = vunpack.c.h.b16 %v3358
        %v4570 = vunpack.c.l.b16 %v3359
        %v4571 = vunpack.c.h.b16 %v3359
        %v4572 = vunpack.c.l.b16 %v3360
        %v4573 = vunpack.c.h.b16 %v3360
        %v4574 = vunpack.c.l.b16 %v3361
        %v4575 = vunpack.c.h.b16 %v3361
        %v4576 = vunpack.c.l.b16 %v3362
        %v4577 = vunpack.c.h.b16 %v3362
        %v4578 = vunpack.c.l.b16 %v3363
        %v4579 = vunpack.c.h.b16 %v3363
        %v4580 = vunpack.c.l.b16 %v3364
        %v4581 = vunpack.c.h.b16 %v3364
        %v4582 = vunpack.c.l.b16 %v3365
        %v4583 = vunpack.c.h.b16 %v3365
        %v4584 = vunpack.c.l.b16 %v3366
        %v4585 = vunpack.c.h.b16 %v3366
        %v4586 = vunpack.c.l.b16 %v3367
        %v4587 = vunpack.c.h.b16 %v3367
        %v4588 = vunpack.c.l.b16 %v3368
        %v4589 = vunpack.c.h.b16 %v3368
        %v4590 = vunpack.c.l.b16 %v3369
        %v4591 = vunpack.c.h.b16 %v3369
        %v4592 = vunpack.c.l.b16 %v3370
        %v4593 = vunpack.c.h.b16 %v3370
        %v4594 = vunpack.c.l.b16 %v3371
        %v4595 = vunpack.c.h.b16 %v3371
        %v4596 = vunpack.c.l.b16 %v3372
        %v4597 = vunpack.c.h.b16 %v3372
        %v4598 = vunpack.c.l.b16 %v3373
        %v4599 = vunpack.c.h.b16 %v3373
        %v4600 = vunpack.c.l.b16 %v3374
        %v4601 = vunpack.c.h.b16 %v3374
        %v4602 = vunpack.c.l.b16 %v3375
        %v4603 = vunpack.c.h.b16 %v3375
        %v4604 = vunpack.c.l.b16 %v3376
        %v4605 = vunpack.c.h.b16 %v3376
        %v4606 = vunpack.c.l.b16 %v3377
        %v4607 = vunpack.c.h.b16 %v3377
        %v4608 = vunpack.c.l.b16 %v3378
        %v4609 = vunpack.c.h.b16 %v3378
        %v4610 = vunpack.c.l.b16 %v3379
        %v4611 = vunpack.c.h.b16 %v3379
        %v4612 = vunpack.c.l.b16 %v3380
        %v4613 = vunpack.c.h.b16 %v3380
        %v4614 = vunpack.c.l.b16 %v3381
        %v4615 = vunpack.c.h.b16 %v3381
        %v4616 = vunpack.c.l.b16 %v3382
        %v4617 = vunpack.c.h.b16 %v3382
        %v4618 = vunpack.c.l.b16 %v3383
        %v4619 = vunpack.c.h.b16 %v3383
        %v4620 = vunpack.c.l.b16 %v3384
        %v4621 = vunpack.c.h.b16 %v3384
        %v4622 = vunpack.c.l.b16 %v3385
        %v4623 = vunpack.c.h.b16 %v3385
        %v4624 = vunpack.c.l.b16 %v3386
        %v4625 = vunpack.c.h.b16 %v3386
        %v4626 = vunpack.c.l.b16 %v3387
        %v4627 = vunpack.c.h.b16 %v3387
        %v4628 = vunpack.c.l.b16 %v3388
        %v4629 = vunpack.c.h.b16 %v3388
        %v4630 = vunpack.c.l.b16 %v3389
        %v4631 = vunpack.c.h.b16 %v3389
        %v4632 = vunpack.c.l.b16 %v3390
        %v4633 = vunpack.c.h.b16 %v3390
        %v4634 = vunpack.c.l.b16 %v3391
        %v4635 = vunpack.c.h.b16 %v3391
        %v4636 = vunpack.c.l.b16 %v3392
        %v4637 = vunpack.c.h.b16 %v3392
        %v4638 = vunpack.c.l.b16 %v3393
        %v4639 = vunpack.c.h.b16 %v3393
        %v4640 = vunpack.c.l.b16 %v3394
        %v4641 = vunpack.c.h.b16 %v3394
        %v4642 = vunpack.c.l.b16 %v3395
        %v4643 = vunpack.c.h.b16 %v3395
        %v4644 = vunpack.c.l.b16 %v3396
        %v4645 = vunpack.c.h.b16 %v3396
        %v4646 = vunpack.c.l.b16 %v3397
        %v4647 = vunpack.c.h.b16 %v3397
        %v4648 = vunpack.c.l.b16 %v3398
        %v4649 = vunpack.c.h.b16 %v3398
        %v4650 = vunpack.c.l.b16 %v3399
        %v4651 = vunpack.c.h.b16 %v3399
        %v4652 = vunpack.c.l.b16 %v3400
        %v4653 = vunpack.c.h.b16 %v3400
        %v4654 = vunpack.c.l.b16 %v3401
        %v4655 = vunpack.c.h.b16 %v3401
        %v4656 = vunpack.c.l.b16 %v3402
        %v4657 = vunpack.c.h.b16 %v3402
        %v4658 = vunpack.c.l.b16 %v3403
        %v4659 = vunpack.c.h.b16 %v3403
        %v4660 = vunpack.c.l.b16 %v3404
        %v4661 = vunpack.c.h.b16 %v3404
        %v4662 = vunpack.c.l.b16 %v3405
        %v4663 = vunpack.c.h.b16 %v3405
        %v4664 = vunpack.c.l.b16 %v3406
        %v4665 = vunpack.c.h.b16 %v3406
        %v4666 = vunpack.c.l.b16 %v3407
        %v4667 = vunpack.c.h.b16 %v3407
        %v4668 = vunpack.c.l.b16 %v3408
        %v4669 = vunpack.c.h.b16 %v3408
        %v4670 = vunpack.c.l.b16 %v3409
        %v4671 = vunpack.c.h.b16 %v3409
        %v4672 = vunpack.c.l.b16 %v3410
        %v4673 = vunpack.c.h.b16 %v3410
        %v4674 = vunpack.c.l.b16 %v3411
        %v4675 = vunpack.c.h.b16 %v3411
        %v4676 = vunpack.c.l.b16 %v3412
        %v4677 = vunpack.c.h.b16 %v3412
        %v4678 = vunpack.c.l.b16 %v3413
        %v4679 = vunpack.c.h.b16 %v3413
        %v4680 = vunpack.c.l.b16 %v3414
        %v4681 = vunpack.c.h.b16 %v3414
        %v4682 = vunpack.c.l.b16 %v3415
        %v4683 = vunpack.c.h.b16 %v3415
        %v4684 = vunpack.c.l.b16 %v3416
        %v4685 = vunpack.c.h.b16 %v3416
        %v4686 = vunpack.c.l.b16 %v3417
        %v4687 = vunpack.c.h.b16 %v3417
        %v4688 = vunpack.c.l.b16 %v3418
        %v4689 = vunpack.c.h.b16 %v3418
        %v4690 = vunpack.c.l.b16 %v3419
        %v4691 = vunpack.c.h.b16 %v3419
        %v4692 = vunpack.c.l.b16 %v3420
        %v4693 = vunpack.c.h.b16 %v3420
        %v4694 = vunpack.c.l.b16 %v3421
        %v4695 = vunpack.c.h.b16 %v3421
        %v4696 = vunpack.c.l.b16 %v3422
        %v4697 = vunpack.c.h.b16 %v3422
        %v4698 = vunpack.c.l.b16 %v3423
        %v4699 = vunpack.c.h.b16 %v3423
        %v4700 = vunpack.c.l.b16 %v3424
        %v4701 = vunpack.c.h.b16 %v3424
        %v4702 = vunpack.c.l.b16 %v3425
        %v4703 = vunpack.c.h.b16 %v3425
        %v4704 = vunpack.c.l.b16 %v3426
        %v4705 = vunpack.c.h.b16 %v3426
        %v4706 = vunpack.c.l.b16 %v3427
        %v4707 = vunpack.c.h.b16 %v3427
        %v4708 = vunpack.c.l.b16 %v3428
        %v4709 = vunpack.c.h.b16 %v3428
        %v4710 = vunpack.c.l.b16 %v3429
        %v4711 = vunpack.c.h.b16 %v3429
        %v4712 = vunpack.c.l.b16 %v3430
        %v4713 = vunpack.c.h.b16 %v3430
        %v4714 = vunpack.c.l.b16 %v3431
        %v4715 = vunpack.c.h.b16 %v3431
        %v4716 = vunpack.c.l.b16 %v3432
        %v4717 = vunpack.c.h.b16 %v3432
        %v4718 = vunpack.c.l.b16 %v3433
        %v4719 = vunpack.c.h.b16 %v3433
        %v4720 = vunpack.c.l.b16 %v3434
        %v4721 = vunpack.c.h.b16 %v3434
        %v4722 = vunpack.c.l.b16 %v3435
        %v4723 = vunpack.c.h.b16 %v3435
        %v4724 = vunpack.c.l.b16 %v3436
        %v4725 = vunpack.c.h.b16 %v3436
        %v4726 = vunpack.c.l.b16 %v3437
        %v4727 = vunpack.c.h.b16 %v3437
        %v4728 = vunpack.c.l.b16 %v3438
        %v4729 = vunpack.c.h.b16 %v3438
        %v4730 = vunpack.c.l.b16 %v3439
        %v4731 = vunpack.c.h.b16 %v3439
        %v4732 = vunpack.c.l.b16 %v3440
        %v4733 = vunpack.c.h.b16 %v3440
        %v4734 = vunpack.c.l.b16 %v3441
        %v4735 = vunpack.c.h.b16 %v3441
        %v4736 = vunpack.c.l.b16 %v3442
        %v4737 = vunpack.c.h.b16 %v3442
        %v4738 = vunpack.c.l.b16 %v3443
        %v4739 = vunpack.c.h.b16 %v3443
        %v4740 = vunpack.c.l.b16 %v3444
        %v4741 = vunpack.c.h.b16 %v3444
        %v4742 = vunpack.c.l.b16 %v3445
        %v4743 = vunpack.c.h.b16 %v3445
        %v4744 = vunpack.c.l.b16 %v3446
        %v4745 = vunpack.c.h.b16 %v3446
        %v4746 = vunpack.c.l.b16 %v3447
        %v4747 = vunpack.c.h.b16 %v3447
        %v4748 = vunpack.c.l.b16 %v3448
        %v4749 = vunpack.c.h.b16 %v3448
        %v4750 = vunpack.c.l.b16 %v3449
        %v4751 = vunpack.c.h.b16 %v3449
        %v4752 = vunpack.c.l.b16 %v3450
        %v4753 = vunpack.c.h.b16 %v3450
        %v4754 = vunpack.c.l.b16 %v3451
        %v4755 = vunpack.c.h.b16 %v3451
        %v4756 = vunpack.c.l.b16 %v3452
        %v4757 = vunpack.c.h.b16 %v3452
        %v4758 = vunpack.c.l.b16 %v3453
        %v4759 = vunpack.c.h.b16 %v3453
        %v4760 = vunpack.c.l.b16 %v3454
        %v4761 = vunpack.c.h.b16 %v3454
        %v4762 = vunpack.c.l.b16 %v3455
        %v4763 = vunpack.c.h.b16 %v3455
        %v4764 = vunpack.c.l.b16 %v3456
        %v4765 = vunpack.c.h.b16 %v3456
        %v4766 = vunpack.c.l.b16 %v3457
        %v4767 = vunpack.c.h.b16 %v3457
        %v4768 = vunpack.c.l.b16 %v3458
        %v4769 = vunpack.c.h.b16 %v3458
        %v4770 = vunpack.c.l.b16 %v3459
        %v4771 = vunpack.c.h.b16 %v3459
        %v4772 = vunpack.c.l.b16 %v3460
        %v4773 = vunpack.c.h.b16 %v3460
        %v4774 = vunpack.c.l.b16 %v3461
        %v4775 = vunpack.c.h.b16 %v3461
        %v4776 = vunpack.c.l.b16 %v3462
        %v4777 = vunpack.c.h.b16 %v3462
        %v4778 = vunpack.c.l.b16 %v3463
        %v4779 = vunpack.c.h.b16 %v3463
        %v4780 = vunpack.c.l.b16 %v3464
        %v4781 = vunpack.c.h.b16 %v3464
        %v4782 = vunpack.c.l.b16 %v3465
        %v4783 = vunpack.c.h.b16 %v3465
        %v4784 = vunpack.c.l.b16 %v3466
        %v4785 = vunpack.c.h.b16 %v3466
        %v4786 = vunpack.c.l.b16 %v3467
        %v4787 = vunpack.c.h.b16 %v3467
        %v4788 = vunpack.c.l.b16 %v3468
        %v4789 = vunpack.c.h.b16 %v3468
        %v4790 = vunpack.c.l.b16 %v3469
        %v4791 = vunpack.c.h.b16 %v3469
        %v4792 = vunpack.c.l.b16 %v3470
        %v4793 = vunpack.c.h.b16 %v3470
        %v4794 = vunpack.c.l.b16 %v3471
        %v4795 = vunpack.c.h.b16 %v3471
        %v4796 = vunpack.c.l.b16 %v3472
        %v4797 = vunpack.c.h.b16 %v3472
        %v4798 = vunpack.c.l.b16 %v3473
        %v4799 = vunpack.c.h.b16 %v3473
        %v4800 = vunpack.c.l.b16 %v3474
        %v4801 = vunpack.c.h.b16 %v3474
        %v4802 = vunpack.c.l.b16 %v3475
        %v4803 = vunpack.c.h.b16 %v3475
        %v4804 = vunpack.c.l.b16 %v3476
        %v4805 = vunpack.c.h.b16 %v3476
        %v4806 = vunpack.c.l.b16 %v3477
        %v4807 = vunpack.c.h.b16 %v3477
        %v4808 = vunpack.c.l.b16 %v3478
        %v4809 = vunpack.c.h.b16 %v3478
        %v4810 = vunpack.c.l.b16 %v3479
        %v4811 = vunpack.c.h.b16 %v3479
        %v4812 = vunpack.c.l.b16 %v3480
        %v4813 = vunpack.c.h.b16 %v3480
        %v4814 = vunpack.c.l.b16 %v3481
        %v4815 = vunpack.c.h.b16 %v3481
        %v4816 = vunpack.c.l.b16 %v3482
        %v4817 = vunpack.c.h.b16 %v3482
        %v4818 = vunpack.c.l.b16 %v3483
        %v4819 = vunpack.c.h.b16 %v3483
        %v4820 = vunpack.c.l.b16 %v3484
        %v4821 = vunpack.c.h.b16 %v3484
        %v4822 = vunpack.c.l.b16 %v3485
        %v4823 = vunpack.c.h.b16 %v3485
        %v4824 = vunpack.c.l.b16 %v3486
        %v4825 = vunpack.c.h.b16 %v3486
        %v4826 = vunpack.c.l.b16 %v3487
        %v4827 = vunpack.c.h.b16 %v3487
        %v4828 = vunpack.c.l.b16 %v3488
        %v4829 = vunpack.c.h.b16 %v3488
        %v4830 = vunpack.c.l.b16 %v3489
        %v4831 = vunpack.c.h.b16 %v3489
        %v4832 = vunpack.c.l.b16 %v3490
        %v4833 = vunpack.c.h.b16 %v3490
        %v4834 = vunpack.c.l.b16 %v3491
        %v4835 = vunpack.c.h.b16 %v3491
        %v4836 = vunpack.c.l.b16 %v3492
        %v4837 = vunpack.c.h.b16 %v3492
        %v4838 = vunpack.c.l.b16 %v3493
        %v4839 = vunpack.c.h.b16 %v3493
        %v4840 = vunpack.c.l.b16 %v3494
        %v4841 = vunpack.c.h.b16 %v3494
        %v4842 = vunpack.c.l.b16 %v3495
        %v4843 = vunpack.c.h.b16 %v3495
        %v4844 = vunpack.c.l.b16 %v3496
        %v4845 = vunpack.c.h.b16 %v3496
        %v4846 = vunpack.c.l.b16 %v3497
        %v4847 = vunpack.c.h.b16 %v3497
        %v4848 = vunpack.c.l.b16 %v3498
        %v4849 = vunpack.c.h.b16 %v3498
        %v4850 = vunpack.c.l.b16 %v3499
        %v4851 = vunpack.c.h.b16 %v3499
        %v4852 = vunpack.c.l.b16 %v3500
        %v4853 = vunpack.c.h.b16 %v3500
        %v4854 = vunpack.c.l.b16 %v3501
        %v4855 = vunpack.c.h.b16 %v3501
        %v4856 = vunpack.c.l.b16 %v3502
        %v4857 = vunpack.c.h.b16 %v3502
        %v4858 = vunpack.c.l.b16 %v3503
        %v4859 = vunpack.c.h.b16 %v3503
        %v4860 = vunpack.c.l.b16 %v3504
        %v4861 = vunpack.c.h.b16 %v3504
        %v4862 = vunpack.c.l.b16 %v3505
        %v4863 = vunpack.c.h.b16 %v3505
        %v4864 = vunpack.c.l.b16 %v3506
        %v4865 = vunpack.c.h.b16 %v3506
        %v4866 = vunpack.c.l.b16 %v3507
        %v4867 = vunpack.c.h.b16 %v3507
        %v4868 = vunpack.c.l.b16 %v3508
        %v4869 = vunpack.c.h.b16 %v3508
        %v4870 = vunpack.c.l.b16 %v3509
        %v4871 = vunpack.c.h.b16 %v3509
        %v4872 = vunpack.c.l.b16 %v3510
        %v4873 = vunpack.c.h.b16 %v3510
        %v4874 = vunpack.c.l.b16 %v3511
        %v4875 = vunpack.c.h.b16 %v3511
        %v4876 = vunpack.c.l.b16 %v3512
        %v4877 = vunpack.c.h.b16 %v3512
        %v4878 = vunpack.c.l.b16 %v3513
        %v4879 = vunpack.c.h.b16 %v3513
        %v4880 = vunpack.c.l.b16 %v3514
        %v4881 = vunpack.c.h.b16 %v3514
        %v4882 = vunpack.c.l.b16 %v3515
        %v4883 = vunpack.c.h.b16 %v3515
        %v4884 = vunpack.c.l.b16 %v3516
        %v4885 = vunpack.c.h.b16 %v3516
        %v4886 = vunpack.c.l.b16 %v3517
        %v4887 = vunpack.c.h.b16 %v3517
        %v4888 = vunpack.c.l.b16 %v3518
        %v4889 = vunpack.c.h.b16 %v3518
        %v4890 = vunpack.c.l.b16 %v3519
        %v4891 = vunpack.c.h.b16 %v3519
        %v4892 = vunpack.c.l.b16 %v3520
        %v4893 = vunpack.c.h.b16 %v3520
        %v4894 = vunpack.c.l.b16 %v3521
        %v4895 = vunpack.c.h.b16 %v3521
        %v4896 = vunpack.c.l.b16 %v3522
        %v4897 = vunpack.c.h.b16 %v3522
        %v4898 = vunpack.c.l.b16 %v3523
        %v4899 = vunpack.c.h.b16 %v3523
        %v4900 = vunpack.c.l.b16 %v3524
        %v4901 = vunpack.c.h.b16 %v3524
        %v4902 = vunpack.c.l.b16 %v3525
        %v4903 = vunpack.c.h.b16 %v3525
        %v4904 = vunpack.c.l.b16 %v3526
        %v4905 = vunpack.c.h.b16 %v3526
        %v4906 = vunpack.c.l.b16 %v3527
        %v4907 = vunpack.c.h.b16 %v3527
        %v4908 = vunpack.c.l.b16 %v3528
        %v4909 = vunpack.c.h.b16 %v3528
        %v4910 = vunpack.c.l.b16 %v3529
        %v4911 = vunpack.c.h.b16 %v3529
        %v4912 = vunpack.c.l.b16 %v3530
        %v4913 = vunpack.c.h.b16 %v3530
        %v4914 = vunpack.c.l.b16 %v3531
        %v4915 = vunpack.c.h.b16 %v3531
        %v4916 = vunpack.c.l.b16 %v3532
        %v4917 = vunpack.c.h.b16 %v3532
        %v4918 = vunpack.c.l.b16 %v3533
        %v4919 = vunpack.c.h.b16 %v3533
        %v4920 = vunpack.c.l.b16 %v3534
        %v4921 = vunpack.c.h.b16 %v3534
        %v4922 = vunpack.c.l.b16 %v3535
        %v4923 = vunpack.c.h.b16 %v3535
        %v4924 = vunpack.c.l.b16 %v3536
        %v4925 = vunpack.c.h.b16 %v3536
        %v4926 = vunpack.c.l.b16 %v3537
        %v4927 = vunpack.c.h.b16 %v3537
        %v4928 = vunpack.c.l.b16 %v3538
        %v4929 = vunpack.c.h.b16 %v3538
        %v4930 = vunpack.c.l.b16 %v3539
        %v4931 = vunpack.c.h.b16 %v3539
        %v4932 = vunpack.c.l.b16 %v3540
        %v4933 = vunpack.c.h.b16 %v3540
        %v4934 = vunpack.c.l.b16 %v3541
        %v4935 = vunpack.c.h.b16 %v3541
        %v4936 = vunpack.c.l.b16 %v3542
        %v4937 = vunpack.c.h.b16 %v3542
        %v4938 = vunpack.c.l.b16 %v3543
        %v4939 = vunpack.c.h.b16 %v3543
        %v4940 = vunpack.c.l.b16 %v3544
        %v4941 = vunpack.c.h.b16 %v3544
        %v4942 = vunpack.c.l.b16 %v3545
        %v4943 = vunpack.c.h.b16 %v3545
        %v4944 = vunpack.c.l.b16 %v3546
        %v4945 = vunpack.c.h.b16 %v3546
        %v4946 = vunpack.c.l.b16 %v3547
        %v4947 = vunpack.c.h.b16 %v3547
        %v4948 = vunpack.c.l.b16 %v3548
        %v4949 = vunpack.c.h.b16 %v3548
        %v4950 = vunpack.c.l.b16 %v3549
        %v4951 = vunpack.c.h.b16 %v3549
        %v4952 = vunpack.c.l.b16 %v3550
        %v4953 = vunpack.c.h.b16 %v3550
        %v4954 = vunpack.c.l.b16 %v3551
        %v4955 = vunpack.c.h.b16 %v3551
        %v4956 = vunpack.c.l.b16 %v3552
        %v4957 = vunpack.c.h.b16 %v3552
        %v4958 = vunpack.c.l.b16 %v3553
        %v4959 = vunpack.c.h.b16 %v3553
        %v4960 = vunpack.c.l.b16 %v3554
        %v4961 = vunpack.c.h.b16 %v3554
        %v4962 = vunpack.c.l.b16 %v3555
        %v4963 = vunpack.c.h.b16 %v3555
        %v4964 = vunpack.c.l.b16 %v3556
        %v4965 = vunpack.c.h.b16 %v3556
        %v4966 = vunpack.c.l.b16 %v3557
        %v4967 = vunpack.c.h.b16 %v3557
        %v4968 = vunpack.c.l.b16 %v3558
        %v4969 = vunpack.c.h.b16 %v3558
        %v4970 = vunpack.c.l.b16 %v3559
        %v4971 = vunpack.c.h.b16 %v3559
        %v4972 = vunpack.c.l.b16 %v3560
        %v4973 = vunpack.c.h.b16 %v3560
        %v4974 = vunpack.c.l.b16 %v3561
        %v4975 = vunpack.c.h.b16 %v3561
        %v4976 = vunpack.c.l.b16 %v3562
        %v4977 = vunpack.c.h.b16 %v3562
        %v4978 = vunpack.c.l.b16 %v3563
        %v4979 = vunpack.c.h.b16 %v3563
        %v4980 = vunpack.c.l.b16 %v3564
        %v4981 = vunpack.c.h.b16 %v3564
        %v4982 = vunpack.c.l.b16 %v3565
        %v4983 = vunpack.c.h.b16 %v3565
        %v4984 = vunpack.c.l.b16 %v3566
        %v4985 = vunpack.c.h.b16 %v3566
        %v4986 = vunpack.c.l.b16 %v3567
        %v4987 = vunpack.c.h.b16 %v3567
        %v4988 = vunpack.c.l.b16 %v3568
        %v4989 = vunpack.c.h.b16 %v3568
        %v4990 = vunpack.c.l.b16 %v3569
        %v4991 = vunpack.c.h.b16 %v3569
        %v4992 = vunpack.c.l.b16 %v3570
        %v4993 = vunpack.c.h.b16 %v3570
        %v4994 = vunpack.c.l.b16 %v3571
        %v4995 = vunpack.c.h.b16 %v3571
        %v4996 = vunpack.c.l.b16 %v3572
        %v4997 = vunpack.c.h.b16 %v3572
        %v4998 = vunpack.c.l.b16 %v3573
        %v4999 = vunpack.c.h.b16 %v3573
        %v5000 = vunpack.c.l.b16 %v3574
        %v5001 = vunpack.c.h.b16 %v3574
        %v5002 = vunpack.c.l.b16 %v3575
        %v5003 = vunpack.c.h.b16 %v3575
        %v5004 = vunpack.c.l.b16 %v3576
        %v5005 = vunpack.c.h.b16 %v3576
        %v5006 = vunpack.c.l.b16 %v3577
        %v5007 = vunpack.c.h.b16 %v3577
        %v5008 = vunpack.c.l.b16 %v3578
        %v5009 = vunpack.c.h.b16 %v3578
        %v5010 = vunpack.c.l.b16 %v3579
        %v5011 = vunpack.c.h.b16 %v3579
        %v5012 = vunpack.c.l.b16 %v3580
        %v5013 = vunpack.c.h.b16 %v3580
        %v5014 = vunpack.c.l.b16 %v3581
        %v5015 = vunpack.c.h.b16 %v3581
        %v5016 = vunpack.c.l.b16 %v3582
        %v5017 = vunpack.c.h.b16 %v3582
        %v5018 = vunpack.c.l.b16 %v3583
        %v5019 = vunpack.c.h.b16 %v3583
        %v5020 = vunpack.c.l.b16 %v3584
        %v5021 = vunpack.c.h.b16 %v3584
        %v5022 = vunpack.c.l.b16 %v3585
        %v5023 = vunpack.c.h.b16 %v3585
        %v5024 = vunpack.c.l.b16 %v3586
        %v5025 = vunpack.c.h.b16 %v3586
        %v5026 = vunpack.c.l.b16 %v3587
        %v5027 = vunpack.c.h.b16 %v3587
        %v5028 = vunpack.c.l.b16 %v3588
        %v5029 = vunpack.c.h.b16 %v3588
        %v5030 = vunpack.c.l.b16 %v3589
        %v5031 = vunpack.c.h.b16 %v3589
        %v5032 = vunpack.c.l.b16 %v3590
        %v5033 = vunpack.c.h.b16 %v3590
        %v5034 = vunpack.c.l.b16 %v3591
        %v5035 = vunpack.c.h.b16 %v3591
        %v5036 = vunpack.c.l.b16 %v3592
        %v5037 = vunpack.c.h.b16 %v3592
        %v5038 = vunpack.c.l.b16 %v3593
        %v5039 = vunpack.c.h.b16 %v3593
        %v5040 = vunpack.c.l.b16 %v3594
        %v5041 = vunpack.c.h.b16 %v3594
        %v5042 = vunpack.c.l.b16 %v3595
        %v5043 = vunpack.c.h.b16 %v3595
        %v5044 = vunpack.c.l.b16 %v3596
        %v5045 = vunpack.c.h.b16 %v3596
        %v5046 = vunpack.c.l.b16 %v3597
        %v5047 = vunpack.c.h.b16 %v3597
        %v5048 = vunpack.c.l.b16 %v3598
        %v5049 = vunpack.c.h.b16 %v3598
        %v5050 = vunpack.c.l.b16 %v3599
        %v5051 = vunpack.c.h.b16 %v3599
        %v5052 = vunpack.c.l.b16 %v3600
        %v5053 = vunpack.c.h.b16 %v3600
        %v5054 = vunpack.c.l.b16 %v3601
        %v5055 = vunpack.c.h.b16 %v3601
        %v5056 = vunpack.c.l.b16 %v3602
        %v5057 = vunpack.c.h.b16 %v3602
        %v5058 = vunpack.c.l.b16 %v3603
        %v5059 = vunpack.c.h.b16 %v3603
        %v5060 = vunpack.c.l.b16 %v3604
        %v5061 = vunpack.c.h.b16 %v3604
        %v5062 = vunpack.c.l.b16 %v3605
        %v5063 = vunpack.c.h.b16 %v3605
        %v5064 = vunpack.c.l.b16 %v3606
        %v5065 = vunpack.c.h.b16 %v3606
        %v5066 = vunpack.c.l.b16 %v3607
        %v5067 = vunpack.c.h.b16 %v3607
        %v5068 = vunpack.c.l.b16 %v3608
        %v5069 = vunpack.c.h.b16 %v3608
        %v5070 = vunpack.c.l.b16 %v3609
        %v5071 = vunpack.c.h.b16 %v3609
        %v5072 = vunpack.c.l.b16 %v3610
        %v5073 = vunpack.c.h.b16 %v3610
        %v5074 = vunpack.c.l.b16 %v3611
        %v5075 = vunpack.c.h.b16 %v3611
        %v5076 = vunpack.c.l.b16 %v3612
        %v5077 = vunpack.c.h.b16 %v3612
        %v5078 = vunpack.c.l.b16 %v3613
        %v5079 = vunpack.c.h.b16 %v3613
        %v5080 = vunpack.c.l.b16 %v3614
        %v5081 = vunpack.c.h.b16 %v3614
        %v5082 = vunpack.c.l.b16 %v3615
        %v5083 = vunpack.c.h.b16 %v3615
        %v5084 = vunpack.c.l.b16 %v3616
        %v5085 = vunpack.c.h.b16 %v3616
        %v5086 = vunpack.c.l.b16 %v3617
        %v5087 = vunpack.c.h.b16 %v3617
        %v5088 = vunpack.c.l.b16 %v3618
        %v5089 = vunpack.c.h.b16 %v3618
        %v5090 = vunpack.c.l.b16 %v3619
        %v5091 = vunpack.c.h.b16 %v3619
        %v5092 = vunpack.c.l.b16 %v3620
        %v5093 = vunpack.c.h.b16 %v3620
        %v5094 = vunpack.c.l.b16 %v3621
        %v5095 = vunpack.c.h.b16 %v3621
        %v5096 = vunpack.c.l.b16 %v3622
        %v5097 = vunpack.c.h.b16 %v3622
        %v5098 = vunpack.c.l.b16 %v3623
        %v5099 = vunpack.c.h.b16 %v3623
        %v5100 = vunpack.c.l.b16 %v3624
        %v5101 = vunpack.c.h.b16 %v3624
        %v5102 = vunpack.c.l.b16 %v3625
        %v5103 = vunpack.c.h.b16 %v3625
        %v5104 = vunpack.c.l.b16 %v3626
        %v5105 = vunpack.c.h.b16 %v3626
        %v5106 = vunpack.c.l.b16 %v3627
        %v5107 = vunpack.c.h.b16 %v3627
        %v5108 = vunpack.c.l.b16 %v3628
        %v5109 = vunpack.c.h.b16 %v3628
        %v5110 = vunpack.c.l.b16 %v3629
        %v5111 = vunpack.c.h.b16 %v3629
        %v5112 = vunpack.c.l.b16 %v3630
        %v5113 = vunpack.c.h.b16 %v3630
        %v5114 = vunpack.c.l.b16 %v3631
        %v5115 = vunpack.c.h.b16 %v3631
        %v5116 = vunpack.c.l.b16 %v3632
        %v5117 = vunpack.c.h.b16 %v3632
        %v5118 = vunpack.c.l.b16 %v3633
        %v5119 = vunpack.c.h.b16 %v3633
        %v5120 = vunpack.c.l.b16 %v3634
        %v5121 = vunpack.c.h.b16 %v3634
        %v5122 = vunpack.c.l.b16 %v3635
        %v5123 = vunpack.c.h.b16 %v3635
        %v5124 = vunpack.c.l.b16 %v3636
        %v5125 = vunpack.c.h.b16 %v3636
        %v5126 = vunpack.c.l.b16 %v3637
        %v5127 = vunpack.c.h.b16 %v3637
        %v5128 = vunpack.c.l.b16 %v3638
        %v5129 = vunpack.c.h.b16 %v3638
        %v5130 = vunpack.c.l.b16 %v3639
        %v5131 = vunpack.c.h.b16 %v3639
        %v5132 = vunpack.c.l.b16 %v3640
        %v5133 = vunpack.c.h.b16 %v3640
        %v5134 = vunpack.c.l.b16 %v3641
        %v5135 = vunpack.c.h.b16 %v3641
        %v5136 = vunpack.c.l.b16 %v3642
        %v5137 = vunpack.c.h.b16 %v3642
        %v5138 = vunpack.c.l.b16 %v3643
        %v5139 = vunpack.c.h.b16 %v3643
        %v5140 = vunpack.c.l.b16 %v3644
        %v5141 = vunpack.c.h.b16 %v3644
        %v5142 = vunpack.c.l.b16 %v3645
        %v5143 = vunpack.c.h.b16 %v3645
        %v5144 = vunpack.c.l.b16 %v3646
        %v5145 = vunpack.c.h.b16 %v3646
        %v5146 = vunpack.c.l.b16 %v3647
        %v5147 = vunpack.c.h.b16 %v3647
        %v5148 = vunpack.c.l.b16 %v3648
        %v5149 = vunpack.c.h.b16 %v3648
        %v5150 = vunpack.c.l.b16 %v3649
        %v5151 = vunpack.c.h.b16 %v3649
        %v5152 = vunpack.c.l.b16 %v3650
        %v5153 = vunpack.c.h.b16 %v3650
        %v5154 = vunpack.c.l.b16 %v3651
        %v5155 = vunpack.c.h.b16 %v3651
        %v5156 = vunpack.c.l.b16 %v3652
        %v5157 = vunpack.c.h.b16 %v3652
        %v5158 = vunpack.c.l.b16 %v3653
        %v5159 = vunpack.c.h.b16 %v3653
        %v5160 = vunpack.c.l.b16 %v3654
        %v5161 = vunpack.c.h.b16 %v3654
        %v5162 = vunpack.c.l.b16 %v3655
        %v5163 = vunpack.c.h.b16 %v3655
        %v5164 = vunpack.c.l.b16 %v3656
        %v5165 = vunpack.c.h.b16 %v3656
        %v5166 = vunpack.c.l.b16 %v3657
        %v5167 = vunpack.c.h.b16 %v3657
        %v5168 = vunpack.c.l.b16 %v3658
        %v5169 = vunpack.c.h.b16 %v3658
        %v5170 = vunpack.c.l.b16 %v3659
        %v5171 = vunpack.c.h.b16 %v3659
        %v5172 = vunpack.c.l.b16 %v3660
        %v5173 = vunpack.c.h.b16 %v3660
        %v5174 = vunpack.c.l.b16 %v3661
        %v5175 = vunpack.c.h.b16 %v3661
        %v5176 = vunpack.c.l.b16 %v3662
        %v5177 = vunpack.c.h.b16 %v3662
        %v5178 = vunpack.c.l.b16 %v3663
        %v5179 = vunpack.c.h.b16 %v3663
        %v5180 = vunpack.c.l.b16 %v3664
        %v5181 = vunpack.c.h.b16 %v3664
        %v5182 = vunpack.c.l.b16 %v3665
        %v5183 = vunpack.c.h.b16 %v3665
        %v5184 = vunpack.c.l.b16 %v3666
        %v5185 = vunpack.c.h.b16 %v3666
        %v5186 = vunpack.c.l.b16 %v3667
        %v5187 = vunpack.c.h.b16 %v3667
        %v5188 = vunpack.c.l.b16 %v3668
        %v5189 = vunpack.c.h.b16 %v3668
        %v5190 = vunpack.c.l.b16 %v3669
        %v5191 = vunpack.c.h.b16 %v3669
        %v5192 = vunpack.c.l.b16 %v3670
        %v5193 = vunpack.c.h.b16 %v3670
        %v5194 = vunpack.c.l.b16 %v3671
        %v5195 = vunpack.c.h.b16 %v3671
        %v5196 = vunpack.c.l.b16 %v3672
        %v5197 = vunpack.c.h.b16 %v3672
        %v5198 = vunpack.c.l.b16 %v3673
        %v5199 = vunpack.c.h.b16 %v3673
        %v5200 = vunpack.c.l.b16 %v3674
        %v5201 = vunpack.c.h.b16 %v3674
        %v5202 = vunpack.c.l.b16 %v3675
        %v5203 = vunpack.c.h.b16 %v3675
        %v5204 = vunpack.c.l.b16 %v3676
        %v5205 = vunpack.c.h.b16 %v3676
        %v5206 = vunpack.c.l.b16 %v3677
        %v5207 = vunpack.c.h.b16 %v3677
        %v5208 = vunpack.c.l.b16 %v3678
        %v5209 = vunpack.c.h.b16 %v3678
        %v5210 = vunpack.c.l.b16 %v3679
        %v5211 = vunpack.c.h.b16 %v3679
        %v5212 = vunpack.c.l.b16 %v3680
        %v5213 = vunpack.c.h.b16 %v3680
        %v5214 = vunpack.c.l.b16 %v3681
        %v5215 = vunpack.c.h.b16 %v3681
        %v5216 = vunpack.c.l.b16 %v3682
        %v5217 = vunpack.c.h.b16 %v3682
        %v5218 = vunpack.c.l.b16 %v3683
        %v5219 = vunpack.c.h.b16 %v3683
        %v5220 = vunpack.c.l.b16 %v3684
        %v5221 = vunpack.c.h.b16 %v3684
        %v5222 = vunpack.c.l.b16 %v3685
        %v5223 = vunpack.c.h.b16 %v3685
        %v5224 = vunpack.c.l.b16 %v3686
        %v5225 = vunpack.c.h.b16 %v3686
        %v5226 = vunpack.c.l.b16 %v3687
        %v5227 = vunpack.c.h.b16 %v3687
        %v5228 = vunpack.c.l.b16 %v3688
        %v5229 = vunpack.c.h.b16 %v3688
        %v5230 = vunpack.c.l.b16 %v3689
        %v5231 = vunpack.c.h.b16 %v3689
        %v5232 = vunpack.c.l.b16 %v3690
        %v5233 = vunpack.c.h.b16 %v3690
        %v5234 = vunpack.c.l.b16 %v3691
        %v5235 = vunpack.c.h.b16 %v3691
        %v5236 = vunpack.c.l.b16 %v3692
        %v5237 = vunpack.c.h.b16 %v3692
        %v5238 = vunpack.c.l.b16 %v3693
        %v5239 = vunpack.c.h.b16 %v3693
        %v5240 = vunpack.c.l.b16 %v3694
        %v5241 = vunpack.c.h.b16 %v3694
        %v5242 = vunpack.c.l.b16 %v3695
        %v5243 = vunpack.c.h.b16 %v3695
        %v5244 = vunpack.c.l.b16 %v3696
        %v5245 = vunpack.c.h.b16 %v3696
        %v5246 = vunpack.c.l.b16 %v3697
        %v5247 = vunpack.c.h.b16 %v3697
        %v5248 = vunpack.c.l.b16 %v3698
        %v5249 = vunpack.c.h.b16 %v3698
        %v5250 = vunpack.c.l.b16 %v3699
        %v5251 = vunpack.c.h.b16 %v3699
        %v5252 = vunpack.c.l.b16 %v3700
        %v5253 = vunpack.c.h.b16 %v3700
        %v5254 = vunpack.c.l.b16 %v3701
        %v5255 = vunpack.c.h.b16 %v3701
        %v5256 = vunpack.c.l.b16 %v3702
        %v5257 = vunpack.c.h.b16 %v3702
        %v5258 = vunpack.c.l.b16 %v3703
        %v5259 = vunpack.c.h.b16 %v3703
        %v5260 = vunpack.c.l.b16 %v3704
        %v5261 = vunpack.c.h.b16 %v3704
        %v5262 = vunpack.c.l.b16 %v3705
        %v5263 = vunpack.c.h.b16 %v3705
        %v5264 = vunpack.c.l.b16 %v3706
        %v5265 = vunpack.c.h.b16 %v3706
        %v5266 = vunpack.c.l.b16 %v3707
        %v5267 = vunpack.c.h.b16 %v3707
        %v5268 = vunpack.c.l.b16 %v3708
        %v5269 = vunpack.c.h.b16 %v3708
        %v5270 = vunpack.c.l.b16 %v3709
        %v5271 = vunpack.c.h.b16 %v3709
        %v5272 = vunpack.c.l.b16 %v3710
        %v5273 = vunpack.c.h.b16 %v3710
        %v5274 = vunpack.c.l.b16 %v3711
        %v5275 = vunpack.c.h.b16 %v3711
        %v5276 = vunpack.c.l.b16 %v3712
        %v5277 = vunpack.c.h.b16 %v3712
        %v5278 = vunpack.c.l.b16 %v3713
        %v5279 = vunpack.c.h.b16 %v3713
        %v5280 = vunpack.c.l.b16 %v3714
        %v5281 = vunpack.c.h.b16 %v3714
        %v5282 = vunpack.c.l.b16 %v3715
        %v5283 = vunpack.c.h.b16 %v3715
        %v5284 = vunpack.c.l.b16 %v3716
        %v5285 = vunpack.c.h.b16 %v3716
        %v5286 = vunpack.c.l.b16 %v3717
        %v5287 = vunpack.c.h.b16 %v3717
        %v5288 = vunpack.c.l.b16 %v3718
        %v5289 = vunpack.c.h.b16 %v3718
        %v5290 = vunpack.c.l.b16 %v3719
        %v5291 = vunpack.c.h.b16 %v3719
        %v5292 = vunpack.c.l.b16 %v3720
        %v5293 = vunpack.c.h.b16 %v3720
        %v5294 = vunpack.c.l.b16 %v3721
        %v5295 = vunpack.c.h.b16 %v3721
        %v5296 = vunpack.c.l.b16 %v3722
        %v5297 = vunpack.c.h.b16 %v3722
        %v5298 = vunpack.c.l.b16 %v3723
        %v5299 = vunpack.c.h.b16 %v3723
        %v5300 = vunpack.c.l.b16 %v3724
        %v5301 = vunpack.c.h.b16 %v3724
        %v5302 = vunpack.c.l.b16 %v3725
        %v5303 = vunpack.c.h.b16 %v3725
        %v5304 = vpack.c.b16 %v4288, %v4280
        %v5305 = vpack.c.b16 %v4289, %v4281
        %v5306 = vpack.c.b16 %v4290, %v4282
        %v5307 = vpack.c.b16 %v4291, %v4283
        %v5308 = vpack.c.b16 %v4292, %v4284
        %v5309 = vpack.c.b16 %v4293, %v4285
        %v5310 = vpack.c.b16 %v4294, %v4286
        %v5311 = vpack.c.b16 %v4295, %v4287
        %v5312 = vpack.c.b16 %v4304, %v4296
        %v5313 = vpack.c.b16 %v4305, %v4297
        %v5314 = vpack.c.b16 %v4306, %v4298
        %v5315 = vpack.c.b16 %v4307, %v4299
        %v5316 = vpack.c.b16 %v4308, %v4300
        %v5317 = vpack.c.b16 %v4309, %v4301
        %v5318 = vpack.c.b16 %v4310, %v4302
        %v5319 = vpack.c.b16 %v4311, %v4303
        %v5320 = vpack.c.b16 %v4320, %v4312
        %v5321 = vpack.c.b16 %v4321, %v4313
        %v5322 = vpack.c.b16 %v4322, %v4314
        %v5323 = vpack.c.b16 %v4323, %v4315
        %v5324 = vpack.c.b16 %v4324, %v4316
        %v5325 = vpack.c.b16 %v4325, %v4317
        %v5326 = vpack.c.b16 %v4326, %v4318
        %v5327 = vpack.c.b16 %v4327, %v4319
        %v5328 = vpack.c.b16 %v4336, %v4328
        %v5329 = vpack.c.b16 %v4337, %v4329
        %v5330 = vpack.c.b16 %v4338, %v4330
        %v5331 = vpack.c.b16 %v4339, %v4331
        %v5332 = vpack.c.b16 %v4340, %v4332
        %v5333 = vpack.c.b16 %v4341, %v4333
        %v5334 = vpack.c.b16 %v4342, %v4334
        %v5335 = vpack.c.b16 %v4343, %v4335
        %v5336 = vpack.c.b16 %v4352, %v4344
        %v5337 = vpack.c.b16 %v4353, %v4345
        %v5338 = vpack.c.b16 %v4354, %v4346
        %v5339 = vpack.c.b16 %v4355, %v4347
        %v5340 = vpack.c.b16 %v4356, %v4348
        %v5341 = vpack.c.b16 %v4357, %v4349
        %v5342 = vpack.c.b16 %v4358, %v4350
        %v5343 = vpack.c.b16 %v4359, %v4351
        %v5344 = vpack.c.b16 %v4368, %v4360
        %v5345 = vpack.c.b16 %v4369, %v4361
        %v5346 = vpack.c.b16 %v4370, %v4362
        %v5347 = vpack.c.b16 %v4371, %v4363
        %v5348 = vpack.c.b16 %v4372, %v4364
        %v5349 = vpack.c.b16 %v4373, %v4365
        %v5350 = vpack.c.b16 %v4374, %v4366
        %v5351 = vpack.c.b16 %v4375, %v4367
        %v5352 = vpack.c.b16 %v4384, %v4376
        %v5353 = vpack.c.b16 %v4385, %v4377
        %v5354 = vpack.c.b16 %v4386, %v4378
        %v5355 = vpack.c.b16 %v4387, %v4379
        %v5356 = vpack.c.b16 %v4388, %v4380
        %v5357 = vpack.c.b16 %v4389, %v4381
        %v5358 = vpack.c.b16 %v4390, %v4382
        %v5359 = vpack.c.b16 %v4391, %v4383
        %v5360 = vpack.c.b16 %v4400, %v4392
        %v5361 = vpack.c.b16 %v4401, %v4393
        %v5362 = vpack.c.b16 %v4402, %v4394
        %v5363 = vpack.c.b16 %v4403, %v4395
        %v5364 = vpack.c.b16 %v4404, %v4396
        %v5365 = vpack.c.b16 %v4405, %v4397
        %v5366 = vpack.c.b16 %v4406, %v4398
        %v5367 = vpack.c.b16 %v4407, %v4399
        %v5368 = vpack.c.b16 %v4416, %v4408
        %v5369 = vpack.c.b16 %v4417, %v4409
        %v5370 = vpack.c.b16 %v4418, %v4410
        %v5371 = vpack.c.b16 %v4419, %v4411
        %v5372 = vpack.c.b16 %v4420, %v4412
        %v5373 = vpack.c.b16 %v4421, %v4413
        %v5374 = vpack.c.b16 %v4422, %v4414
        %v5375 = vpack.c.b16 %v4423, %v4415
        %v5376 = vpack.c.b16 %v4432, %v4424
        %v5377 = vpack.c.b16 %v4433, %v4425
        %v5378 = vpack.c.b16 %v4434, %v4426
        %v5379 = vpack.c.b16 %v4435, %v4427
        %v5380 = vpack.c.b16 %v4436, %v4428
        %v5381 = vpack.c.b16 %v4437, %v4429
        %v5382 = vpack.c.b16 %v4438, %v4430
        %v5383 = vpack.c.b16 %v4439, %v4431
        %v5384 = vpack.c.b16 %v4448, %v4440
        %v5385 = vpack.c.b16 %v4449, %v4441
        %v5386 = vpack.c.b16 %v4450, %v4442
        %v5387 = vpack.c.b16 %v4451, %v4443
        %v5388 = vpack.c.b16 %v4452, %v4444
        %v5389 = vpack.c.b16 %v4453, %v4445
        %v5390 = vpack.c.b16 %v4454, %v4446
        %v5391 = vpack.c.b16 %v4455, %v4447
        %v5392 = vpack.c.b16 %v4464, %v4456
        %v5393 = vpack.c.b16 %v4465, %v4457
        %v5394 = vpack.c.b16 %v4466, %v4458
        %v5395 = vpack.c.b16 %v4467, %v4459
        %v5396 = vpack.c.b16 %v4468, %v4460
        %v5397 = vpack.c.b16 %v4469, %v4461
        %v5398 = vpack.c.b16 %v4470, %v4462
        %v5399 = vpack.c.b16 %v4471, %v4463
        %v5400 = vpack.c.b16 %v4480, %v4472
        %v5401 = vpack.c.b16 %v4481, %v4473
        %v5402 = vpack.c.b16 %v4482, %v4474
        %v5403 = vpack.c.b16 %v4483, %v4475
        %v5404 = vpack.c.b16 %v4484, %v4476
        %v5405 = vpack.c.b16 %v4485, %v4477
        %v5406 = vpack.c.b16 %v4486, %v4478
        %v5407 = vpack.c.b16 %v4487, %v4479
        %v5408 = vpack.c.b16 %v4496, %v4488
        %v5409 = vpack.c.b16 %v4497, %v4489
        %v5410 = vpack.c.b16 %v4498, %v4490
        %v5411 = vpack.c.b16 %v4499, %v4491
        %v5412 = vpack.c.b16 %v4500, %v4492
        %v5413 = vpack.c.b16 %v4501, %v4493
        %v5414 = vpack.c.b16 %v4502, %v4494
        %v5415 = vpack.c.b16 %v4503, %v4495
        %v5416 = vpack.c.b16 %v4512, %v4504
        %v5417 = vpack.c.b16 %v4513, %v4505
        %v5418 = vpack.c.b16 %v4514, %v4506
        %v5419 = vpack.c.b16 %v4515, %v4507
        %v5420 = vpack.c.b16 %v4516, %v4508
        %v5421 = vpack.c.b16 %v4517, %v4509
        %v5422 = vpack.c.b16 %v4518, %v4510
        %v5423 = vpack.c.b16 %v4519, %v4511
        %v5424 = vpack.c.b16 %v4528, %v4520
        %v5425 = vpack.c.b16 %v4529, %v4521
        %v5426 = vpack.c.b16 %v4530, %v4522
        %v5427 = vpack.c.b16 %v4531, %v4523
        %v5428 = vpack.c.b16 %v4532, %v4524
        %v5429 = vpack.c.b16 %v4533, %v4525
        %v5430 = vpack.c.b16 %v4534, %v4526
        %v5431 = vpack.c.b16 %v4535, %v4527
        %v5432 = vpack.c.b16 %v4544, %v4536
        %v5433 = vpack.c.b16 %v4545, %v4537
        %v5434 = vpack.c.b16 %v4546, %v4538
        %v5435 = vpack.c.b16 %v4547, %v4539
        %v5436 = vpack.c.b16 %v4548, %v4540
        %v5437 = vpack.c.b16 %v4549, %v4541
        %v5438 = vpack.c.b16 %v4550, %v4542
        %v5439 = vpack.c.b16 %v4551, %v4543
        %v5440 = vpack.c.b16 %v4560, %v4552
        %v5441 = vpack.c.b16 %v4561, %v4553
        %v5442 = vpack.c.b16 %v4562, %v4554
        %v5443 = vpack.c.b16 %v4563, %v4555
        %v5444 = vpack.c.b16 %v4564, %v4556
        %v5445 = vpack.c.b16 %v4565, %v4557
        %v5446 = vpack.c.b16 %v4566, %v4558
        %v5447 = vpack.c.b16 %v4567, %v4559
        %v5448 = vpack.c.b16 %v4576, %v4568
        %v5449 = vpack.c.b16 %v4577, %v4569
        %v5450 = vpack.c.b16 %v4578, %v4570
        %v5451 = vpack.c.b16 %v4579, %v4571
        %v5452 = vpack.c.b16 %v4580, %v4572
        %v5453 = vpack.c.b16 %v4581, %v4573
        %v5454 = vpack.c.b16 %v4582, %v4574
        %v5455 = vpack.c.b16 %v4583, %v4575
        %v5456 = vpack.c.b16 %v4592, %v4584
        %v5457 = vpack.c.b16 %v4593, %v4585
        %v5458 = vpack.c.b16 %v4594, %v4586
        %v5459 = vpack.c.b16 %v4595, %v4587
        %v5460 = vpack.c.b16 %v4596, %v4588
        %v5461 = vpack.c.b16 %v4597, %v4589
        %v5462 = vpack.c.b16 %v4598, %v4590
        %v5463 = vpack.c.b16 %v4599, %v4591
        %v5464 = vpack.c.b16 %v4608, %v4600
        %v5465 = vpack.c.b16 %v4609, %v4601
        %v5466 = vpack.c.b16 %v4610, %v4602
        %v5467 = vpack.c.b16 %v4611, %v4603
        %v5468 = vpack.c.b16 %v4612, %v4604
        %v5469 = vpack.c.b16 %v4613, %v4605
        %v5470 = vpack.c.b16 %v4614, %v4606
        %v5471 = vpack.c.b16 %v4615, %v4607
        %v5472 = vpack.c.b16 %v4624, %v4616
        %v5473 = vpack.c.b16 %v4625, %v4617
        %v5474 = vpack.c.b16 %v4626, %v4618
        %v5475 = vpack.c.b16 %v4627, %v4619
        %v5476 = vpack.c.b16 %v4628, %v4620
        %v5477 = vpack.c.b16 %v4629, %v4621
        %v5478 = vpack.c.b16 %v4630, %v4622
        %v5479 = vpack.c.b16 %v4631, %v4623
        %v5480 = vpack.c.b16 %v4640, %v4632
        %v5481 = vpack.c.b16 %v4641, %v4633
        %v5482 = vpack.c.b16 %v4642, %v4634
        %v5483 = vpack.c.b16 %v4643, %v4635
        %v5484 = vpack.c.b16 %v4644, %v4636
        %v5485 = vpack.c.b16 %v4645, %v4637
        %v5486 = vpack.c.b16 %v4646, %v4638
        %v5487 = vpack.c.b16 %v4647, %v4639
        %v5488 = vpack.c.b16 %v4656, %v4648
        %v5489 = vpack.c.b16 %v4657, %v4649
        %v5490 = vpack.c.b16 %v4658, %v4650
        %v5491 = vpack.c.b16 %v4659, %v4651
        %v5492 = vpack.c.b16 %v4660, %v4652
        %v5493 = vpack.c.b16 %v4661, %v4653
        %v5494 = vpack.c.b16 %v4662, %v4654
        %v5495 = vpack.c.b16 %v4663, %v4655
        %v5496 = vpack.c.b16 %v4672, %v4664
        %v5497 = vpack.c.b16 %v4673, %v4665
        %v5498 = vpack.c.b16 %v4674, %v4666
        %v5499 = vpack.c.b16 %v4675, %v4667
        %v5500 = vpack.c.b16 %v4676, %v4668
        %v5501 = vpack.c.b16 %v4677, %v4669
        %v5502 = vpack.c.b16 %v4678, %v4670
        %v5503 = vpack.c.b16 %v4679, %v4671
        %v5504 = vpack.c.b16 %v4688, %v4680
        %v5505 = vpack.c.b16 %v4689, %v4681
        %v5506 = vpack.c.b16 %v4690, %v4682
        %v5507 = vpack.c.b16 %v4691, %v4683
        %v5508 = vpack.c.b16 %v4692, %v4684
        %v5509 = vpack.c.b16 %v4693, %v4685
        %v5510 = vpack.c.b16 %v4694, %v4686
        %v5511 = vpack.c.b16 %v4695, %v4687
        %v5512 = vpack.c.b16 %v4704, %v4696
        %v5513 = vpack.c.b16 %v4705, %v4697
        %v5514 = vpack.c.b16 %v4706, %v4698
        %v5515 = vpack.c.b16 %v4707, %v4699
        %v5516 = vpack.c.b16 %v4708, %v4700
        %v5517 = vpack.c.b16 %v4709, %v4701
        %v5518 = vpack.c.b16 %v4710, %v4702
        %v5519 = vpack.c.b16 %v4711, %v4703
        %v5520 = vpack.c.b16 %v4720, %v4712
        %v5521 = vpack.c.b16 %v4721, %v4713
        %v5522 = vpack.c.b16 %v4722, %v4714
        %v5523 = vpack.c.b16 %v4723, %v4715
        %v5524 = vpack.c.b16 %v4724, %v4716
        %v5525 = vpack.c.b16 %v4725, %v4717
        %v5526 = vpack.c.b16 %v4726, %v4718
        %v5527 = vpack.c.b16 %v4727, %v4719
        %v5528 = vpack.c.b16 %v4736, %v4728
        %v5529 = vpack.c.b16 %v4737, %v4729
        %v5530 = vpack.c.b16 %v4738, %v4730
        %v5531 = vpack.c.b16 %v4739, %v4731
        %v5532 = vpack.c.b16 %v4740, %v4732
        %v5533 = vpack.c.b16 %v4741, %v4733
        %v5534 = vpack.c.b16 %v4742, %v4734
        %v5535 = vpack.c.b16 %v4743, %v4735
        %v5536 = vpack.c.b16 %v4752, %v4744
        %v5537 = vpack.c.b16 %v4753, %v4745
        %v5538 = vpack.c.b16 %v4754, %v4746
        %v5539 = vpack.c.b16 %v4755, %v4747
        %v5540 = vpack.c.b16 %v4756, %v4748
        %v5541 = vpack.c.b16 %v4757, %v4749
        %v5542 = vpack.c.b16 %v4758, %v4750
        %v5543 = vpack.c.b16 %v4759, %v4751
        %v5544 = vpack.c.b16 %v4768, %v4760
        %v5545 = vpack.c.b16 %v4769, %v4761
        %v5546 = vpack.c.b16 %v4770, %v4762
        %v5547 = vpack.c.b16 %v4771, %v4763
        %v5548 = vpack.c.b16 %v4772, %v4764
        %v5549 = vpack.c.b16 %v4773, %v4765
        %v5550 = vpack.c.b16 %v4774, %v4766
        %v5551 = vpack.c.b16 %v4775, %v4767
        %v5552 = vpack.c.b16 %v4784, %v4776
        %v5553 = vpack.c.b16 %v4785, %v4777
        %v5554 = vpack.c.b16 %v4786, %v4778
        %v5555 = vpack.c.b16 %v4787, %v4779
        %v5556 = vpack.c.b16 %v4788, %v4780
        %v5557 = vpack.c.b16 %v4789, %v4781
        %v5558 = vpack.c.b16 %v4790, %v4782
        %v5559 = vpack.c.b16 %v4791, %v4783
        %v5560 = vpack.c.b16 %v4800, %v4792
        %v5561 = vpack.c.b16 %v4801, %v4793
        %v5562 = vpack.c.b16 %v4802, %v4794
        %v5563 = vpack.c.b16 %v4803, %v4795
        %v5564 = vpack.c.b16 %v4804, %v4796
        %v5565 = vpack.c.b16 %v4805, %v4797
        %v5566 = vpack.c.b16 %v4806, %v4798
        %v5567 = vpack.c.b16 %v4807, %v4799
        %v5568 = vpack.c.b16 %v4816, %v4808
        %v5569 = vpack.c.b16 %v4817, %v4809
        %v5570 = vpack.c.b16 %v4818, %v4810
        %v5571 = vpack.c.b16 %v4819, %v4811
        %v5572 = vpack.c.b16 %v4820, %v4812
        %v5573 = vpack.c.b16 %v4821, %v4813
        %v5574 = vpack.c.b16 %v4822, %v4814
        %v5575 = vpack.c.b16 %v4823, %v4815
        %v5576 = vpack.c.b16 %v4832, %v4824
        %v5577 = vpack.c.b16 %v4833, %v4825
        %v5578 = vpack.c.b16 %v4834, %v4826
        %v5579 = vpack.c.b16 %v4835, %v4827
        %v5580 = vpack.c.b16 %v4836, %v4828
        %v5581 = vpack.c.b16 %v4837, %v4829
        %v5582 = vpack.c.b16 %v4838, %v4830
        %v5583 = vpack.c.b16 %v4839, %v4831
        %v5584 = vpack.c.b16 %v4848, %v4840
        %v5585 = vpack.c.b16 %v4849, %v4841
        %v5586 = vpack.c.b16 %v4850, %v4842
        %v5587 = vpack.c.b16 %v4851, %v4843
        %v5588 = vpack.c.b16 %v4852, %v4844
        %v5589 = vpack.c.b16 %v4853, %v4845
        %v5590 = vpack.c.b16 %v4854, %v4846
        %v5591 = vpack.c.b16 %v4855, %v4847
        %v5592 = vpack.c.b16 %v4864, %v4856
        %v5593 = vpack.c.b16 %v4865, %v4857
        %v5594 = vpack.c.b16 %v4866, %v4858
        %v5595 = vpack.c.b16 %v4867, %v4859
        %v5596 = vpack.c.b16 %v4868, %v4860
        %v5597 = vpack.c.b16 %v4869, %v4861
        %v5598 = vpack.c.b16 %v4870, %v4862
        %v5599 = vpack.c.b16 %v4871, %v4863
        %v5600 = vpack.c.b16 %v4880, %v4872
        %v5601 = vpack.c.b16 %v4881, %v4873
        %v5602 = vpack.c.b16 %v4882, %v4874
        %v5603 = vpack.c.b16 %v4883, %v4875
        %v5604 = vpack.c.b16 %v4884, %v4876
        %v5605 = vpack.c.b16 %v4885, %v4877
        %v5606 = vpack.c.b16 %v4886, %v4878
        %v5607 = vpack.c.b16 %v4887, %v4879
        %v5608 = vpack.c.b16 %v4896, %v4888
        %v5609 = vpack.c.b16 %v4897, %v4889
        %v5610 = vpack.c.b16 %v4898, %v4890
        %v5611 = vpack.c.b16 %v4899, %v4891
        %v5612 = vpack.c.b16 %v4900, %v4892
        %v5613 = vpack.c.b16 %v4901, %v4893
        %v5614 = vpack.c.b16 %v4902, %v4894
        %v5615 = vpack.c.b16 %v4903, %v4895
        %v5616 = vpack.c.b16 %v4912, %v4904
        %v5617 = vpack.c.b16 %v4913, %v4905
        %v5618 = vpack.c.b16 %v4914, %v4906
        %v5619 = vpack.c.b16 %v4915, %v4907
        %v5620 = vpack.c.b16 %v4916, %v4908
        %v5621 = vpack.c.b16 %v4917, %v4909
        %v5622 = vpack.c.b16 %v4918, %v4910
        %v5623 = vpack.c.b16 %v4919, %v4911
        %v5624 = vpack.c.b16 %v4928, %v4920
        %v5625 = vpack.c.b16 %v4929, %v4921
        %v5626 = vpack.c.b16 %v4930, %v4922
        %v5627 = vpack.c.b16 %v4931, %v4923
        %v5628 = vpack.c.b16 %v4932, %v4924
        %v5629 = vpack.c.b16 %v4933, %v4925
        %v5630 = vpack.c.b16 %v4934, %v4926
        %v5631 = vpack.c.b16 %v4935, %v4927
        %v5632 = vpack.c.b16 %v4944, %v4936
        %v5633 = vpack.c.b16 %v4945, %v4937
        %v5634 = vpack.c.b16 %v4946, %v4938
        %v5635 = vpack.c.b16 %v4947, %v4939
        %v5636 = vpack.c.b16 %v4948, %v4940
        %v5637 = vpack.c.b16 %v4949, %v4941
        %v5638 = vpack.c.b16 %v4950, %v4942
        %v5639 = vpack.c.b16 %v4951, %v4943
        %v5640 = vpack.c.b16 %v4960, %v4952
        %v5641 = vpack.c.b16 %v4961, %v4953
        %v5642 = vpack.c.b16 %v4962, %v4954
        %v5643 = vpack.c.b16 %v4963, %v4955
        %v5644 = vpack.c.b16 %v4964, %v4956
        %v5645 = vpack.c.b16 %v4965, %v4957
        %v5646 = vpack.c.b16 %v4966, %v4958
        %v5647 = vpack.c.b16 %v4967, %v4959
        %v5648 = vpack.c.b16 %v4976, %v4968
        %v5649 = vpack.c.b16 %v4977, %v4969
        %v5650 = vpack.c.b16 %v4978, %v4970
        %v5651 = vpack.c.b16 %v4979, %v4971
        %v5652 = vpack.c.b16 %v4980, %v4972
        %v5653 = vpack.c.b16 %v4981, %v4973
        %v5654 = vpack.c.b16 %v4982, %v4974
        %v5655 = vpack.c.b16 %v4983, %v4975
        %v5656 = vpack.c.b16 %v4992, %v4984
        %v5657 = vpack.c.b16 %v4993, %v4985
        %v5658 = vpack.c.b16 %v4994, %v4986
        %v5659 = vpack.c.b16 %v4995, %v4987
        %v5660 = vpack.c.b16 %v4996, %v4988
        %v5661 = vpack.c.b16 %v4997, %v4989
        %v5662 = vpack.c.b16 %v4998, %v4990
        %v5663 = vpack.c.b16 %v4999, %v4991
        %v5664 = vpack.c.b16 %v5008, %v5000
        %v5665 = vpack.c.b16 %v5009, %v5001
        %v5666 = vpack.c.b16 %v5010, %v5002
        %v5667 = vpack.c.b16 %v5011, %v5003
        %v5668 = vpack.c.b16 %v5012, %v5004
        %v5669 = vpack.c.b16 %v5013, %v5005
        %v5670 = vpack.c.b16 %v5014, %v5006
        %v5671 = vpack.c.b16 %v5015, %v5007
        %v5672 = vpack.c.b16 %v5024, %v5016
        %v5673 = vpack.c.b16 %v5025, %v5017
        %v5674 = vpack.c.b16 %v5026, %v5018
        %v5675 = vpack.c.b16 %v5027, %v5019
        %v5676 = vpack.c.b16 %v5028, %v5020
        %v5677 = vpack.c.b16 %v5029, %v5021
        %v5678 = vpack.c.b16 %v5030, %v5022
        %v5679 = vpack.c.b16 %v5031, %v5023
        %v5680 = vpack.c.b16 %v5040, %v5032
        %v5681 = vpack.c.b16 %v5041, %v5033
        %v5682 = vpack.c.b16 %v5042, %v5034
        %v5683 = vpack.c.b16 %v5043, %v5035
        %v5684 = vpack.c.b16 %v5044, %v5036
        %v5685 = vpack.c.b16 %v5045, %v5037
        %v5686 = vpack.c.b16 %v5046, %v5038
        %v5687 = vpack.c.b16 %v5047, %v5039
        %v5688 = vpack.c.b16 %v5056, %v5048
        %v5689 = vpack.c.b16 %v5057, %v5049
        %v5690 = vpack.c.b16 %v5058, %v5050
        %v5691 = vpack.c.b16 %v5059, %v5051
        %v5692 = vpack.c.b16 %v5060, %v5052
        %v5693 = vpack.c.b16 %v5061, %v5053
        %v5694 = vpack.c.b16 %v5062, %v5054
        %v5695 = vpack.c.b16 %v5063, %v5055
        %v5696 = vpack.c.b16 %v5072, %v5064
        %v5697 = vpack.c.b16 %v5073, %v5065
        %v5698 = vpack.c.b16 %v5074, %v5066
        %v5699 = vpack.c.b16 %v5075, %v5067
        %v5700 = vpack.c.b16 %v5076, %v5068
        %v5701 = vpack.c.b16 %v5077, %v5069
        %v5702 = vpack.c.b16 %v5078, %v5070
        %v5703 = vpack.c.b16 %v5079, %v5071
        %v5704 = vpack.c.b16 %v5088, %v5080
        %v5705 = vpack.c.b16 %v5089, %v5081
        %v5706 = vpack.c.b16 %v5090, %v5082
        %v5707 = vpack.c.b16 %v5091, %v5083
        %v5708 = vpack.c.b16 %v5092, %v5084
        %v5709 = vpack.c.b16 %v5093, %v5085
        %v5710 = vpack.c.b16 %v5094, %v5086
        %v5711 = vpack.c.b16 %v5095, %v5087
        %v5712 = vpack.c.b16 %v5104, %v5096
        %v5713 = vpack.c.b16 %v5105, %v5097
        %v5714 = vpack.c.b16 %v5106, %v5098
        %v5715 = vpack.c.b16 %v5107, %v5099
        %v5716 = vpack.c.b16 %v5108, %v5100
        %v5717 = vpack.c.b16 %v5109, %v5101
        %v5718 = vpack.c.b16 %v5110, %v5102
        %v5719 = vpack.c.b16 %v5111, %v5103
        %v5720 = vpack.c.b16 %v5120, %v5112
        %v5721 = vpack.c.b16 %v5121, %v5113
        %v5722 = vpack.c.b16 %v5122, %v5114
        %v5723 = vpack.c.b16 %v5123, %v5115
        %v5724 = vpack.c.b16 %v5124, %v5116
        %v5725 = vpack.c.b16 %v5125, %v5117
        %v5726 = vpack.c.b16 %v5126, %v5118
        %v5727 = vpack.c.b16 %v5127, %v5119
        %v5728 = vpack.c.b16 %v5136, %v5128
        %v5729 = vpack.c.b16 %v5137, %v5129
        %v5730 = vpack.c.b16 %v5138, %v5130
        %v5731 = vpack.c.b16 %v5139, %v5131
        %v5732 = vpack.c.b16 %v5140, %v5132
        %v5733 = vpack.c.b16 %v5141, %v5133
        %v5734 = vpack.c.b16 %v5142, %v5134
        %v5735 = vpack.c.b16 %v5143, %v5135
        %v5736 = vpack.c.b16 %v5152, %v5144
        %v5737 = vpack.c.b16 %v5153, %v5145
        %v5738 = vpack.c.b16 %v5154, %v5146
        %v5739 = vpack.c.b16 %v5155, %v5147
        %v5740 = vpack.c.b16 %v5156, %v5148
        %v5741 = vpack.c.b16 %v5157, %v5149
        %v5742 = vpack.c.b16 %v5158, %v5150
        %v5743 = vpack.c.b16 %v5159, %v5151
        %v5744 = vpack.c.b16 %v5168, %v5160
        %v5745 = vpack.c.b16 %v5169, %v5161
        %v5746 = vpack.c.b16 %v5170, %v5162
        %v5747 = vpack.c.b16 %v5171, %v5163
        %v5748 = vpack.c.b16 %v5172, %v5164
        %v5749 = vpack.c.b16 %v5173, %v5165
        %v5750 = vpack.c.b16 %v5174, %v5166
        %v5751 = vpack.c.b16 %v5175, %v5167
        %v5752 = vpack.c.b16 %v5184, %v5176
        %v5753 = vpack.c.b16 %v5185, %v5177
        %v5754 = vpack.c.b16 %v5186, %v5178
        %v5755 = vpack.c.b16 %v5187, %v5179
        %v5756 = vpack.c.b16 %v5188, %v5180
        %v5757 = vpack.c.b16 %v5189, %v5181
        %v5758 = vpack.c.b16 %v5190, %v5182
        %v5759 = vpack.c.b16 %v5191, %v5183
        %v5760 = vpack.c.b16 %v5200, %v5192
        %v5761 = vpack.c.b16 %v5201, %v5193
        %v5762 = vpack.c.b16 %v5202, %v5194
        %v5763 = vpack.c.b16 %v5203, %v5195
        %v5764 = vpack.c.b16 %v5204, %v5196
        %v5765 = vpack.c.b16 %v5205, %v5197
        %v5766 = vpack.c.b16 %v5206, %v5198
        %v5767 = vpack.c.b16 %v5207, %v5199
        %v5768 = vpack.c.b16 %v5216, %v5208
        %v5769 = vpack.c.b16 %v5217, %v5209
        %v5770 = vpack.c.b16 %v5218, %v5210
        %v5771 = vpack.c.b16 %v5219, %v5211
        %v5772 = vpack.c.b16 %v5220, %v5212
        %v5773 = vpack.c.b16 %v5221, %v5213
        %v5774 = vpack.c.b16 %v5222, %v5214
        %v5775 = vpack.c.b16 %v5223, %v5215
        %v5776 = vpack.c.b16 %v5232, %v5224
        %v5777 = vpack.c.b16 %v5233, %v5225
        %v5778 = vpack.c.b16 %v5234, %v5226
        %v5779 = vpack.c.b16 %v5235, %v5227
        %v5780 = vpack.c.b16 %v5236, %v5228
        %v5781 = vpack.c.b16 %v5237, %v5229
        %v5782 = vpack.c.b16 %v5238, %v5230
        %v5783 = vpack.c.b16 %v5239, %v5231
        %v5784 = vpack.c.b16 %v5248, %v5240
        %v5785 = vpack.c.b16 %v5249, %v5241
        %v5786 = vpack.c.b16 %v5250, %v5242
        %v5787 = vpack.c.b16 %v5251, %v5243
        %v5788 = vpack.c.b16 %v5252, %v5244
        %v5789 = vpack.c.b16 %v5253, %v5245
        %v5790 = vpack.c.b16 %v5254, %v5246
        %v5791 = vpack.c.b16 %v5255, %v5247
        %v5792 = vpack.c.b16 %v5264, %v5256
        %v5793 = vpack.c.b16 %v5265, %v5257
        %v5794 = vpack.c.b16 %v5266, %v5258
        %v5795 = vpack.c.b16 %v5267, %v5259
        %v5796 = vpack.c.b16 %v5268, %v5260
        %v5797 = vpack.c.b16 %v5269, %v5261
        %v5798 = vpack.c.b16 %v5270, %v5262
        %v5799 = vpack.c.b16 %v5271, %v5263
        %v5800 = vpack.c.b16 %v5280, %v5272
        %v5801 = vpack.c.b16 %v5281, %v5273
        %v5802 = vpack.c.b16 %v5282, %v5274
        %v5803 = vpack.c.b16 %v5283, %v5275
        %v5804 = vpack.c.b16 %v5284, %v5276
        %v5805 = vpack.c.b16 %v5285, %v5277
        %v5806 = vpack.c.b16 %v5286, %v5278
        %v5807 = vpack.c.b16 %v5287, %v5279
        %v5808 = vpack.c.b16 %v5296, %v5288
        %v5809 = vpack.c.b16 %v5297, %v5289
        %v5810 = vpack.c.b16 %v5298, %v5290
        %v5811 = vpack.c.b16 %v5299, %v5291
        %v5812 = vpack.c.b16 %v5300, %v5292
        %v5813 = vpack.c.b16 %v5301, %v5293
        %v5814 = vpack.c.b16 %v5302, %v5294
        %v5815 = vpack.c.b16 %v5303, %v5295
        %6328 = vmatprep.subr.bf16.mxu0 %v5305
        %6329 = vmatpush1.bf16.msra.mxu0 %v5304
        %6330 = vmatprep.subr.bf16.mxu0 %v5313
        %6331 = vmatpush1.bf16.msra.mxu0 %v5312
        %6332 = vmatprep.subr.bf16.mxu0 %v5321
        %6333 = vmatpush1.bf16.msra.mxu0 %v5320
        %6334 = vmatprep.subr.bf16.mxu0 %v5329
        %6335 = vmatpush1.bf16.msra.mxu0 %v5328
        %6336 = vmatprep.subr.bf16.mxu0 %v5337
        %6337 = vmatpush1.bf16.msra.mxu0 %v5336
        %6338 = vmatprep.subr.bf16.mxu0 %v5345
        %6339 = vmatpush1.bf16.msra.mxu0 %v5344
        %6340 = vmatprep.subr.bf16.mxu0 %v5353
        %6341 = vmatpush1.bf16.msra.mxu0 %v5352
        %6342 = vmatprep.subr.bf16.mxu0 %v5361
        %6343 = vmatpush1.bf16.msra.mxu0 %v5360
        %6344 = vmatprep.subr.bf16.mxu0 %v5369
        %6345 = vmatpush1.bf16.msra.mxu0 %v5368
        %6346 = vmatprep.subr.bf16.mxu0 %v5377
        %6347 = vmatpush1.bf16.msra.mxu0 %v5376
        %6348 = vmatprep.subr.bf16.mxu0 %v5385
        %6349 = vmatpush1.bf16.msra.mxu0 %v5384
        %6350 = vmatprep.subr.bf16.mxu0 %v5393
        %6351 = vmatpush1.bf16.msra.mxu0 %v5392
        %6352 = vmatprep.subr.bf16.mxu0 %v5401
        %6353 = vmatpush1.bf16.msra.mxu0 %v5400
        %6354 = vmatprep.subr.bf16.mxu0 %v5409
        %6355 = vmatpush1.bf16.msra.mxu0 %v5408
        %6356 = vmatprep.subr.bf16.mxu0 %v5417
        %6357 = vmatpush1.bf16.msra.mxu0 %v5416
        %6358 = vmatprep.subr.bf16.mxu0 %v5425
        %6359 = vmatpush1.bf16.msra.mxu0 %v5424
        %6360 = vmatprep.mubr.bf16.mxu0 %v3087
        %6361 = vmatmul.mubr.bf16.gmra.mrb[0].mxu0 %v3086
        %v6362 = vpop.f32.mrb[0].mxu0
        %v6363 = vadd.f32 %v3731, %v6362
        %v6364 = vpop.f32.mrb[0].mxu0
        %v6365 = vadd.f32 %v3735, %v6364
        %v6366 = vpop.f32.mrb[0].mxu0
        %v6367 = vadd.f32 %v3731, %v6366
        %v6368 = vpop.f32.mrb[0].mxu0
        %v6369 = vadd.f32 %v3735, %v6368
        %6370 = vmatprep.mubr.bf16.mxu0 %v3095
        %6371 = vmatmul.mubr.bf16.gmra.mrb[0].mxu0 %v3094
        %v6372 = vpop.f32.mrb[0].mxu0
        %v6373 = vadd.f32 %v3731, %v6372
        %v6374 = vpop.f32.mrb[0].mxu0
        %v6375 = vadd.f32 %v3735, %v6374
        %v6376 = vpop.f32.mrb[0].mxu0
        %v6377 = vadd.f32 %v3731, %v6376
        %v6378 = vpop.f32.mrb[0].mxu0
        %v6379 = vadd.f32 %v3735, %v6378
        %6380 = vmatprep.mubr.bf16.mxu0 %v3103
        %6381 = vmatmul.mubr.bf16.gmra.mrb[0].mxu0 %v3102
        %v6382 = vpop.f32.mrb[0].mxu0
        %v6383 = vadd.f32 %v3731, %v6382
        %v6384 = vpop.f32.mrb[0].mxu0
        %v6385 = vadd.f32 %v3735, %v6384
        %v6386 = vpop.f32.mrb[0].mxu0
        %v6387 = vadd.f32 %v3731, %v6386
        %v6388 = vpop.f32.mrb[0].mxu0
        %v6389 = vadd.f32 %v3735, %v6388
        %6390 = vmatprep.mubr.bf16.mxu0 %v3111
        %6391 = vmatmul.mubr.bf16.gmra.mrb[0].mxu0 %v3110
        %v6392 = vpop.f32.mrb[0].mxu0
        %v6393 = vadd.f32 %v3731, %v6392
        %v6394 = vpop.f32.mrb[0].mxu0
        %v6395 = vadd.f32 %v3735, %v6394
        %v6396 = vpop.f32.mrb[0].mxu0
        %v6397 = vadd.f32 %v3731, %v6396
        %v6398 = vpop.f32.mrb[0].mxu0
        %v6399 = vadd.f32 %v3735, %v6398
        %6400 = vmatprep.mubr.bf16.mxu0 %v3119
        %6401 = vmatmul.mubr.bf16.gmra.mrb[0].mxu0 %v3118
        %v6402 = vpop.f32.mrb[0].mxu0
        %v6403 = vadd.f32 %v3731, %v6402
        %v6404 = vpop.f32.mrb[0].mxu0
        %v6405 = vadd.f32 %v3735, %v6404
        %v6406 = vpop.f32.mrb[0].mxu0
        %v6407 = vadd.f32 %v3731, %v6406
        %v6408 = vpop.f32.mrb[0].mxu0
        %v6409 = vadd.f32 %v3735, %v6408
        %6410 = vmatprep.mubr.bf16.mxu0 %v3127
        %6411 = vmatmul.mubr.bf16.gmra.mrb[0].mxu0 %v3126
        %v6412 = vpop.f32.mrb[0].mxu0
        %v6413 = vadd.f32 %v3731, %v6412
        %v6414 = vpop.f32.mrb[0].mxu0
        %v6415 = vadd.f32 %v3735, %v6414
        %v6416 = vpop.f32.mrb[0].mxu0
        %v6417 = vadd.f32 %v3731, %v6416
        %v6418 = vpop.f32.mrb[0].mxu0
        %v6419 = vadd.f32 %v3735, %v6418
        %6420 = vmatprep.mubr.bf16.mxu0 %v3135
        %6421 = vmatmul.mubr.bf16.gmra.mrb[0].mxu0 %v3134
        %v6422 = vpop.f32.mrb[0].mxu0
        %v6423 = vadd.f32 %v3731, %v6422
        %v6424 = vpop.f32.mrb[0].mxu0
        %v6425 = vadd.f32 %v3735, %v6424
        %v6426 = vpop.f32.mrb[0].mxu0
        %v6427 = vadd.f32 %v3731, %v6426
        %v6428 = vpop.f32.mrb[0].mxu0
        %v6429 = vadd.f32 %v3735, %v6428
        %6430 = vmatprep.mubr.bf16.mxu0 %v3143
        %6431 = vmatmul.mubr.bf16.gmra.mrb[0].mxu0 %v3142
        %v6432 = vpop.f32.mrb[0].mxu0
        %v6433 = vadd.f32 %v3731, %v6432
        %v6434 = vpop.f32.mrb[0].mxu0
        %v6435 = vadd.f32 %v3735, %v6434
        %v6436 = vpop.f32.mrb[0].mxu0
        %v6437 = vadd.f32 %v3731, %v6436
        %v6438 = vpop.f32.mrb[0].mxu0
        %v6439 = vadd.f32 %v3735, %v6438
        %6440 = vmatprep.mubr.bf16.mxu0 %v3151
        %6441 = vmatmul.mubr.bf16.gmra.mrb[0].mxu0 %v3150
        %v6442 = vpop.f32.mrb[0].mxu0
        %v6443 = vadd.f32 %v3731, %v6442
        %v6444 = vpop.f32.mrb[0].mxu0
        %v6445 = vadd.f32 %v3735, %v6444
        %v6446 = vpop.f32.mrb[0].mxu0
        %v6447 = vadd.f32 %v3731, %v6446
        %v6448 = vpop.f32.mrb[0].mxu0
        %v6449 = vadd.f32 %v3735, %v6448
        %6450 = vmatprep.mubr.bf16.mxu0 %v3159
        %6451 = vmatmul.mubr.bf16.gmra.mrb[0].mxu0 %v3158
        %v6452 = vpop.f32.mrb[0].mxu0
        %v6453 = vadd.f32 %v3731, %v6452
        %v6454 = vpop.f32.mrb[0].mxu0
        %v6455 = vadd.f32 %v3735, %v6454
        %v6456 = vpop.f32.mrb[0].mxu0
        %v6457 = vadd.f32 %v3731, %v6456
        %v6458 = vpop.f32.mrb[0].mxu0
        %v6459 = vadd.f32 %v3735, %v6458
        %6460 = vmatprep.mubr.bf16.mxu0 %v3167
        %6461 = vmatmul.mubr.bf16.gmra.mrb[0].mxu0 %v3166
        %v6462 = vpop.f32.mrb[0].mxu0
        %v6463 = vadd.f32 %v3731, %v6462
        %v6464 = vpop.f32.mrb[0].mxu0
        %v6465 = vadd.f32 %v3735, %v6464
        %v6466 = vpop.f32.mrb[0].mxu0
        %v6467 = vadd.f32 %v3731, %v6466
        %v6468 = vpop.f32.mrb[0].mxu0
        %v6469 = vadd.f32 %v3735, %v6468
        %6470 = vmatprep.mubr.bf16.mxu0 %v3175
        %6471 = vmatmul.mubr.bf16.gmra.mrb[0].mxu0 %v3174
        %v6472 = vpop.f32.mrb[0].mxu0
        %v6473 = vadd.f32 %v3731, %v6472
        %v6474 = vpop.f32.mrb[0].mxu0
        %v6475 = vadd.f32 %v3735, %v6474
        %v6476 = vpop.f32.mrb[0].mxu0
        %v6477 = vadd.f32 %v3731, %v6476
        %v6478 = vpop.f32.mrb[0].mxu0
        %v6479 = vadd.f32 %v3735, %v6478
        %6480 = vmatprep.mubr.bf16.mxu0 %v3183
        %6481 = vmatmul.mubr.bf16.gmra.mrb[0].mxu0 %v3182
        %v6482 = vpop.f32.mrb[0].mxu0
        %v6483 = vadd.f32 %v3731, %v6482
        %v6484 = vpop.f32.mrb[0].mxu0
        %v6485 = vadd.f32 %v3735, %v6484
        %v6486 = vpop.f32.mrb[0].mxu0
        %v6487 = vadd.f32 %v3731, %v6486
        %v6488 = vpop.f32.mrb[0].mxu0
        %v6489 = vadd.f32 %v3735, %v6488
        %6490 = vmatprep.mubr.bf16.mxu0 %v3191
        %6491 = vmatmul.mubr.bf16.gmra.mrb[0].mxu0 %v3190
        %v6492 = vpop.f32.mrb[0].mxu0
        %v6493 = vadd.f32 %v3731, %v6492
        %v6494 = vpop.f32.mrb[0].mxu0
        %v6495 = vadd.f32 %v3735, %v6494
        %v6496 = vpop.f32.mrb[0].mxu0
        %v6497 = vadd.f32 %v3731, %v6496
        %v6498 = vpop.f32.mrb[0].mxu0
        %v6499 = vadd.f32 %v3735, %v6498
        %6500 = vmatprep.mubr.bf16.mxu0 %v3199
        %6501 = vmatmul.mubr.bf16.gmra.mrb[0].mxu0 %v3198
        %v6502 = vpop.f32.mrb[0].mxu0
        %v6503 = vadd.f32 %v3731, %v6502
        %v6504 = vpop.f32.mrb[0].mxu0
        %v6505 = vadd.f32 %v3735, %v6504
        %v6506 = vpop.f32.mrb[0].mxu0
        %v6507 = vadd.f32 %v3731, %v6506
        %v6508 = vpop.f32.mrb[0].mxu0
        %v6509 = vadd.f32 %v3735, %v6508
        %6510 = vmatprep.mubr.bf16.mxu0 %v3207
        %6511 = vmatmul.mubr.bf16.gmra.mrb[0].mxu0 %v3206
        %v6512 = vpop.f32.mrb[0].mxu0
        %v6513 = vadd.f32 %v3731, %v6512
        %v6514 = vpop.f32.mrb[0].mxu0
        %v6515 = vadd.f32 %v3735, %v6514
        %v6516 = vpop.f32.mrb[0].mxu0
        %v6517 = vadd.f32 %v3731, %v6516
        %v6518 = vpop.f32.mrb[0].mxu0
        %v6519 = vadd.f32 %v3735, %v6518
        %6520 = vdwg.mxu0
        %6521 = vmatprep.subr.bf16.mxu0 %v5433
        %6522 = vmatpush1.bf16.msra.mxu0 %v5432
        %6523 = vmatprep.subr.bf16.mxu0 %v5441
        %6524 = vmatpush1.bf16.msra.mxu0 %v5440
        %6525 = vmatprep.subr.bf16.mxu0 %v5449
        %6526 = vmatpush1.bf16.msra.mxu0 %v5448
        %6527 = vmatprep.subr.bf16.mxu0 %v5457
        %6528 = vmatpush1.bf16.msra.mxu0 %v5456
        %6529 = vmatprep.subr.bf16.mxu0 %v5465
        %6530 = vmatpush1.bf16.msra.mxu0 %v5464
        %6531 = vmatprep.subr.bf16.mxu0 %v5473
        %6532 = vmatpush1.bf16.msra.mxu0 %v5472
        %6533 = vmatprep.subr.bf16.mxu0 %v5481
        %6534 = vmatpush1.bf16.msra.mxu0 %v5480
        %6535 = vmatprep.subr.bf16.mxu0 %v5489
        %6536 = vmatpush1.bf16.msra.mxu0 %v5488
        %6537 = vmatprep.subr.bf16.mxu0 %v5497
        %6538 = vmatpush1.bf16.msra.mxu0 %v5496
        %6539 = vmatprep.subr.bf16.mxu0 %v5505
        %6540 = vmatpush1.bf16.msra.mxu0 %v5504
        %6541 = vmatprep.subr.bf16.mxu0 %v5513
        %6542 = vmatpush1.bf16.msra.mxu0 %v5512
        %6543 = vmatprep.subr.bf16.mxu0 %v5521
        %6544 = vmatpush1.bf16.msra.mxu0 %v5520
        %6545 = vmatprep.subr.bf16.mxu0 %v5529
        %6546 = vmatpush1.bf16.msra.mxu0 %v5528
        %6547 = vmatprep.subr.bf16.mxu0 %v5537
        %6548 = vmatpush1.bf16.msra.mxu0 %v5536
        %6549 = vmatprep.subr.bf16.mxu0 %v5545
        %6550 = vmatpush1.bf16.msra.mxu0 %v5544
        %6551 = vmatprep.subr.bf16.mxu0 %v5553
        %6552 = vmatpush1.bf16.msra.mxu0 %v5552
        %6553 = vmatprep.mubr.bf16.mxu0 %v3089
        %6554 = vmatmul.mubr.bf16.gmra.mrb[0].mxu0 %v3088
        %v6555 = vpop.f32.mrb[0].mxu0
        %v6556 = vadd.f32 %v6363, %v6555
        %v6557 = vpop.f32.mrb[0].mxu0
        %v6558 = vadd.f32 %v6365, %v6557
        %v6559 = vpop.f32.mrb[0].mxu0
        %v6560 = vadd.f32 %v6367, %v6559
        %v6561 = vpop.f32.mrb[0].mxu0
        %v6562 = vadd.f32 %v6369, %v6561
        %6563 = vmatprep.mubr.bf16.mxu0 %v3097
        %6564 = vmatmul.mubr.bf16.gmra.mrb[0].mxu0 %v3096
        %v6565 = vpop.f32.mrb[0].mxu0
        %v6566 = vadd.f32 %v6373, %v6565
        %v6567 = vpop.f32.mrb[0].mxu0
        %v6568 = vadd.f32 %v6375, %v6567
        %v6569 = vpop.f32.mrb[0].mxu0
        %v6570 = vadd.f32 %v6377, %v6569
        %v6571 = vpop.f32.mrb[0].mxu0
        %v6572 = vadd.f32 %v6379, %v6571
        %6573 = vmatprep.mubr.bf16.mxu0 %v3105
        %6574 = vmatmul.mubr.bf16.gmra.mrb[0].mxu0 %v3104
        %v6575 = vpop.f32.mrb[0].mxu0
        %v6576 = vadd.f32 %v6383, %v6575
        %v6577 = vpop.f32.mrb[0].mxu0
        %v6578 = vadd.f32 %v6385, %v6577
        %v6579 = vpop.f32.mrb[0].mxu0
        %v6580 = vadd.f32 %v6387, %v6579
        %v6581 = vpop.f32.mrb[0].mxu0
        %v6582 = vadd.f32 %v6389, %v6581
        %6583 = vmatprep.mubr.bf16.mxu0 %v3113
        %6584 = vmatmul.mubr.bf16.gmra.mrb[0].mxu0 %v3112
        %v6585 = vpop.f32.mrb[0].mxu0
        %v6586 = vadd.f32 %v6393, %v6585
        %v6587 = vpop.f32.mrb[0].mxu0
        %v6588 = vadd.f32 %v6395, %v6587
        %v6589 = vpop.f32.mrb[0].mxu0
        %v6590 = vadd.f32 %v6397, %v6589
        %v6591 = vpop.f32.mrb[0].mxu0
        %v6592 = vadd.f32 %v6399, %v6591
        %6593 = vmatprep.mubr.bf16.mxu0 %v3121
        %6594 = vmatmul.mubr.bf16.gmra.mrb[0].mxu0 %v3120
        %v6595 = vpop.f32.mrb[0].mxu0
        %v6596 = vadd.f32 %v6403, %v6595
        %v6597 = vpop.f32.mrb[0].mxu0
        %v6598 = vadd.f32 %v6405, %v6597
        %v6599 = vpop.f32.mrb[0].mxu0
        %v6600 = vadd.f32 %v6407, %v6599
        %v6601 = vpop.f32.mrb[0].mxu0
        %v6602 = vadd.f32 %v6409, %v6601
        %6603 = vmatprep.mubr.bf16.mxu0 %v3129
        %6604 = vmatmul.mubr.bf16.gmra.mrb[0].mxu0 %v3128
        %v6605 = vpop.f32.mrb[0].mxu0
        %v6606 = vadd.f32 %v6413, %v6605
        %v6607 = vpop.f32.mrb[0].mxu0
        %v6608 = vadd.f32 %v6415, %v6607
        %v6609 = vpop.f32.mrb[0].mxu0
        %v6610 = vadd.f32 %v6417, %v6609
        %v6611 = vpop.f32.mrb[0].mxu0
        %v6612 = vadd.f32 %v6419, %v6611
        %6613 = vmatprep.mubr.bf16.mxu0 %v3137
        %6614 = vmatmul.mubr.bf16.gmra.mrb[0].mxu0 %v3136
        %v6615 = vpop.f32.mrb[0].mxu0
        %v6616 = vadd.f32 %v6423, %v6615
        %v6617 = vpop.f32.mrb[0].mxu0
        %v6618 = vadd.f32 %v6425, %v6617
        %v6619 = vpop.f32.mrb[0].mxu0
        %v6620 = vadd.f32 %v6427, %v6619
        %v6621 = vpop.f32.mrb[0].mxu0
        %v6622 = vadd.f32 %v6429, %v6621
        %6623 = vmatprep.mubr.bf16.mxu0 %v3145
        %6624 = vmatmul.mubr.bf16.gmra.mrb[0].mxu0 %v3144
        %v6625 = vpop.f32.mrb[0].mxu0
        %v6626 = vadd.f32 %v6433, %v6625
        %v6627 = vpop.f32.mrb[0].mxu0
        %v6628 = vadd.f32 %v6435, %v6627
        %v6629 = vpop.f32.mrb[0].mxu0
        %v6630 = vadd.f32 %v6437, %v6629
        %v6631 = vpop.f32.mrb[0].mxu0
        %v6632 = vadd.f32 %v6439, %v6631
        %6633 = vmatprep.mubr.bf16.mxu0 %v3153
        %6634 = vmatmul.mubr.bf16.gmra.mrb[0].mxu0 %v3152
        %v6635 = vpop.f32.mrb[0].mxu0
        %v6636 = vadd.f32 %v6443, %v6635
        %v6637 = vpop.f32.mrb[0].mxu0
        %v6638 = vadd.f32 %v6445, %v6637
        %v6639 = vpop.f32.mrb[0].mxu0
        %v6640 = vadd.f32 %v6447, %v6639
        %v6641 = vpop.f32.mrb[0].mxu0
        %v6642 = vadd.f32 %v6449, %v6641
        %6643 = vmatprep.mubr.bf16.mxu0 %v3161
        %6644 = vmatmul.mubr.bf16.gmra.mrb[0].mxu0 %v3160
        %v6645 = vpop.f32.mrb[0].mxu0
        %v6646 = vadd.f32 %v6453, %v6645
        %v6647 = vpop.f32.mrb[0].mxu0
        %v6648 = vadd.f32 %v6455, %v6647
        %v6649 = vpop.f32.mrb[0].mxu0
        %v6650 = vadd.f32 %v6457, %v6649
        %v6651 = vpop.f32.mrb[0].mxu0
        %v6652 = vadd.f32 %v6459, %v6651
        %6653 = vmatprep.mubr.bf16.mxu0 %v3169
        %6654 = vmatmul.mubr.bf16.gmra.mrb[0].mxu0 %v3168
        %v6655 = vpop.f32.mrb[0].mxu0
        %v6656 = vadd.f32 %v6463, %v6655
        %v6657 = vpop.f32.mrb[0].mxu0
        %v6658 = vadd.f32 %v6465, %v6657
        %v6659 = vpop.f32.mrb[0].mxu0
        %v6660 = vadd.f32 %v6467, %v6659
        %v6661 = vpop.f32.mrb[0].mxu0
        %v6662 = vadd.f32 %v6469, %v6661
        %6663 = vmatprep.mubr.bf16.mxu0 %v3177
        %6664 = vmatmul.mubr.bf16.gmra.mrb[0].mxu0 %v3176
        %v6665 = vpop.f32.mrb[0].mxu0
        %v6666 = vadd.f32 %v6473, %v6665
        %v6667 = vpop.f32.mrb[0].mxu0
        %v6668 = vadd.f32 %v6475, %v6667
        %v6669 = vpop.f32.mrb[0].mxu0
        %v6670 = vadd.f32 %v6477, %v6669
        %v6671 = vpop.f32.mrb[0].mxu0
        %v6672 = vadd.f32 %v6479, %v6671
        %6673 = vmatprep.mubr.bf16.mxu0 %v3185
        %6674 = vmatmul.mubr.bf16.gmra.mrb[0].mxu0 %v3184
        %v6675 = vpop.f32.mrb[0].mxu0
        %v6676 = vadd.f32 %v6483, %v6675
        %v6677 = vpop.f32.mrb[0].mxu0
        %v6678 = vadd.f32 %v6485, %v6677
        %v6679 = vpop.f32.mrb[0].mxu0
        %v6680 = vadd.f32 %v6487, %v6679
        %v6681 = vpop.f32.mrb[0].mxu0
        %v6682 = vadd.f32 %v6489, %v6681
        %6683 = vmatprep.mubr.bf16.mxu0 %v3193
        %6684 = vmatmul.mubr.bf16.gmra.mrb[0].mxu0 %v3192
        %v6685 = vpop.f32.mrb[0].mxu0
        %v6686 = vadd.f32 %v6493, %v6685
        %v6687 = vpop.f32.mrb[0].mxu0
        %v6688 = vadd.f32 %v6495, %v6687
        %v6689 = vpop.f32.mrb[0].mxu0
        %v6690 = vadd.f32 %v6497, %v6689
        %v6691 = vpop.f32.mrb[0].mxu0
        %v6692 = vadd.f32 %v6499, %v6691
        %6693 = vmatprep.mubr.bf16.mxu0 %v3201
        %6694 = vmatmul.mubr.bf16.gmra.mrb[0].mxu0 %v3200
        %v6695 = vpop.f32.mrb[0].mxu0
        %v6696 = vadd.f32 %v6503, %v6695
        %v6697 = vpop.f32.mrb[0].mxu0
        %v6698 = vadd.f32 %v6505, %v6697
        %v6699 = vpop.f32.mrb[0].mxu0
        %v6700 = vadd.f32 %v6507, %v6699
        %v6701 = vpop.f32.mrb[0].mxu0
        %v6702 = vadd.f32 %v6509, %v6701
        %6703 = vmatprep.mubr.bf16.mxu0 %v3209
        %6704 = vmatmul.mubr.bf16.gmra.mrb[0].mxu0 %v3208
        %v6705 = vpop.f32.mrb[0].mxu0
        %v6706 = vadd.f32 %v6513, %v6705
        %v6707 = vpop.f32.mrb[0].mxu0
        %v6708 = vadd.f32 %v6515, %v6707
        %v6709 = vpop.f32.mrb[0].mxu0
        %v6710 = vadd.f32 %v6517, %v6709
        %v6711 = vpop.f32.mrb[0].mxu0
        %v6712 = vadd.f32 %v6519, %v6711
        %6713 = vdwg.mxu0
        %6714 = vmatprep.subr.bf16.mxu0 %v5561
        %6715 = vmatpush1.bf16.msra.mxu0 %v5560
        %6716 = vmatprep.subr.bf16.mxu0 %v5569
        %6717 = vmatpush1.bf16.msra.mxu0 %v5568
        %6718 = vmatprep.subr.bf16.mxu0 %v5577
        %6719 = vmatpush1.bf16.msra.mxu0 %v5576
        %6720 = vmatprep.subr.bf16.mxu0 %v5585
        %6721 = vmatpush1.bf16.msra.mxu0 %v5584
        %6722 = vmatprep.subr.bf16.mxu0 %v5593
        %6723 = vmatpush1.bf16.msra.mxu0 %v5592
        %6724 = vmatprep.subr.bf16.mxu0 %v5601
        %6725 = vmatpush1.bf16.msra.mxu0 %v5600
        %6726 = vmatprep.subr.bf16.mxu0 %v5609
        %6727 = vmatpush1.bf16.msra.mxu0 %v5608
        %6728 = vmatprep.subr.bf16.mxu0 %v5617
        %6729 = vmatpush1.bf16.msra.mxu0 %v5616
        %6730 = vmatprep.subr.bf16.mxu0 %v5625
        %6731 = vmatpush1.bf16.msra.mxu0 %v5624
        %6732 = vmatprep.subr.bf16.mxu0 %v5633
        %6733 = vmatpush1.bf16.msra.mxu0 %v5632
        %6734 = vmatprep.subr.bf16.mxu0 %v5641
        %6735 = vmatpush1.bf16.msra.mxu0 %v5640
        %6736 = vmatprep.subr.bf16.mxu0 %v5649
        %6737 = vmatpush1.bf16.msra.mxu0 %v5648
        %6738 = vmatprep.subr.bf16.mxu0 %v5657
        %6739 = vmatpush1.bf16.msra.mxu0 %v5656
        %6740 = vmatprep.subr.bf16.mxu0 %v5665
        %6741 = vmatpush1.bf16.msra.mxu0 %v5664
        %6742 = vmatprep.subr.bf16.mxu0 %v5673
        %6743 = vmatpush1.bf16.msra.mxu0 %v5672
        %6744 = vmatprep.subr.bf16.mxu0 %v5681
        %6745 = vmatpush1.bf16.msra.mxu0 %v5680
        %6746 = vmatprep.mubr.bf16.mxu0 %v3091
        %6747 = vmatmul.mubr.bf16.gmra.mrb[0].mxu0 %v3090
        %v6748 = vpop.f32.mrb[0].mxu0
        %v6749 = vadd.f32 %v6556, %v6748
        %v6750 = vpop.f32.mrb[0].mxu0
        %v6751 = vadd.f32 %v6558, %v6750
        %v6752 = vpop.f32.mrb[0].mxu0
        %v6753 = vadd.f32 %v6560, %v6752
        %v6754 = vpop.f32.mrb[0].mxu0
        %v6755 = vadd.f32 %v6562, %v6754
        %6756 = vmatprep.mubr.bf16.mxu0 %v3099
        %6757 = vmatmul.mubr.bf16.gmra.mrb[0].mxu0 %v3098
        %v6758 = vpop.f32.mrb[0].mxu0
        %v6759 = vadd.f32 %v6566, %v6758
        %v6760 = vpop.f32.mrb[0].mxu0
        %v6761 = vadd.f32 %v6568, %v6760
        %v6762 = vpop.f32.mrb[0].mxu0
        %v6763 = vadd.f32 %v6570, %v6762
        %v6764 = vpop.f32.mrb[0].mxu0
        %v6765 = vadd.f32 %v6572, %v6764
        %6766 = vmatprep.mubr.bf16.mxu0 %v3107
        %6767 = vmatmul.mubr.bf16.gmra.mrb[0].mxu0 %v3106
        %v6768 = vpop.f32.mrb[0].mxu0
        %v6769 = vadd.f32 %v6576, %v6768
        %v6770 = vpop.f32.mrb[0].mxu0
        %v6771 = vadd.f32 %v6578, %v6770
        %v6772 = vpop.f32.mrb[0].mxu0
        %v6773 = vadd.f32 %v6580, %v6772
        %v6774 = vpop.f32.mrb[0].mxu0
        %v6775 = vadd.f32 %v6582, %v6774
        %6776 = vmatprep.mubr.bf16.mxu0 %v3115
        %6777 = vmatmul.mubr.bf16.gmra.mrb[0].mxu0 %v3114
        %v6778 = vpop.f32.mrb[0].mxu0
        %v6779 = vadd.f32 %v6586, %v6778
        %v6780 = vpop.f32.mrb[0].mxu0
        %v6781 = vadd.f32 %v6588, %v6780
        %v6782 = vpop.f32.mrb[0].mxu0
        %v6783 = vadd.f32 %v6590, %v6782
        %v6784 = vpop.f32.mrb[0].mxu0
        %v6785 = vadd.f32 %v6592, %v6784
        %6786 = vmatprep.mubr.bf16.mxu0 %v3123
        %6787 = vmatmul.mubr.bf16.gmra.mrb[0].mxu0 %v3122
        %v6788 = vpop.f32.mrb[0].mxu0
        %v6789 = vadd.f32 %v6596, %v6788
        %v6790 = vpop.f32.mrb[0].mxu0
        %v6791 = vadd.f32 %v6598, %v6790
        %v6792 = vpop.f32.mrb[0].mxu0
        %v6793 = vadd.f32 %v6600, %v6792
        %v6794 = vpop.f32.mrb[0].mxu0
        %v6795 = vadd.f32 %v6602, %v6794
        %6796 = vmatprep.mubr.bf16.mxu0 %v3131
        %6797 = vmatmul.mubr.bf16.gmra.mrb[0].mxu0 %v3130
        %v6798 = vpop.f32.mrb[0].mxu0
        %v6799 = vadd.f32 %v6606, %v6798
        %v6800 = vpop.f32.mrb[0].mxu0
        %v6801 = vadd.f32 %v6608, %v6800
        %v6802 = vpop.f32.mrb[0].mxu0
        %v6803 = vadd.f32 %v6610, %v6802
        %v6804 = vpop.f32.mrb[0].mxu0
        %v6805 = vadd.f32 %v6612, %v6804
        %6806 = vmatprep.mubr.bf16.mxu0 %v3139
        %6807 = vmatmul.mubr.bf16.gmra.mrb[0].mxu0 %v3138
        %v6808 = vpop.f32.mrb[0].mxu0
        %v6809 = vadd.f32 %v6616, %v6808
        %v6810 = vpop.f32.mrb[0].mxu0
        %v6811 = vadd.f32 %v6618, %v6810
        %v6812 = vpop.f32.mrb[0].mxu0
        %v6813 = vadd.f32 %v6620, %v6812
        %v6814 = vpop.f32.mrb[0].mxu0
        %v6815 = vadd.f32 %v6622, %v6814
        %6816 = vmatprep.mubr.bf16.mxu0 %v3147
        %6817 = vmatmul.mubr.bf16.gmra.mrb[0].mxu0 %v3146
        %v6818 = vpop.f32.mrb[0].mxu0
        %v6819 = vadd.f32 %v6626, %v6818
        %v6820 = vpop.f32.mrb[0].mxu0
        %v6821 = vadd.f32 %v6628, %v6820
        %v6822 = vpop.f32.mrb[0].mxu0
        %v6823 = vadd.f32 %v6630, %v6822
        %v6824 = vpop.f32.mrb[0].mxu0
        %v6825 = vadd.f32 %v6632, %v6824
        %6826 = vmatprep.mubr.bf16.mxu0 %v3155
        %6827 = vmatmul.mubr.bf16.gmra.mrb[0].mxu0 %v3154
        %v6828 = vpop.f32.mrb[0].mxu0
        %v6829 = vadd.f32 %v6636, %v6828
        %v6830 = vpop.f32.mrb[0].mxu0
        %v6831 = vadd.f32 %v6638, %v6830
        %v6832 = vpop.f32.mrb[0].mxu0
        %v6833 = vadd.f32 %v6640, %v6832
        %v6834 = vpop.f32.mrb[0].mxu0
        %v6835 = vadd.f32 %v6642, %v6834
        %6836 = vmatprep.mubr.bf16.mxu0 %v3163
        %6837 = vmatmul.mubr.bf16.gmra.mrb[0].mxu0 %v3162
        %v6838 = vpop.f32.mrb[0].mxu0
        %v6839 = vadd.f32 %v6646, %v6838
        %v6840 = vpop.f32.mrb[0].mxu0
        %v6841 = vadd.f32 %v6648, %v6840
        %v6842 = vpop.f32.mrb[0].mxu0
        %v6843 = vadd.f32 %v6650, %v6842
        %v6844 = vpop.f32.mrb[0].mxu0
        %v6845 = vadd.f32 %v6652, %v6844
        %6846 = vmatprep.mubr.bf16.mxu0 %v3171
        %6847 = vmatmul.mubr.bf16.gmra.mrb[0].mxu0 %v3170
        %v6848 = vpop.f32.mrb[0].mxu0
        %v6849 = vadd.f32 %v6656, %v6848
        %v6850 = vpop.f32.mrb[0].mxu0
        %v6851 = vadd.f32 %v6658, %v6850
        %v6852 = vpop.f32.mrb[0].mxu0
        %v6853 = vadd.f32 %v6660, %v6852
        %v6854 = vpop.f32.mrb[0].mxu0
        %v6855 = vadd.f32 %v6662, %v6854
        %6856 = vmatprep.mubr.bf16.mxu0 %v3179
        %6857 = vmatmul.mubr.bf16.gmra.mrb[0].mxu0 %v3178
        %v6858 = vpop.f32.mrb[0].mxu0
        %v6859 = vadd.f32 %v6666, %v6858
        %v6860 = vpop.f32.mrb[0].mxu0
        %v6861 = vadd.f32 %v6668, %v6860
        %v6862 = vpop.f32.mrb[0].mxu0
        %v6863 = vadd.f32 %v6670, %v6862
        %v6864 = vpop.f32.mrb[0].mxu0
        %v6865 = vadd.f32 %v6672, %v6864
        %6866 = vmatprep.mubr.bf16.mxu0 %v3187
        %6867 = vmatmul.mubr.bf16.gmra.mrb[0].mxu0 %v3186
        %v6868 = vpop.f32.mrb[0].mxu0
        %v6869 = vadd.f32 %v6676, %v6868
        %v6870 = vpop.f32.mrb[0].mxu0
        %v6871 = vadd.f32 %v6678, %v6870
        %v6872 = vpop.f32.mrb[0].mxu0
        %v6873 = vadd.f32 %v6680, %v6872
        %v6874 = vpop.f32.mrb[0].mxu0
        %v6875 = vadd.f32 %v6682, %v6874
        %6876 = vmatprep.mubr.bf16.mxu0 %v3195
        %6877 = vmatmul.mubr.bf16.gmra.mrb[0].mxu0 %v3194
        %v6878 = vpop.f32.mrb[0].mxu0
        %v6879 = vadd.f32 %v6686, %v6878
        %v6880 = vpop.f32.mrb[0].mxu0
        %v6881 = vadd.f32 %v6688, %v6880
        %v6882 = vpop.f32.mrb[0].mxu0
        %v6883 = vadd.f32 %v6690, %v6882
        %v6884 = vpop.f32.mrb[0].mxu0
        %v6885 = vadd.f32 %v6692, %v6884
        %6886 = vmatprep.mubr.bf16.mxu0 %v3203
        %6887 = vmatmul.mubr.bf16.gmra.mrb[0].mxu0 %v3202
        %v6888 = vpop.f32.mrb[0].mxu0
        %v6889 = vadd.f32 %v6696, %v6888
        %v6890 = vpop.f32.mrb[0].mxu0
        %v6891 = vadd.f32 %v6698, %v6890
        %v6892 = vpop.f32.mrb[0].mxu0
        %v6893 = vadd.f32 %v6700, %v6892
        %v6894 = vpop.f32.mrb[0].mxu0
        %v6895 = vadd.f32 %v6702, %v6894
        %6896 = vmatprep.mubr.bf16.mxu0 %v3211
        %6897 = vmatmul.mubr.bf16.gmra.mrb[0].mxu0 %v3210
        %v6898 = vpop.f32.mrb[0].mxu0
        %v6899 = vadd.f32 %v6706, %v6898
        %v6900 = vpop.f32.mrb[0].mxu0
        %v6901 = vadd.f32 %v6708, %v6900
        %v6902 = vpop.f32.mrb[0].mxu0
        %v6903 = vadd.f32 %v6710, %v6902
        %v6904 = vpop.f32.mrb[0].mxu0
        %v6905 = vadd.f32 %v6712, %v6904
        %6906 = vdwg.mxu0
        %6907 = vmatprep.subr.bf16.mxu0 %v5689
        %6908 = vmatpush1.bf16.msra.mxu0 %v5688
        %6909 = vmatprep.subr.bf16.mxu0 %v5697
        %6910 = vmatpush1.bf16.msra.mxu0 %v5696
        %6911 = vmatprep.subr.bf16.mxu0 %v5705
        %6912 = vmatpush1.bf16.msra.mxu0 %v5704
        %6913 = vmatprep.subr.bf16.mxu0 %v5713
        %6914 = vmatpush1.bf16.msra.mxu0 %v5712
        %6915 = vmatprep.subr.bf16.mxu0 %v5721
        %6916 = vmatpush1.bf16.msra.mxu0 %v5720
        %6917 = vmatprep.subr.bf16.mxu0 %v5729
        %6918 = vmatpush1.bf16.msra.mxu0 %v5728
        %6919 = vmatprep.subr.bf16.mxu0 %v5737
        %6920 = vmatpush1.bf16.msra.mxu0 %v5736
        %6921 = vmatprep.subr.bf16.mxu0 %v5745
        %6922 = vmatpush1.bf16.msra.mxu0 %v5744
        %6923 = vmatprep.subr.bf16.mxu0 %v5753
        %6924 = vmatpush1.bf16.msra.mxu0 %v5752
        %6925 = vmatprep.subr.bf16.mxu0 %v5761
        %6926 = vmatpush1.bf16.msra.mxu0 %v5760
        %6927 = vmatprep.subr.bf16.mxu0 %v5769
        %6928 = vmatpush1.bf16.msra.mxu0 %v5768
        %6929 = vmatprep.subr.bf16.mxu0 %v5777
        %6930 = vmatpush1.bf16.msra.mxu0 %v5776
        %6931 = vmatprep.subr.bf16.mxu0 %v5785
        %6932 = vmatpush1.bf16.msra.mxu0 %v5784
        %6933 = vmatprep.subr.bf16.mxu0 %v5793
        %6934 = vmatpush1.bf16.msra.mxu0 %v5792
        %6935 = vmatprep.subr.bf16.mxu0 %v5801
        %6936 = vmatpush1.bf16.msra.mxu0 %v5800
        %6937 = vmatprep.subr.bf16.mxu0 %v5809
        %6938 = vmatpush1.bf16.msra.mxu0 %v5808
        %6939 = vmatprep.mubr.bf16.mxu0 %v3093
        %6940 = vmatmul.mubr.bf16.gmra.mrb[0].mxu0 %v3092
        %v6941 = vpop.f32.mrb[0].mxu0
        %v6942 = vadd.f32 %v6749, %v6941
        %v6943 = vpop.f32.mrb[0].mxu0
        %v6944 = vadd.f32 %v6751, %v6943
        %v6945 = vpop.f32.mrb[0].mxu0
        %v6946 = vadd.f32 %v6753, %v6945
        %v6947 = vpop.f32.mrb[0].mxu0
        %v6948 = vadd.f32 %v6755, %v6947
        %6949 = vmatprep.mubr.bf16.mxu0 %v3101
        %6950 = vmatmul.mubr.bf16.gmra.mrb[0].mxu0 %v3100
        %v6951 = vpop.f32.mrb[0].mxu0
        %v6952 = vadd.f32 %v6759, %v6951
        %v6953 = vpop.f32.mrb[0].mxu0
        %v6954 = vadd.f32 %v6761, %v6953
        %v6955 = vpop.f32.mrb[0].mxu0
        %v6956 = vadd.f32 %v6763, %v6955
        %v6957 = vpop.f32.mrb[0].mxu0
        %v6958 = vadd.f32 %v6765, %v6957
        %6959 = vmatprep.mubr.bf16.mxu0 %v3109
        %6960 = vmatmul.mubr.bf16.gmra.mrb[0].mxu0 %v3108
        %v6961 = vpop.f32.mrb[0].mxu0
        %v6962 = vadd.f32 %v6769, %v6961
        %v6963 = vpop.f32.mrb[0].mxu0
        %v6964 = vadd.f32 %v6771, %v6963
        %v6965 = vpop.f32.mrb[0].mxu0
        %v6966 = vadd.f32 %v6773, %v6965
        %v6967 = vpop.f32.mrb[0].mxu0
        %v6968 = vadd.f32 %v6775, %v6967
        %6969 = vmatprep.mubr.bf16.mxu0 %v3117
        %6970 = vmatmul.mubr.bf16.gmra.mrb[0].mxu0 %v3116
        %v6971 = vpop.f32.mrb[0].mxu0
        %v6972 = vadd.f32 %v6779, %v6971
        %v6973 = vpop.f32.mrb[0].mxu0
        %v6974 = vadd.f32 %v6781, %v6973
        %v6975 = vpop.f32.mrb[0].mxu0
        %v6976 = vadd.f32 %v6783, %v6975
        %v6977 = vpop.f32.mrb[0].mxu0
        %v6978 = vadd.f32 %v6785, %v6977
        %6979 = vmatprep.mubr.bf16.mxu0 %v3125
        %6980 = vmatmul.mubr.bf16.gmra.mrb[0].mxu0 %v3124
        %v6981 = vpop.f32.mrb[0].mxu0
        %v6982 = vadd.f32 %v6789, %v6981
        %v6983 = vpop.f32.mrb[0].mxu0
        %v6984 = vadd.f32 %v6791, %v6983
        %v6985 = vpop.f32.mrb[0].mxu0
        %v6986 = vadd.f32 %v6793, %v6985
        %v6987 = vpop.f32.mrb[0].mxu0
        %v6988 = vadd.f32 %v6795, %v6987
        %6989 = vmatprep.mubr.bf16.mxu0 %v3133
        %6990 = vmatmul.mubr.bf16.gmra.mrb[0].mxu0 %v3132
        %v6991 = vpop.f32.mrb[0].mxu0
        %v6992 = vadd.f32 %v6799, %v6991
        %v6993 = vpop.f32.mrb[0].mxu0
        %v6994 = vadd.f32 %v6801, %v6993
        %v6995 = vpop.f32.mrb[0].mxu0
        %v6996 = vadd.f32 %v6803, %v6995
        %v6997 = vpop.f32.mrb[0].mxu0
        %v6998 = vadd.f32 %v6805, %v6997
        %6999 = vmatprep.mubr.bf16.mxu0 %v3141
        %7000 = vmatmul.mubr.bf16.gmra.mrb[0].mxu0 %v3140
        %v7001 = vpop.f32.mrb[0].mxu0
        %v7002 = vadd.f32 %v6809, %v7001
        %v7003 = vpop.f32.mrb[0].mxu0
        %v7004 = vadd.f32 %v6811, %v7003
        %v7005 = vpop.f32.mrb[0].mxu0
        %v7006 = vadd.f32 %v6813, %v7005
        %v7007 = vpop.f32.mrb[0].mxu0
        %v7008 = vadd.f32 %v6815, %v7007
        %7009 = vmatprep.mubr.bf16.mxu0 %v3149
        %7010 = vmatmul.mubr.bf16.gmra.mrb[0].mxu0 %v3148
        %v7011 = vpop.f32.mrb[0].mxu0
        %v7012 = vadd.f32 %v6819, %v7011
        %v7013 = vpop.f32.mrb[0].mxu0
        %v7014 = vadd.f32 %v6821, %v7013
        %v7015 = vpop.f32.mrb[0].mxu0
        %v7016 = vadd.f32 %v6823, %v7015
        %v7017 = vpop.f32.mrb[0].mxu0
        %v7018 = vadd.f32 %v6825, %v7017
        %7019 = vmatprep.mubr.bf16.mxu0 %v3157
        %7020 = vmatmul.mubr.bf16.gmra.mrb[0].mxu0 %v3156
        %v7021 = vpop.f32.mrb[0].mxu0
        %v7022 = vadd.f32 %v6829, %v7021
        %v7023 = vpop.f32.mrb[0].mxu0
        %v7024 = vadd.f32 %v6831, %v7023
        %v7025 = vpop.f32.mrb[0].mxu0
        %v7026 = vadd.f32 %v6833, %v7025
        %v7027 = vpop.f32.mrb[0].mxu0
        %v7028 = vadd.f32 %v6835, %v7027
        %7029 = vmatprep.mubr.bf16.mxu0 %v3165
        %7030 = vmatmul.mubr.bf16.gmra.mrb[0].mxu0 %v3164
        %v7031 = vpop.f32.mrb[0].mxu0
        %v7032 = vadd.f32 %v6839, %v7031
        %v7033 = vpop.f32.mrb[0].mxu0
        %v7034 = vadd.f32 %v6841, %v7033
        %v7035 = vpop.f32.mrb[0].mxu0
        %v7036 = vadd.f32 %v6843, %v7035
        %v7037 = vpop.f32.mrb[0].mxu0
        %v7038 = vadd.f32 %v6845, %v7037
        %7039 = vmatprep.mubr.bf16.mxu0 %v3173
        %7040 = vmatmul.mubr.bf16.gmra.mrb[0].mxu0 %v3172
        %v7041 = vpop.f32.mrb[0].mxu0
        %v7042 = vadd.f32 %v6849, %v7041
        %v7043 = vpop.f32.mrb[0].mxu0
        %v7044 = vadd.f32 %v6851, %v7043
        %v7045 = vpop.f32.mrb[0].mxu0
        %v7046 = vadd.f32 %v6853, %v7045
        %v7047 = vpop.f32.mrb[0].mxu0
        %v7048 = vadd.f32 %v6855, %v7047
        %7049 = vmatprep.mubr.bf16.mxu0 %v3181
        %7050 = vmatmul.mubr.bf16.gmra.mrb[0].mxu0 %v3180
        %v7051 = vpop.f32.mrb[0].mxu0
        %v7052 = vadd.f32 %v6859, %v7051
        %v7053 = vpop.f32.mrb[0].mxu0
        %v7054 = vadd.f32 %v6861, %v7053
        %v7055 = vpop.f32.mrb[0].mxu0
        %v7056 = vadd.f32 %v6863, %v7055
        %v7057 = vpop.f32.mrb[0].mxu0
        %v7058 = vadd.f32 %v6865, %v7057
        %7059 = vmatprep.mubr.bf16.mxu0 %v3189
        %7060 = vmatmul.mubr.bf16.gmra.mrb[0].mxu0 %v3188
        %v7061 = vpop.f32.mrb[0].mxu0
        %v7062 = vadd.f32 %v6869, %v7061
        %v7063 = vpop.f32.mrb[0].mxu0
        %v7064 = vadd.f32 %v6871, %v7063
        %v7065 = vpop.f32.mrb[0].mxu0
        %v7066 = vadd.f32 %v6873, %v7065
        %v7067 = vpop.f32.mrb[0].mxu0
        %v7068 = vadd.f32 %v6875, %v7067
        %7069 = vmatprep.mubr.bf16.mxu0 %v3197
        %7070 = vmatmul.mubr.bf16.gmra.mrb[0].mxu0 %v3196
        %v7071 = vpop.f32.mrb[0].mxu0
        %v7072 = vadd.f32 %v6879, %v7071
        %v7073 = vpop.f32.mrb[0].mxu0
        %v7074 = vadd.f32 %v6881, %v7073
        %v7075 = vpop.f32.mrb[0].mxu0
        %v7076 = vadd.f32 %v6883, %v7075
        %v7077 = vpop.f32.mrb[0].mxu0
        %v7078 = vadd.f32 %v6885, %v7077
        %7079 = vmatprep.mubr.bf16.mxu0 %v3205
        %7080 = vmatmul.mubr.bf16.gmra.mrb[0].mxu0 %v3204
        %v7081 = vpop.f32.mrb[0].mxu0
        %v7082 = vadd.f32 %v6889, %v7081
        %v7083 = vpop.f32.mrb[0].mxu0
        %v7084 = vadd.f32 %v6891, %v7083
        %v7085 = vpop.f32.mrb[0].mxu0
        %v7086 = vadd.f32 %v6893, %v7085
        %v7087 = vpop.f32.mrb[0].mxu0
        %v7088 = vadd.f32 %v6895, %v7087
        %7089 = vmatprep.mubr.bf16.mxu0 %v3213
        %7090 = vmatmul.mubr.bf16.gmra.mrb[0].mxu0 %v3212
        %v7091 = vpop.f32.mrb[0].mxu0
        %v7092 = vadd.f32 %v6899, %v7091
        %v7093 = vpop.f32.mrb[0].mxu0
        %v7094 = vadd.f32 %v6901, %v7093
        %v7095 = vpop.f32.mrb[0].mxu0
        %v7096 = vadd.f32 %v6903, %v7095
        %v7097 = vpop.f32.mrb[0].mxu0
        %v7098 = vadd.f32 %v6905, %v7097
        %7099 = vdwg.mxu0
        %7100 = vmatprep.subr.bf16.mxu0 %v5307
        %7101 = vmatpush1.bf16.msra.mxu0 %v5306
        %7102 = vmatprep.subr.bf16.mxu0 %v5315
        %7103 = vmatpush1.bf16.msra.mxu0 %v5314
        %7104 = vmatprep.subr.bf16.mxu0 %v5323
        %7105 = vmatpush1.bf16.msra.mxu0 %v5322
        %7106 = vmatprep.subr.bf16.mxu0 %v5331
        %7107 = vmatpush1.bf16.msra.mxu0 %v5330
        %7108 = vmatprep.subr.bf16.mxu0 %v5339
        %7109 = vmatpush1.bf16.msra.mxu0 %v5338
        %7110 = vmatprep.subr.bf16.mxu0 %v5347
        %7111 = vmatpush1.bf16.msra.mxu0 %v5346
        %7112 = vmatprep.subr.bf16.mxu0 %v5355
        %7113 = vmatpush1.bf16.msra.mxu0 %v5354
        %7114 = vmatprep.subr.bf16.mxu0 %v5363
        %7115 = vmatpush1.bf16.msra.mxu0 %v5362
        %7116 = vmatprep.subr.bf16.mxu0 %v5371
        %7117 = vmatpush1.bf16.msra.mxu0 %v5370
        %7118 = vmatprep.subr.bf16.mxu0 %v5379
        %7119 = vmatpush1.bf16.msra.mxu0 %v5378
        %7120 = vmatprep.subr.bf16.mxu0 %v5387
        %7121 = vmatpush1.bf16.msra.mxu0 %v5386
        %7122 = vmatprep.subr.bf16.mxu0 %v5395
        %7123 = vmatpush1.bf16.msra.mxu0 %v5394
        %7124 = vmatprep.subr.bf16.mxu0 %v5403
        %7125 = vmatpush1.bf16.msra.mxu0 %v5402
        %7126 = vmatprep.subr.bf16.mxu0 %v5411
        %7127 = vmatpush1.bf16.msra.mxu0 %v5410
        %7128 = vmatprep.subr.bf16.mxu0 %v5419
        %7129 = vmatpush1.bf16.msra.mxu0 %v5418
        %7130 = vmatprep.subr.bf16.mxu0 %v5427
        %7131 = vmatpush1.bf16.msra.mxu0 %v5426
        %7132 = vmatprep.mubr.bf16.mxu0 %v3087
        %7133 = vmatmul.mubr.bf16.gmra.mrb[0].mxu0 %v3086
        %v7134 = vpop.f32.mrb[0].mxu0
        %v7135 = vadd.f32 %v3739, %v7134
        %v7136 = vpop.f32.mrb[0].mxu0
        %v7137 = vadd.f32 %v3743, %v7136
        %v7138 = vpop.f32.mrb[0].mxu0
        %v7139 = vadd.f32 %v3739, %v7138
        %v7140 = vpop.f32.mrb[0].mxu0
        %v7141 = vadd.f32 %v3743, %v7140
        %7142 = vmatprep.mubr.bf16.mxu0 %v3095
        %7143 = vmatmul.mubr.bf16.gmra.mrb[0].mxu0 %v3094
        %v7144 = vpop.f32.mrb[0].mxu0
        %v7145 = vadd.f32 %v3739, %v7144
        %v7146 = vpop.f32.mrb[0].mxu0
        %v7147 = vadd.f32 %v3743, %v7146
        %v7148 = vpop.f32.mrb[0].mxu0
        %v7149 = vadd.f32 %v3739, %v7148
        %v7150 = vpop.f32.mrb[0].mxu0
        %v7151 = vadd.f32 %v3743, %v7150
        %7152 = vmatprep.mubr.bf16.mxu0 %v3103
        %7153 = vmatmul.mubr.bf16.gmra.mrb[0].mxu0 %v3102
        %v7154 = vpop.f32.mrb[0].mxu0
        %v7155 = vadd.f32 %v3739, %v7154
        %v7156 = vpop.f32.mrb[0].mxu0
        %v7157 = vadd.f32 %v3743, %v7156
        %v7158 = vpop.f32.mrb[0].mxu0
        %v7159 = vadd.f32 %v3739, %v7158
        %v7160 = vpop.f32.mrb[0].mxu0
        %v7161 = vadd.f32 %v3743, %v7160
        %7162 = vmatprep.mubr.bf16.mxu0 %v3111
        %7163 = vmatmul.mubr.bf16.gmra.mrb[0].mxu0 %v3110
        %v7164 = vpop.f32.mrb[0].mxu0
        %v7165 = vadd.f32 %v3739, %v7164
        %v7166 = vpop.f32.mrb[0].mxu0
        %v7167 = vadd.f32 %v3743, %v7166
        %v7168 = vpop.f32.mrb[0].mxu0
        %v7169 = vadd.f32 %v3739, %v7168
        %v7170 = vpop.f32.mrb[0].mxu0
        %v7171 = vadd.f32 %v3743, %v7170
        %7172 = vmatprep.mubr.bf16.mxu0 %v3119
        %7173 = vmatmul.mubr.bf16.gmra.mrb[0].mxu0 %v3118
        %v7174 = vpop.f32.mrb[0].mxu0
        %v7175 = vadd.f32 %v3739, %v7174
        %v7176 = vpop.f32.mrb[0].mxu0
        %v7177 = vadd.f32 %v3743, %v7176
        %v7178 = vpop.f32.mrb[0].mxu0
        %v7179 = vadd.f32 %v3739, %v7178
        %v7180 = vpop.f32.mrb[0].mxu0
        %v7181 = vadd.f32 %v3743, %v7180
        %7182 = vmatprep.mubr.bf16.mxu0 %v3127
        %7183 = vmatmul.mubr.bf16.gmra.mrb[0].mxu0 %v3126
        %v7184 = vpop.f32.mrb[0].mxu0
        %v7185 = vadd.f32 %v3739, %v7184
        %v7186 = vpop.f32.mrb[0].mxu0
        %v7187 = vadd.f32 %v3743, %v7186
        %v7188 = vpop.f32.mrb[0].mxu0
        %v7189 = vadd.f32 %v3739, %v7188
        %v7190 = vpop.f32.mrb[0].mxu0
        %v7191 = vadd.f32 %v3743, %v7190
        %7192 = vmatprep.mubr.bf16.mxu0 %v3135
        %7193 = vmatmul.mubr.bf16.gmra.mrb[0].mxu0 %v3134
        %v7194 = vpop.f32.mrb[0].mxu0
        %v7195 = vadd.f32 %v3739, %v7194
        %v7196 = vpop.f32.mrb[0].mxu0
        %v7197 = vadd.f32 %v3743, %v7196
        %v7198 = vpop.f32.mrb[0].mxu0
        %v7199 = vadd.f32 %v3739, %v7198
        %v7200 = vpop.f32.mrb[0].mxu0
        %v7201 = vadd.f32 %v3743, %v7200
        %7202 = vmatprep.mubr.bf16.mxu0 %v3143
        %7203 = vmatmul.mubr.bf16.gmra.mrb[0].mxu0 %v3142
        %v7204 = vpop.f32.mrb[0].mxu0
        %v7205 = vadd.f32 %v3739, %v7204
        %v7206 = vpop.f32.mrb[0].mxu0
        %v7207 = vadd.f32 %v3743, %v7206
        %v7208 = vpop.f32.mrb[0].mxu0
        %v7209 = vadd.f32 %v3739, %v7208
        %v7210 = vpop.f32.mrb[0].mxu0
        %v7211 = vadd.f32 %v3743, %v7210
        %7212 = vmatprep.mubr.bf16.mxu0 %v3151
        %7213 = vmatmul.mubr.bf16.gmra.mrb[0].mxu0 %v3150
        %v7214 = vpop.f32.mrb[0].mxu0
        %v7215 = vadd.f32 %v3739, %v7214
        %v7216 = vpop.f32.mrb[0].mxu0
        %v7217 = vadd.f32 %v3743, %v7216
        %v7218 = vpop.f32.mrb[0].mxu0
        %v7219 = vadd.f32 %v3739, %v7218
        %v7220 = vpop.f32.mrb[0].mxu0
        %v7221 = vadd.f32 %v3743, %v7220
        %7222 = vmatprep.mubr.bf16.mxu0 %v3159
        %7223 = vmatmul.mubr.bf16.gmra.mrb[0].mxu0 %v3158
        %v7224 = vpop.f32.mrb[0].mxu0
        %v7225 = vadd.f32 %v3739, %v7224
        %v7226 = vpop.f32.mrb[0].mxu0
        %v7227 = vadd.f32 %v3743, %v7226
        %v7228 = vpop.f32.mrb[0].mxu0
        %v7229 = vadd.f32 %v3739, %v7228
        %v7230 = vpop.f32.mrb[0].mxu0
        %v7231 = vadd.f32 %v3743, %v7230
        %7232 = vmatprep.mubr.bf16.mxu0 %v3167
        %7233 = vmatmul.mubr.bf16.gmra.mrb[0].mxu0 %v3166
        %v7234 = vpop.f32.mrb[0].mxu0
        %v7235 = vadd.f32 %v3739, %v7234
        %v7236 = vpop.f32.mrb[0].mxu0
        %v7237 = vadd.f32 %v3743, %v7236
        %v7238 = vpop.f32.mrb[0].mxu0
        %v7239 = vadd.f32 %v3739, %v7238
        %v7240 = vpop.f32.mrb[0].mxu0
        %v7241 = vadd.f32 %v3743, %v7240
        %7242 = vmatprep.mubr.bf16.mxu0 %v3175
        %7243 = vmatmul.mubr.bf16.gmra.mrb[0].mxu0 %v3174
        %v7244 = vpop.f32.mrb[0].mxu0
        %v7245 = vadd.f32 %v3739, %v7244
        %v7246 = vpop.f32.mrb[0].mxu0
        %v7247 = vadd.f32 %v3743, %v7246
        %v7248 = vpop.f32.mrb[0].mxu0
        %v7249 = vadd.f32 %v3739, %v7248
        %v7250 = vpop.f32.mrb[0].mxu0
        %v7251 = vadd.f32 %v3743, %v7250
        %7252 = vmatprep.mubr.bf16.mxu0 %v3183
        %7253 = vmatmul.mubr.bf16.gmra.mrb[0].mxu0 %v3182
        %v7254 = vpop.f32.mrb[0].mxu0
        %v7255 = vadd.f32 %v3739, %v7254
        %v7256 = vpop.f32.mrb[0].mxu0
        %v7257 = vadd.f32 %v3743, %v7256
        %v7258 = vpop.f32.mrb[0].mxu0
        %v7259 = vadd.f32 %v3739, %v7258
        %v7260 = vpop.f32.mrb[0].mxu0
        %v7261 = vadd.f32 %v3743, %v7260
        %7262 = vmatprep.mubr.bf16.mxu0 %v3191
        %7263 = vmatmul.mubr.bf16.gmra.mrb[0].mxu0 %v3190
        %v7264 = vpop.f32.mrb[0].mxu0
        %v7265 = vadd.f32 %v3739, %v7264
        %v7266 = vpop.f32.mrb[0].mxu0
        %v7267 = vadd.f32 %v3743, %v7266
        %v7268 = vpop.f32.mrb[0].mxu0
        %v7269 = vadd.f32 %v3739, %v7268
        %v7270 = vpop.f32.mrb[0].mxu0
        %v7271 = vadd.f32 %v3743, %v7270
        %7272 = vmatprep.mubr.bf16.mxu0 %v3199
        %7273 = vmatmul.mubr.bf16.gmra.mrb[0].mxu0 %v3198
        %v7274 = vpop.f32.mrb[0].mxu0
        %v7275 = vadd.f32 %v3739, %v7274
        %v7276 = vpop.f32.mrb[0].mxu0
        %v7277 = vadd.f32 %v3743, %v7276
        %v7278 = vpop.f32.mrb[0].mxu0
        %v7279 = vadd.f32 %v3739, %v7278
        %v7280 = vpop.f32.mrb[0].mxu0
        %v7281 = vadd.f32 %v3743, %v7280
        %7282 = vmatprep.mubr.bf16.mxu0 %v3207
        %7283 = vmatmul.mubr.bf16.gmra.mrb[0].mxu0 %v3206
        %v7284 = vpop.f32.mrb[0].mxu0
        %v7285 = vadd.f32 %v3739, %v7284
        %v7286 = vpop.f32.mrb[0].mxu0
        %v7287 = vadd.f32 %v3743, %v7286
        %v7288 = vpop.f32.mrb[0].mxu0
        %v7289 = vadd.f32 %v3739, %v7288
        %v7290 = vpop.f32.mrb[0].mxu0
        %v7291 = vadd.f32 %v3743, %v7290
        %7292 = vdwg.mxu0
        %7293 = vmatprep.subr.bf16.mxu0 %v5435
        %7294 = vmatpush1.bf16.msra.mxu0 %v5434
        %7295 = vmatprep.subr.bf16.mxu0 %v5443
        %7296 = vmatpush1.bf16.msra.mxu0 %v5442
        %7297 = vmatprep.subr.bf16.mxu0 %v5451
        %7298 = vmatpush1.bf16.msra.mxu0 %v5450
        %7299 = vmatprep.subr.bf16.mxu0 %v5459
        %7300 = vmatpush1.bf16.msra.mxu0 %v5458
        %7301 = vmatprep.subr.bf16.mxu0 %v5467
        %7302 = vmatpush1.bf16.msra.mxu0 %v5466
        %7303 = vmatprep.subr.bf16.mxu0 %v5475
        %7304 = vmatpush1.bf16.msra.mxu0 %v5474
        %7305 = vmatprep.subr.bf16.mxu0 %v5483
        %7306 = vmatpush1.bf16.msra.mxu0 %v5482
        %7307 = vmatprep.subr.bf16.mxu0 %v5491
        %7308 = vmatpush1.bf16.msra.mxu0 %v5490
        %7309 = vmatprep.subr.bf16.mxu0 %v5499
        %7310 = vmatpush1.bf16.msra.mxu0 %v5498
        %7311 = vmatprep.subr.bf16.mxu0 %v5507
        %7312 = vmatpush1.bf16.msra.mxu0 %v5506
        %7313 = vmatprep.subr.bf16.mxu0 %v5515
        %7314 = vmatpush1.bf16.msra.mxu0 %v5514
        %7315 = vmatprep.subr.bf16.mxu0 %v5523
        %7316 = vmatpush1.bf16.msra.mxu0 %v5522
        %7317 = vmatprep.subr.bf16.mxu0 %v5531
        %7318 = vmatpush1.bf16.msra.mxu0 %v5530
        %7319 = vmatprep.subr.bf16.mxu0 %v5539
        %7320 = vmatpush1.bf16.msra.mxu0 %v5538
        %7321 = vmatprep.subr.bf16.mxu0 %v5547
        %7322 = vmatpush1.bf16.msra.mxu0 %v5546
        %7323 = vmatprep.subr.bf16.mxu0 %v5555
        %7324 = vmatpush1.bf16.msra.mxu0 %v5554
        %7325 = vmatprep.mubr.bf16.mxu0 %v3089
        %7326 = vmatmul.mubr.bf16.gmra.mrb[0].mxu0 %v3088
        %v7327 = vpop.f32.mrb[0].mxu0
        %v7328 = vadd.f32 %v7135, %v7327
        %v7329 = vpop.f32.mrb[0].mxu0
        %v7330 = vadd.f32 %v7137, %v7329
        %v7331 = vpop.f32.mrb[0].mxu0
        %v7332 = vadd.f32 %v7139, %v7331
        %v7333 = vpop.f32.mrb[0].mxu0
        %v7334 = vadd.f32 %v7141, %v7333
        %7335 = vmatprep.mubr.bf16.mxu0 %v3097
        %7336 = vmatmul.mubr.bf16.gmra.mrb[0].mxu0 %v3096
        %v7337 = vpop.f32.mrb[0].mxu0
        %v7338 = vadd.f32 %v7145, %v7337
        %v7339 = vpop.f32.mrb[0].mxu0
        %v7340 = vadd.f32 %v7147, %v7339
        %v7341 = vpop.f32.mrb[0].mxu0
        %v7342 = vadd.f32 %v7149, %v7341
        %v7343 = vpop.f32.mrb[0].mxu0
        %v7344 = vadd.f32 %v7151, %v7343
        %7345 = vmatprep.mubr.bf16.mxu0 %v3105
        %7346 = vmatmul.mubr.bf16.gmra.mrb[0].mxu0 %v3104
        %v7347 = vpop.f32.mrb[0].mxu0
        %v7348 = vadd.f32 %v7155, %v7347
        %v7349 = vpop.f32.mrb[0].mxu0
        %v7350 = vadd.f32 %v7157, %v7349
        %v7351 = vpop.f32.mrb[0].mxu0
        %v7352 = vadd.f32 %v7159, %v7351
        %v7353 = vpop.f32.mrb[0].mxu0
        %v7354 = vadd.f32 %v7161, %v7353
        %7355 = vmatprep.mubr.bf16.mxu0 %v3113
        %7356 = vmatmul.mubr.bf16.gmra.mrb[0].mxu0 %v3112
        %v7357 = vpop.f32.mrb[0].mxu0
        %v7358 = vadd.f32 %v7165, %v7357
        %v7359 = vpop.f32.mrb[0].mxu0
        %v7360 = vadd.f32 %v7167, %v7359
        %v7361 = vpop.f32.mrb[0].mxu0
        %v7362 = vadd.f32 %v7169, %v7361
        %v7363 = vpop.f32.mrb[0].mxu0
        %v7364 = vadd.f32 %v7171, %v7363
        %7365 = vmatprep.mubr.bf16.mxu0 %v3121
        %7366 = vmatmul.mubr.bf16.gmra.mrb[0].mxu0 %v3120
        %v7367 = vpop.f32.mrb[0].mxu0
        %v7368 = vadd.f32 %v7175, %v7367
        %v7369 = vpop.f32.mrb[0].mxu0
        %v7370 = vadd.f32 %v7177, %v7369
        %v7371 = vpop.f32.mrb[0].mxu0
        %v7372 = vadd.f32 %v7179, %v7371
        %v7373 = vpop.f32.mrb[0].mxu0
        %v7374 = vadd.f32 %v7181, %v7373
        %7375 = vmatprep.mubr.bf16.mxu0 %v3129
        %7376 = vmatmul.mubr.bf16.gmra.mrb[0].mxu0 %v3128
        %v7377 = vpop.f32.mrb[0].mxu0
        %v7378 = vadd.f32 %v7185, %v7377
        %v7379 = vpop.f32.mrb[0].mxu0
        %v7380 = vadd.f32 %v7187, %v7379
        %v7381 = vpop.f32.mrb[0].mxu0
        %v7382 = vadd.f32 %v7189, %v7381
        %v7383 = vpop.f32.mrb[0].mxu0
        %v7384 = vadd.f32 %v7191, %v7383
        %7385 = vmatprep.mubr.bf16.mxu0 %v3137
        %7386 = vmatmul.mubr.bf16.gmra.mrb[0].mxu0 %v3136
        %v7387 = vpop.f32.mrb[0].mxu0
        %v7388 = vadd.f32 %v7195, %v7387
        %v7389 = vpop.f32.mrb[0].mxu0
        %v7390 = vadd.f32 %v7197, %v7389
        %v7391 = vpop.f32.mrb[0].mxu0
        %v7392 = vadd.f32 %v7199, %v7391
        %v7393 = vpop.f32.mrb[0].mxu0
        %v7394 = vadd.f32 %v7201, %v7393
        %7395 = vmatprep.mubr.bf16.mxu0 %v3145
        %7396 = vmatmul.mubr.bf16.gmra.mrb[0].mxu0 %v3144
        %v7397 = vpop.f32.mrb[0].mxu0
        %v7398 = vadd.f32 %v7205, %v7397
        %v7399 = vpop.f32.mrb[0].mxu0
        %v7400 = vadd.f32 %v7207, %v7399
        %v7401 = vpop.f32.mrb[0].mxu0
        %v7402 = vadd.f32 %v7209, %v7401
        %v7403 = vpop.f32.mrb[0].mxu0
        %v7404 = vadd.f32 %v7211, %v7403
        %7405 = vmatprep.mubr.bf16.mxu0 %v3153
        %7406 = vmatmul.mubr.bf16.gmra.mrb[0].mxu0 %v3152
        %v7407 = vpop.f32.mrb[0].mxu0
        %v7408 = vadd.f32 %v7215, %v7407
        %v7409 = vpop.f32.mrb[0].mxu0
        %v7410 = vadd.f32 %v7217, %v7409
        %v7411 = vpop.f32.mrb[0].mxu0
        %v7412 = vadd.f32 %v7219, %v7411
        %v7413 = vpop.f32.mrb[0].mxu0
        %v7414 = vadd.f32 %v7221, %v7413
        %7415 = vmatprep.mubr.bf16.mxu0 %v3161
        %7416 = vmatmul.mubr.bf16.gmra.mrb[0].mxu0 %v3160
        %v7417 = vpop.f32.mrb[0].mxu0
        %v7418 = vadd.f32 %v7225, %v7417
        %v7419 = vpop.f32.mrb[0].mxu0
        %v7420 = vadd.f32 %v7227, %v7419
        %v7421 = vpop.f32.mrb[0].mxu0
        %v7422 = vadd.f32 %v7229, %v7421
        %v7423 = vpop.f32.mrb[0].mxu0
        %v7424 = vadd.f32 %v7231, %v7423
        %7425 = vmatprep.mubr.bf16.mxu0 %v3169
        %7426 = vmatmul.mubr.bf16.gmra.mrb[0].mxu0 %v3168
        %v7427 = vpop.f32.mrb[0].mxu0
        %v7428 = vadd.f32 %v7235, %v7427
        %v7429 = vpop.f32.mrb[0].mxu0
        %v7430 = vadd.f32 %v7237, %v7429
        %v7431 = vpop.f32.mrb[0].mxu0
        %v7432 = vadd.f32 %v7239, %v7431
        %v7433 = vpop.f32.mrb[0].mxu0
        %v7434 = vadd.f32 %v7241, %v7433
        %7435 = vmatprep.mubr.bf16.mxu0 %v3177
        %7436 = vmatmul.mubr.bf16.gmra.mrb[0].mxu0 %v3176
        %v7437 = vpop.f32.mrb[0].mxu0
        %v7438 = vadd.f32 %v7245, %v7437
        %v7439 = vpop.f32.mrb[0].mxu0
        %v7440 = vadd.f32 %v7247, %v7439
        %v7441 = vpop.f32.mrb[0].mxu0
        %v7442 = vadd.f32 %v7249, %v7441
        %v7443 = vpop.f32.mrb[0].mxu0
        %v7444 = vadd.f32 %v7251, %v7443
        %7445 = vmatprep.mubr.bf16.mxu0 %v3185
        %7446 = vmatmul.mubr.bf16.gmra.mrb[0].mxu0 %v3184
        %v7447 = vpop.f32.mrb[0].mxu0
        %v7448 = vadd.f32 %v7255, %v7447
        %v7449 = vpop.f32.mrb[0].mxu0
        %v7450 = vadd.f32 %v7257, %v7449
        %v7451 = vpop.f32.mrb[0].mxu0
        %v7452 = vadd.f32 %v7259, %v7451
        %v7453 = vpop.f32.mrb[0].mxu0
        %v7454 = vadd.f32 %v7261, %v7453
        %7455 = vmatprep.mubr.bf16.mxu0 %v3193
        %7456 = vmatmul.mubr.bf16.gmra.mrb[0].mxu0 %v3192
        %v7457 = vpop.f32.mrb[0].mxu0
        %v7458 = vadd.f32 %v7265, %v7457
        %v7459 = vpop.f32.mrb[0].mxu0
        %v7460 = vadd.f32 %v7267, %v7459
        %v7461 = vpop.f32.mrb[0].mxu0
        %v7462 = vadd.f32 %v7269, %v7461
        %v7463 = vpop.f32.mrb[0].mxu0
        %v7464 = vadd.f32 %v7271, %v7463
        %7465 = vmatprep.mubr.bf16.mxu0 %v3201
        %7466 = vmatmul.mubr.bf16.gmra.mrb[0].mxu0 %v3200
        %v7467 = vpop.f32.mrb[0].mxu0
        %v7468 = vadd.f32 %v7275, %v7467
        %v7469 = vpop.f32.mrb[0].mxu0
        %v7470 = vadd.f32 %v7277, %v7469
        %v7471 = vpop.f32.mrb[0].mxu0
        %v7472 = vadd.f32 %v7279, %v7471
        %v7473 = vpop.f32.mrb[0].mxu0
        %v7474 = vadd.f32 %v7281, %v7473
        %7475 = vmatprep.mubr.bf16.mxu0 %v3209
        %7476 = vmatmul.mubr.bf16.gmra.mrb[0].mxu0 %v3208
        %v7477 = vpop.f32.mrb[0].mxu0
        %v7478 = vadd.f32 %v7285, %v7477
        %v7479 = vpop.f32.mrb[0].mxu0
        %v7480 = vadd.f32 %v7287, %v7479
        %v7481 = vpop.f32.mrb[0].mxu0
        %v7482 = vadd.f32 %v7289, %v7481
        %v7483 = vpop.f32.mrb[0].mxu0
        %v7484 = vadd.f32 %v7291, %v7483
        %7485 = vdwg.mxu0
        %7486 = vmatprep.subr.bf16.mxu0 %v5563
        %7487 = vmatpush1.bf16.msra.mxu0 %v5562
        %7488 = vmatprep.subr.bf16.mxu0 %v5571
        %7489 = vmatpush1.bf16.msra.mxu0 %v5570
        %7490 = vmatprep.subr.bf16.mxu0 %v5579
        %7491 = vmatpush1.bf16.msra.mxu0 %v5578
        %7492 = vmatprep.subr.bf16.mxu0 %v5587
        %7493 = vmatpush1.bf16.msra.mxu0 %v5586
        %7494 = vmatprep.subr.bf16.mxu0 %v5595
        %7495 = vmatpush1.bf16.msra.mxu0 %v5594
        %7496 = vmatprep.subr.bf16.mxu0 %v5603
        %7497 = vmatpush1.bf16.msra.mxu0 %v5602
        %7498 = vmatprep.subr.bf16.mxu0 %v5611
        %7499 = vmatpush1.bf16.msra.mxu0 %v5610
        %7500 = vmatprep.subr.bf16.mxu0 %v5619
        %7501 = vmatpush1.bf16.msra.mxu0 %v5618
        %7502 = vmatprep.subr.bf16.mxu0 %v5627
        %7503 = vmatpush1.bf16.msra.mxu0 %v5626
        %7504 = vmatprep.subr.bf16.mxu0 %v5635
        %7505 = vmatpush1.bf16.msra.mxu0 %v5634
        %7506 = vmatprep.subr.bf16.mxu0 %v5643
        %7507 = vmatpush1.bf16.msra.mxu0 %v5642
        %7508 = vmatprep.subr.bf16.mxu0 %v5651
        %7509 = vmatpush1.bf16.msra.mxu0 %v5650
        %7510 = vmatprep.subr.bf16.mxu0 %v5659
        %7511 = vmatpush1.bf16.msra.mxu0 %v5658
        %7512 = vmatprep.subr.bf16.mxu0 %v5667
        %7513 = vmatpush1.bf16.msra.mxu0 %v5666
        %7514 = vmatprep.subr.bf16.mxu0 %v5675
        %7515 = vmatpush1.bf16.msra.mxu0 %v5674
        %7516 = vmatprep.subr.bf16.mxu0 %v5683
        %7517 = vmatpush1.bf16.msra.mxu0 %v5682
        %7518 = vmatprep.mubr.bf16.mxu0 %v3091
        %7519 = vmatmul.mubr.bf16.gmra.mrb[0].mxu0 %v3090
        %v7520 = vpop.f32.mrb[0].mxu0
        %v7521 = vadd.f32 %v7328, %v7520
        %v7522 = vpop.f32.mrb[0].mxu0
        %v7523 = vadd.f32 %v7330, %v7522
        %v7524 = vpop.f32.mrb[0].mxu0
        %v7525 = vadd.f32 %v7332, %v7524
        %v7526 = vpop.f32.mrb[0].mxu0
        %v7527 = vadd.f32 %v7334, %v7526
        %7528 = vmatprep.mubr.bf16.mxu0 %v3099
        %7529 = vmatmul.mubr.bf16.gmra.mrb[0].mxu0 %v3098
        %v7530 = vpop.f32.mrb[0].mxu0
        %v7531 = vadd.f32 %v7338, %v7530
        %v7532 = vpop.f32.mrb[0].mxu0
        %v7533 = vadd.f32 %v7340, %v7532
        %v7534 = vpop.f32.mrb[0].mxu0
        %v7535 = vadd.f32 %v7342, %v7534
        %v7536 = vpop.f32.mrb[0].mxu0
        %v7537 = vadd.f32 %v7344, %v7536
        %7538 = vmatprep.mubr.bf16.mxu0 %v3107
        %7539 = vmatmul.mubr.bf16.gmra.mrb[0].mxu0 %v3106
        %v7540 = vpop.f32.mrb[0].mxu0
        %v7541 = vadd.f32 %v7348, %v7540
        %v7542 = vpop.f32.mrb[0].mxu0
        %v7543 = vadd.f32 %v7350, %v7542
        %v7544 = vpop.f32.mrb[0].mxu0
        %v7545 = vadd.f32 %v7352, %v7544
        %v7546 = vpop.f32.mrb[0].mxu0
        %v7547 = vadd.f32 %v7354, %v7546
        %7548 = vmatprep.mubr.bf16.mxu0 %v3115
        %7549 = vmatmul.mubr.bf16.gmra.mrb[0].mxu0 %v3114
        %v7550 = vpop.f32.mrb[0].mxu0
        %v7551 = vadd.f32 %v7358, %v7550
        %v7552 = vpop.f32.mrb[0].mxu0
        %v7553 = vadd.f32 %v7360, %v7552
        %v7554 = vpop.f32.mrb[0].mxu0
        %v7555 = vadd.f32 %v7362, %v7554
        %v7556 = vpop.f32.mrb[0].mxu0
        %v7557 = vadd.f32 %v7364, %v7556
        %7558 = vmatprep.mubr.bf16.mxu0 %v3123
        %7559 = vmatmul.mubr.bf16.gmra.mrb[0].mxu0 %v3122
        %v7560 = vpop.f32.mrb[0].mxu0
        %v7561 = vadd.f32 %v7368, %v7560
        %v7562 = vpop.f32.mrb[0].mxu0
        %v7563 = vadd.f32 %v7370, %v7562
        %v7564 = vpop.f32.mrb[0].mxu0
        %v7565 = vadd.f32 %v7372, %v7564
        %v7566 = vpop.f32.mrb[0].mxu0
        %v7567 = vadd.f32 %v7374, %v7566
        %7568 = vmatprep.mubr.bf16.mxu0 %v3131
        %7569 = vmatmul.mubr.bf16.gmra.mrb[0].mxu0 %v3130
        %v7570 = vpop.f32.mrb[0].mxu0
        %v7571 = vadd.f32 %v7378, %v7570
        %v7572 = vpop.f32.mrb[0].mxu0
        %v7573 = vadd.f32 %v7380, %v7572
        %v7574 = vpop.f32.mrb[0].mxu0
        %v7575 = vadd.f32 %v7382, %v7574
        %v7576 = vpop.f32.mrb[0].mxu0
        %v7577 = vadd.f32 %v7384, %v7576
        %7578 = vmatprep.mubr.bf16.mxu0 %v3139
        %7579 = vmatmul.mubr.bf16.gmra.mrb[0].mxu0 %v3138
        %v7580 = vpop.f32.mrb[0].mxu0
        %v7581 = vadd.f32 %v7388, %v7580
        %v7582 = vpop.f32.mrb[0].mxu0
        %v7583 = vadd.f32 %v7390, %v7582
        %v7584 = vpop.f32.mrb[0].mxu0
        %v7585 = vadd.f32 %v7392, %v7584
        %v7586 = vpop.f32.mrb[0].mxu0
        %v7587 = vadd.f32 %v7394, %v7586
        %7588 = vmatprep.mubr.bf16.mxu0 %v3147
        %7589 = vmatmul.mubr.bf16.gmra.mrb[0].mxu0 %v3146
        %v7590 = vpop.f32.mrb[0].mxu0
        %v7591 = vadd.f32 %v7398, %v7590
        %v7592 = vpop.f32.mrb[0].mxu0
        %v7593 = vadd.f32 %v7400, %v7592
        %v7594 = vpop.f32.mrb[0].mxu0
        %v7595 = vadd.f32 %v7402, %v7594
        %v7596 = vpop.f32.mrb[0].mxu0
        %v7597 = vadd.f32 %v7404, %v7596
        %7598 = vmatprep.mubr.bf16.mxu0 %v3155
        %7599 = vmatmul.mubr.bf16.gmra.mrb[0].mxu0 %v3154
        %v7600 = vpop.f32.mrb[0].mxu0
        %v7601 = vadd.f32 %v7408, %v7600
        %v7602 = vpop.f32.mrb[0].mxu0
        %v7603 = vadd.f32 %v7410, %v7602
        %v7604 = vpop.f32.mrb[0].mxu0
        %v7605 = vadd.f32 %v7412, %v7604
        %v7606 = vpop.f32.mrb[0].mxu0
        %v7607 = vadd.f32 %v7414, %v7606
        %7608 = vmatprep.mubr.bf16.mxu0 %v3163
        %7609 = vmatmul.mubr.bf16.gmra.mrb[0].mxu0 %v3162
        %v7610 = vpop.f32.mrb[0].mxu0
        %v7611 = vadd.f32 %v7418, %v7610
        %v7612 = vpop.f32.mrb[0].mxu0
        %v7613 = vadd.f32 %v7420, %v7612
        %v7614 = vpop.f32.mrb[0].mxu0
        %v7615 = vadd.f32 %v7422, %v7614
        %v7616 = vpop.f32.mrb[0].mxu0
        %v7617 = vadd.f32 %v7424, %v7616
        %7618 = vmatprep.mubr.bf16.mxu0 %v3171
        %7619 = vmatmul.mubr.bf16.gmra.mrb[0].mxu0 %v3170
        %v7620 = vpop.f32.mrb[0].mxu0
        %v7621 = vadd.f32 %v7428, %v7620
        %v7622 = vpop.f32.mrb[0].mxu0
        %v7623 = vadd.f32 %v7430, %v7622
        %v7624 = vpop.f32.mrb[0].mxu0
        %v7625 = vadd.f32 %v7432, %v7624
        %v7626 = vpop.f32.mrb[0].mxu0
        %v7627 = vadd.f32 %v7434, %v7626
        %7628 = vmatprep.mubr.bf16.mxu0 %v3179
        %7629 = vmatmul.mubr.bf16.gmra.mrb[0].mxu0 %v3178
        %v7630 = vpop.f32.mrb[0].mxu0
        %v7631 = vadd.f32 %v7438, %v7630
        %v7632 = vpop.f32.mrb[0].mxu0
        %v7633 = vadd.f32 %v7440, %v7632
        %v7634 = vpop.f32.mrb[0].mxu0
        %v7635 = vadd.f32 %v7442, %v7634
        %v7636 = vpop.f32.mrb[0].mxu0
        %v7637 = vadd.f32 %v7444, %v7636
        %7638 = vmatprep.mubr.bf16.mxu0 %v3187
        %7639 = vmatmul.mubr.bf16.gmra.mrb[0].mxu0 %v3186
        %v7640 = vpop.f32.mrb[0].mxu0
        %v7641 = vadd.f32 %v7448, %v7640
        %v7642 = vpop.f32.mrb[0].mxu0
        %v7643 = vadd.f32 %v7450, %v7642
        %v7644 = vpop.f32.mrb[0].mxu0
        %v7645 = vadd.f32 %v7452, %v7644
        %v7646 = vpop.f32.mrb[0].mxu0
        %v7647 = vadd.f32 %v7454, %v7646
        %7648 = vmatprep.mubr.bf16.mxu0 %v3195
        %7649 = vmatmul.mubr.bf16.gmra.mrb[0].mxu0 %v3194
        %v7650 = vpop.f32.mrb[0].mxu0
        %v7651 = vadd.f32 %v7458, %v7650
        %v7652 = vpop.f32.mrb[0].mxu0
        %v7653 = vadd.f32 %v7460, %v7652
        %v7654 = vpop.f32.mrb[0].mxu0
        %v7655 = vadd.f32 %v7462, %v7654
        %v7656 = vpop.f32.mrb[0].mxu0
        %v7657 = vadd.f32 %v7464, %v7656
        %7658 = vmatprep.mubr.bf16.mxu0 %v3203
        %7659 = vmatmul.mubr.bf16.gmra.mrb[0].mxu0 %v3202
        %v7660 = vpop.f32.mrb[0].mxu0
        %v7661 = vadd.f32 %v7468, %v7660
        %v7662 = vpop.f32.mrb[0].mxu0
        %v7663 = vadd.f32 %v7470, %v7662
        %v7664 = vpop.f32.mrb[0].mxu0
        %v7665 = vadd.f32 %v7472, %v7664
        %v7666 = vpop.f32.mrb[0].mxu0
        %v7667 = vadd.f32 %v7474, %v7666
        %7668 = vmatprep.mubr.bf16.mxu0 %v3211
        %7669 = vmatmul.mubr.bf16.gmra.mrb[0].mxu0 %v3210
        %v7670 = vpop.f32.mrb[0].mxu0
        %v7671 = vadd.f32 %v7478, %v7670
        %v7672 = vpop.f32.mrb[0].mxu0
        %v7673 = vadd.f32 %v7480, %v7672
        %v7674 = vpop.f32.mrb[0].mxu0
        %v7675 = vadd.f32 %v7482, %v7674
        %v7676 = vpop.f32.mrb[0].mxu0
        %v7677 = vadd.f32 %v7484, %v7676
        %7678 = vdwg.mxu0
        %7679 = vmatprep.subr.bf16.mxu0 %v5691
        %7680 = vmatpush1.bf16.msra.mxu0 %v5690
        %7681 = vmatprep.subr.bf16.mxu0 %v5699
        %7682 = vmatpush1.bf16.msra.mxu0 %v5698
        %7683 = vmatprep.subr.bf16.mxu0 %v5707
        %7684 = vmatpush1.bf16.msra.mxu0 %v5706
        %7685 = vmatprep.subr.bf16.mxu0 %v5715
        %7686 = vmatpush1.bf16.msra.mxu0 %v5714
        %7687 = vmatprep.subr.bf16.mxu0 %v5723
        %7688 = vmatpush1.bf16.msra.mxu0 %v5722
        %7689 = vmatprep.subr.bf16.mxu0 %v5731
        %7690 = vmatpush1.bf16.msra.mxu0 %v5730
        %7691 = vmatprep.subr.bf16.mxu0 %v5739
        %7692 = vmatpush1.bf16.msra.mxu0 %v5738
        %7693 = vmatprep.subr.bf16.mxu0 %v5747
        %7694 = vmatpush1.bf16.msra.mxu0 %v5746
        %7695 = vmatprep.subr.bf16.mxu0 %v5755
        %7696 = vmatpush1.bf16.msra.mxu0 %v5754
        %7697 = vmatprep.subr.bf16.mxu0 %v5763
        %7698 = vmatpush1.bf16.msra.mxu0 %v5762
        %7699 = vmatprep.subr.bf16.mxu0 %v5771
        %7700 = vmatpush1.bf16.msra.mxu0 %v5770
        %7701 = vmatprep.subr.bf16.mxu0 %v5779
        %7702 = vmatpush1.bf16.msra.mxu0 %v5778
        %7703 = vmatprep.subr.bf16.mxu0 %v5787
        %7704 = vmatpush1.bf16.msra.mxu0 %v5786
        %7705 = vmatprep.subr.bf16.mxu0 %v5795
        %7706 = vmatpush1.bf16.msra.mxu0 %v5794
        %7707 = vmatprep.subr.bf16.mxu0 %v5803
        %7708 = vmatpush1.bf16.msra.mxu0 %v5802
        %7709 = vmatprep.subr.bf16.mxu0 %v5811
        %7710 = vmatpush1.bf16.msra.mxu0 %v5810
        %7711 = vmatprep.mubr.bf16.mxu0 %v3093
        %7712 = vmatmul.mubr.bf16.gmra.mrb[0].mxu0 %v3092
        %v7713 = vpop.f32.mrb[0].mxu0
        %v7714 = vadd.f32 %v7521, %v7713
        %v7715 = vpop.f32.mrb[0].mxu0
        %v7716 = vadd.f32 %v7523, %v7715
        %v7717 = vpop.f32.mrb[0].mxu0
        %v7718 = vadd.f32 %v7525, %v7717
        %v7719 = vpop.f32.mrb[0].mxu0
        %v7720 = vadd.f32 %v7527, %v7719
        %7721 = vmatprep.mubr.bf16.mxu0 %v3101
        %7722 = vmatmul.mubr.bf16.gmra.mrb[0].mxu0 %v3100
        %v7723 = vpop.f32.mrb[0].mxu0
        %v7724 = vadd.f32 %v7531, %v7723
        %v7725 = vpop.f32.mrb[0].mxu0
        %v7726 = vadd.f32 %v7533, %v7725
        %v7727 = vpop.f32.mrb[0].mxu0
        %v7728 = vadd.f32 %v7535, %v7727
        %v7729 = vpop.f32.mrb[0].mxu0
        %v7730 = vadd.f32 %v7537, %v7729
        %7731 = vmatprep.mubr.bf16.mxu0 %v3109
        %7732 = vmatmul.mubr.bf16.gmra.mrb[0].mxu0 %v3108
        %v7733 = vpop.f32.mrb[0].mxu0
        %v7734 = vadd.f32 %v7541, %v7733
        %v7735 = vpop.f32.mrb[0].mxu0
        %v7736 = vadd.f32 %v7543, %v7735
        %v7737 = vpop.f32.mrb[0].mxu0
        %v7738 = vadd.f32 %v7545, %v7737
        %v7739 = vpop.f32.mrb[0].mxu0
        %v7740 = vadd.f32 %v7547, %v7739
        %7741 = vmatprep.mubr.bf16.mxu0 %v3117
        %7742 = vmatmul.mubr.bf16.gmra.mrb[0].mxu0 %v3116
        %v7743 = vpop.f32.mrb[0].mxu0
        %v7744 = vadd.f32 %v7551, %v7743
        %v7745 = vpop.f32.mrb[0].mxu0
        %v7746 = vadd.f32 %v7553, %v7745
        %v7747 = vpop.f32.mrb[0].mxu0
        %v7748 = vadd.f32 %v7555, %v7747
        %v7749 = vpop.f32.mrb[0].mxu0
        %v7750 = vadd.f32 %v7557, %v7749
        %7751 = vmatprep.mubr.bf16.mxu0 %v3125
        %7752 = vmatmul.mubr.bf16.gmra.mrb[0].mxu0 %v3124
        %v7753 = vpop.f32.mrb[0].mxu0
        %v7754 = vadd.f32 %v7561, %v7753
        %v7755 = vpop.f32.mrb[0].mxu0
        %v7756 = vadd.f32 %v7563, %v7755
        %v7757 = vpop.f32.mrb[0].mxu0
        %v7758 = vadd.f32 %v7565, %v7757
        %v7759 = vpop.f32.mrb[0].mxu0
        %v7760 = vadd.f32 %v7567, %v7759
        %7761 = vmatprep.mubr.bf16.mxu0 %v3133
        %7762 = vmatmul.mubr.bf16.gmra.mrb[0].mxu0 %v3132
        %v7763 = vpop.f32.mrb[0].mxu0
        %v7764 = vadd.f32 %v7571, %v7763
        %v7765 = vpop.f32.mrb[0].mxu0
        %v7766 = vadd.f32 %v7573, %v7765
        %v7767 = vpop.f32.mrb[0].mxu0
        %v7768 = vadd.f32 %v7575, %v7767
        %v7769 = vpop.f32.mrb[0].mxu0
        %v7770 = vadd.f32 %v7577, %v7769
        %7771 = vmatprep.mubr.bf16.mxu0 %v3141
        %7772 = vmatmul.mubr.bf16.gmra.mrb[0].mxu0 %v3140
        %v7773 = vpop.f32.mrb[0].mxu0
        %v7774 = vadd.f32 %v7581, %v7773
        %v7775 = vpop.f32.mrb[0].mxu0
        %v7776 = vadd.f32 %v7583, %v7775
        %v7777 = vpop.f32.mrb[0].mxu0
        %v7778 = vadd.f32 %v7585, %v7777
        %v7779 = vpop.f32.mrb[0].mxu0
        %v7780 = vadd.f32 %v7587, %v7779
        %7781 = vmatprep.mubr.bf16.mxu0 %v3149
        %7782 = vmatmul.mubr.bf16.gmra.mrb[0].mxu0 %v3148
        %v7783 = vpop.f32.mrb[0].mxu0
        %v7784 = vadd.f32 %v7591, %v7783
        %v7785 = vpop.f32.mrb[0].mxu0
        %v7786 = vadd.f32 %v7593, %v7785
        %v7787 = vpop.f32.mrb[0].mxu0
        %v7788 = vadd.f32 %v7595, %v7787
        %v7789 = vpop.f32.mrb[0].mxu0
        %v7790 = vadd.f32 %v7597, %v7789
        %7791 = vmatprep.mubr.bf16.mxu0 %v3157
        %7792 = vmatmul.mubr.bf16.gmra.mrb[0].mxu0 %v3156
        %v7793 = vpop.f32.mrb[0].mxu0
        %v7794 = vadd.f32 %v7601, %v7793
        %v7795 = vpop.f32.mrb[0].mxu0
        %v7796 = vadd.f32 %v7603, %v7795
        %v7797 = vpop.f32.mrb[0].mxu0
        %v7798 = vadd.f32 %v7605, %v7797
        %v7799 = vpop.f32.mrb[0].mxu0
        %v7800 = vadd.f32 %v7607, %v7799
        %7801 = vmatprep.mubr.bf16.mxu0 %v3165
        %7802 = vmatmul.mubr.bf16.gmra.mrb[0].mxu0 %v3164
        %v7803 = vpop.f32.mrb[0].mxu0
        %v7804 = vadd.f32 %v7611, %v7803
        %v7805 = vpop.f32.mrb[0].mxu0
        %v7806 = vadd.f32 %v7613, %v7805
        %v7807 = vpop.f32.mrb[0].mxu0
        %v7808 = vadd.f32 %v7615, %v7807
        %v7809 = vpop.f32.mrb[0].mxu0
        %v7810 = vadd.f32 %v7617, %v7809
        %7811 = vmatprep.mubr.bf16.mxu0 %v3173
        %7812 = vmatmul.mubr.bf16.gmra.mrb[0].mxu0 %v3172
        %v7813 = vpop.f32.mrb[0].mxu0
        %v7814 = vadd.f32 %v7621, %v7813
        %v7815 = vpop.f32.mrb[0].mxu0
        %v7816 = vadd.f32 %v7623, %v7815
        %v7817 = vpop.f32.mrb[0].mxu0
        %v7818 = vadd.f32 %v7625, %v7817
        %v7819 = vpop.f32.mrb[0].mxu0
        %v7820 = vadd.f32 %v7627, %v7819
        %7821 = vmatprep.mubr.bf16.mxu0 %v3181
        %7822 = vmatmul.mubr.bf16.gmra.mrb[0].mxu0 %v3180
        %v7823 = vpop.f32.mrb[0].mxu0
        %v7824 = vadd.f32 %v7631, %v7823
        %v7825 = vpop.f32.mrb[0].mxu0
        %v7826 = vadd.f32 %v7633, %v7825
        %v7827 = vpop.f32.mrb[0].mxu0
        %v7828 = vadd.f32 %v7635, %v7827
        %v7829 = vpop.f32.mrb[0].mxu0
        %v7830 = vadd.f32 %v7637, %v7829
        %7831 = vmatprep.mubr.bf16.mxu0 %v3189
        %7832 = vmatmul.mubr.bf16.gmra.mrb[0].mxu0 %v3188
        %v7833 = vpop.f32.mrb[0].mxu0
        %v7834 = vadd.f32 %v7641, %v7833
        %v7835 = vpop.f32.mrb[0].mxu0
        %v7836 = vadd.f32 %v7643, %v7835
        %v7837 = vpop.f32.mrb[0].mxu0
        %v7838 = vadd.f32 %v7645, %v7837
        %v7839 = vpop.f32.mrb[0].mxu0
        %v7840 = vadd.f32 %v7647, %v7839
        %7841 = vmatprep.mubr.bf16.mxu0 %v3197
        %7842 = vmatmul.mubr.bf16.gmra.mrb[0].mxu0 %v3196
        %v7843 = vpop.f32.mrb[0].mxu0
        %v7844 = vadd.f32 %v7651, %v7843
        %v7845 = vpop.f32.mrb[0].mxu0
        %v7846 = vadd.f32 %v7653, %v7845
        %v7847 = vpop.f32.mrb[0].mxu0
        %v7848 = vadd.f32 %v7655, %v7847
        %v7849 = vpop.f32.mrb[0].mxu0
        %v7850 = vadd.f32 %v7657, %v7849
        %7851 = vmatprep.mubr.bf16.mxu0 %v3205
        %7852 = vmatmul.mubr.bf16.gmra.mrb[0].mxu0 %v3204
        %v7853 = vpop.f32.mrb[0].mxu0
        %v7854 = vadd.f32 %v7661, %v7853
        %v7855 = vpop.f32.mrb[0].mxu0
        %v7856 = vadd.f32 %v7663, %v7855
        %v7857 = vpop.f32.mrb[0].mxu0
        %v7858 = vadd.f32 %v7665, %v7857
        %v7859 = vpop.f32.mrb[0].mxu0
        %v7860 = vadd.f32 %v7667, %v7859
        %7861 = vmatprep.mubr.bf16.mxu0 %v3213
        %7862 = vmatmul.mubr.bf16.gmra.mrb[0].mxu0 %v3212
        %v7863 = vpop.f32.mrb[0].mxu0
        %v7864 = vadd.f32 %v7671, %v7863
        %v7865 = vpop.f32.mrb[0].mxu0
        %v7866 = vadd.f32 %v7673, %v7865
        %v7867 = vpop.f32.mrb[0].mxu0
        %v7868 = vadd.f32 %v7675, %v7867
        %v7869 = vpop.f32.mrb[0].mxu0
        %v7870 = vadd.f32 %v7677, %v7869
        %7871 = vdwg.mxu0
        %7872 = vmatprep.subr.bf16.mxu0 %v5309
        %7873 = vmatpush1.bf16.msra.mxu0 %v5308
        %7874 = vmatprep.subr.bf16.mxu0 %v5317
        %7875 = vmatpush1.bf16.msra.mxu0 %v5316
        %7876 = vmatprep.subr.bf16.mxu0 %v5325
        %7877 = vmatpush1.bf16.msra.mxu0 %v5324
        %7878 = vmatprep.subr.bf16.mxu0 %v5333
        %7879 = vmatpush1.bf16.msra.mxu0 %v5332
        %7880 = vmatprep.subr.bf16.mxu0 %v5341
        %7881 = vmatpush1.bf16.msra.mxu0 %v5340
        %7882 = vmatprep.subr.bf16.mxu0 %v5349
        %7883 = vmatpush1.bf16.msra.mxu0 %v5348
        %7884 = vmatprep.subr.bf16.mxu0 %v5357
        %7885 = vmatpush1.bf16.msra.mxu0 %v5356
        %7886 = vmatprep.subr.bf16.mxu0 %v5365
        %7887 = vmatpush1.bf16.msra.mxu0 %v5364
        %7888 = vmatprep.subr.bf16.mxu0 %v5373
        %7889 = vmatpush1.bf16.msra.mxu0 %v5372
        %7890 = vmatprep.subr.bf16.mxu0 %v5381
        %7891 = vmatpush1.bf16.msra.mxu0 %v5380
        %7892 = vmatprep.subr.bf16.mxu0 %v5389
        %7893 = vmatpush1.bf16.msra.mxu0 %v5388
        %7894 = vmatprep.subr.bf16.mxu0 %v5397
        %7895 = vmatpush1.bf16.msra.mxu0 %v5396
        %7896 = vmatprep.subr.bf16.mxu0 %v5405
        %7897 = vmatpush1.bf16.msra.mxu0 %v5404
        %7898 = vmatprep.subr.bf16.mxu0 %v5413
        %7899 = vmatpush1.bf16.msra.mxu0 %v5412
        %7900 = vmatprep.subr.bf16.mxu0 %v5421
        %7901 = vmatpush1.bf16.msra.mxu0 %v5420
        %7902 = vmatprep.subr.bf16.mxu0 %v5429
        %7903 = vmatpush1.bf16.msra.mxu0 %v5428
        %7904 = vmatprep.mubr.bf16.mxu0 %v3087
        %7905 = vmatmul.mubr.bf16.gmra.mrb[0].mxu0 %v3086
        %v7906 = vpop.f32.mrb[0].mxu0
        %v7907 = vadd.f32 %v3747, %v7906
        %v7908 = vpop.f32.mrb[0].mxu0
        %v7909 = vadd.f32 %v3751, %v7908
        %v7910 = vpop.f32.mrb[0].mxu0
        %v7911 = vadd.f32 %v3747, %v7910
        %v7912 = vpop.f32.mrb[0].mxu0
        %v7913 = vadd.f32 %v3751, %v7912
        %7914 = vmatprep.mubr.bf16.mxu0 %v3095
        %7915 = vmatmul.mubr.bf16.gmra.mrb[0].mxu0 %v3094
        %v7916 = vpop.f32.mrb[0].mxu0
        %v7917 = vadd.f32 %v3747, %v7916
        %v7918 = vpop.f32.mrb[0].mxu0
        %v7919 = vadd.f32 %v3751, %v7918
        %v7920 = vpop.f32.mrb[0].mxu0
        %v7921 = vadd.f32 %v3747, %v7920
        %v7922 = vpop.f32.mrb[0].mxu0
        %v7923 = vadd.f32 %v3751, %v7922
        %7924 = vmatprep.mubr.bf16.mxu0 %v3103
        %7925 = vmatmul.mubr.bf16.gmra.mrb[0].mxu0 %v3102
        %v7926 = vpop.f32.mrb[0].mxu0
        %v7927 = vadd.f32 %v3747, %v7926
        %v7928 = vpop.f32.mrb[0].mxu0
        %v7929 = vadd.f32 %v3751, %v7928
        %v7930 = vpop.f32.mrb[0].mxu0
        %v7931 = vadd.f32 %v3747, %v7930
        %v7932 = vpop.f32.mrb[0].mxu0
        %v7933 = vadd.f32 %v3751, %v7932
        %7934 = vmatprep.mubr.bf16.mxu0 %v3111
        %7935 = vmatmul.mubr.bf16.gmra.mrb[0].mxu0 %v3110
        %v7936 = vpop.f32.mrb[0].mxu0
        %v7937 = vadd.f32 %v3747, %v7936
        %v7938 = vpop.f32.mrb[0].mxu0
        %v7939 = vadd.f32 %v3751, %v7938
        %v7940 = vpop.f32.mrb[0].mxu0
        %v7941 = vadd.f32 %v3747, %v7940
        %v7942 = vpop.f32.mrb[0].mxu0
        %v7943 = vadd.f32 %v3751, %v7942
        %7944 = vmatprep.mubr.bf16.mxu0 %v3119
        %7945 = vmatmul.mubr.bf16.gmra.mrb[0].mxu0 %v3118
        %v7946 = vpop.f32.mrb[0].mxu0
        %v7947 = vadd.f32 %v3747, %v7946
        %v7948 = vpop.f32.mrb[0].mxu0
        %v7949 = vadd.f32 %v3751, %v7948
        %v7950 = vpop.f32.mrb[0].mxu0
        %v7951 = vadd.f32 %v3747, %v7950
        %v7952 = vpop.f32.mrb[0].mxu0
        %v7953 = vadd.f32 %v3751, %v7952
        %7954 = vmatprep.mubr.bf16.mxu0 %v3127
        %7955 = vmatmul.mubr.bf16.gmra.mrb[0].mxu0 %v3126
        %v7956 = vpop.f32.mrb[0].mxu0
        %v7957 = vadd.f32 %v3747, %v7956
        %v7958 = vpop.f32.mrb[0].mxu0
        %v7959 = vadd.f32 %v3751, %v7958
        %v7960 = vpop.f32.mrb[0].mxu0
        %v7961 = vadd.f32 %v3747, %v7960
        %v7962 = vpop.f32.mrb[0].mxu0
        %v7963 = vadd.f32 %v3751, %v7962
        %7964 = vmatprep.mubr.bf16.mxu0 %v3135
        %7965 = vmatmul.mubr.bf16.gmra.mrb[0].mxu0 %v3134
        %v7966 = vpop.f32.mrb[0].mxu0
        %v7967 = vadd.f32 %v3747, %v7966
        %v7968 = vpop.f32.mrb[0].mxu0
        %v7969 = vadd.f32 %v3751, %v7968
        %v7970 = vpop.f32.mrb[0].mxu0
        %v7971 = vadd.f32 %v3747, %v7970
        %v7972 = vpop.f32.mrb[0].mxu0
        %v7973 = vadd.f32 %v3751, %v7972
        %7974 = vmatprep.mubr.bf16.mxu0 %v3143
        %7975 = vmatmul.mubr.bf16.gmra.mrb[0].mxu0 %v3142
        %v7976 = vpop.f32.mrb[0].mxu0
        %v7977 = vadd.f32 %v3747, %v7976
        %v7978 = vpop.f32.mrb[0].mxu0
        %v7979 = vadd.f32 %v3751, %v7978
        %v7980 = vpop.f32.mrb[0].mxu0
        %v7981 = vadd.f32 %v3747, %v7980
        %v7982 = vpop.f32.mrb[0].mxu0
        %v7983 = vadd.f32 %v3751, %v7982
        %7984 = vmatprep.mubr.bf16.mxu0 %v3151
        %7985 = vmatmul.mubr.bf16.gmra.mrb[0].mxu0 %v3150
        %v7986 = vpop.f32.mrb[0].mxu0
        %v7987 = vadd.f32 %v3747, %v7986
        %v7988 = vpop.f32.mrb[0].mxu0
        %v7989 = vadd.f32 %v3751, %v7988
        %v7990 = vpop.f32.mrb[0].mxu0
        %v7991 = vadd.f32 %v3747, %v7990
        %v7992 = vpop.f32.mrb[0].mxu0
        %v7993 = vadd.f32 %v3751, %v7992
        %7994 = vmatprep.mubr.bf16.mxu0 %v3159
        %7995 = vmatmul.mubr.bf16.gmra.mrb[0].mxu0 %v3158
        %v7996 = vpop.f32.mrb[0].mxu0
        %v7997 = vadd.f32 %v3747, %v7996
        %v7998 = vpop.f32.mrb[0].mxu0
        %v7999 = vadd.f32 %v3751, %v7998
        %v8000 = vpop.f32.mrb[0].mxu0
        %v8001 = vadd.f32 %v3747, %v8000
        %v8002 = vpop.f32.mrb[0].mxu0
        %v8003 = vadd.f32 %v3751, %v8002
        %8004 = vmatprep.mubr.bf16.mxu0 %v3167
        %8005 = vmatmul.mubr.bf16.gmra.mrb[0].mxu0 %v3166
        %v8006 = vpop.f32.mrb[0].mxu0
        %v8007 = vadd.f32 %v3747, %v8006
        %v8008 = vpop.f32.mrb[0].mxu0
        %v8009 = vadd.f32 %v3751, %v8008
        %v8010 = vpop.f32.mrb[0].mxu0
        %v8011 = vadd.f32 %v3747, %v8010
        %v8012 = vpop.f32.mrb[0].mxu0
        %v8013 = vadd.f32 %v3751, %v8012
        %8014 = vmatprep.mubr.bf16.mxu0 %v3175
        %8015 = vmatmul.mubr.bf16.gmra.mrb[0].mxu0 %v3174
        %v8016 = vpop.f32.mrb[0].mxu0
        %v8017 = vadd.f32 %v3747, %v8016
        %v8018 = vpop.f32.mrb[0].mxu0
        %v8019 = vadd.f32 %v3751, %v8018
        %v8020 = vpop.f32.mrb[0].mxu0
        %v8021 = vadd.f32 %v3747, %v8020
        %v8022 = vpop.f32.mrb[0].mxu0
        %v8023 = vadd.f32 %v3751, %v8022
        %8024 = vmatprep.mubr.bf16.mxu0 %v3183
        %8025 = vmatmul.mubr.bf16.gmra.mrb[0].mxu0 %v3182
        %v8026 = vpop.f32.mrb[0].mxu0
        %v8027 = vadd.f32 %v3747, %v8026
        %v8028 = vpop.f32.mrb[0].mxu0
        %v8029 = vadd.f32 %v3751, %v8028
        %v8030 = vpop.f32.mrb[0].mxu0
        %v8031 = vadd.f32 %v3747, %v8030
        %v8032 = vpop.f32.mrb[0].mxu0
        %v8033 = vadd.f32 %v3751, %v8032
        %8034 = vmatprep.mubr.bf16.mxu0 %v3191
        %8035 = vmatmul.mubr.bf16.gmra.mrb[0].mxu0 %v3190
        %v8036 = vpop.f32.mrb[0].mxu0
        %v8037 = vadd.f32 %v3747, %v8036
        %v8038 = vpop.f32.mrb[0].mxu0
        %v8039 = vadd.f32 %v3751, %v8038
        %v8040 = vpop.f32.mrb[0].mxu0
        %v8041 = vadd.f32 %v3747, %v8040
        %v8042 = vpop.f32.mrb[0].mxu0
        %v8043 = vadd.f32 %v3751, %v8042
        %8044 = vmatprep.mubr.bf16.mxu0 %v3199
        %8045 = vmatmul.mubr.bf16.gmra.mrb[0].mxu0 %v3198
        %v8046 = vpop.f32.mrb[0].mxu0
        %v8047 = vadd.f32 %v3747, %v8046
        %v8048 = vpop.f32.mrb[0].mxu0
        %v8049 = vadd.f32 %v3751, %v8048
        %v8050 = vpop.f32.mrb[0].mxu0
        %v8051 = vadd.f32 %v3747, %v8050
        %v8052 = vpop.f32.mrb[0].mxu0
        %v8053 = vadd.f32 %v3751, %v8052
        %8054 = vmatprep.mubr.bf16.mxu0 %v3207
        %8055 = vmatmul.mubr.bf16.gmra.mrb[0].mxu0 %v3206
        %v8056 = vpop.f32.mrb[0].mxu0
        %v8057 = vadd.f32 %v3747, %v8056
        %v8058 = vpop.f32.mrb[0].mxu0
        %v8059 = vadd.f32 %v3751, %v8058
        %v8060 = vpop.f32.mrb[0].mxu0
        %v8061 = vadd.f32 %v3747, %v8060
        %v8062 = vpop.f32.mrb[0].mxu0
        %v8063 = vadd.f32 %v3751, %v8062
        %8064 = vdwg.mxu0
        %8065 = vmatprep.subr.bf16.mxu0 %v5437
        %8066 = vmatpush1.bf16.msra.mxu0 %v5436
        %8067 = vmatprep.subr.bf16.mxu0 %v5445
        %8068 = vmatpush1.bf16.msra.mxu0 %v5444
        %8069 = vmatprep.subr.bf16.mxu0 %v5453
        %8070 = vmatpush1.bf16.msra.mxu0 %v5452
        %8071 = vmatprep.subr.bf16.mxu0 %v5461
        %8072 = vmatpush1.bf16.msra.mxu0 %v5460
        %8073 = vmatprep.subr.bf16.mxu0 %v5469
        %8074 = vmatpush1.bf16.msra.mxu0 %v5468
        %8075 = vmatprep.subr.bf16.mxu0 %v5477
        %8076 = vmatpush1.bf16.msra.mxu0 %v5476
        %8077 = vmatprep.subr.bf16.mxu0 %v5485
        %8078 = vmatpush1.bf16.msra.mxu0 %v5484
        %8079 = vmatprep.subr.bf16.mxu0 %v5493
        %8080 = vmatpush1.bf16.msra.mxu0 %v5492
        %8081 = vmatprep.subr.bf16.mxu0 %v5501
        %8082 = vmatpush1.bf16.msra.mxu0 %v5500
        %8083 = vmatprep.subr.bf16.mxu0 %v5509
        %8084 = vmatpush1.bf16.msra.mxu0 %v5508
        %8085 = vmatprep.subr.bf16.mxu0 %v5517
        %8086 = vmatpush1.bf16.msra.mxu0 %v5516
        %8087 = vmatprep.subr.bf16.mxu0 %v5525
        %8088 = vmatpush1.bf16.msra.mxu0 %v5524
        %8089 = vmatprep.subr.bf16.mxu0 %v5533
        %8090 = vmatpush1.bf16.msra.mxu0 %v5532
        %8091 = vmatprep.subr.bf16.mxu0 %v5541
        %8092 = vmatpush1.bf16.msra.mxu0 %v5540
        %8093 = vmatprep.subr.bf16.mxu0 %v5549
        %8094 = vmatpush1.bf16.msra.mxu0 %v5548
        %8095 = vmatprep.subr.bf16.mxu0 %v5557
        %8096 = vmatpush1.bf16.msra.mxu0 %v5556
        %8097 = vmatprep.mubr.bf16.mxu0 %v3089
        %8098 = vmatmul.mubr.bf16.gmra.mrb[0].mxu0 %v3088
        %v8099 = vpop.f32.mrb[0].mxu0
        %v8100 = vadd.f32 %v7907, %v8099
        %v8101 = vpop.f32.mrb[0].mxu0
        %v8102 = vadd.f32 %v7909, %v8101
        %v8103 = vpop.f32.mrb[0].mxu0
        %v8104 = vadd.f32 %v7911, %v8103
        %v8105 = vpop.f32.mrb[0].mxu0
        %v8106 = vadd.f32 %v7913, %v8105
        %8107 = vmatprep.mubr.bf16.mxu0 %v3097
        %8108 = vmatmul.mubr.bf16.gmra.mrb[0].mxu0 %v3096
        %v8109 = vpop.f32.mrb[0].mxu0
        %v8110 = vadd.f32 %v7917, %v8109
        %v8111 = vpop.f32.mrb[0].mxu0
        %v8112 = vadd.f32 %v7919, %v8111
        %v8113 = vpop.f32.mrb[0].mxu0
        %v8114 = vadd.f32 %v7921, %v8113
        %v8115 = vpop.f32.mrb[0].mxu0
        %v8116 = vadd.f32 %v7923, %v8115
        %8117 = vmatprep.mubr.bf16.mxu0 %v3105
        %8118 = vmatmul.mubr.bf16.gmra.mrb[0].mxu0 %v3104
        %v8119 = vpop.f32.mrb[0].mxu0
        %v8120 = vadd.f32 %v7927, %v8119
        %v8121 = vpop.f32.mrb[0].mxu0
        %v8122 = vadd.f32 %v7929, %v8121
        %v8123 = vpop.f32.mrb[0].mxu0
        %v8124 = vadd.f32 %v7931, %v8123
        %v8125 = vpop.f32.mrb[0].mxu0
        %v8126 = vadd.f32 %v7933, %v8125
        %8127 = vmatprep.mubr.bf16.mxu0 %v3113
        %8128 = vmatmul.mubr.bf16.gmra.mrb[0].mxu0 %v3112
        %v8129 = vpop.f32.mrb[0].mxu0
        %v8130 = vadd.f32 %v7937, %v8129
        %v8131 = vpop.f32.mrb[0].mxu0
        %v8132 = vadd.f32 %v7939, %v8131
        %v8133 = vpop.f32.mrb[0].mxu0
        %v8134 = vadd.f32 %v7941, %v8133
        %v8135 = vpop.f32.mrb[0].mxu0
        %v8136 = vadd.f32 %v7943, %v8135
        %8137 = vmatprep.mubr.bf16.mxu0 %v3121
        %8138 = vmatmul.mubr.bf16.gmra.mrb[0].mxu0 %v3120
        %v8139 = vpop.f32.mrb[0].mxu0
        %v8140 = vadd.f32 %v7947, %v8139
        %v8141 = vpop.f32.mrb[0].mxu0
        %v8142 = vadd.f32 %v7949, %v8141
        %v8143 = vpop.f32.mrb[0].mxu0
        %v8144 = vadd.f32 %v7951, %v8143
        %v8145 = vpop.f32.mrb[0].mxu0
        %v8146 = vadd.f32 %v7953, %v8145
        %8147 = vmatprep.mubr.bf16.mxu0 %v3129
        %8148 = vmatmul.mubr.bf16.gmra.mrb[0].mxu0 %v3128
        %v8149 = vpop.f32.mrb[0].mxu0
        %v8150 = vadd.f32 %v7957, %v8149
        %v8151 = vpop.f32.mrb[0].mxu0
        %v8152 = vadd.f32 %v7959, %v8151
        %v8153 = vpop.f32.mrb[0].mxu0
        %v8154 = vadd.f32 %v7961, %v8153
        %v8155 = vpop.f32.mrb[0].mxu0
        %v8156 = vadd.f32 %v7963, %v8155
        %8157 = vmatprep.mubr.bf16.mxu0 %v3137
        %8158 = vmatmul.mubr.bf16.gmra.mrb[0].mxu0 %v3136
        %v8159 = vpop.f32.mrb[0].mxu0
        %v8160 = vadd.f32 %v7967, %v8159
        %v8161 = vpop.f32.mrb[0].mxu0
        %v8162 = vadd.f32 %v7969, %v8161
        %v8163 = vpop.f32.mrb[0].mxu0
        %v8164 = vadd.f32 %v7971, %v8163
        %v8165 = vpop.f32.mrb[0].mxu0
        %v8166 = vadd.f32 %v7973, %v8165
        %8167 = vmatprep.mubr.bf16.mxu0 %v3145
        %8168 = vmatmul.mubr.bf16.gmra.mrb[0].mxu0 %v3144
        %v8169 = vpop.f32.mrb[0].mxu0
        %v8170 = vadd.f32 %v7977, %v8169
        %v8171 = vpop.f32.mrb[0].mxu0
        %v8172 = vadd.f32 %v7979, %v8171
        %v8173 = vpop.f32.mrb[0].mxu0
        %v8174 = vadd.f32 %v7981, %v8173
        %v8175 = vpop.f32.mrb[0].mxu0
        %v8176 = vadd.f32 %v7983, %v8175
        %8177 = vmatprep.mubr.bf16.mxu0 %v3153
        %8178 = vmatmul.mubr.bf16.gmra.mrb[0].mxu0 %v3152
        %v8179 = vpop.f32.mrb[0].mxu0
        %v8180 = vadd.f32 %v7987, %v8179
        %v8181 = vpop.f32.mrb[0].mxu0
        %v8182 = vadd.f32 %v7989, %v8181
        %v8183 = vpop.f32.mrb[0].mxu0
        %v8184 = vadd.f32 %v7991, %v8183
        %v8185 = vpop.f32.mrb[0].mxu0
        %v8186 = vadd.f32 %v7993, %v8185
        %8187 = vmatprep.mubr.bf16.mxu0 %v3161
        %8188 = vmatmul.mubr.bf16.gmra.mrb[0].mxu0 %v3160
        %v8189 = vpop.f32.mrb[0].mxu0
        %v8190 = vadd.f32 %v7997, %v8189
        %v8191 = vpop.f32.mrb[0].mxu0
        %v8192 = vadd.f32 %v7999, %v8191
        %v8193 = vpop.f32.mrb[0].mxu0
        %v8194 = vadd.f32 %v8001, %v8193
        %v8195 = vpop.f32.mrb[0].mxu0
        %v8196 = vadd.f32 %v8003, %v8195
        %8197 = vmatprep.mubr.bf16.mxu0 %v3169
        %8198 = vmatmul.mubr.bf16.gmra.mrb[0].mxu0 %v3168
        %v8199 = vpop.f32.mrb[0].mxu0
        %v8200 = vadd.f32 %v8007, %v8199
        %v8201 = vpop.f32.mrb[0].mxu0
        %v8202 = vadd.f32 %v8009, %v8201
        %v8203 = vpop.f32.mrb[0].mxu0
        %v8204 = vadd.f32 %v8011, %v8203
        %v8205 = vpop.f32.mrb[0].mxu0
        %v8206 = vadd.f32 %v8013, %v8205
        %8207 = vmatprep.mubr.bf16.mxu0 %v3177
        %8208 = vmatmul.mubr.bf16.gmra.mrb[0].mxu0 %v3176
        %v8209 = vpop.f32.mrb[0].mxu0
        %v8210 = vadd.f32 %v8017, %v8209
        %v8211 = vpop.f32.mrb[0].mxu0
        %v8212 = vadd.f32 %v8019, %v8211
        %v8213 = vpop.f32.mrb[0].mxu0
        %v8214 = vadd.f32 %v8021, %v8213
        %v8215 = vpop.f32.mrb[0].mxu0
        %v8216 = vadd.f32 %v8023, %v8215
        %8217 = vmatprep.mubr.bf16.mxu0 %v3185
        %8218 = vmatmul.mubr.bf16.gmra.mrb[0].mxu0 %v3184
        %v8219 = vpop.f32.mrb[0].mxu0
        %v8220 = vadd.f32 %v8027, %v8219
        %v8221 = vpop.f32.mrb[0].mxu0
        %v8222 = vadd.f32 %v8029, %v8221
        %v8223 = vpop.f32.mrb[0].mxu0
        %v8224 = vadd.f32 %v8031, %v8223
        %v8225 = vpop.f32.mrb[0].mxu0
        %v8226 = vadd.f32 %v8033, %v8225
        %8227 = vmatprep.mubr.bf16.mxu0 %v3193
        %8228 = vmatmul.mubr.bf16.gmra.mrb[0].mxu0 %v3192
        %v8229 = vpop.f32.mrb[0].mxu0
        %v8230 = vadd.f32 %v8037, %v8229
        %v8231 = vpop.f32.mrb[0].mxu0
        %v8232 = vadd.f32 %v8039, %v8231
        %v8233 = vpop.f32.mrb[0].mxu0
        %v8234 = vadd.f32 %v8041, %v8233
        %v8235 = vpop.f32.mrb[0].mxu0
        %v8236 = vadd.f32 %v8043, %v8235
        %8237 = vmatprep.mubr.bf16.mxu0 %v3201
        %8238 = vmatmul.mubr.bf16.gmra.mrb[0].mxu0 %v3200
        %v8239 = vpop.f32.mrb[0].mxu0
        %v8240 = vadd.f32 %v8047, %v8239
        %v8241 = vpop.f32.mrb[0].mxu0
        %v8242 = vadd.f32 %v8049, %v8241
        %v8243 = vpop.f32.mrb[0].mxu0
        %v8244 = vadd.f32 %v8051, %v8243
        %v8245 = vpop.f32.mrb[0].mxu0
        %v8246 = vadd.f32 %v8053, %v8245
        %8247 = vmatprep.mubr.bf16.mxu0 %v3209
        %8248 = vmatmul.mubr.bf16.gmra.mrb[0].mxu0 %v3208
        %v8249 = vpop.f32.mrb[0].mxu0
        %v8250 = vadd.f32 %v8057, %v8249
        %v8251 = vpop.f32.mrb[0].mxu0
        %v8252 = vadd.f32 %v8059, %v8251
        %v8253 = vpop.f32.mrb[0].mxu0
        %v8254 = vadd.f32 %v8061, %v8253
        %v8255 = vpop.f32.mrb[0].mxu0
        %v8256 = vadd.f32 %v8063, %v8255
        %8257 = vdwg.mxu0
        %8258 = vmatprep.subr.bf16.mxu0 %v5565
        %8259 = vmatpush1.bf16.msra.mxu0 %v5564
        %8260 = vmatprep.subr.bf16.mxu0 %v5573
        %8261 = vmatpush1.bf16.msra.mxu0 %v5572
        %8262 = vmatprep.subr.bf16.mxu0 %v5581
        %8263 = vmatpush1.bf16.msra.mxu0 %v5580
        %8264 = vmatprep.subr.bf16.mxu0 %v5589
        %8265 = vmatpush1.bf16.msra.mxu0 %v5588
        %8266 = vmatprep.subr.bf16.mxu0 %v5597
        %8267 = vmatpush1.bf16.msra.mxu0 %v5596
        %8268 = vmatprep.subr.bf16.mxu0 %v5605
        %8269 = vmatpush1.bf16.msra.mxu0 %v5604
        %8270 = vmatprep.subr.bf16.mxu0 %v5613
        %8271 = vmatpush1.bf16.msra.mxu0 %v5612
        %8272 = vmatprep.subr.bf16.mxu0 %v5621
        %8273 = vmatpush1.bf16.msra.mxu0 %v5620
        %8274 = vmatprep.subr.bf16.mxu0 %v5629
        %8275 = vmatpush1.bf16.msra.mxu0 %v5628
        %8276 = vmatprep.subr.bf16.mxu0 %v5637
        %8277 = vmatpush1.bf16.msra.mxu0 %v5636
        %8278 = vmatprep.subr.bf16.mxu0 %v5645
        %8279 = vmatpush1.bf16.msra.mxu0 %v5644
        %8280 = vmatprep.subr.bf16.mxu0 %v5653
        %8281 = vmatpush1.bf16.msra.mxu0 %v5652
        %8282 = vmatprep.subr.bf16.mxu0 %v5661
        %8283 = vmatpush1.bf16.msra.mxu0 %v5660
        %8284 = vmatprep.subr.bf16.mxu0 %v5669
        %8285 = vmatpush1.bf16.msra.mxu0 %v5668
        %8286 = vmatprep.subr.bf16.mxu0 %v5677
        %8287 = vmatpush1.bf16.msra.mxu0 %v5676
        %8288 = vmatprep.subr.bf16.mxu0 %v5685
        %8289 = vmatpush1.bf16.msra.mxu0 %v5684
        %8290 = vmatprep.mubr.bf16.mxu0 %v3091
        %8291 = vmatmul.mubr.bf16.gmra.mrb[0].mxu0 %v3090
        %v8292 = vpop.f32.mrb[0].mxu0
        %v8293 = vadd.f32 %v8100, %v8292
        %v8294 = vpop.f32.mrb[0].mxu0
        %v8295 = vadd.f32 %v8102, %v8294
        %v8296 = vpop.f32.mrb[0].mxu0
        %v8297 = vadd.f32 %v8104, %v8296
        %v8298 = vpop.f32.mrb[0].mxu0
        %v8299 = vadd.f32 %v8106, %v8298
        %8300 = vmatprep.mubr.bf16.mxu0 %v3099
        %8301 = vmatmul.mubr.bf16.gmra.mrb[0].mxu0 %v3098
        %v8302 = vpop.f32.mrb[0].mxu0
        %v8303 = vadd.f32 %v8110, %v8302
        %v8304 = vpop.f32.mrb[0].mxu0
        %v8305 = vadd.f32 %v8112, %v8304
        %v8306 = vpop.f32.mrb[0].mxu0
        %v8307 = vadd.f32 %v8114, %v8306
        %v8308 = vpop.f32.mrb[0].mxu0
        %v8309 = vadd.f32 %v8116, %v8308
        %8310 = vmatprep.mubr.bf16.mxu0 %v3107
        %8311 = vmatmul.mubr.bf16.gmra.mrb[0].mxu0 %v3106
        %v8312 = vpop.f32.mrb[0].mxu0
        %v8313 = vadd.f32 %v8120, %v8312
        %v8314 = vpop.f32.mrb[0].mxu0
        %v8315 = vadd.f32 %v8122, %v8314
        %v8316 = vpop.f32.mrb[0].mxu0
        %v8317 = vadd.f32 %v8124, %v8316
        %v8318 = vpop.f32.mrb[0].mxu0
        %v8319 = vadd.f32 %v8126, %v8318
        %8320 = vmatprep.mubr.bf16.mxu0 %v3115
        %8321 = vmatmul.mubr.bf16.gmra.mrb[0].mxu0 %v3114
        %v8322 = vpop.f32.mrb[0].mxu0
        %v8323 = vadd.f32 %v8130, %v8322
        %v8324 = vpop.f32.mrb[0].mxu0
        %v8325 = vadd.f32 %v8132, %v8324
        %v8326 = vpop.f32.mrb[0].mxu0
        %v8327 = vadd.f32 %v8134, %v8326
        %v8328 = vpop.f32.mrb[0].mxu0
        %v8329 = vadd.f32 %v8136, %v8328
        %8330 = vmatprep.mubr.bf16.mxu0 %v3123
        %8331 = vmatmul.mubr.bf16.gmra.mrb[0].mxu0 %v3122
        %v8332 = vpop.f32.mrb[0].mxu0
        %v8333 = vadd.f32 %v8140, %v8332
        %v8334 = vpop.f32.mrb[0].mxu0
        %v8335 = vadd.f32 %v8142, %v8334
        %v8336 = vpop.f32.mrb[0].mxu0
        %v8337 = vadd.f32 %v8144, %v8336
        %v8338 = vpop.f32.mrb[0].mxu0
        %v8339 = vadd.f32 %v8146, %v8338
        %8340 = vmatprep.mubr.bf16.mxu0 %v3131
        %8341 = vmatmul.mubr.bf16.gmra.mrb[0].mxu0 %v3130
        %v8342 = vpop.f32.mrb[0].mxu0
        %v8343 = vadd.f32 %v8150, %v8342
        %v8344 = vpop.f32.mrb[0].mxu0
        %v8345 = vadd.f32 %v8152, %v8344
        %v8346 = vpop.f32.mrb[0].mxu0
        %v8347 = vadd.f32 %v8154, %v8346
        %v8348 = vpop.f32.mrb[0].mxu0
        %v8349 = vadd.f32 %v8156, %v8348
        %8350 = vmatprep.mubr.bf16.mxu0 %v3139
        %8351 = vmatmul.mubr.bf16.gmra.mrb[0].mxu0 %v3138
        %v8352 = vpop.f32.mrb[0].mxu0
        %v8353 = vadd.f32 %v8160, %v8352
        %v8354 = vpop.f32.mrb[0].mxu0
        %v8355 = vadd.f32 %v8162, %v8354
        %v8356 = vpop.f32.mrb[0].mxu0
        %v8357 = vadd.f32 %v8164, %v8356
        %v8358 = vpop.f32.mrb[0].mxu0
        %v8359 = vadd.f32 %v8166, %v8358
        %8360 = vmatprep.mubr.bf16.mxu0 %v3147
        %8361 = vmatmul.mubr.bf16.gmra.mrb[0].mxu0 %v3146
        %v8362 = vpop.f32.mrb[0].mxu0
        %v8363 = vadd.f32 %v8170, %v8362
        %v8364 = vpop.f32.mrb[0].mxu0
        %v8365 = vadd.f32 %v8172, %v8364
        %v8366 = vpop.f32.mrb[0].mxu0
        %v8367 = vadd.f32 %v8174, %v8366
        %v8368 = vpop.f32.mrb[0].mxu0
        %v8369 = vadd.f32 %v8176, %v8368
        %8370 = vmatprep.mubr.bf16.mxu0 %v3155
        %8371 = vmatmul.mubr.bf16.gmra.mrb[0].mxu0 %v3154
        %v8372 = vpop.f32.mrb[0].mxu0
        %v8373 = vadd.f32 %v8180, %v8372
        %v8374 = vpop.f32.mrb[0].mxu0
        %v8375 = vadd.f32 %v8182, %v8374
        %v8376 = vpop.f32.mrb[0].mxu0
        %v8377 = vadd.f32 %v8184, %v8376
        %v8378 = vpop.f32.mrb[0].mxu0
        %v8379 = vadd.f32 %v8186, %v8378
        %8380 = vmatprep.mubr.bf16.mxu0 %v3163
        %8381 = vmatmul.mubr.bf16.gmra.mrb[0].mxu0 %v3162
        %v8382 = vpop.f32.mrb[0].mxu0
        %v8383 = vadd.f32 %v8190, %v8382
        %v8384 = vpop.f32.mrb[0].mxu0
        %v8385 = vadd.f32 %v8192, %v8384
        %v8386 = vpop.f32.mrb[0].mxu0
        %v8387 = vadd.f32 %v8194, %v8386
        %v8388 = vpop.f32.mrb[0].mxu0
        %v8389 = vadd.f32 %v8196, %v8388
        %8390 = vmatprep.mubr.bf16.mxu0 %v3171
        %8391 = vmatmul.mubr.bf16.gmra.mrb[0].mxu0 %v3170
        %v8392 = vpop.f32.mrb[0].mxu0
        %v8393 = vadd.f32 %v8200, %v8392
        %v8394 = vpop.f32.mrb[0].mxu0
        %v8395 = vadd.f32 %v8202, %v8394
        %v8396 = vpop.f32.mrb[0].mxu0
        %v8397 = vadd.f32 %v8204, %v8396
        %v8398 = vpop.f32.mrb[0].mxu0
        %v8399 = vadd.f32 %v8206, %v8398
        %8400 = vmatprep.mubr.bf16.mxu0 %v3179
        %8401 = vmatmul.mubr.bf16.gmra.mrb[0].mxu0 %v3178
        %v8402 = vpop.f32.mrb[0].mxu0
        %v8403 = vadd.f32 %v8210, %v8402
        %v8404 = vpop.f32.mrb[0].mxu0
        %v8405 = vadd.f32 %v8212, %v8404
        %v8406 = vpop.f32.mrb[0].mxu0
        %v8407 = vadd.f32 %v8214, %v8406
        %v8408 = vpop.f32.mrb[0].mxu0
        %v8409 = vadd.f32 %v8216, %v8408
        %8410 = vmatprep.mubr.bf16.mxu0 %v3187
        %8411 = vmatmul.mubr.bf16.gmra.mrb[0].mxu0 %v3186
        %v8412 = vpop.f32.mrb[0].mxu0
        %v8413 = vadd.f32 %v8220, %v8412
        %v8414 = vpop.f32.mrb[0].mxu0
        %v8415 = vadd.f32 %v8222, %v8414
        %v8416 = vpop.f32.mrb[0].mxu0
        %v8417 = vadd.f32 %v8224, %v8416
        %v8418 = vpop.f32.mrb[0].mxu0
        %v8419 = vadd.f32 %v8226, %v8418
        %8420 = vmatprep.mubr.bf16.mxu0 %v3195
        %8421 = vmatmul.mubr.bf16.gmra.mrb[0].mxu0 %v3194
        %v8422 = vpop.f32.mrb[0].mxu0
        %v8423 = vadd.f32 %v8230, %v8422
        %v8424 = vpop.f32.mrb[0].mxu0
        %v8425 = vadd.f32 %v8232, %v8424
        %v8426 = vpop.f32.mrb[0].mxu0
        %v8427 = vadd.f32 %v8234, %v8426
        %v8428 = vpop.f32.mrb[0].mxu0
        %v8429 = vadd.f32 %v8236, %v8428
        %8430 = vmatprep.mubr.bf16.mxu0 %v3203
        %8431 = vmatmul.mubr.bf16.gmra.mrb[0].mxu0 %v3202
        %v8432 = vpop.f32.mrb[0].mxu0
        %v8433 = vadd.f32 %v8240, %v8432
        %v8434 = vpop.f32.mrb[0].mxu0
        %v8435 = vadd.f32 %v8242, %v8434
        %v8436 = vpop.f32.mrb[0].mxu0
        %v8437 = vadd.f32 %v8244, %v8436
        %v8438 = vpop.f32.mrb[0].mxu0
        %v8439 = vadd.f32 %v8246, %v8438
        %8440 = vmatprep.mubr.bf16.mxu0 %v3211
        %8441 = vmatmul.mubr.bf16.gmra.mrb[0].mxu0 %v3210
        %v8442 = vpop.f32.mrb[0].mxu0
        %v8443 = vadd.f32 %v8250, %v8442
        %v8444 = vpop.f32.mrb[0].mxu0
        %v8445 = vadd.f32 %v8252, %v8444
        %v8446 = vpop.f32.mrb[0].mxu0
        %v8447 = vadd.f32 %v8254, %v8446
        %v8448 = vpop.f32.mrb[0].mxu0
        %v8449 = vadd.f32 %v8256, %v8448
        %8450 = vdwg.mxu0
        %8451 = vmatprep.subr.bf16.mxu0 %v5693
        %8452 = vmatpush1.bf16.msra.mxu0 %v5692
        %8453 = vmatprep.subr.bf16.mxu0 %v5701
        %8454 = vmatpush1.bf16.msra.mxu0 %v5700
        %8455 = vmatprep.subr.bf16.mxu0 %v5709
        %8456 = vmatpush1.bf16.msra.mxu0 %v5708
        %8457 = vmatprep.subr.bf16.mxu0 %v5717
        %8458 = vmatpush1.bf16.msra.mxu0 %v5716
        %8459 = vmatprep.subr.bf16.mxu0 %v5725
        %8460 = vmatpush1.bf16.msra.mxu0 %v5724
        %8461 = vmatprep.subr.bf16.mxu0 %v5733
        %8462 = vmatpush1.bf16.msra.mxu0 %v5732
        %8463 = vmatprep.subr.bf16.mxu0 %v5741
        %8464 = vmatpush1.bf16.msra.mxu0 %v5740
        %8465 = vmatprep.subr.bf16.mxu0 %v5749
        %8466 = vmatpush1.bf16.msra.mxu0 %v5748
        %8467 = vmatprep.subr.bf16.mxu0 %v5757
        %8468 = vmatpush1.bf16.msra.mxu0 %v5756
        %8469 = vmatprep.subr.bf16.mxu0 %v5765
        %8470 = vmatpush1.bf16.msra.mxu0 %v5764
        %8471 = vmatprep.subr.bf16.mxu0 %v5773
        %8472 = vmatpush1.bf16.msra.mxu0 %v5772
        %8473 = vmatprep.subr.bf16.mxu0 %v5781
        %8474 = vmatpush1.bf16.msra.mxu0 %v5780
        %8475 = vmatprep.subr.bf16.mxu0 %v5789
        %8476 = vmatpush1.bf16.msra.mxu0 %v5788
        %8477 = vmatprep.subr.bf16.mxu0 %v5797
        %8478 = vmatpush1.bf16.msra.mxu0 %v5796
        %8479 = vmatprep.subr.bf16.mxu0 %v5805
        %8480 = vmatpush1.bf16.msra.mxu0 %v5804
        %8481 = vmatprep.subr.bf16.mxu0 %v5813
        %8482 = vmatpush1.bf16.msra.mxu0 %v5812
        %8483 = vmatprep.mubr.bf16.mxu0 %v3093
        %8484 = vmatmul.mubr.bf16.gmra.mrb[0].mxu0 %v3092
        %v8485 = vpop.f32.mrb[0].mxu0
        %v8486 = vadd.f32 %v8293, %v8485
        %v8487 = vpop.f32.mrb[0].mxu0
        %v8488 = vadd.f32 %v8295, %v8487
        %v8489 = vpop.f32.mrb[0].mxu0
        %v8490 = vadd.f32 %v8297, %v8489
        %v8491 = vpop.f32.mrb[0].mxu0
        %v8492 = vadd.f32 %v8299, %v8491
        %8493 = vmatprep.mubr.bf16.mxu0 %v3101
        %8494 = vmatmul.mubr.bf16.gmra.mrb[0].mxu0 %v3100
        %v8495 = vpop.f32.mrb[0].mxu0
        %v8496 = vadd.f32 %v8303, %v8495
        %v8497 = vpop.f32.mrb[0].mxu0
        %v8498 = vadd.f32 %v8305, %v8497
        %v8499 = vpop.f32.mrb[0].mxu0
        %v8500 = vadd.f32 %v8307, %v8499
        %v8501 = vpop.f32.mrb[0].mxu0
        %v8502 = vadd.f32 %v8309, %v8501
        %8503 = vmatprep.mubr.bf16.mxu0 %v3109
        %8504 = vmatmul.mubr.bf16.gmra.mrb[0].mxu0 %v3108
        %v8505 = vpop.f32.mrb[0].mxu0
        %v8506 = vadd.f32 %v8313, %v8505
        %v8507 = vpop.f32.mrb[0].mxu0
        %v8508 = vadd.f32 %v8315, %v8507
        %v8509 = vpop.f32.mrb[0].mxu0
        %v8510 = vadd.f32 %v8317, %v8509
        %v8511 = vpop.f32.mrb[0].mxu0
        %v8512 = vadd.f32 %v8319, %v8511
        %8513 = vmatprep.mubr.bf16.mxu0 %v3117
        %8514 = vmatmul.mubr.bf16.gmra.mrb[0].mxu0 %v3116
        %v8515 = vpop.f32.mrb[0].mxu0
        %v8516 = vadd.f32 %v8323, %v8515
        %v8517 = vpop.f32.mrb[0].mxu0
        %v8518 = vadd.f32 %v8325, %v8517
        %v8519 = vpop.f32.mrb[0].mxu0
        %v8520 = vadd.f32 %v8327, %v8519
        %v8521 = vpop.f32.mrb[0].mxu0
        %v8522 = vadd.f32 %v8329, %v8521
        %8523 = vmatprep.mubr.bf16.mxu0 %v3125
        %8524 = vmatmul.mubr.bf16.gmra.mrb[0].mxu0 %v3124
        %v8525 = vpop.f32.mrb[0].mxu0
        %v8526 = vadd.f32 %v8333, %v8525
        %v8527 = vpop.f32.mrb[0].mxu0
        %v8528 = vadd.f32 %v8335, %v8527
        %v8529 = vpop.f32.mrb[0].mxu0
        %v8530 = vadd.f32 %v8337, %v8529
        %v8531 = vpop.f32.mrb[0].mxu0
        %v8532 = vadd.f32 %v8339, %v8531
        %8533 = vmatprep.mubr.bf16.mxu0 %v3133
        %8534 = vmatmul.mubr.bf16.gmra.mrb[0].mxu0 %v3132
        %v8535 = vpop.f32.mrb[0].mxu0
        %v8536 = vadd.f32 %v8343, %v8535
        %v8537 = vpop.f32.mrb[0].mxu0
        %v8538 = vadd.f32 %v8345, %v8537
        %v8539 = vpop.f32.mrb[0].mxu0
        %v8540 = vadd.f32 %v8347, %v8539
        %v8541 = vpop.f32.mrb[0].mxu0
        %v8542 = vadd.f32 %v8349, %v8541
        %8543 = vmatprep.mubr.bf16.mxu0 %v3141
        %8544 = vmatmul.mubr.bf16.gmra.mrb[0].mxu0 %v3140
        %v8545 = vpop.f32.mrb[0].mxu0
        %v8546 = vadd.f32 %v8353, %v8545
        %v8547 = vpop.f32.mrb[0].mxu0
        %v8548 = vadd.f32 %v8355, %v8547
        %v8549 = vpop.f32.mrb[0].mxu0
        %v8550 = vadd.f32 %v8357, %v8549
        %v8551 = vpop.f32.mrb[0].mxu0
        %v8552 = vadd.f32 %v8359, %v8551
        %8553 = vmatprep.mubr.bf16.mxu0 %v3149
        %8554 = vmatmul.mubr.bf16.gmra.mrb[0].mxu0 %v3148
        %v8555 = vpop.f32.mrb[0].mxu0
        %v8556 = vadd.f32 %v8363, %v8555
        %v8557 = vpop.f32.mrb[0].mxu0
        %v8558 = vadd.f32 %v8365, %v8557
        %v8559 = vpop.f32.mrb[0].mxu0
        %v8560 = vadd.f32 %v8367, %v8559
        %v8561 = vpop.f32.mrb[0].mxu0
        %v8562 = vadd.f32 %v8369, %v8561
        %8563 = vmatprep.mubr.bf16.mxu0 %v3157
        %8564 = vmatmul.mubr.bf16.gmra.mrb[0].mxu0 %v3156
        %v8565 = vpop.f32.mrb[0].mxu0
        %v8566 = vadd.f32 %v8373, %v8565
        %v8567 = vpop.f32.mrb[0].mxu0
        %v8568 = vadd.f32 %v8375, %v8567
        %v8569 = vpop.f32.mrb[0].mxu0
        %v8570 = vadd.f32 %v8377, %v8569
        %v8571 = vpop.f32.mrb[0].mxu0
        %v8572 = vadd.f32 %v8379, %v8571
        %8573 = vmatprep.mubr.bf16.mxu0 %v3165
        %8574 = vmatmul.mubr.bf16.gmra.mrb[0].mxu0 %v3164
        %v8575 = vpop.f32.mrb[0].mxu0
        %v8576 = vadd.f32 %v8383, %v8575
        %v8577 = vpop.f32.mrb[0].mxu0
        %v8578 = vadd.f32 %v8385, %v8577
        %v8579 = vpop.f32.mrb[0].mxu0
        %v8580 = vadd.f32 %v8387, %v8579
        %v8581 = vpop.f32.mrb[0].mxu0
        %v8582 = vadd.f32 %v8389, %v8581
        %8583 = vmatprep.mubr.bf16.mxu0 %v3173
        %8584 = vmatmul.mubr.bf16.gmra.mrb[0].mxu0 %v3172
        %v8585 = vpop.f32.mrb[0].mxu0
        %v8586 = vadd.f32 %v8393, %v8585
        %v8587 = vpop.f32.mrb[0].mxu0
        %v8588 = vadd.f32 %v8395, %v8587
        %v8589 = vpop.f32.mrb[0].mxu0
        %v8590 = vadd.f32 %v8397, %v8589
        %v8591 = vpop.f32.mrb[0].mxu0
        %v8592 = vadd.f32 %v8399, %v8591
        %8593 = vmatprep.mubr.bf16.mxu0 %v3181
        %8594 = vmatmul.mubr.bf16.gmra.mrb[0].mxu0 %v3180
        %v8595 = vpop.f32.mrb[0].mxu0
        %v8596 = vadd.f32 %v8403, %v8595
        %v8597 = vpop.f32.mrb[0].mxu0
        %v8598 = vadd.f32 %v8405, %v8597
        %v8599 = vpop.f32.mrb[0].mxu0
        %v8600 = vadd.f32 %v8407, %v8599
        %v8601 = vpop.f32.mrb[0].mxu0
        %v8602 = vadd.f32 %v8409, %v8601
        %8603 = vmatprep.mubr.bf16.mxu0 %v3189
        %8604 = vmatmul.mubr.bf16.gmra.mrb[0].mxu0 %v3188
        %v8605 = vpop.f32.mrb[0].mxu0
        %v8606 = vadd.f32 %v8413, %v8605
        %v8607 = vpop.f32.mrb[0].mxu0
        %v8608 = vadd.f32 %v8415, %v8607
        %v8609 = vpop.f32.mrb[0].mxu0
        %v8610 = vadd.f32 %v8417, %v8609
        %v8611 = vpop.f32.mrb[0].mxu0
        %v8612 = vadd.f32 %v8419, %v8611
        %8613 = vmatprep.mubr.bf16.mxu0 %v3197
        %8614 = vmatmul.mubr.bf16.gmra.mrb[0].mxu0 %v3196
        %v8615 = vpop.f32.mrb[0].mxu0
        %v8616 = vadd.f32 %v8423, %v8615
        %v8617 = vpop.f32.mrb[0].mxu0
        %v8618 = vadd.f32 %v8425, %v8617
        %v8619 = vpop.f32.mrb[0].mxu0
        %v8620 = vadd.f32 %v8427, %v8619
        %v8621 = vpop.f32.mrb[0].mxu0
        %v8622 = vadd.f32 %v8429, %v8621
        %8623 = vmatprep.mubr.bf16.mxu0 %v3205
        %8624 = vmatmul.mubr.bf16.gmra.mrb[0].mxu0 %v3204
        %v8625 = vpop.f32.mrb[0].mxu0
        %v8626 = vadd.f32 %v8433, %v8625
        %v8627 = vpop.f32.mrb[0].mxu0
        %v8628 = vadd.f32 %v8435, %v8627
        %v8629 = vpop.f32.mrb[0].mxu0
        %v8630 = vadd.f32 %v8437, %v8629
        %v8631 = vpop.f32.mrb[0].mxu0
        %v8632 = vadd.f32 %v8439, %v8631
        %8633 = vmatprep.mubr.bf16.mxu0 %v3213
        %8634 = vmatmul.mubr.bf16.gmra.mrb[0].mxu0 %v3212
        %v8635 = vpop.f32.mrb[0].mxu0
        %v8636 = vadd.f32 %v8443, %v8635
        %v8637 = vpop.f32.mrb[0].mxu0
        %v8638 = vadd.f32 %v8445, %v8637
        %v8639 = vpop.f32.mrb[0].mxu0
        %v8640 = vadd.f32 %v8447, %v8639
        %v8641 = vpop.f32.mrb[0].mxu0
        %v8642 = vadd.f32 %v8449, %v8641
        %8643 = vdwg.mxu0
        %8644 = vmatprep.subr.bf16.mxu0 %v5311
        %8645 = vmatpush1.bf16.msra.mxu0 %v5310
        %8646 = vmatprep.subr.bf16.mxu0 %v5319
        %8647 = vmatpush1.bf16.msra.mxu0 %v5318
        %8648 = vmatprep.subr.bf16.mxu0 %v5327
        %8649 = vmatpush1.bf16.msra.mxu0 %v5326
        %8650 = vmatprep.subr.bf16.mxu0 %v5335
        %8651 = vmatpush1.bf16.msra.mxu0 %v5334
        %8652 = vmatprep.subr.bf16.mxu0 %v5343
        %8653 = vmatpush1.bf16.msra.mxu0 %v5342
        %8654 = vmatprep.subr.bf16.mxu0 %v5351
        %8655 = vmatpush1.bf16.msra.mxu0 %v5350
        %8656 = vmatprep.subr.bf16.mxu0 %v5359
        %8657 = vmatpush1.bf16.msra.mxu0 %v5358
        %8658 = vmatprep.subr.bf16.mxu0 %v5367
        %8659 = vmatpush1.bf16.msra.mxu0 %v5366
        %8660 = vmatprep.subr.bf16.mxu0 %v5375
        %8661 = vmatpush1.bf16.msra.mxu0 %v5374
        %8662 = vmatprep.subr.bf16.mxu0 %v5383
        %8663 = vmatpush1.bf16.msra.mxu0 %v5382
        %8664 = vmatprep.subr.bf16.mxu0 %v5391
        %8665 = vmatpush1.bf16.msra.mxu0 %v5390
        %8666 = vmatprep.subr.bf16.mxu0 %v5399
        %8667 = vmatpush1.bf16.msra.mxu0 %v5398
        %8668 = vmatprep.subr.bf16.mxu0 %v5407
        %8669 = vmatpush1.bf16.msra.mxu0 %v5406
        %8670 = vmatprep.subr.bf16.mxu0 %v5415
        %8671 = vmatpush1.bf16.msra.mxu0 %v5414
        %8672 = vmatprep.subr.bf16.mxu0 %v5423
        %8673 = vmatpush1.bf16.msra.mxu0 %v5422
        %8674 = vmatprep.subr.bf16.mxu0 %v5431
        %8675 = vmatpush1.bf16.msra.mxu0 %v5430
        %8676 = vmatprep.mubr.bf16.mxu0 %v3087
        %8677 = vmatmul.mubr.bf16.gmra.mrb[0].mxu0 %v3086
        %v8678 = vpop.f32.mrb[0].mxu0
        %v8679 = vadd.f32 %v3755, %v8678
        %v8680 = vpop.f32.mrb[0].mxu0
        %v8681 = vadd.f32 %v3759, %v8680
        %v8682 = vpop.f32.mrb[0].mxu0
        %v8683 = vadd.f32 %v3755, %v8682
        %v8684 = vpop.f32.mrb[0].mxu0
        %v8685 = vadd.f32 %v3759, %v8684
        %8686 = vmatprep.mubr.bf16.mxu0 %v3095
        %8687 = vmatmul.mubr.bf16.gmra.mrb[0].mxu0 %v3094
        %v8688 = vpop.f32.mrb[0].mxu0
        %v8689 = vadd.f32 %v3755, %v8688
        %v8690 = vpop.f32.mrb[0].mxu0
        %v8691 = vadd.f32 %v3759, %v8690
        %v8692 = vpop.f32.mrb[0].mxu0
        %v8693 = vadd.f32 %v3755, %v8692
        %v8694 = vpop.f32.mrb[0].mxu0
        %v8695 = vadd.f32 %v3759, %v8694
        %8696 = vmatprep.mubr.bf16.mxu0 %v3103
        %8697 = vmatmul.mubr.bf16.gmra.mrb[0].mxu0 %v3102
        %v8698 = vpop.f32.mrb[0].mxu0
        %v8699 = vadd.f32 %v3755, %v8698
        %v8700 = vpop.f32.mrb[0].mxu0
        %v8701 = vadd.f32 %v3759, %v8700
        %v8702 = vpop.f32.mrb[0].mxu0
        %v8703 = vadd.f32 %v3755, %v8702
        %v8704 = vpop.f32.mrb[0].mxu0
        %v8705 = vadd.f32 %v3759, %v8704
        %8706 = vmatprep.mubr.bf16.mxu0 %v3111
        %8707 = vmatmul.mubr.bf16.gmra.mrb[0].mxu0 %v3110
        %v8708 = vpop.f32.mrb[0].mxu0
        %v8709 = vadd.f32 %v3755, %v8708
        %v8710 = vpop.f32.mrb[0].mxu0
        %v8711 = vadd.f32 %v3759, %v8710
        %v8712 = vpop.f32.mrb[0].mxu0
        %v8713 = vadd.f32 %v3755, %v8712
        %v8714 = vpop.f32.mrb[0].mxu0
        %v8715 = vadd.f32 %v3759, %v8714
        %8716 = vmatprep.mubr.bf16.mxu0 %v3119
        %8717 = vmatmul.mubr.bf16.gmra.mrb[0].mxu0 %v3118
        %v8718 = vpop.f32.mrb[0].mxu0
        %v8719 = vadd.f32 %v3755, %v8718
        %v8720 = vpop.f32.mrb[0].mxu0
        %v8721 = vadd.f32 %v3759, %v8720
        %v8722 = vpop.f32.mrb[0].mxu0
        %v8723 = vadd.f32 %v3755, %v8722
        %v8724 = vpop.f32.mrb[0].mxu0
        %v8725 = vadd.f32 %v3759, %v8724
        %8726 = vmatprep.mubr.bf16.mxu0 %v3127
        %8727 = vmatmul.mubr.bf16.gmra.mrb[0].mxu0 %v3126
        %v8728 = vpop.f32.mrb[0].mxu0
        %v8729 = vadd.f32 %v3755, %v8728
        %v8730 = vpop.f32.mrb[0].mxu0
        %v8731 = vadd.f32 %v3759, %v8730
        %v8732 = vpop.f32.mrb[0].mxu0
        %v8733 = vadd.f32 %v3755, %v8732
        %v8734 = vpop.f32.mrb[0].mxu0
        %v8735 = vadd.f32 %v3759, %v8734
        %8736 = vmatprep.mubr.bf16.mxu0 %v3135
        %8737 = vmatmul.mubr.bf16.gmra.mrb[0].mxu0 %v3134
        %v8738 = vpop.f32.mrb[0].mxu0
        %v8739 = vadd.f32 %v3755, %v8738
        %v8740 = vpop.f32.mrb[0].mxu0
        %v8741 = vadd.f32 %v3759, %v8740
        %v8742 = vpop.f32.mrb[0].mxu0
        %v8743 = vadd.f32 %v3755, %v8742
        %v8744 = vpop.f32.mrb[0].mxu0
        %v8745 = vadd.f32 %v3759, %v8744
        %8746 = vmatprep.mubr.bf16.mxu0 %v3143
        %8747 = vmatmul.mubr.bf16.gmra.mrb[0].mxu0 %v3142
        %v8748 = vpop.f32.mrb[0].mxu0
        %v8749 = vadd.f32 %v3755, %v8748
        %v8750 = vpop.f32.mrb[0].mxu0
        %v8751 = vadd.f32 %v3759, %v8750
        %v8752 = vpop.f32.mrb[0].mxu0
        %v8753 = vadd.f32 %v3755, %v8752
        %v8754 = vpop.f32.mrb[0].mxu0
        %v8755 = vadd.f32 %v3759, %v8754
        %8756 = vmatprep.mubr.bf16.mxu0 %v3151
        %8757 = vmatmul.mubr.bf16.gmra.mrb[0].mxu0 %v3150
        %v8758 = vpop.f32.mrb[0].mxu0
        %v8759 = vadd.f32 %v3755, %v8758
        %v8760 = vpop.f32.mrb[0].mxu0
        %v8761 = vadd.f32 %v3759, %v8760
        %v8762 = vpop.f32.mrb[0].mxu0
        %v8763 = vadd.f32 %v3755, %v8762
        %v8764 = vpop.f32.mrb[0].mxu0
        %v8765 = vadd.f32 %v3759, %v8764
        %8766 = vmatprep.mubr.bf16.mxu0 %v3159
        %8767 = vmatmul.mubr.bf16.gmra.mrb[0].mxu0 %v3158
        %v8768 = vpop.f32.mrb[0].mxu0
        %v8769 = vadd.f32 %v3755, %v8768
        %v8770 = vpop.f32.mrb[0].mxu0
        %v8771 = vadd.f32 %v3759, %v8770
        %v8772 = vpop.f32.mrb[0].mxu0
        %v8773 = vadd.f32 %v3755, %v8772
        %v8774 = vpop.f32.mrb[0].mxu0
        %v8775 = vadd.f32 %v3759, %v8774
        %8776 = vmatprep.mubr.bf16.mxu0 %v3167
        %8777 = vmatmul.mubr.bf16.gmra.mrb[0].mxu0 %v3166
        %v8778 = vpop.f32.mrb[0].mxu0
        %v8779 = vadd.f32 %v3755, %v8778
        %v8780 = vpop.f32.mrb[0].mxu0
        %v8781 = vadd.f32 %v3759, %v8780
        %v8782 = vpop.f32.mrb[0].mxu0
        %v8783 = vadd.f32 %v3755, %v8782
        %v8784 = vpop.f32.mrb[0].mxu0
        %v8785 = vadd.f32 %v3759, %v8784
        %8786 = vmatprep.mubr.bf16.mxu0 %v3175
        %8787 = vmatmul.mubr.bf16.gmra.mrb[0].mxu0 %v3174
        %v8788 = vpop.f32.mrb[0].mxu0
        %v8789 = vadd.f32 %v3755, %v8788
        %v8790 = vpop.f32.mrb[0].mxu0
        %v8791 = vadd.f32 %v3759, %v8790
        %v8792 = vpop.f32.mrb[0].mxu0
        %v8793 = vadd.f32 %v3755, %v8792
        %v8794 = vpop.f32.mrb[0].mxu0
        %v8795 = vadd.f32 %v3759, %v8794
        %8796 = vmatprep.mubr.bf16.mxu0 %v3183
        %8797 = vmatmul.mubr.bf16.gmra.mrb[0].mxu0 %v3182
        %v8798 = vpop.f32.mrb[0].mxu0
        %v8799 = vadd.f32 %v3755, %v8798
        %v8800 = vpop.f32.mrb[0].mxu0
        %v8801 = vadd.f32 %v3759, %v8800
        %v8802 = vpop.f32.mrb[0].mxu0
        %v8803 = vadd.f32 %v3755, %v8802
        %v8804 = vpop.f32.mrb[0].mxu0
        %v8805 = vadd.f32 %v3759, %v8804
        %8806 = vmatprep.mubr.bf16.mxu0 %v3191
        %8807 = vmatmul.mubr.bf16.gmra.mrb[0].mxu0 %v3190
        %v8808 = vpop.f32.mrb[0].mxu0
        %v8809 = vadd.f32 %v3755, %v8808
        %v8810 = vpop.f32.mrb[0].mxu0
        %v8811 = vadd.f32 %v3759, %v8810
        %v8812 = vpop.f32.mrb[0].mxu0
        %v8813 = vadd.f32 %v3755, %v8812
        %v8814 = vpop.f32.mrb[0].mxu0
        %v8815 = vadd.f32 %v3759, %v8814
        %8816 = vmatprep.mubr.bf16.mxu0 %v3199
        %8817 = vmatmul.mubr.bf16.gmra.mrb[0].mxu0 %v3198
        %v8818 = vpop.f32.mrb[0].mxu0
        %v8819 = vadd.f32 %v3755, %v8818
        %v8820 = vpop.f32.mrb[0].mxu0
        %v8821 = vadd.f32 %v3759, %v8820
        %v8822 = vpop.f32.mrb[0].mxu0
        %v8823 = vadd.f32 %v3755, %v8822
        %v8824 = vpop.f32.mrb[0].mxu0
        %v8825 = vadd.f32 %v3759, %v8824
        %8826 = vmatprep.mubr.bf16.mxu0 %v3207
        %8827 = vmatmul.mubr.bf16.gmra.mrb[0].mxu0 %v3206
        %v8828 = vpop.f32.mrb[0].mxu0
        %v8829 = vadd.f32 %v3755, %v8828
        %v8830 = vpop.f32.mrb[0].mxu0
        %v8831 = vadd.f32 %v3759, %v8830
        %v8832 = vpop.f32.mrb[0].mxu0
        %v8833 = vadd.f32 %v3755, %v8832
        %v8834 = vpop.f32.mrb[0].mxu0
        %v8835 = vadd.f32 %v3759, %v8834
        %8836 = vdwg.mxu0
        %8837 = vmatprep.subr.bf16.mxu0 %v5439
        %8838 = vmatpush1.bf16.msra.mxu0 %v5438
        %8839 = vmatprep.subr.bf16.mxu0 %v5447
        %8840 = vmatpush1.bf16.msra.mxu0 %v5446
        %8841 = vmatprep.subr.bf16.mxu0 %v5455
        %8842 = vmatpush1.bf16.msra.mxu0 %v5454
        %8843 = vmatprep.subr.bf16.mxu0 %v5463
        %8844 = vmatpush1.bf16.msra.mxu0 %v5462
        %8845 = vmatprep.subr.bf16.mxu0 %v5471
        %8846 = vmatpush1.bf16.msra.mxu0 %v5470
        %8847 = vmatprep.subr.bf16.mxu0 %v5479
        %8848 = vmatpush1.bf16.msra.mxu0 %v5478
        %8849 = vmatprep.subr.bf16.mxu0 %v5487
        %8850 = vmatpush1.bf16.msra.mxu0 %v5486
        %8851 = vmatprep.subr.bf16.mxu0 %v5495
        %8852 = vmatpush1.bf16.msra.mxu0 %v5494
        %8853 = vmatprep.subr.bf16.mxu0 %v5503
        %8854 = vmatpush1.bf16.msra.mxu0 %v5502
        %8855 = vmatprep.subr.bf16.mxu0 %v5511
        %8856 = vmatpush1.bf16.msra.mxu0 %v5510
        %8857 = vmatprep.subr.bf16.mxu0 %v5519
        %8858 = vmatpush1.bf16.msra.mxu0 %v5518
        %8859 = vmatprep.subr.bf16.mxu0 %v5527
        %8860 = vmatpush1.bf16.msra.mxu0 %v5526
        %8861 = vmatprep.subr.bf16.mxu0 %v5535
        %8862 = vmatpush1.bf16.msra.mxu0 %v5534
        %8863 = vmatprep.subr.bf16.mxu0 %v5543
        %8864 = vmatpush1.bf16.msra.mxu0 %v5542
        %8865 = vmatprep.subr.bf16.mxu0 %v5551
        %8866 = vmatpush1.bf16.msra.mxu0 %v5550
        %8867 = vmatprep.subr.bf16.mxu0 %v5559
        %8868 = vmatpush1.bf16.msra.mxu0 %v5558
        %8869 = vmatprep.mubr.bf16.mxu0 %v3089
        %8870 = vmatmul.mubr.bf16.gmra.mrb[0].mxu0 %v3088
        %v8871 = vpop.f32.mrb[0].mxu0
        %v8872 = vadd.f32 %v8679, %v8871
        %v8873 = vpop.f32.mrb[0].mxu0
        %v8874 = vadd.f32 %v8681, %v8873
        %v8875 = vpop.f32.mrb[0].mxu0
        %v8876 = vadd.f32 %v8683, %v8875
        %v8877 = vpop.f32.mrb[0].mxu0
        %v8878 = vadd.f32 %v8685, %v8877
        %8879 = vmatprep.mubr.bf16.mxu0 %v3097
        %8880 = vmatmul.mubr.bf16.gmra.mrb[0].mxu0 %v3096
        %v8881 = vpop.f32.mrb[0].mxu0
        %v8882 = vadd.f32 %v8689, %v8881
        %v8883 = vpop.f32.mrb[0].mxu0
        %v8884 = vadd.f32 %v8691, %v8883
        %v8885 = vpop.f32.mrb[0].mxu0
        %v8886 = vadd.f32 %v8693, %v8885
        %v8887 = vpop.f32.mrb[0].mxu0
        %v8888 = vadd.f32 %v8695, %v8887
        %8889 = vmatprep.mubr.bf16.mxu0 %v3105
        %8890 = vmatmul.mubr.bf16.gmra.mrb[0].mxu0 %v3104
        %v8891 = vpop.f32.mrb[0].mxu0
        %v8892 = vadd.f32 %v8699, %v8891
        %v8893 = vpop.f32.mrb[0].mxu0
        %v8894 = vadd.f32 %v8701, %v8893
        %v8895 = vpop.f32.mrb[0].mxu0
        %v8896 = vadd.f32 %v8703, %v8895
        %v8897 = vpop.f32.mrb[0].mxu0
        %v8898 = vadd.f32 %v8705, %v8897
        %8899 = vmatprep.mubr.bf16.mxu0 %v3113
        %8900 = vmatmul.mubr.bf16.gmra.mrb[0].mxu0 %v3112
        %v8901 = vpop.f32.mrb[0].mxu0
        %v8902 = vadd.f32 %v8709, %v8901
        %v8903 = vpop.f32.mrb[0].mxu0
        %v8904 = vadd.f32 %v8711, %v8903
        %v8905 = vpop.f32.mrb[0].mxu0
        %v8906 = vadd.f32 %v8713, %v8905
        %v8907 = vpop.f32.mrb[0].mxu0
        %v8908 = vadd.f32 %v8715, %v8907
        %8909 = vmatprep.mubr.bf16.mxu0 %v3121
        %8910 = vmatmul.mubr.bf16.gmra.mrb[0].mxu0 %v3120
        %v8911 = vpop.f32.mrb[0].mxu0
        %v8912 = vadd.f32 %v8719, %v8911
        %v8913 = vpop.f32.mrb[0].mxu0
        %v8914 = vadd.f32 %v8721, %v8913
        %v8915 = vpop.f32.mrb[0].mxu0
        %v8916 = vadd.f32 %v8723, %v8915
        %v8917 = vpop.f32.mrb[0].mxu0
        %v8918 = vadd.f32 %v8725, %v8917
        %8919 = vmatprep.mubr.bf16.mxu0 %v3129
        %8920 = vmatmul.mubr.bf16.gmra.mrb[0].mxu0 %v3128
        %v8921 = vpop.f32.mrb[0].mxu0
        %v8922 = vadd.f32 %v8729, %v8921
        %v8923 = vpop.f32.mrb[0].mxu0
        %v8924 = vadd.f32 %v8731, %v8923
        %v8925 = vpop.f32.mrb[0].mxu0
        %v8926 = vadd.f32 %v8733, %v8925
        %v8927 = vpop.f32.mrb[0].mxu0
        %v8928 = vadd.f32 %v8735, %v8927
        %8929 = vmatprep.mubr.bf16.mxu0 %v3137
        %8930 = vmatmul.mubr.bf16.gmra.mrb[0].mxu0 %v3136
        %v8931 = vpop.f32.mrb[0].mxu0
        %v8932 = vadd.f32 %v8739, %v8931
        %v8933 = vpop.f32.mrb[0].mxu0
        %v8934 = vadd.f32 %v8741, %v8933
        %v8935 = vpop.f32.mrb[0].mxu0
        %v8936 = vadd.f32 %v8743, %v8935
        %v8937 = vpop.f32.mrb[0].mxu0
        %v8938 = vadd.f32 %v8745, %v8937
        %8939 = vmatprep.mubr.bf16.mxu0 %v3145
        %8940 = vmatmul.mubr.bf16.gmra.mrb[0].mxu0 %v3144
        %v8941 = vpop.f32.mrb[0].mxu0
        %v8942 = vadd.f32 %v8749, %v8941
        %v8943 = vpop.f32.mrb[0].mxu0
        %v8944 = vadd.f32 %v8751, %v8943
        %v8945 = vpop.f32.mrb[0].mxu0
        %v8946 = vadd.f32 %v8753, %v8945
        %v8947 = vpop.f32.mrb[0].mxu0
        %v8948 = vadd.f32 %v8755, %v8947
        %8949 = vmatprep.mubr.bf16.mxu0 %v3153
        %8950 = vmatmul.mubr.bf16.gmra.mrb[0].mxu0 %v3152
        %v8951 = vpop.f32.mrb[0].mxu0
        %v8952 = vadd.f32 %v8759, %v8951
        %v8953 = vpop.f32.mrb[0].mxu0
        %v8954 = vadd.f32 %v8761, %v8953
        %v8955 = vpop.f32.mrb[0].mxu0
        %v8956 = vadd.f32 %v8763, %v8955
        %v8957 = vpop.f32.mrb[0].mxu0
        %v8958 = vadd.f32 %v8765, %v8957
        %8959 = vmatprep.mubr.bf16.mxu0 %v3161
        %8960 = vmatmul.mubr.bf16.gmra.mrb[0].mxu0 %v3160
        %v8961 = vpop.f32.mrb[0].mxu0
        %v8962 = vadd.f32 %v8769, %v8961
        %v8963 = vpop.f32.mrb[0].mxu0
        %v8964 = vadd.f32 %v8771, %v8963
        %v8965 = vpop.f32.mrb[0].mxu0
        %v8966 = vadd.f32 %v8773, %v8965
        %v8967 = vpop.f32.mrb[0].mxu0
        %v8968 = vadd.f32 %v8775, %v8967
        %8969 = vmatprep.mubr.bf16.mxu0 %v3169
        %8970 = vmatmul.mubr.bf16.gmra.mrb[0].mxu0 %v3168
        %v8971 = vpop.f32.mrb[0].mxu0
        %v8972 = vadd.f32 %v8779, %v8971
        %v8973 = vpop.f32.mrb[0].mxu0
        %v8974 = vadd.f32 %v8781, %v8973
        %v8975 = vpop.f32.mrb[0].mxu0
        %v8976 = vadd.f32 %v8783, %v8975
        %v8977 = vpop.f32.mrb[0].mxu0
        %v8978 = vadd.f32 %v8785, %v8977
        %8979 = vmatprep.mubr.bf16.mxu0 %v3177
        %8980 = vmatmul.mubr.bf16.gmra.mrb[0].mxu0 %v3176
        %v8981 = vpop.f32.mrb[0].mxu0
        %v8982 = vadd.f32 %v8789, %v8981
        %v8983 = vpop.f32.mrb[0].mxu0
        %v8984 = vadd.f32 %v8791, %v8983
        %v8985 = vpop.f32.mrb[0].mxu0
        %v8986 = vadd.f32 %v8793, %v8985
        %v8987 = vpop.f32.mrb[0].mxu0
        %v8988 = vadd.f32 %v8795, %v8987
        %8989 = vmatprep.mubr.bf16.mxu0 %v3185
        %8990 = vmatmul.mubr.bf16.gmra.mrb[0].mxu0 %v3184
        %v8991 = vpop.f32.mrb[0].mxu0
        %v8992 = vadd.f32 %v8799, %v8991
        %v8993 = vpop.f32.mrb[0].mxu0
        %v8994 = vadd.f32 %v8801, %v8993
        %v8995 = vpop.f32.mrb[0].mxu0
        %v8996 = vadd.f32 %v8803, %v8995
        %v8997 = vpop.f32.mrb[0].mxu0
        %v8998 = vadd.f32 %v8805, %v8997
        %8999 = vmatprep.mubr.bf16.mxu0 %v3193
        %9000 = vmatmul.mubr.bf16.gmra.mrb[0].mxu0 %v3192
        %v9001 = vpop.f32.mrb[0].mxu0
        %v9002 = vadd.f32 %v8809, %v9001
        %v9003 = vpop.f32.mrb[0].mxu0
        %v9004 = vadd.f32 %v8811, %v9003
        %v9005 = vpop.f32.mrb[0].mxu0
        %v9006 = vadd.f32 %v8813, %v9005
        %v9007 = vpop.f32.mrb[0].mxu0
        %v9008 = vadd.f32 %v8815, %v9007
        %9009 = vmatprep.mubr.bf16.mxu0 %v3201
        %9010 = vmatmul.mubr.bf16.gmra.mrb[0].mxu0 %v3200
        %v9011 = vpop.f32.mrb[0].mxu0
        %v9012 = vadd.f32 %v8819, %v9011
        %v9013 = vpop.f32.mrb[0].mxu0
        %v9014 = vadd.f32 %v8821, %v9013
        %v9015 = vpop.f32.mrb[0].mxu0
        %v9016 = vadd.f32 %v8823, %v9015
        %v9017 = vpop.f32.mrb[0].mxu0
        %v9018 = vadd.f32 %v8825, %v9017
        %9019 = vmatprep.mubr.bf16.mxu0 %v3209
        %9020 = vmatmul.mubr.bf16.gmra.mrb[0].mxu0 %v3208
        %v9021 = vpop.f32.mrb[0].mxu0
        %v9022 = vadd.f32 %v8829, %v9021
        %v9023 = vpop.f32.mrb[0].mxu0
        %v9024 = vadd.f32 %v8831, %v9023
        %v9025 = vpop.f32.mrb[0].mxu0
        %v9026 = vadd.f32 %v8833, %v9025
        %v9027 = vpop.f32.mrb[0].mxu0
        %v9028 = vadd.f32 %v8835, %v9027
        %9029 = vdwg.mxu0
        %9030 = vmatprep.subr.bf16.mxu0 %v5567
        %9031 = vmatpush1.bf16.msra.mxu0 %v5566
        %9032 = vmatprep.subr.bf16.mxu0 %v5575
        %9033 = vmatpush1.bf16.msra.mxu0 %v5574
        %9034 = vmatprep.subr.bf16.mxu0 %v5583
        %9035 = vmatpush1.bf16.msra.mxu0 %v5582
        %9036 = vmatprep.subr.bf16.mxu0 %v5591
        %9037 = vmatpush1.bf16.msra.mxu0 %v5590
        %9038 = vmatprep.subr.bf16.mxu0 %v5599
        %9039 = vmatpush1.bf16.msra.mxu0 %v5598
        %9040 = vmatprep.subr.bf16.mxu0 %v5607
        %9041 = vmatpush1.bf16.msra.mxu0 %v5606
        %9042 = vmatprep.subr.bf16.mxu0 %v5615
        %9043 = vmatpush1.bf16.msra.mxu0 %v5614
        %9044 = vmatprep.subr.bf16.mxu0 %v5623
        %9045 = vmatpush1.bf16.msra.mxu0 %v5622
        %9046 = vmatprep.subr.bf16.mxu0 %v5631
        %9047 = vmatpush1.bf16.msra.mxu0 %v5630
        %9048 = vmatprep.subr.bf16.mxu0 %v5639
        %9049 = vmatpush1.bf16.msra.mxu0 %v5638
        %9050 = vmatprep.subr.bf16.mxu0 %v5647
        %9051 = vmatpush1.bf16.msra.mxu0 %v5646
        %9052 = vmatprep.subr.bf16.mxu0 %v5655
        %9053 = vmatpush1.bf16.msra.mxu0 %v5654
        %9054 = vmatprep.subr.bf16.mxu0 %v5663
        %9055 = vmatpush1.bf16.msra.mxu0 %v5662
        %9056 = vmatprep.subr.bf16.mxu0 %v5671
        %9057 = vmatpush1.bf16.msra.mxu0 %v5670
        %9058 = vmatprep.subr.bf16.mxu0 %v5679
        %9059 = vmatpush1.bf16.msra.mxu0 %v5678
        %9060 = vmatprep.subr.bf16.mxu0 %v5687
        %9061 = vmatpush1.bf16.msra.mxu0 %v5686
        %9062 = vmatprep.mubr.bf16.mxu0 %v3091
        %9063 = vmatmul.mubr.bf16.gmra.mrb[0].mxu0 %v3090
        %v9064 = vpop.f32.mrb[0].mxu0
        %v9065 = vadd.f32 %v8872, %v9064
        %v9066 = vpop.f32.mrb[0].mxu0
        %v9067 = vadd.f32 %v8874, %v9066
        %v9068 = vpop.f32.mrb[0].mxu0
        %v9069 = vadd.f32 %v8876, %v9068
        %v9070 = vpop.f32.mrb[0].mxu0
        %v9071 = vadd.f32 %v8878, %v9070
        %9072 = vmatprep.mubr.bf16.mxu0 %v3099
        %9073 = vmatmul.mubr.bf16.gmra.mrb[0].mxu0 %v3098
        %v9074 = vpop.f32.mrb[0].mxu0
        %v9075 = vadd.f32 %v8882, %v9074
        %v9076 = vpop.f32.mrb[0].mxu0
        %v9077 = vadd.f32 %v8884, %v9076
        %v9078 = vpop.f32.mrb[0].mxu0
        %v9079 = vadd.f32 %v8886, %v9078
        %v9080 = vpop.f32.mrb[0].mxu0
        %v9081 = vadd.f32 %v8888, %v9080
        %9082 = vmatprep.mubr.bf16.mxu0 %v3107
        %9083 = vmatmul.mubr.bf16.gmra.mrb[0].mxu0 %v3106
        %v9084 = vpop.f32.mrb[0].mxu0
        %v9085 = vadd.f32 %v8892, %v9084
        %v9086 = vpop.f32.mrb[0].mxu0
        %v9087 = vadd.f32 %v8894, %v9086
        %v9088 = vpop.f32.mrb[0].mxu0
        %v9089 = vadd.f32 %v8896, %v9088
        %v9090 = vpop.f32.mrb[0].mxu0
        %v9091 = vadd.f32 %v8898, %v9090
        %9092 = vmatprep.mubr.bf16.mxu0 %v3115
        %9093 = vmatmul.mubr.bf16.gmra.mrb[0].mxu0 %v3114
        %v9094 = vpop.f32.mrb[0].mxu0
        %v9095 = vadd.f32 %v8902, %v9094
        %v9096 = vpop.f32.mrb[0].mxu0
        %v9097 = vadd.f32 %v8904, %v9096
        %v9098 = vpop.f32.mrb[0].mxu0
        %v9099 = vadd.f32 %v8906, %v9098
        %v9100 = vpop.f32.mrb[0].mxu0
        %v9101 = vadd.f32 %v8908, %v9100
        %9102 = vmatprep.mubr.bf16.mxu0 %v3123
        %9103 = vmatmul.mubr.bf16.gmra.mrb[0].mxu0 %v3122
        %v9104 = vpop.f32.mrb[0].mxu0
        %v9105 = vadd.f32 %v8912, %v9104
        %v9106 = vpop.f32.mrb[0].mxu0
        %v9107 = vadd.f32 %v8914, %v9106
        %v9108 = vpop.f32.mrb[0].mxu0
        %v9109 = vadd.f32 %v8916, %v9108
        %v9110 = vpop.f32.mrb[0].mxu0
        %v9111 = vadd.f32 %v8918, %v9110
        %9112 = vmatprep.mubr.bf16.mxu0 %v3131
        %9113 = vmatmul.mubr.bf16.gmra.mrb[0].mxu0 %v3130
        %v9114 = vpop.f32.mrb[0].mxu0
        %v9115 = vadd.f32 %v8922, %v9114
        %v9116 = vpop.f32.mrb[0].mxu0
        %v9117 = vadd.f32 %v8924, %v9116
        %v9118 = vpop.f32.mrb[0].mxu0
        %v9119 = vadd.f32 %v8926, %v9118
        %v9120 = vpop.f32.mrb[0].mxu0
        %v9121 = vadd.f32 %v8928, %v9120
        %9122 = vmatprep.mubr.bf16.mxu0 %v3139
        %9123 = vmatmul.mubr.bf16.gmra.mrb[0].mxu0 %v3138
        %v9124 = vpop.f32.mrb[0].mxu0
        %v9125 = vadd.f32 %v8932, %v9124
        %v9126 = vpop.f32.mrb[0].mxu0
        %v9127 = vadd.f32 %v8934, %v9126
        %v9128 = vpop.f32.mrb[0].mxu0
        %v9129 = vadd.f32 %v8936, %v9128
        %v9130 = vpop.f32.mrb[0].mxu0
        %v9131 = vadd.f32 %v8938, %v9130
        %9132 = vmatprep.mubr.bf16.mxu0 %v3147
        %9133 = vmatmul.mubr.bf16.gmra.mrb[0].mxu0 %v3146
        %v9134 = vpop.f32.mrb[0].mxu0
        %v9135 = vadd.f32 %v8942, %v9134
        %v9136 = vpop.f32.mrb[0].mxu0
        %v9137 = vadd.f32 %v8944, %v9136
        %v9138 = vpop.f32.mrb[0].mxu0
        %v9139 = vadd.f32 %v8946, %v9138
        %v9140 = vpop.f32.mrb[0].mxu0
        %v9141 = vadd.f32 %v8948, %v9140
        %9142 = vmatprep.mubr.bf16.mxu0 %v3155
        %9143 = vmatmul.mubr.bf16.gmra.mrb[0].mxu0 %v3154
        %v9144 = vpop.f32.mrb[0].mxu0
        %v9145 = vadd.f32 %v8952, %v9144
        %v9146 = vpop.f32.mrb[0].mxu0
        %v9147 = vadd.f32 %v8954, %v9146
        %v9148 = vpop.f32.mrb[0].mxu0
        %v9149 = vadd.f32 %v8956, %v9148
        %v9150 = vpop.f32.mrb[0].mxu0
        %v9151 = vadd.f32 %v8958, %v9150
        %9152 = vmatprep.mubr.bf16.mxu0 %v3163
        %9153 = vmatmul.mubr.bf16.gmra.mrb[0].mxu0 %v3162
        %v9154 = vpop.f32.mrb[0].mxu0
        %v9155 = vadd.f32 %v8962, %v9154
        %v9156 = vpop.f32.mrb[0].mxu0
        %v9157 = vadd.f32 %v8964, %v9156
        %v9158 = vpop.f32.mrb[0].mxu0
        %v9159 = vadd.f32 %v8966, %v9158
        %v9160 = vpop.f32.mrb[0].mxu0
        %v9161 = vadd.f32 %v8968, %v9160
        %9162 = vmatprep.mubr.bf16.mxu0 %v3171
        %9163 = vmatmul.mubr.bf16.gmra.mrb[0].mxu0 %v3170
        %v9164 = vpop.f32.mrb[0].mxu0
        %v9165 = vadd.f32 %v8972, %v9164
        %v9166 = vpop.f32.mrb[0].mxu0
        %v9167 = vadd.f32 %v8974, %v9166
        %v9168 = vpop.f32.mrb[0].mxu0
        %v9169 = vadd.f32 %v8976, %v9168
        %v9170 = vpop.f32.mrb[0].mxu0
        %v9171 = vadd.f32 %v8978, %v9170
        %9172 = vmatprep.mubr.bf16.mxu0 %v3179
        %9173 = vmatmul.mubr.bf16.gmra.mrb[0].mxu0 %v3178
        %v9174 = vpop.f32.mrb[0].mxu0
        %v9175 = vadd.f32 %v8982, %v9174
        %v9176 = vpop.f32.mrb[0].mxu0
        %v9177 = vadd.f32 %v8984, %v9176
        %v9178 = vpop.f32.mrb[0].mxu0
        %v9179 = vadd.f32 %v8986, %v9178
        %v9180 = vpop.f32.mrb[0].mxu0
        %v9181 = vadd.f32 %v8988, %v9180
        %9182 = vmatprep.mubr.bf16.mxu0 %v3187
        %9183 = vmatmul.mubr.bf16.gmra.mrb[0].mxu0 %v3186
        %v9184 = vpop.f32.mrb[0].mxu0
        %v9185 = vadd.f32 %v8992, %v9184
        %v9186 = vpop.f32.mrb[0].mxu0
        %v9187 = vadd.f32 %v8994, %v9186
        %v9188 = vpop.f32.mrb[0].mxu0
        %v9189 = vadd.f32 %v8996, %v9188
        %v9190 = vpop.f32.mrb[0].mxu0
        %v9191 = vadd.f32 %v8998, %v9190
        %9192 = vmatprep.mubr.bf16.mxu0 %v3195
        %9193 = vmatmul.mubr.bf16.gmra.mrb[0].mxu0 %v3194
        %v9194 = vpop.f32.mrb[0].mxu0
        %v9195 = vadd.f32 %v9002, %v9194
        %v9196 = vpop.f32.mrb[0].mxu0
        %v9197 = vadd.f32 %v9004, %v9196
        %v9198 = vpop.f32.mrb[0].mxu0
        %v9199 = vadd.f32 %v9006, %v9198
        %v9200 = vpop.f32.mrb[0].mxu0
        %v9201 = vadd.f32 %v9008, %v9200
        %9202 = vmatprep.mubr.bf16.mxu0 %v3203
        %9203 = vmatmul.mubr.bf16.gmra.mrb[0].mxu0 %v3202
        %v9204 = vpop.f32.mrb[0].mxu0
        %v9205 = vadd.f32 %v9012, %v9204
        %v9206 = vpop.f32.mrb[0].mxu0
        %v9207 = vadd.f32 %v9014, %v9206
        %v9208 = vpop.f32.mrb[0].mxu0
        %v9209 = vadd.f32 %v9016, %v9208
        %v9210 = vpop.f32.mrb[0].mxu0
        %v9211 = vadd.f32 %v9018, %v9210
        %9212 = vmatprep.mubr.bf16.mxu0 %v3211
        %9213 = vmatmul.mubr.bf16.gmra.mrb[0].mxu0 %v3210
        %v9214 = vpop.f32.mrb[0].mxu0
        %v9215 = vadd.f32 %v9022, %v9214
        %v9216 = vpop.f32.mrb[0].mxu0
        %v9217 = vadd.f32 %v9024, %v9216
        %v9218 = vpop.f32.mrb[0].mxu0
        %v9219 = vadd.f32 %v9026, %v9218
        %v9220 = vpop.f32.mrb[0].mxu0
        %v9221 = vadd.f32 %v9028, %v9220
        %9222 = vdwg.mxu0
        %9223 = vmatprep.subr.bf16.mxu0 %v5695
        %9224 = vmatpush1.bf16.msra.mxu0 %v5694
        %9225 = vmatprep.subr.bf16.mxu0 %v5703
        %9226 = vmatpush1.bf16.msra.mxu0 %v5702
        %9227 = vmatprep.subr.bf16.mxu0 %v5711
        %9228 = vmatpush1.bf16.msra.mxu0 %v5710
        %9229 = vmatprep.subr.bf16.mxu0 %v5719
        %9230 = vmatpush1.bf16.msra.mxu0 %v5718
        %9231 = vmatprep.subr.bf16.mxu0 %v5727
        %9232 = vmatpush1.bf16.msra.mxu0 %v5726
        %9233 = vmatprep.subr.bf16.mxu0 %v5735
        %9234 = vmatpush1.bf16.msra.mxu0 %v5734
        %9235 = vmatprep.subr.bf16.mxu0 %v5743
        %9236 = vmatpush1.bf16.msra.mxu0 %v5742
        %9237 = vmatprep.subr.bf16.mxu0 %v5751
        %9238 = vmatpush1.bf16.msra.mxu0 %v5750
        %9239 = vmatprep.subr.bf16.mxu0 %v5759
        %9240 = vmatpush1.bf16.msra.mxu0 %v5758
        %9241 = vmatprep.subr.bf16.mxu0 %v5767
        %9242 = vmatpush1.bf16.msra.mxu0 %v5766
        %9243 = vmatprep.subr.bf16.mxu0 %v5775
        %9244 = vmatpush1.bf16.msra.mxu0 %v5774
        %9245 = vmatprep.subr.bf16.mxu0 %v5783
        %9246 = vmatpush1.bf16.msra.mxu0 %v5782
        %9247 = vmatprep.subr.bf16.mxu0 %v5791
        %9248 = vmatpush1.bf16.msra.mxu0 %v5790
        %9249 = vmatprep.subr.bf16.mxu0 %v5799
        %9250 = vmatpush1.bf16.msra.mxu0 %v5798
        %9251 = vmatprep.subr.bf16.mxu0 %v5807
        %9252 = vmatpush1.bf16.msra.mxu0 %v5806
        %9253 = vmatprep.subr.bf16.mxu0 %v5815
        %9254 = vmatpush1.bf16.msra.mxu0 %v5814
        %9255 = vmatprep.mubr.bf16.mxu0 %v3093
        %9256 = vmatmul.mubr.bf16.gmra.mrb[0].mxu0 %v3092
        %v9257 = vpop.f32.mrb[0].mxu0
        %v9258 = vadd.f32 %v9065, %v9257
        %v9259 = vpop.f32.mrb[0].mxu0
        %v9260 = vadd.f32 %v9067, %v9259
        %v9261 = vpop.f32.mrb[0].mxu0
        %v9262 = vadd.f32 %v9069, %v9261
        %v9263 = vpop.f32.mrb[0].mxu0
        %v9264 = vadd.f32 %v9071, %v9263
        %9265 = vmatprep.mubr.bf16.mxu0 %v3101
        %9266 = vmatmul.mubr.bf16.gmra.mrb[0].mxu0 %v3100
        %v9267 = vpop.f32.mrb[0].mxu0
        %v9268 = vadd.f32 %v9075, %v9267
        %v9269 = vpop.f32.mrb[0].mxu0
        %v9270 = vadd.f32 %v9077, %v9269
        %v9271 = vpop.f32.mrb[0].mxu0
        %v9272 = vadd.f32 %v9079, %v9271
        %v9273 = vpop.f32.mrb[0].mxu0
        %v9274 = vadd.f32 %v9081, %v9273
        %9275 = vmatprep.mubr.bf16.mxu0 %v3109
        %9276 = vmatmul.mubr.bf16.gmra.mrb[0].mxu0 %v3108
        %v9277 = vpop.f32.mrb[0].mxu0
        %v9278 = vadd.f32 %v9085, %v9277
        %v9279 = vpop.f32.mrb[0].mxu0
        %v9280 = vadd.f32 %v9087, %v9279
        %v9281 = vpop.f32.mrb[0].mxu0
        %v9282 = vadd.f32 %v9089, %v9281
        %v9283 = vpop.f32.mrb[0].mxu0
        %v9284 = vadd.f32 %v9091, %v9283
        %9285 = vmatprep.mubr.bf16.mxu0 %v3117
        %9286 = vmatmul.mubr.bf16.gmra.mrb[0].mxu0 %v3116
        %v9287 = vpop.f32.mrb[0].mxu0
        %v9288 = vadd.f32 %v9095, %v9287
        %v9289 = vpop.f32.mrb[0].mxu0
        %v9290 = vadd.f32 %v9097, %v9289
        %v9291 = vpop.f32.mrb[0].mxu0
        %v9292 = vadd.f32 %v9099, %v9291
        %v9293 = vpop.f32.mrb[0].mxu0
        %v9294 = vadd.f32 %v9101, %v9293
        %9295 = vmatprep.mubr.bf16.mxu0 %v3125
        %9296 = vmatmul.mubr.bf16.gmra.mrb[0].mxu0 %v3124
        %v9297 = vpop.f32.mrb[0].mxu0
        %v9298 = vadd.f32 %v9105, %v9297
        %v9299 = vpop.f32.mrb[0].mxu0
        %v9300 = vadd.f32 %v9107, %v9299
        %v9301 = vpop.f32.mrb[0].mxu0
        %v9302 = vadd.f32 %v9109, %v9301
        %v9303 = vpop.f32.mrb[0].mxu0
        %v9304 = vadd.f32 %v9111, %v9303
        %9305 = vmatprep.mubr.bf16.mxu0 %v3133
        %9306 = vmatmul.mubr.bf16.gmra.mrb[0].mxu0 %v3132
        %v9307 = vpop.f32.mrb[0].mxu0
        %v9308 = vadd.f32 %v9115, %v9307
        %v9309 = vpop.f32.mrb[0].mxu0
        %v9310 = vadd.f32 %v9117, %v9309
        %v9311 = vpop.f32.mrb[0].mxu0
        %v9312 = vadd.f32 %v9119, %v9311
        %v9313 = vpop.f32.mrb[0].mxu0
        %v9314 = vadd.f32 %v9121, %v9313
        %9315 = vmatprep.mubr.bf16.mxu0 %v3141
        %9316 = vmatmul.mubr.bf16.gmra.mrb[0].mxu0 %v3140
        %v9317 = vpop.f32.mrb[0].mxu0
        %v9318 = vadd.f32 %v9125, %v9317
        %v9319 = vpop.f32.mrb[0].mxu0
        %v9320 = vadd.f32 %v9127, %v9319
        %v9321 = vpop.f32.mrb[0].mxu0
        %v9322 = vadd.f32 %v9129, %v9321
        %v9323 = vpop.f32.mrb[0].mxu0
        %v9324 = vadd.f32 %v9131, %v9323
        %9325 = vmatprep.mubr.bf16.mxu0 %v3149
        %9326 = vmatmul.mubr.bf16.gmra.mrb[0].mxu0 %v3148
        %v9327 = vpop.f32.mrb[0].mxu0
        %v9328 = vadd.f32 %v9135, %v9327
        %v9329 = vpop.f32.mrb[0].mxu0
        %v9330 = vadd.f32 %v9137, %v9329
        %v9331 = vpop.f32.mrb[0].mxu0
        %v9332 = vadd.f32 %v9139, %v9331
        %v9333 = vpop.f32.mrb[0].mxu0
        %v9334 = vadd.f32 %v9141, %v9333
        %9335 = vmatprep.mubr.bf16.mxu0 %v3157
        %9336 = vmatmul.mubr.bf16.gmra.mrb[0].mxu0 %v3156
        %v9337 = vpop.f32.mrb[0].mxu0
        %v9338 = vadd.f32 %v9145, %v9337
        %v9339 = vpop.f32.mrb[0].mxu0
        %v9340 = vadd.f32 %v9147, %v9339
        %v9341 = vpop.f32.mrb[0].mxu0
        %v9342 = vadd.f32 %v9149, %v9341
        %v9343 = vpop.f32.mrb[0].mxu0
        %v9344 = vadd.f32 %v9151, %v9343
        %9345 = vmatprep.mubr.bf16.mxu0 %v3165
        %9346 = vmatmul.mubr.bf16.gmra.mrb[0].mxu0 %v3164
        %v9347 = vpop.f32.mrb[0].mxu0
        %v9348 = vadd.f32 %v9155, %v9347
        %v9349 = vpop.f32.mrb[0].mxu0
        %v9350 = vadd.f32 %v9157, %v9349
        %v9351 = vpop.f32.mrb[0].mxu0
        %v9352 = vadd.f32 %v9159, %v9351
        %v9353 = vpop.f32.mrb[0].mxu0
        %v9354 = vadd.f32 %v9161, %v9353
        %9355 = vmatprep.mubr.bf16.mxu0 %v3173
        %9356 = vmatmul.mubr.bf16.gmra.mrb[0].mxu0 %v3172
        %v9357 = vpop.f32.mrb[0].mxu0
        %v9358 = vadd.f32 %v9165, %v9357
        %v9359 = vpop.f32.mrb[0].mxu0
        %v9360 = vadd.f32 %v9167, %v9359
        %v9361 = vpop.f32.mrb[0].mxu0
        %v9362 = vadd.f32 %v9169, %v9361
        %v9363 = vpop.f32.mrb[0].mxu0
        %v9364 = vadd.f32 %v9171, %v9363
        %9365 = vmatprep.mubr.bf16.mxu0 %v3181
        %9366 = vmatmul.mubr.bf16.gmra.mrb[0].mxu0 %v3180
        %v9367 = vpop.f32.mrb[0].mxu0
        %v9368 = vadd.f32 %v9175, %v9367
        %v9369 = vpop.f32.mrb[0].mxu0
        %v9370 = vadd.f32 %v9177, %v9369
        %v9371 = vpop.f32.mrb[0].mxu0
        %v9372 = vadd.f32 %v9179, %v9371
        %v9373 = vpop.f32.mrb[0].mxu0
        %v9374 = vadd.f32 %v9181, %v9373
        %9375 = vmatprep.mubr.bf16.mxu0 %v3189
        %9376 = vmatmul.mubr.bf16.gmra.mrb[0].mxu0 %v3188
        %v9377 = vpop.f32.mrb[0].mxu0
        %v9378 = vadd.f32 %v9185, %v9377
        %v9379 = vpop.f32.mrb[0].mxu0
        %v9380 = vadd.f32 %v9187, %v9379
        %v9381 = vpop.f32.mrb[0].mxu0
        %v9382 = vadd.f32 %v9189, %v9381
        %v9383 = vpop.f32.mrb[0].mxu0
        %v9384 = vadd.f32 %v9191, %v9383
        %9385 = vmatprep.mubr.bf16.mxu0 %v3197
        %9386 = vmatmul.mubr.bf16.gmra.mrb[0].mxu0 %v3196
        %v9387 = vpop.f32.mrb[0].mxu0
        %v9388 = vadd.f32 %v9195, %v9387
        %v9389 = vpop.f32.mrb[0].mxu0
        %v9390 = vadd.f32 %v9197, %v9389
        %v9391 = vpop.f32.mrb[0].mxu0
        %v9392 = vadd.f32 %v9199, %v9391
        %v9393 = vpop.f32.mrb[0].mxu0
        %v9394 = vadd.f32 %v9201, %v9393
        %9395 = vmatprep.mubr.bf16.mxu0 %v3205
        %9396 = vmatmul.mubr.bf16.gmra.mrb[0].mxu0 %v3204
        %v9397 = vpop.f32.mrb[0].mxu0
        %v9398 = vadd.f32 %v9205, %v9397
        %v9399 = vpop.f32.mrb[0].mxu0
        %v9400 = vadd.f32 %v9207, %v9399
        %v9401 = vpop.f32.mrb[0].mxu0
        %v9402 = vadd.f32 %v9209, %v9401
        %v9403 = vpop.f32.mrb[0].mxu0
        %v9404 = vadd.f32 %v9211, %v9403
        %9405 = vmatprep.mubr.bf16.mxu0 %v3213
        %9406 = vmatmul.mubr.bf16.gmra.mrb[0].mxu0 %v3212
        %v9407 = vpop.f32.mrb[0].mxu0
        %v9408 = vadd.f32 %v9215, %v9407
        %v9409 = vpop.f32.mrb[0].mxu0
        %v9410 = vadd.f32 %v9217, %v9409
        %v9411 = vpop.f32.mrb[0].mxu0
        %v9412 = vadd.f32 %v9219, %v9411
        %v9413 = vpop.f32.mrb[0].mxu0
        %v9414 = vadd.f32 %v9221, %v9413
        %9415 = vdwg.mxu0
        %v9416 = vmul.f32 %v6942, 0.5
        %v9417 = vmul.f32 %v6944, 0.5
        %v9418 = vmul.f32 %v7714, 0.5
        %v9419 = vmul.f32 %v7716, 0.5
        %v9420 = vmul.f32 %v8486, 0.5
        %v9421 = vmul.f32 %v8488, 0.5
        %v9422 = vmul.f32 %v9258, 0.5
        %v9423 = vmul.f32 %v9260, 0.5
        %v9424 = vmul.f32 %v6946, 0.5
        %v9425 = vmul.f32 %v6948, 0.5
        %v9426 = vmul.f32 %v7718, 0.5
        %v9427 = vmul.f32 %v7720, 0.5
        %v9428 = vmul.f32 %v8490, 0.5
        %v9429 = vmul.f32 %v8492, 0.5
        %v9430 = vmul.f32 %v9262, 0.5
        %v9431 = vmul.f32 %v9264, 0.5
        %v9432 = vmul.f32 %v6952, 0.5
        %v9433 = vmul.f32 %v6954, 0.5
        %v9434 = vmul.f32 %v7724, 0.5
        %v9435 = vmul.f32 %v7726, 0.5
        %v9436 = vmul.f32 %v8496, 0.5
        %v9437 = vmul.f32 %v8498, 0.5
        %v9438 = vmul.f32 %v9268, 0.5
        %v9439 = vmul.f32 %v9270, 0.5
        %v9440 = vmul.f32 %v6956, 0.5
        %v9441 = vmul.f32 %v6958, 0.5
        %v9442 = vmul.f32 %v7728, 0.5
        %v9443 = vmul.f32 %v7730, 0.5
        %v9444 = vmul.f32 %v8500, 0.5
        %v9445 = vmul.f32 %v8502, 0.5
        %v9446 = vmul.f32 %v9272, 0.5
        %v9447 = vmul.f32 %v9274, 0.5
        %v9448 = vmul.f32 %v6962, 0.5
        %v9449 = vmul.f32 %v6964, 0.5
        %v9450 = vmul.f32 %v7734, 0.5
        %v9451 = vmul.f32 %v7736, 0.5
        %v9452 = vmul.f32 %v8506, 0.5
        %v9453 = vmul.f32 %v8508, 0.5
        %v9454 = vmul.f32 %v9278, 0.5
        %v9455 = vmul.f32 %v9280, 0.5
        %v9456 = vmul.f32 %v6966, 0.5
        %v9457 = vmul.f32 %v6968, 0.5
        %v9458 = vmul.f32 %v7738, 0.5
        %v9459 = vmul.f32 %v7740, 0.5
        %v9460 = vmul.f32 %v8510, 0.5
        %v9461 = vmul.f32 %v8512, 0.5
        %v9462 = vmul.f32 %v9282, 0.5
        %v9463 = vmul.f32 %v9284, 0.5
        %v9464 = vmul.f32 %v6972, 0.5
        %v9465 = vmul.f32 %v6974, 0.5
        %v9466 = vmul.f32 %v7744, 0.5
        %v9467 = vmul.f32 %v7746, 0.5
        %v9468 = vmul.f32 %v8516, 0.5
        %v9469 = vmul.f32 %v8518, 0.5
        %v9470 = vmul.f32 %v9288, 0.5
        %v9471 = vmul.f32 %v9290, 0.5
        %v9472 = vmul.f32 %v6976, 0.5
        %v9473 = vmul.f32 %v6978, 0.5
        %v9474 = vmul.f32 %v7748, 0.5
        %v9475 = vmul.f32 %v7750, 0.5
        %v9476 = vmul.f32 %v8520, 0.5
        %v9477 = vmul.f32 %v8522, 0.5
        %v9478 = vmul.f32 %v9292, 0.5
        %v9479 = vmul.f32 %v9294, 0.5
        %v9480 = vmul.f32 %v6982, 0.5
        %v9481 = vmul.f32 %v6984, 0.5
        %v9482 = vmul.f32 %v7754, 0.5
        %v9483 = vmul.f32 %v7756, 0.5
        %v9484 = vmul.f32 %v8526, 0.5
        %v9485 = vmul.f32 %v8528, 0.5
        %v9486 = vmul.f32 %v9298, 0.5
        %v9487 = vmul.f32 %v9300, 0.5
        %v9488 = vmul.f32 %v6986, 0.5
        %v9489 = vmul.f32 %v6988, 0.5
        %v9490 = vmul.f32 %v7758, 0.5
        %v9491 = vmul.f32 %v7760, 0.5
        %v9492 = vmul.f32 %v8530, 0.5
        %v9493 = vmul.f32 %v8532, 0.5
        %v9494 = vmul.f32 %v9302, 0.5
        %v9495 = vmul.f32 %v9304, 0.5
        %v9496 = vmul.f32 %v6992, 0.5
        %v9497 = vmul.f32 %v6994, 0.5
        %v9498 = vmul.f32 %v7764, 0.5
        %v9499 = vmul.f32 %v7766, 0.5
        %v9500 = vmul.f32 %v8536, 0.5
        %v9501 = vmul.f32 %v8538, 0.5
        %v9502 = vmul.f32 %v9308, 0.5
        %v9503 = vmul.f32 %v9310, 0.5
        %v9504 = vmul.f32 %v6996, 0.5
        %v9505 = vmul.f32 %v6998, 0.5
        %v9506 = vmul.f32 %v7768, 0.5
        %v9507 = vmul.f32 %v7770, 0.5
        %v9508 = vmul.f32 %v8540, 0.5
        %v9509 = vmul.f32 %v8542, 0.5
        %v9510 = vmul.f32 %v9312, 0.5
        %v9511 = vmul.f32 %v9314, 0.5
        %v9512 = vmul.f32 %v7002, 0.5
        %v9513 = vmul.f32 %v7004, 0.5
        %v9514 = vmul.f32 %v7774, 0.5
        %v9515 = vmul.f32 %v7776, 0.5
        %v9516 = vmul.f32 %v8546, 0.5
        %v9517 = vmul.f32 %v8548, 0.5
        %v9518 = vmul.f32 %v9318, 0.5
        %v9519 = vmul.f32 %v9320, 0.5
        %v9520 = vmul.f32 %v7006, 0.5
        %v9521 = vmul.f32 %v7008, 0.5
        %v9522 = vmul.f32 %v7778, 0.5
        %v9523 = vmul.f32 %v7780, 0.5
        %v9524 = vmul.f32 %v8550, 0.5
        %v9525 = vmul.f32 %v8552, 0.5
        %v9526 = vmul.f32 %v9322, 0.5
        %v9527 = vmul.f32 %v9324, 0.5
        %v9528 = vmul.f32 %v7012, 0.5
        %v9529 = vmul.f32 %v7014, 0.5
        %v9530 = vmul.f32 %v7784, 0.5
        %v9531 = vmul.f32 %v7786, 0.5
        %v9532 = vmul.f32 %v8556, 0.5
        %v9533 = vmul.f32 %v8558, 0.5
        %v9534 = vmul.f32 %v9328, 0.5
        %v9535 = vmul.f32 %v9330, 0.5
        %v9536 = vmul.f32 %v7016, 0.5
        %v9537 = vmul.f32 %v7018, 0.5
        %v9538 = vmul.f32 %v7788, 0.5
        %v9539 = vmul.f32 %v7790, 0.5
        %v9540 = vmul.f32 %v8560, 0.5
        %v9541 = vmul.f32 %v8562, 0.5
        %v9542 = vmul.f32 %v9332, 0.5
        %v9543 = vmul.f32 %v9334, 0.5
        %v9544 = vmul.f32 %v7022, 0.5
        %v9545 = vmul.f32 %v7024, 0.5
        %v9546 = vmul.f32 %v7794, 0.5
        %v9547 = vmul.f32 %v7796, 0.5
        %v9548 = vmul.f32 %v8566, 0.5
        %v9549 = vmul.f32 %v8568, 0.5
        %v9550 = vmul.f32 %v9338, 0.5
        %v9551 = vmul.f32 %v9340, 0.5
        %v9552 = vmul.f32 %v7026, 0.5
        %v9553 = vmul.f32 %v7028, 0.5
        %v9554 = vmul.f32 %v7798, 0.5
        %v9555 = vmul.f32 %v7800, 0.5
        %v9556 = vmul.f32 %v8570, 0.5
        %v9557 = vmul.f32 %v8572, 0.5
        %v9558 = vmul.f32 %v9342, 0.5
        %v9559 = vmul.f32 %v9344, 0.5
        %v9560 = vmul.f32 %v7032, 0.5
        %v9561 = vmul.f32 %v7034, 0.5
        %v9562 = vmul.f32 %v7804, 0.5
        %v9563 = vmul.f32 %v7806, 0.5
        %v9564 = vmul.f32 %v8576, 0.5
        %v9565 = vmul.f32 %v8578, 0.5
        %v9566 = vmul.f32 %v9348, 0.5
        %v9567 = vmul.f32 %v9350, 0.5
        %v9568 = vmul.f32 %v7036, 0.5
        %v9569 = vmul.f32 %v7038, 0.5
        %v9570 = vmul.f32 %v7808, 0.5
        %v9571 = vmul.f32 %v7810, 0.5
        %v9572 = vmul.f32 %v8580, 0.5
        %v9573 = vmul.f32 %v8582, 0.5
        %v9574 = vmul.f32 %v9352, 0.5
        %v9575 = vmul.f32 %v9354, 0.5
        %v9576 = vmul.f32 %v7042, 0.5
        %v9577 = vmul.f32 %v7044, 0.5
        %v9578 = vmul.f32 %v7814, 0.5
        %v9579 = vmul.f32 %v7816, 0.5
        %v9580 = vmul.f32 %v8586, 0.5
        %v9581 = vmul.f32 %v8588, 0.5
        %v9582 = vmul.f32 %v9358, 0.5
        %v9583 = vmul.f32 %v9360, 0.5
        %v9584 = vmul.f32 %v7046, 0.5
        %v9585 = vmul.f32 %v7048, 0.5
        %v9586 = vmul.f32 %v7818, 0.5
        %v9587 = vmul.f32 %v7820, 0.5
        %v9588 = vmul.f32 %v8590, 0.5
        %v9589 = vmul.f32 %v8592, 0.5
        %v9590 = vmul.f32 %v9362, 0.5
        %v9591 = vmul.f32 %v9364, 0.5
        %v9592 = vmul.f32 %v7052, 0.5
        %v9593 = vmul.f32 %v7054, 0.5
        %v9594 = vmul.f32 %v7824, 0.5
        %v9595 = vmul.f32 %v7826, 0.5
        %v9596 = vmul.f32 %v8596, 0.5
        %v9597 = vmul.f32 %v8598, 0.5
        %v9598 = vmul.f32 %v9368, 0.5
        %v9599 = vmul.f32 %v9370, 0.5
        %v9600 = vmul.f32 %v7056, 0.5
        %v9601 = vmul.f32 %v7058, 0.5
        %v9602 = vmul.f32 %v7828, 0.5
        %v9603 = vmul.f32 %v7830, 0.5
        %v9604 = vmul.f32 %v8600, 0.5
        %v9605 = vmul.f32 %v8602, 0.5
        %v9606 = vmul.f32 %v9372, 0.5
        %v9607 = vmul.f32 %v9374, 0.5
        %v9608 = vmul.f32 %v7062, 0.5
        %v9609 = vmul.f32 %v7064, 0.5
        %v9610 = vmul.f32 %v7834, 0.5
        %v9611 = vmul.f32 %v7836, 0.5
        %v9612 = vmul.f32 %v8606, 0.5
        %v9613 = vmul.f32 %v8608, 0.5
        %v9614 = vmul.f32 %v9378, 0.5
        %v9615 = vmul.f32 %v9380, 0.5
        %v9616 = vmul.f32 %v7066, 0.5
        %v9617 = vmul.f32 %v7068, 0.5
        %v9618 = vmul.f32 %v7838, 0.5
        %v9619 = vmul.f32 %v7840, 0.5
        %v9620 = vmul.f32 %v8610, 0.5
        %v9621 = vmul.f32 %v8612, 0.5
        %v9622 = vmul.f32 %v9382, 0.5
        %v9623 = vmul.f32 %v9384, 0.5
        %v9624 = vmul.f32 %v7072, 0.5
        %v9625 = vmul.f32 %v7074, 0.5
        %v9626 = vmul.f32 %v7844, 0.5
        %v9627 = vmul.f32 %v7846, 0.5
        %v9628 = vmul.f32 %v8616, 0.5
        %v9629 = vmul.f32 %v8618, 0.5
        %v9630 = vmul.f32 %v9388, 0.5
        %v9631 = vmul.f32 %v9390, 0.5
        %v9632 = vmul.f32 %v7076, 0.5
        %v9633 = vmul.f32 %v7078, 0.5
        %v9634 = vmul.f32 %v7848, 0.5
        %v9635 = vmul.f32 %v7850, 0.5
        %v9636 = vmul.f32 %v8620, 0.5
        %v9637 = vmul.f32 %v8622, 0.5
        %v9638 = vmul.f32 %v9392, 0.5
        %v9639 = vmul.f32 %v9394, 0.5
        %v9640 = vmul.f32 %v7082, 0.5
        %v9641 = vmul.f32 %v7084, 0.5
        %v9642 = vmul.f32 %v7854, 0.5
        %v9643 = vmul.f32 %v7856, 0.5
        %v9644 = vmul.f32 %v8626, 0.5
        %v9645 = vmul.f32 %v8628, 0.5
        %v9646 = vmul.f32 %v9398, 0.5
        %v9647 = vmul.f32 %v9400, 0.5
        %v9648 = vmul.f32 %v7086, 0.5
        %v9649 = vmul.f32 %v7088, 0.5
        %v9650 = vmul.f32 %v7858, 0.5
        %v9651 = vmul.f32 %v7860, 0.5
        %v9652 = vmul.f32 %v8630, 0.5
        %v9653 = vmul.f32 %v8632, 0.5
        %v9654 = vmul.f32 %v9402, 0.5
        %v9655 = vmul.f32 %v9404, 0.5
        %v9656 = vmul.f32 %v7092, 0.5
        %v9657 = vmul.f32 %v7094, 0.5
        %v9658 = vmul.f32 %v7864, 0.5
        %v9659 = vmul.f32 %v7866, 0.5
        %v9660 = vmul.f32 %v8636, 0.5
        %v9661 = vmul.f32 %v8638, 0.5
        %v9662 = vmul.f32 %v9408, 0.5
        %v9663 = vmul.f32 %v9410, 0.5
        %v9664 = vmul.f32 %v7096, 0.5
        %v9665 = vmul.f32 %v7098, 0.5
        %v9666 = vmul.f32 %v7868, 0.5
        %v9667 = vmul.f32 %v7870, 0.5
        %v9668 = vmul.f32 %v8640, 0.5
        %v9669 = vmul.f32 %v8642, 0.5
        %v9670 = vmul.f32 %v9412, 0.5
        %v9671 = vmul.f32 %v9414, 0.5
        %v9672 = vtanh.pop %v9416
        %v9673 = vtanh.pop %v9417
        %v9674 = vtanh.pop %v9418
        %v9675 = vtanh.pop %v9419
        %v9676 = vtanh.pop %v9420
        %v9677 = vtanh.pop %v9421
        %v9678 = vtanh.pop %v9422
        %v9679 = vtanh.pop %v9423
        %v9680 = vtanh.pop %v9424
        %v9681 = vtanh.pop %v9425
        %v9682 = vtanh.pop %v9426
        %v9683 = vtanh.pop %v9427
        %v9684 = vtanh.pop %v9428
        %v9685 = vtanh.pop %v9429
        %v9686 = vtanh.pop %v9430
        %v9687 = vtanh.pop %v9431
        %v9688 = vtanh.pop %v9432
        %v9689 = vtanh.pop %v9433
        %v9690 = vtanh.pop %v9434
        %v9691 = vtanh.pop %v9435
        %v9692 = vtanh.pop %v9436
        %v9693 = vtanh.pop %v9437
        %v9694 = vtanh.pop %v9438
        %v9695 = vtanh.pop %v9439
        %v9696 = vtanh.pop %v9440
        %v9697 = vtanh.pop %v9441
        %v9698 = vtanh.pop %v9442
        %v9699 = vtanh.pop %v9443
        %v9700 = vtanh.pop %v9444
        %v9701 = vtanh.pop %v9445
        %v9702 = vtanh.pop %v9446
        %v9703 = vtanh.pop %v9447
        %v9704 = vtanh.pop %v9448
        %v9705 = vtanh.pop %v9449
        %v9706 = vtanh.pop %v9450
        %v9707 = vtanh.pop %v9451
        %v9708 = vtanh.pop %v9452
        %v9709 = vtanh.pop %v9453
        %v9710 = vtanh.pop %v9454
        %v9711 = vtanh.pop %v9455
        %v9712 = vtanh.pop %v9456
        %v9713 = vtanh.pop %v9457
        %v9714 = vtanh.pop %v9458
        %v9715 = vtanh.pop %v9459
        %v9716 = vtanh.pop %v9460
        %v9717 = vtanh.pop %v9461
        %v9718 = vtanh.pop %v9462
        %v9719 = vtanh.pop %v9463
        %v9720 = vtanh.pop %v9464
        %v9721 = vtanh.pop %v9465
        %v9722 = vtanh.pop %v9466
        %v9723 = vtanh.pop %v9467
        %v9724 = vtanh.pop %v9468
        %v9725 = vtanh.pop %v9469
        %v9726 = vtanh.pop %v9470
        %v9727 = vtanh.pop %v9471
        %v9728 = vtanh.pop %v9472
        %v9729 = vtanh.pop %v9473
        %v9730 = vtanh.pop %v9474
        %v9731 = vtanh.pop %v9475
        %v9732 = vtanh.pop %v9476
        %v9733 = vtanh.pop %v9477
        %v9734 = vtanh.pop %v9478
        %v9735 = vtanh.pop %v9479
        %v9736 = vtanh.pop %v9480
        %v9737 = vtanh.pop %v9481
        %v9738 = vtanh.pop %v9482
        %v9739 = vtanh.pop %v9483
        %v9740 = vtanh.pop %v9484
        %v9741 = vtanh.pop %v9485
        %v9742 = vtanh.pop %v9486
        %v9743 = vtanh.pop %v9487
        %v9744 = vtanh.pop %v9488
        %v9745 = vtanh.pop %v9489
        %v9746 = vtanh.pop %v9490
        %v9747 = vtanh.pop %v9491
        %v9748 = vtanh.pop %v9492
        %v9749 = vtanh.pop %v9493
        %v9750 = vtanh.pop %v9494
        %v9751 = vtanh.pop %v9495
        %v9752 = vtanh.pop %v9496
        %v9753 = vtanh.pop %v9497
        %v9754 = vtanh.pop %v9498
        %v9755 = vtanh.pop %v9499
        %v9756 = vtanh.pop %v9500
        %v9757 = vtanh.pop %v9501
        %v9758 = vtanh.pop %v9502
        %v9759 = vtanh.pop %v9503
        %v9760 = vtanh.pop %v9504
        %v9761 = vtanh.pop %v9505
        %v9762 = vtanh.pop %v9506
        %v9763 = vtanh.pop %v9507
        %v9764 = vtanh.pop %v9508
        %v9765 = vtanh.pop %v9509
        %v9766 = vtanh.pop %v9510
        %v9767 = vtanh.pop %v9511
        %v9768 = vtanh.pop %v9512
        %v9769 = vtanh.pop %v9513
        %v9770 = vtanh.pop %v9514
        %v9771 = vtanh.pop %v9515
        %v9772 = vtanh.pop %v9516
        %v9773 = vtanh.pop %v9517
        %v9774 = vtanh.pop %v9518
        %v9775 = vtanh.pop %v9519
        %v9776 = vtanh.pop %v9520
        %v9777 = vtanh.pop %v9521
        %v9778 = vtanh.pop %v9522
        %v9779 = vtanh.pop %v9523
        %v9780 = vtanh.pop %v9524
        %v9781 = vtanh.pop %v9525
        %v9782 = vtanh.pop %v9526
        %v9783 = vtanh.pop %v9527
        %v9784 = vtanh.pop %v9528
        %v9785 = vtanh.pop %v9529
        %v9786 = vtanh.pop %v9530
        %v9787 = vtanh.pop %v9531
        %v9788 = vtanh.pop %v9532
        %v9789 = vtanh.pop %v9533
        %v9790 = vtanh.pop %v9534
        %v9791 = vtanh.pop %v9535
        %v9792 = vtanh.pop %v9536
        %v9793 = vtanh.pop %v9537
        %v9794 = vtanh.pop %v9538
        %v9795 = vtanh.pop %v9539
        %v9796 = vtanh.pop %v9540
        %v9797 = vtanh.pop %v9541
        %v9798 = vtanh.pop %v9542
        %v9799 = vtanh.pop %v9543
        %v9800 = vtanh.pop %v9544
        %v9801 = vtanh.pop %v9545
        %v9802 = vtanh.pop %v9546
        %v9803 = vtanh.pop %v9547
        %v9804 = vtanh.pop %v9548
        %v9805 = vtanh.pop %v9549
        %v9806 = vtanh.pop %v9550
        %v9807 = vtanh.pop %v9551
        %v9808 = vtanh.pop %v9552
        %v9809 = vtanh.pop %v9553
        %v9810 = vtanh.pop %v9554
        %v9811 = vtanh.pop %v9555
        %v9812 = vtanh.pop %v9556
        %v9813 = vtanh.pop %v9557
        %v9814 = vtanh.pop %v9558
        %v9815 = vtanh.pop %v9559
        %v9816 = vtanh.pop %v9560
        %v9817 = vtanh.pop %v9561
        %v9818 = vtanh.pop %v9562
        %v9819 = vtanh.pop %v9563
        %v9820 = vtanh.pop %v9564
        %v9821 = vtanh.pop %v9565
        %v9822 = vtanh.pop %v9566
        %v9823 = vtanh.pop %v9567
        %v9824 = vtanh.pop %v9568
        %v9825 = vtanh.pop %v9569
        %v9826 = vtanh.pop %v9570
        %v9827 = vtanh.pop %v9571
        %v9828 = vtanh.pop %v9572
        %v9829 = vtanh.pop %v9573
        %v9830 = vtanh.pop %v9574
        %v9831 = vtanh.pop %v9575
        %v9832 = vtanh.pop %v9576
        %v9833 = vtanh.pop %v9577
        %v9834 = vtanh.pop %v9578
        %v9835 = vtanh.pop %v9579
        %v9836 = vtanh.pop %v9580
        %v9837 = vtanh.pop %v9581
        %v9838 = vtanh.pop %v9582
        %v9839 = vtanh.pop %v9583
        %v9840 = vtanh.pop %v9584
        %v9841 = vtanh.pop %v9585
        %v9842 = vtanh.pop %v9586
        %v9843 = vtanh.pop %v9587
        %v9844 = vtanh.pop %v9588
        %v9845 = vtanh.pop %v9589
        %v9846 = vtanh.pop %v9590
        %v9847 = vtanh.pop %v9591
        %v9848 = vtanh.pop %v9592
        %v9849 = vtanh.pop %v9593
        %v9850 = vtanh.pop %v9594
        %v9851 = vtanh.pop %v9595
        %v9852 = vtanh.pop %v9596
        %v9853 = vtanh.pop %v9597
        %v9854 = vtanh.pop %v9598
        %v9855 = vtanh.pop %v9599
        %v9856 = vtanh.pop %v9600
        %v9857 = vtanh.pop %v9601
        %v9858 = vtanh.pop %v9602
        %v9859 = vtanh.pop %v9603
        %v9860 = vtanh.pop %v9604
        %v9861 = vtanh.pop %v9605
        %v9862 = vtanh.pop %v9606
        %v9863 = vtanh.pop %v9607
        %v9864 = vtanh.pop %v9608
        %v9865 = vtanh.pop %v9609
        %v9866 = vtanh.pop %v9610
        %v9867 = vtanh.pop %v9611
        %v9868 = vtanh.pop %v9612
        %v9869 = vtanh.pop %v9613
        %v9870 = vtanh.pop %v9614
        %v9871 = vtanh.pop %v9615
        %v9872 = vtanh.pop %v9616
        %v9873 = vtanh.pop %v9617
        %v9874 = vtanh.pop %v9618
        %v9875 = vtanh.pop %v9619
        %v9876 = vtanh.pop %v9620
        %v9877 = vtanh.pop %v9621
        %v9878 = vtanh.pop %v9622
        %v9879 = vtanh.pop %v9623
        %v9880 = vtanh.pop %v9624
        %v9881 = vtanh.pop %v9625
        %v9882 = vtanh.pop %v9626
        %v9883 = vtanh.pop %v9627
        %v9884 = vtanh.pop %v9628
        %v9885 = vtanh.pop %v9629
        %v9886 = vtanh.pop %v9630
        %v9887 = vtanh.pop %v9631
        %v9888 = vtanh.pop %v9632
        %v9889 = vtanh.pop %v9633
        %v9890 = vtanh.pop %v9634
        %v9891 = vtanh.pop %v9635
        %v9892 = vtanh.pop %v9636
        %v9893 = vtanh.pop %v9637
        %v9894 = vtanh.pop %v9638
        %v9895 = vtanh.pop %v9639
        %v9896 = vtanh.pop %v9640
        %v9897 = vtanh.pop %v9641
        %v9898 = vtanh.pop %v9642
        %v9899 = vtanh.pop %v9643
        %v9900 = vtanh.pop %v9644
        %v9901 = vtanh.pop %v9645
        %v9902 = vtanh.pop %v9646
        %v9903 = vtanh.pop %v9647
        %v9904 = vtanh.pop %v9648
        %v9905 = vtanh.pop %v9649
        %v9906 = vtanh.pop %v9650
        %v9907 = vtanh.pop %v9651
        %v9908 = vtanh.pop %v9652
        %v9909 = vtanh.pop %v9653
        %v9910 = vtanh.pop %v9654
        %v9911 = vtanh.pop %v9655
        %v9912 = vtanh.pop %v9656
        %v9913 = vtanh.pop %v9657
        %v9914 = vtanh.pop %v9658
        %v9915 = vtanh.pop %v9659
        %v9916 = vtanh.pop %v9660
        %v9917 = vtanh.pop %v9661
        %v9918 = vtanh.pop %v9662
        %v9919 = vtanh.pop %v9663
        %v9920 = vtanh.pop %v9664
        %v9921 = vtanh.pop %v9665
        %v9922 = vtanh.pop %v9666
        %v9923 = vtanh.pop %v9667
        %v9924 = vtanh.pop %v9668
        %v9925 = vtanh.pop %v9669
        %v9926 = vtanh.pop %v9670
        %v9927 = vtanh.pop %v9671
        %v9928 = vmul.f32 %v9672, 0.5
        %v9929 = vmul.f32 %v9673, 0.5
        %v9930 = vmul.f32 %v9674, 0.5
        %v9931 = vmul.f32 %v9675, 0.5
        %v9932 = vmul.f32 %v9676, 0.5
        %v9933 = vmul.f32 %v9677, 0.5
        %v9934 = vmul.f32 %v9678, 0.5
        %v9935 = vmul.f32 %v9679, 0.5
        %v9936 = vmul.f32 %v9680, 0.5
        %v9937 = vmul.f32 %v9681, 0.5
        %v9938 = vmul.f32 %v9682, 0.5
        %v9939 = vmul.f32 %v9683, 0.5
        %v9940 = vmul.f32 %v9684, 0.5
        %v9941 = vmul.f32 %v9685, 0.5
        %v9942 = vmul.f32 %v9686, 0.5
        %v9943 = vmul.f32 %v9687, 0.5
        %v9944 = vmul.f32 %v9688, 0.5
        %v9945 = vmul.f32 %v9689, 0.5
        %v9946 = vmul.f32 %v9690, 0.5
        %v9947 = vmul.f32 %v9691, 0.5
        %v9948 = vmul.f32 %v9692, 0.5
        %v9949 = vmul.f32 %v9693, 0.5
        %v9950 = vmul.f32 %v9694, 0.5
        %v9951 = vmul.f32 %v9695, 0.5
        %v9952 = vmul.f32 %v9696, 0.5
        %v9953 = vmul.f32 %v9697, 0.5
        %v9954 = vmul.f32 %v9698, 0.5
        %v9955 = vmul.f32 %v9699, 0.5
        %v9956 = vmul.f32 %v9700, 0.5
        %v9957 = vmul.f32 %v9701, 0.5
        %v9958 = vmul.f32 %v9702, 0.5
        %v9959 = vmul.f32 %v9703, 0.5
        %v9960 = vmul.f32 %v9704, 0.5
        %v9961 = vmul.f32 %v9705, 0.5
        %v9962 = vmul.f32 %v9706, 0.5
        %v9963 = vmul.f32 %v9707, 0.5
        %v9964 = vmul.f32 %v9708, 0.5
        %v9965 = vmul.f32 %v9709, 0.5
        %v9966 = vmul.f32 %v9710, 0.5
        %v9967 = vmul.f32 %v9711, 0.5
        %v9968 = vmul.f32 %v9712, 0.5
        %v9969 = vmul.f32 %v9713, 0.5
        %v9970 = vmul.f32 %v9714, 0.5
        %v9971 = vmul.f32 %v9715, 0.5
        %v9972 = vmul.f32 %v9716, 0.5
        %v9973 = vmul.f32 %v9717, 0.5
        %v9974 = vmul.f32 %v9718, 0.5
        %v9975 = vmul.f32 %v9719, 0.5
        %v9976 = vmul.f32 %v9720, 0.5
        %v9977 = vmul.f32 %v9721, 0.5
        %v9978 = vmul.f32 %v9722, 0.5
        %v9979 = vmul.f32 %v9723, 0.5
        %v9980 = vmul.f32 %v9724, 0.5
        %v9981 = vmul.f32 %v9725, 0.5
        %v9982 = vmul.f32 %v9726, 0.5
        %v9983 = vmul.f32 %v9727, 0.5
        %v9984 = vmul.f32 %v9728, 0.5
        %v9985 = vmul.f32 %v9729, 0.5
        %v9986 = vmul.f32 %v9730, 0.5
        %v9987 = vmul.f32 %v9731, 0.5
        %v9988 = vmul.f32 %v9732, 0.5
        %v9989 = vmul.f32 %v9733, 0.5
        %v9990 = vmul.f32 %v9734, 0.5
        %v9991 = vmul.f32 %v9735, 0.5
        %v9992 = vmul.f32 %v9736, 0.5
        %v9993 = vmul.f32 %v9737, 0.5
        %v9994 = vmul.f32 %v9738, 0.5
        %v9995 = vmul.f32 %v9739, 0.5
        %v9996 = vmul.f32 %v9740, 0.5
        %v9997 = vmul.f32 %v9741, 0.5
        %v9998 = vmul.f32 %v9742, 0.5
        %v9999 = vmul.f32 %v9743, 0.5
        %v10000 = vmul.f32 %v9744, 0.5
        %v10001 = vmul.f32 %v9745, 0.5
        %v10002 = vmul.f32 %v9746, 0.5
        %v10003 = vmul.f32 %v9747, 0.5
        %v10004 = vmul.f32 %v9748, 0.5
        %v10005 = vmul.f32 %v9749, 0.5
        %v10006 = vmul.f32 %v9750, 0.5
        %v10007 = vmul.f32 %v9751, 0.5
        %v10008 = vmul.f32 %v9752, 0.5
        %v10009 = vmul.f32 %v9753, 0.5
        %v10010 = vmul.f32 %v9754, 0.5
        %v10011 = vmul.f32 %v9755, 0.5
        %v10012 = vmul.f32 %v9756, 0.5
        %v10013 = vmul.f32 %v9757, 0.5
        %v10014 = vmul.f32 %v9758, 0.5
        %v10015 = vmul.f32 %v9759, 0.5
        %v10016 = vmul.f32 %v9760, 0.5
        %v10017 = vmul.f32 %v9761, 0.5
        %v10018 = vmul.f32 %v9762, 0.5
        %v10019 = vmul.f32 %v9763, 0.5
        %v10020 = vmul.f32 %v9764, 0.5
        %v10021 = vmul.f32 %v9765, 0.5
        %v10022 = vmul.f32 %v9766, 0.5
        %v10023 = vmul.f32 %v9767, 0.5
        %v10024 = vmul.f32 %v9768, 0.5
        %v10025 = vmul.f32 %v9769, 0.5
        %v10026 = vmul.f32 %v9770, 0.5
        %v10027 = vmul.f32 %v9771, 0.5
        %v10028 = vmul.f32 %v9772, 0.5
        %v10029 = vmul.f32 %v9773, 0.5
        %v10030 = vmul.f32 %v9774, 0.5
        %v10031 = vmul.f32 %v9775, 0.5
        %v10032 = vmul.f32 %v9776, 0.5
        %v10033 = vmul.f32 %v9777, 0.5
        %v10034 = vmul.f32 %v9778, 0.5
        %v10035 = vmul.f32 %v9779, 0.5
        %v10036 = vmul.f32 %v9780, 0.5
        %v10037 = vmul.f32 %v9781, 0.5
        %v10038 = vmul.f32 %v9782, 0.5
        %v10039 = vmul.f32 %v9783, 0.5
        %v10040 = vmul.f32 %v9784, 0.5
        %v10041 = vmul.f32 %v9785, 0.5
        %v10042 = vmul.f32 %v9786, 0.5
        %v10043 = vmul.f32 %v9787, 0.5
        %v10044 = vmul.f32 %v9788, 0.5
        %v10045 = vmul.f32 %v9789, 0.5
        %v10046 = vmul.f32 %v9790, 0.5
        %v10047 = vmul.f32 %v9791, 0.5
        %v10048 = vmul.f32 %v9792, 0.5
        %v10049 = vmul.f32 %v9793, 0.5
        %v10050 = vmul.f32 %v9794, 0.5
        %v10051 = vmul.f32 %v9795, 0.5
        %v10052 = vmul.f32 %v9796, 0.5
        %v10053 = vmul.f32 %v9797, 0.5
        %v10054 = vmul.f32 %v9798, 0.5
        %v10055 = vmul.f32 %v9799, 0.5
        %v10056 = vmul.f32 %v9800, 0.5
        %v10057 = vmul.f32 %v9801, 0.5
        %v10058 = vmul.f32 %v9802, 0.5
        %v10059 = vmul.f32 %v9803, 0.5
        %v10060 = vmul.f32 %v9804, 0.5
        %v10061 = vmul.f32 %v9805, 0.5
        %v10062 = vmul.f32 %v9806, 0.5
        %v10063 = vmul.f32 %v9807, 0.5
        %v10064 = vmul.f32 %v9808, 0.5
        %v10065 = vmul.f32 %v9809, 0.5
        %v10066 = vmul.f32 %v9810, 0.5
        %v10067 = vmul.f32 %v9811, 0.5
        %v10068 = vmul.f32 %v9812, 0.5
        %v10069 = vmul.f32 %v9813, 0.5
        %v10070 = vmul.f32 %v9814, 0.5
        %v10071 = vmul.f32 %v9815, 0.5
        %v10072 = vmul.f32 %v9816, 0.5
        %v10073 = vmul.f32 %v9817, 0.5
        %v10074 = vmul.f32 %v9818, 0.5
        %v10075 = vmul.f32 %v9819, 0.5
        %v10076 = vmul.f32 %v9820, 0.5
        %v10077 = vmul.f32 %v9821, 0.5
        %v10078 = vmul.f32 %v9822, 0.5
        %v10079 = vmul.f32 %v9823, 0.5
        %v10080 = vmul.f32 %v9824, 0.5
        %v10081 = vmul.f32 %v9825, 0.5
        %v10082 = vmul.f32 %v9826, 0.5
        %v10083 = vmul.f32 %v9827, 0.5
        %v10084 = vmul.f32 %v9828, 0.5
        %v10085 = vmul.f32 %v9829, 0.5
        %v10086 = vmul.f32 %v9830, 0.5
        %v10087 = vmul.f32 %v9831, 0.5
        %v10088 = vmul.f32 %v9832, 0.5
        %v10089 = vmul.f32 %v9833, 0.5
        %v10090 = vmul.f32 %v9834, 0.5
        %v10091 = vmul.f32 %v9835, 0.5
        %v10092 = vmul.f32 %v9836, 0.5
        %v10093 = vmul.f32 %v9837, 0.5
        %v10094 = vmul.f32 %v9838, 0.5
        %v10095 = vmul.f32 %v9839, 0.5
        %v10096 = vmul.f32 %v9840, 0.5
        %v10097 = vmul.f32 %v9841, 0.5
        %v10098 = vmul.f32 %v9842, 0.5
        %v10099 = vmul.f32 %v9843, 0.5
        %v10100 = vmul.f32 %v9844, 0.5
        %v10101 = vmul.f32 %v9845, 0.5
        %v10102 = vmul.f32 %v9846, 0.5
        %v10103 = vmul.f32 %v9847, 0.5
        %v10104 = vmul.f32 %v9848, 0.5
        %v10105 = vmul.f32 %v9849, 0.5
        %v10106 = vmul.f32 %v9850, 0.5
        %v10107 = vmul.f32 %v9851, 0.5
        %v10108 = vmul.f32 %v9852, 0.5
        %v10109 = vmul.f32 %v9853, 0.5
        %v10110 = vmul.f32 %v9854, 0.5
        %v10111 = vmul.f32 %v9855, 0.5
        %v10112 = vmul.f32 %v9856, 0.5
        %v10113 = vmul.f32 %v9857, 0.5
        %v10114 = vmul.f32 %v9858, 0.5
        %v10115 = vmul.f32 %v9859, 0.5
        %v10116 = vmul.f32 %v9860, 0.5
        %v10117 = vmul.f32 %v9861, 0.5
        %v10118 = vmul.f32 %v9862, 0.5
        %v10119 = vmul.f32 %v9863, 0.5
        %v10120 = vmul.f32 %v9864, 0.5
        %v10121 = vmul.f32 %v9865, 0.5
        %v10122 = vmul.f32 %v9866, 0.5
        %v10123 = vmul.f32 %v9867, 0.5
        %v10124 = vmul.f32 %v9868, 0.5
        %v10125 = vmul.f32 %v9869, 0.5
        %v10126 = vmul.f32 %v9870, 0.5
        %v10127 = vmul.f32 %v9871, 0.5
        %v10128 = vmul.f32 %v9872, 0.5
        %v10129 = vmul.f32 %v9873, 0.5
        %v10130 = vmul.f32 %v9874, 0.5
        %v10131 = vmul.f32 %v9875, 0.5
        %v10132 = vmul.f32 %v9876, 0.5
        %v10133 = vmul.f32 %v9877, 0.5
        %v10134 = vmul.f32 %v9878, 0.5
        %v10135 = vmul.f32 %v9879, 0.5
        %v10136 = vmul.f32 %v9880, 0.5
        %v10137 = vmul.f32 %v9881, 0.5
        %v10138 = vmul.f32 %v9882, 0.5
        %v10139 = vmul.f32 %v9883, 0.5
        %v10140 = vmul.f32 %v9884, 0.5
        %v10141 = vmul.f32 %v9885, 0.5
        %v10142 = vmul.f32 %v9886, 0.5
        %v10143 = vmul.f32 %v9887, 0.5
        %v10144 = vmul.f32 %v9888, 0.5
        %v10145 = vmul.f32 %v9889, 0.5
        %v10146 = vmul.f32 %v9890, 0.5
        %v10147 = vmul.f32 %v9891, 0.5
        %v10148 = vmul.f32 %v9892, 0.5
        %v10149 = vmul.f32 %v9893, 0.5
        %v10150 = vmul.f32 %v9894, 0.5
        %v10151 = vmul.f32 %v9895, 0.5
        %v10152 = vmul.f32 %v9896, 0.5
        %v10153 = vmul.f32 %v9897, 0.5
        %v10154 = vmul.f32 %v9898, 0.5
        %v10155 = vmul.f32 %v9899, 0.5
        %v10156 = vmul.f32 %v9900, 0.5
        %v10157 = vmul.f32 %v9901, 0.5
        %v10158 = vmul.f32 %v9902, 0.5
        %v10159 = vmul.f32 %v9903, 0.5
        %v10160 = vmul.f32 %v9904, 0.5
        %v10161 = vmul.f32 %v9905, 0.5
        %v10162 = vmul.f32 %v9906, 0.5
        %v10163 = vmul.f32 %v9907, 0.5
        %v10164 = vmul.f32 %v9908, 0.5
        %v10165 = vmul.f32 %v9909, 0.5
        %v10166 = vmul.f32 %v9910, 0.5
        %v10167 = vmul.f32 %v9911, 0.5
        %v10168 = vmul.f32 %v9912, 0.5
        %v10169 = vmul.f32 %v9913, 0.5
        %v10170 = vmul.f32 %v9914, 0.5
        %v10171 = vmul.f32 %v9915, 0.5
        %v10172 = vmul.f32 %v9916, 0.5
        %v10173 = vmul.f32 %v9917, 0.5
        %v10174 = vmul.f32 %v9918, 0.5
        %v10175 = vmul.f32 %v9919, 0.5
        %v10176 = vmul.f32 %v9920, 0.5
        %v10177 = vmul.f32 %v9921, 0.5
        %v10178 = vmul.f32 %v9922, 0.5
        %v10179 = vmul.f32 %v9923, 0.5
        %v10180 = vmul.f32 %v9924, 0.5
        %v10181 = vmul.f32 %v9925, 0.5
        %v10182 = vmul.f32 %v9926, 0.5
        %v10183 = vmul.f32 %v9927, 0.5
        %v10184 = vadd.f32 %v9928, 0.5
        %v10185 = vadd.f32 %v9929, 0.5
        %v10186 = vadd.f32 %v9930, 0.5
        %v10187 = vadd.f32 %v9931, 0.5
        %v10188 = vadd.f32 %v9932, 0.5
        %v10189 = vadd.f32 %v9933, 0.5
        %v10190 = vadd.f32 %v9934, 0.5
        %v10191 = vadd.f32 %v9935, 0.5
        %v10192 = vadd.f32 %v9936, 0.5
        %v10193 = vadd.f32 %v9937, 0.5
        %v10194 = vadd.f32 %v9938, 0.5
        %v10195 = vadd.f32 %v9939, 0.5
        %v10196 = vadd.f32 %v9940, 0.5
        %v10197 = vadd.f32 %v9941, 0.5
        %v10198 = vadd.f32 %v9942, 0.5
        %v10199 = vadd.f32 %v9943, 0.5
        %v10200 = vadd.f32 %v9944, 0.5
        %v10201 = vadd.f32 %v9945, 0.5
        %v10202 = vadd.f32 %v9946, 0.5
        %v10203 = vadd.f32 %v9947, 0.5
        %v10204 = vadd.f32 %v9948, 0.5
        %v10205 = vadd.f32 %v9949, 0.5
        %v10206 = vadd.f32 %v9950, 0.5
        %v10207 = vadd.f32 %v9951, 0.5
        %v10208 = vadd.f32 %v9952, 0.5
        %v10209 = vadd.f32 %v9953, 0.5
        %v10210 = vadd.f32 %v9954, 0.5
        %v10211 = vadd.f32 %v9955, 0.5
        %v10212 = vadd.f32 %v9956, 0.5
        %v10213 = vadd.f32 %v9957, 0.5
        %v10214 = vadd.f32 %v9958, 0.5
        %v10215 = vadd.f32 %v9959, 0.5
        %v10216 = vadd.f32 %v9960, 0.5
        %v10217 = vadd.f32 %v9961, 0.5
        %v10218 = vadd.f32 %v9962, 0.5
        %v10219 = vadd.f32 %v9963, 0.5
        %v10220 = vadd.f32 %v9964, 0.5
        %v10221 = vadd.f32 %v9965, 0.5
        %v10222 = vadd.f32 %v9966, 0.5
        %v10223 = vadd.f32 %v9967, 0.5
        %v10224 = vadd.f32 %v9968, 0.5
        %v10225 = vadd.f32 %v9969, 0.5
        %v10226 = vadd.f32 %v9970, 0.5
        %v10227 = vadd.f32 %v9971, 0.5
        %v10228 = vadd.f32 %v9972, 0.5
        %v10229 = vadd.f32 %v9973, 0.5
        %v10230 = vadd.f32 %v9974, 0.5
        %v10231 = vadd.f32 %v9975, 0.5
        %v10232 = vadd.f32 %v9976, 0.5
        %v10233 = vadd.f32 %v9977, 0.5
        %v10234 = vadd.f32 %v9978, 0.5
        %v10235 = vadd.f32 %v9979, 0.5
        %v10236 = vadd.f32 %v9980, 0.5
        %v10237 = vadd.f32 %v9981, 0.5
        %v10238 = vadd.f32 %v9982, 0.5
        %v10239 = vadd.f32 %v9983, 0.5
        %v10240 = vadd.f32 %v9984, 0.5
        %v10241 = vadd.f32 %v9985, 0.5
        %v10242 = vadd.f32 %v9986, 0.5
        %v10243 = vadd.f32 %v9987, 0.5
        %v10244 = vadd.f32 %v9988, 0.5
        %v10245 = vadd.f32 %v9989, 0.5
        %v10246 = vadd.f32 %v9990, 0.5
        %v10247 = vadd.f32 %v9991, 0.5
        %v10248 = vadd.f32 %v9992, 0.5
        %v10249 = vadd.f32 %v9993, 0.5
        %v10250 = vadd.f32 %v9994, 0.5
        %v10251 = vadd.f32 %v9995, 0.5
        %v10252 = vadd.f32 %v9996, 0.5
        %v10253 = vadd.f32 %v9997, 0.5
        %v10254 = vadd.f32 %v9998, 0.5
        %v10255 = vadd.f32 %v9999, 0.5
        %v10256 = vadd.f32 %v10000, 0.5
        %v10257 = vadd.f32 %v10001, 0.5
        %v10258 = vadd.f32 %v10002, 0.5
        %v10259 = vadd.f32 %v10003, 0.5
        %v10260 = vadd.f32 %v10004, 0.5
        %v10261 = vadd.f32 %v10005, 0.5
        %v10262 = vadd.f32 %v10006, 0.5
        %v10263 = vadd.f32 %v10007, 0.5
        %v10264 = vadd.f32 %v10008, 0.5
        %v10265 = vadd.f32 %v10009, 0.5
        %v10266 = vadd.f32 %v10010, 0.5
        %v10267 = vadd.f32 %v10011, 0.5
        %v10268 = vadd.f32 %v10012, 0.5
        %v10269 = vadd.f32 %v10013, 0.5
        %v10270 = vadd.f32 %v10014, 0.5
        %v10271 = vadd.f32 %v10015, 0.5
        %v10272 = vadd.f32 %v10016, 0.5
        %v10273 = vadd.f32 %v10017, 0.5
        %v10274 = vadd.f32 %v10018, 0.5
        %v10275 = vadd.f32 %v10019, 0.5
        %v10276 = vadd.f32 %v10020, 0.5
        %v10277 = vadd.f32 %v10021, 0.5
        %v10278 = vadd.f32 %v10022, 0.5
        %v10279 = vadd.f32 %v10023, 0.5
        %v10280 = vadd.f32 %v10024, 0.5
        %v10281 = vadd.f32 %v10025, 0.5
        %v10282 = vadd.f32 %v10026, 0.5
        %v10283 = vadd.f32 %v10027, 0.5
        %v10284 = vadd.f32 %v10028, 0.5
        %v10285 = vadd.f32 %v10029, 0.5
        %v10286 = vadd.f32 %v10030, 0.5
        %v10287 = vadd.f32 %v10031, 0.5
        %v10288 = vadd.f32 %v10032, 0.5
        %v10289 = vadd.f32 %v10033, 0.5
        %v10290 = vadd.f32 %v10034, 0.5
        %v10291 = vadd.f32 %v10035, 0.5
        %v10292 = vadd.f32 %v10036, 0.5
        %v10293 = vadd.f32 %v10037, 0.5
        %v10294 = vadd.f32 %v10038, 0.5
        %v10295 = vadd.f32 %v10039, 0.5
        %v10296 = vadd.f32 %v10040, 0.5
        %v10297 = vadd.f32 %v10041, 0.5
        %v10298 = vadd.f32 %v10042, 0.5
        %v10299 = vadd.f32 %v10043, 0.5
        %v10300 = vadd.f32 %v10044, 0.5
        %v10301 = vadd.f32 %v10045, 0.5
        %v10302 = vadd.f32 %v10046, 0.5
        %v10303 = vadd.f32 %v10047, 0.5
        %v10304 = vadd.f32 %v10048, 0.5
        %v10305 = vadd.f32 %v10049, 0.5
        %v10306 = vadd.f32 %v10050, 0.5
        %v10307 = vadd.f32 %v10051, 0.5
        %v10308 = vadd.f32 %v10052, 0.5
        %v10309 = vadd.f32 %v10053, 0.5
        %v10310 = vadd.f32 %v10054, 0.5
        %v10311 = vadd.f32 %v10055, 0.5
        %v10312 = vadd.f32 %v10056, 0.5
        %v10313 = vadd.f32 %v10057, 0.5
        %v10314 = vadd.f32 %v10058, 0.5
        %v10315 = vadd.f32 %v10059, 0.5
        %v10316 = vadd.f32 %v10060, 0.5
        %v10317 = vadd.f32 %v10061, 0.5
        %v10318 = vadd.f32 %v10062, 0.5
        %v10319 = vadd.f32 %v10063, 0.5
        %v10320 = vadd.f32 %v10064, 0.5
        %v10321 = vadd.f32 %v10065, 0.5
        %v10322 = vadd.f32 %v10066, 0.5
        %v10323 = vadd.f32 %v10067, 0.5
        %v10324 = vadd.f32 %v10068, 0.5
        %v10325 = vadd.f32 %v10069, 0.5
        %v10326 = vadd.f32 %v10070, 0.5
        %v10327 = vadd.f32 %v10071, 0.5
        %v10328 = vadd.f32 %v10072, 0.5
        %v10329 = vadd.f32 %v10073, 0.5
        %v10330 = vadd.f32 %v10074, 0.5
        %v10331 = vadd.f32 %v10075, 0.5
        %v10332 = vadd.f32 %v10076, 0.5
        %v10333 = vadd.f32 %v10077, 0.5
        %v10334 = vadd.f32 %v10078, 0.5
        %v10335 = vadd.f32 %v10079, 0.5
        %v10336 = vadd.f32 %v10080, 0.5
        %v10337 = vadd.f32 %v10081, 0.5
        %v10338 = vadd.f32 %v10082, 0.5
        %v10339 = vadd.f32 %v10083, 0.5
        %v10340 = vadd.f32 %v10084, 0.5
        %v10341 = vadd.f32 %v10085, 0.5
        %v10342 = vadd.f32 %v10086, 0.5
        %v10343 = vadd.f32 %v10087, 0.5
        %v10344 = vadd.f32 %v10088, 0.5
        %v10345 = vadd.f32 %v10089, 0.5
        %v10346 = vadd.f32 %v10090, 0.5
        %v10347 = vadd.f32 %v10091, 0.5
        %v10348 = vadd.f32 %v10092, 0.5
        %v10349 = vadd.f32 %v10093, 0.5
        %v10350 = vadd.f32 %v10094, 0.5
        %v10351 = vadd.f32 %v10095, 0.5
        %v10352 = vadd.f32 %v10096, 0.5
        %v10353 = vadd.f32 %v10097, 0.5
        %v10354 = vadd.f32 %v10098, 0.5
        %v10355 = vadd.f32 %v10099, 0.5
        %v10356 = vadd.f32 %v10100, 0.5
        %v10357 = vadd.f32 %v10101, 0.5
        %v10358 = vadd.f32 %v10102, 0.5
        %v10359 = vadd.f32 %v10103, 0.5
        %v10360 = vadd.f32 %v10104, 0.5
        %v10361 = vadd.f32 %v10105, 0.5
        %v10362 = vadd.f32 %v10106, 0.5
        %v10363 = vadd.f32 %v10107, 0.5
        %v10364 = vadd.f32 %v10108, 0.5
        %v10365 = vadd.f32 %v10109, 0.5
        %v10366 = vadd.f32 %v10110, 0.5
        %v10367 = vadd.f32 %v10111, 0.5
        %v10368 = vadd.f32 %v10112, 0.5
        %v10369 = vadd.f32 %v10113, 0.5
        %v10370 = vadd.f32 %v10114, 0.5
        %v10371 = vadd.f32 %v10115, 0.5
        %v10372 = vadd.f32 %v10116, 0.5
        %v10373 = vadd.f32 %v10117, 0.5
        %v10374 = vadd.f32 %v10118, 0.5
        %v10375 = vadd.f32 %v10119, 0.5
        %v10376 = vadd.f32 %v10120, 0.5
        %v10377 = vadd.f32 %v10121, 0.5
        %v10378 = vadd.f32 %v10122, 0.5
        %v10379 = vadd.f32 %v10123, 0.5
        %v10380 = vadd.f32 %v10124, 0.5
        %v10381 = vadd.f32 %v10125, 0.5
        %v10382 = vadd.f32 %v10126, 0.5
        %v10383 = vadd.f32 %v10127, 0.5
        %v10384 = vadd.f32 %v10128, 0.5
        %v10385 = vadd.f32 %v10129, 0.5
        %v10386 = vadd.f32 %v10130, 0.5
        %v10387 = vadd.f32 %v10131, 0.5
        %v10388 = vadd.f32 %v10132, 0.5
        %v10389 = vadd.f32 %v10133, 0.5
        %v10390 = vadd.f32 %v10134, 0.5
        %v10391 = vadd.f32 %v10135, 0.5
        %v10392 = vadd.f32 %v10136, 0.5
        %v10393 = vadd.f32 %v10137, 0.5
        %v10394 = vadd.f32 %v10138, 0.5
        %v10395 = vadd.f32 %v10139, 0.5
        %v10396 = vadd.f32 %v10140, 0.5
        %v10397 = vadd.f32 %v10141, 0.5
        %v10398 = vadd.f32 %v10142, 0.5
        %v10399 = vadd.f32 %v10143, 0.5
        %v10400 = vadd.f32 %v10144, 0.5
        %v10401 = vadd.f32 %v10145, 0.5
        %v10402 = vadd.f32 %v10146, 0.5
        %v10403 = vadd.f32 %v10147, 0.5
        %v10404 = vadd.f32 %v10148, 0.5
        %v10405 = vadd.f32 %v10149, 0.5
        %v10406 = vadd.f32 %v10150, 0.5
        %v10407 = vadd.f32 %v10151, 0.5
        %v10408 = vadd.f32 %v10152, 0.5
        %v10409 = vadd.f32 %v10153, 0.5
        %v10410 = vadd.f32 %v10154, 0.5
        %v10411 = vadd.f32 %v10155, 0.5
        %v10412 = vadd.f32 %v10156, 0.5
        %v10413 = vadd.f32 %v10157, 0.5
        %v10414 = vadd.f32 %v10158, 0.5
        %v10415 = vadd.f32 %v10159, 0.5
        %v10416 = vadd.f32 %v10160, 0.5
        %v10417 = vadd.f32 %v10161, 0.5
        %v10418 = vadd.f32 %v10162, 0.5
        %v10419 = vadd.f32 %v10163, 0.5
        %v10420 = vadd.f32 %v10164, 0.5
        %v10421 = vadd.f32 %v10165, 0.5
        %v10422 = vadd.f32 %v10166, 0.5
        %v10423 = vadd.f32 %v10167, 0.5
        %v10424 = vadd.f32 %v10168, 0.5
        %v10425 = vadd.f32 %v10169, 0.5
        %v10426 = vadd.f32 %v10170, 0.5
        %v10427 = vadd.f32 %v10171, 0.5
        %v10428 = vadd.f32 %v10172, 0.5
        %v10429 = vadd.f32 %v10173, 0.5
        %v10430 = vadd.f32 %v10174, 0.5
        %v10431 = vadd.f32 %v10175, 0.5
        %v10432 = vadd.f32 %v10176, 0.5
        %v10433 = vadd.f32 %v10177, 0.5
        %v10434 = vadd.f32 %v10178, 0.5
        %v10435 = vadd.f32 %v10179, 0.5
        %v10436 = vadd.f32 %v10180, 0.5
        %v10437 = vadd.f32 %v10181, 0.5
        %v10438 = vadd.f32 %v10182, 0.5
        %v10439 = vadd.f32 %v10183, 0.5
        %v10440 = vpack.c.bf16 %v10192, %v10184
        %v10441 = vpack.c.bf16 %v10193, %v10185
        %v10442 = vpack.c.bf16 %v10194, %v10186
        %v10443 = vpack.c.bf16 %v10195, %v10187
        %v10444 = vpack.c.bf16 %v10196, %v10188
        %v10445 = vpack.c.bf16 %v10197, %v10189
        %v10446 = vpack.c.bf16 %v10198, %v10190
        %v10447 = vpack.c.bf16 %v10199, %v10191
        %v10448 = vpack.c.bf16 %v10208, %v10200
        %v10449 = vpack.c.bf16 %v10209, %v10201
        %v10450 = vpack.c.bf16 %v10210, %v10202
        %v10451 = vpack.c.bf16 %v10211, %v10203
        %v10452 = vpack.c.bf16 %v10212, %v10204
        %v10453 = vpack.c.bf16 %v10213, %v10205
        %v10454 = vpack.c.bf16 %v10214, %v10206
        %v10455 = vpack.c.bf16 %v10215, %v10207
        %v10456 = vpack.c.bf16 %v10224, %v10216
        %v10457 = vpack.c.bf16 %v10225, %v10217
        %v10458 = vpack.c.bf16 %v10226, %v10218
        %v10459 = vpack.c.bf16 %v10227, %v10219
        %v10460 = vpack.c.bf16 %v10228, %v10220
        %v10461 = vpack.c.bf16 %v10229, %v10221
        %v10462 = vpack.c.bf16 %v10230, %v10222
        %v10463 = vpack.c.bf16 %v10231, %v10223
        %v10464 = vpack.c.bf16 %v10240, %v10232
        %v10465 = vpack.c.bf16 %v10241, %v10233
        %v10466 = vpack.c.bf16 %v10242, %v10234
        %v10467 = vpack.c.bf16 %v10243, %v10235
        %v10468 = vpack.c.bf16 %v10244, %v10236
        %v10469 = vpack.c.bf16 %v10245, %v10237
        %v10470 = vpack.c.bf16 %v10246, %v10238
        %v10471 = vpack.c.bf16 %v10247, %v10239
        %v10472 = vpack.c.bf16 %v10256, %v10248
        %v10473 = vpack.c.bf16 %v10257, %v10249
        %v10474 = vpack.c.bf16 %v10258, %v10250
        %v10475 = vpack.c.bf16 %v10259, %v10251
        %v10476 = vpack.c.bf16 %v10260, %v10252
        %v10477 = vpack.c.bf16 %v10261, %v10253
        %v10478 = vpack.c.bf16 %v10262, %v10254
        %v10479 = vpack.c.bf16 %v10263, %v10255
        %v10480 = vpack.c.bf16 %v10272, %v10264
        %v10481 = vpack.c.bf16 %v10273, %v10265
        %v10482 = vpack.c.bf16 %v10274, %v10266
        %v10483 = vpack.c.bf16 %v10275, %v10267
        %v10484 = vpack.c.bf16 %v10276, %v10268
        %v10485 = vpack.c.bf16 %v10277, %v10269
        %v10486 = vpack.c.bf16 %v10278, %v10270
        %v10487 = vpack.c.bf16 %v10279, %v10271
        %v10488 = vpack.c.bf16 %v10288, %v10280
        %v10489 = vpack.c.bf16 %v10289, %v10281
        %v10490 = vpack.c.bf16 %v10290, %v10282
        %v10491 = vpack.c.bf16 %v10291, %v10283
        %v10492 = vpack.c.bf16 %v10292, %v10284
        %v10493 = vpack.c.bf16 %v10293, %v10285
        %v10494 = vpack.c.bf16 %v10294, %v10286
        %v10495 = vpack.c.bf16 %v10295, %v10287
        %v10496 = vpack.c.bf16 %v10304, %v10296
        %v10497 = vpack.c.bf16 %v10305, %v10297
        %v10498 = vpack.c.bf16 %v10306, %v10298
        %v10499 = vpack.c.bf16 %v10307, %v10299
        %v10500 = vpack.c.bf16 %v10308, %v10300
        %v10501 = vpack.c.bf16 %v10309, %v10301
        %v10502 = vpack.c.bf16 %v10310, %v10302
        %v10503 = vpack.c.bf16 %v10311, %v10303
        %v10504 = vpack.c.bf16 %v10320, %v10312
        %v10505 = vpack.c.bf16 %v10321, %v10313
        %v10506 = vpack.c.bf16 %v10322, %v10314
        %v10507 = vpack.c.bf16 %v10323, %v10315
        %v10508 = vpack.c.bf16 %v10324, %v10316
        %v10509 = vpack.c.bf16 %v10325, %v10317
        %v10510 = vpack.c.bf16 %v10326, %v10318
        %v10511 = vpack.c.bf16 %v10327, %v10319
        %v10512 = vpack.c.bf16 %v10336, %v10328
        %v10513 = vpack.c.bf16 %v10337, %v10329
        %v10514 = vpack.c.bf16 %v10338, %v10330
        %v10515 = vpack.c.bf16 %v10339, %v10331
        %v10516 = vpack.c.bf16 %v10340, %v10332
        %v10517 = vpack.c.bf16 %v10341, %v10333
        %v10518 = vpack.c.bf16 %v10342, %v10334
        %v10519 = vpack.c.bf16 %v10343, %v10335
        %v10520 = vpack.c.bf16 %v10352, %v10344
        %v10521 = vpack.c.bf16 %v10353, %v10345
        %v10522 = vpack.c.bf16 %v10354, %v10346
        %v10523 = vpack.c.bf16 %v10355, %v10347
        %v10524 = vpack.c.bf16 %v10356, %v10348
        %v10525 = vpack.c.bf16 %v10357, %v10349
        %v10526 = vpack.c.bf16 %v10358, %v10350
        %v10527 = vpack.c.bf16 %v10359, %v10351
        %v10528 = vpack.c.bf16 %v10368, %v10360
        %v10529 = vpack.c.bf16 %v10369, %v10361
        %v10530 = vpack.c.bf16 %v10370, %v10362
        %v10531 = vpack.c.bf16 %v10371, %v10363
        %v10532 = vpack.c.bf16 %v10372, %v10364
        %v10533 = vpack.c.bf16 %v10373, %v10365
        %v10534 = vpack.c.bf16 %v10374, %v10366
        %v10535 = vpack.c.bf16 %v10375, %v10367
        %v10536 = vpack.c.bf16 %v10384, %v10376
        %v10537 = vpack.c.bf16 %v10385, %v10377
        %v10538 = vpack.c.bf16 %v10386, %v10378
        %v10539 = vpack.c.bf16 %v10387, %v10379
        %v10540 = vpack.c.bf16 %v10388, %v10380
        %v10541 = vpack.c.bf16 %v10389, %v10381
        %v10542 = vpack.c.bf16 %v10390, %v10382
        %v10543 = vpack.c.bf16 %v10391, %v10383
        %v10544 = vpack.c.bf16 %v10400, %v10392
        %v10545 = vpack.c.bf16 %v10401, %v10393
        %v10546 = vpack.c.bf16 %v10402, %v10394
        %v10547 = vpack.c.bf16 %v10403, %v10395
        %v10548 = vpack.c.bf16 %v10404, %v10396
        %v10549 = vpack.c.bf16 %v10405, %v10397
        %v10550 = vpack.c.bf16 %v10406, %v10398
        %v10551 = vpack.c.bf16 %v10407, %v10399
        %v10552 = vpack.c.bf16 %v10416, %v10408
        %v10553 = vpack.c.bf16 %v10417, %v10409
        %v10554 = vpack.c.bf16 %v10418, %v10410
        %v10555 = vpack.c.bf16 %v10419, %v10411
        %v10556 = vpack.c.bf16 %v10420, %v10412
        %v10557 = vpack.c.bf16 %v10421, %v10413
        %v10558 = vpack.c.bf16 %v10422, %v10414
        %v10559 = vpack.c.bf16 %v10423, %v10415
        %v10560 = vpack.c.bf16 %v10432, %v10424
        %v10561 = vpack.c.bf16 %v10433, %v10425
        %v10562 = vpack.c.bf16 %v10434, %v10426
        %v10563 = vpack.c.bf16 %v10435, %v10427
        %v10564 = vpack.c.bf16 %v10436, %v10428
        %v10565 = vpack.c.bf16 %v10437, %v10429
        %v10566 = vpack.c.bf16 %v10438, %v10430
        %v10567 = vpack.c.bf16 %v10439, %v10431
        %v10568 = vld [vmem:[#allocation10] sm:$0xf]
        %v10569 = vld [vmem:[#allocation10 + $0x4] sm:$0xf]
        %v10570 = vld [vmem:[#allocation10 + $0x8] sm:$0xf]
        %v10571 = vld [vmem:[#allocation10 + $0xc] sm:$0xf]
        %v10572 = vld [vmem:[#allocation10 + $0x10] sm:$0xf]
        %v10573 = vld [vmem:[#allocation10 + $0x14] sm:$0xf]
        %v10574 = vld [vmem:[#allocation10 + $0x18] sm:$0xf]
        %v10575 = vld [vmem:[#allocation10 + $0x1c] sm:$0xf]
        %v10576 = vld [vmem:[#allocation10 + $0x20] sm:$0xf]
        %v10577 = vld [vmem:[#allocation10 + $0x24] sm:$0xf]
        %v10578 = vld [vmem:[#allocation10 + $0x28] sm:$0xf]
        %v10579 = vld [vmem:[#allocation10 + $0x2c] sm:$0xf]
        %v10580 = vld [vmem:[#allocation10 + $0x30] sm:$0xf]
        %v10581 = vld [vmem:[#allocation10 + $0x34] sm:$0xf]
        %v10582 = vld [vmem:[#allocation10 + $0x38] sm:$0xf]
        %v10583 = vld [vmem:[#allocation10 + $0x3c] sm:$0xf]
        %v10584 = vld [vmem:[#allocation10 + $0x40] sm:$0xf]
        %v10585 = vld [vmem:[#allocation10 + $0x44] sm:$0xf]
        %v10586 = vld [vmem:[#allocation10 + $0x48] sm:$0xf]
        %v10587 = vld [vmem:[#allocation10 + $0x4c] sm:$0xf]
        %v10588 = vld [vmem:[#allocation10 + $0x50] sm:$0xf]
        %v10589 = vld [vmem:[#allocation10 + $0x54] sm:$0xf]
        %v10590 = vld [vmem:[#allocation10 + $0x58] sm:$0xf]
        %v10591 = vld [vmem:[#allocation10 + $0x5c] sm:$0xf]
        %v10592 = vld [vmem:[#allocation10 + $0x60] sm:$0xf]
        %v10593 = vld [vmem:[#allocation10 + $0x64] sm:$0xf]
        %v10594 = vld [vmem:[#allocation10 + $0x68] sm:$0xf]
        %v10595 = vld [vmem:[#allocation10 + $0x6c] sm:$0xf]
        %v10596 = vld [vmem:[#allocation10 + $0x70] sm:$0xf]
        %v10597 = vld [vmem:[#allocation10 + $0x74] sm:$0xf]
        %v10598 = vld [vmem:[#allocation10 + $0x78] sm:$0xf]
        %v10599 = vld [vmem:[#allocation10 + $0x7c] sm:$0xf]
        %v10600 = vld [vmem:[#allocation10 + $0x80] sm:$0xf]
        %v10601 = vld [vmem:[#allocation10 + $0x84] sm:$0xf]
        %v10602 = vld [vmem:[#allocation10 + $0x88] sm:$0xf]
        %v10603 = vld [vmem:[#allocation10 + $0x8c] sm:$0xf]
        %v10604 = vld [vmem:[#allocation10 + $0x90] sm:$0xf]
        %v10605 = vld [vmem:[#allocation10 + $0x94] sm:$0xf]
        %v10606 = vld [vmem:[#allocation10 + $0x98] sm:$0xf]
        %v10607 = vld [vmem:[#allocation10 + $0x9c] sm:$0xf]
        %v10608 = vld [vmem:[#allocation10 + $0xa0] sm:$0xf]
        %v10609 = vld [vmem:[#allocation10 + $0xa4] sm:$0xf]
        %v10610 = vld [vmem:[#allocation10 + $0xa8] sm:$0xf]
        %v10611 = vld [vmem:[#allocation10 + $0xac] sm:$0xf]
        %v10612 = vld [vmem:[#allocation10 + $0xb0] sm:$0xf]
        %v10613 = vld [vmem:[#allocation10 + $0xb4] sm:$0xf]
        %v10614 = vld [vmem:[#allocation10 + $0xb8] sm:$0xf]
        %v10615 = vld [vmem:[#allocation10 + $0xbc] sm:$0xf]
        %v10616 = vld [vmem:[#allocation10 + $0xc0] sm:$0xf]
        %v10617 = vld [vmem:[#allocation10 + $0xc4] sm:$0xf]
        %v10618 = vld [vmem:[#allocation10 + $0xc8] sm:$0xf]
        %v10619 = vld [vmem:[#allocation10 + $0xcc] sm:$0xf]
        %v10620 = vld [vmem:[#allocation10 + $0xd0] sm:$0xf]
        %v10621 = vld [vmem:[#allocation10 + $0xd4] sm:$0xf]
        %v10622 = vld [vmem:[#allocation10 + $0xd8] sm:$0xf]
        %v10623 = vld [vmem:[#allocation10 + $0xdc] sm:$0xf]
        %v10624 = vld [vmem:[#allocation10 + $0xe0] sm:$0xf]
        %v10625 = vld [vmem:[#allocation10 + $0xe4] sm:$0xf]
        %v10626 = vld [vmem:[#allocation10 + $0xe8] sm:$0xf]
        %v10627 = vld [vmem:[#allocation10 + $0xec] sm:$0xf]
        %v10628 = vld [vmem:[#allocation10 + $0xf0] sm:$0xf]
        %v10629 = vld [vmem:[#allocation10 + $0xf4] sm:$0xf]
        %v10630 = vld [vmem:[#allocation10 + $0xf8] sm:$0xf]
        %v10631 = vld [vmem:[#allocation10 + $0xfc] sm:$0xf]
        %v10632 = vld [vmem:[#allocation10 + $0x100] sm:$0xf]
        %v10633 = vld [vmem:[#allocation10 + $0x104] sm:$0xf]
        %v10634 = vld [vmem:[#allocation10 + $0x108] sm:$0xf]
        %v10635 = vld [vmem:[#allocation10 + $0x10c] sm:$0xf]
        %v10636 = vld [vmem:[#allocation10 + $0x110] sm:$0xf]
        %v10637 = vld [vmem:[#allocation10 + $0x114] sm:$0xf]
        %v10638 = vld [vmem:[#allocation10 + $0x118] sm:$0xf]
        %v10639 = vld [vmem:[#allocation10 + $0x11c] sm:$0xf]
        %v10640 = vld [vmem:[#allocation10 + $0x120] sm:$0xf]
        %v10641 = vld [vmem:[#allocation10 + $0x124] sm:$0xf]
        %v10642 = vld [vmem:[#allocation10 + $0x128] sm:$0xf]
        %v10643 = vld [vmem:[#allocation10 + $0x12c] sm:$0xf]
        %v10644 = vld [vmem:[#allocation10 + $0x130] sm:$0xf]
        %v10645 = vld [vmem:[#allocation10 + $0x134] sm:$0xf]
        %v10646 = vld [vmem:[#allocation10 + $0x138] sm:$0xf]
        %v10647 = vld [vmem:[#allocation10 + $0x13c] sm:$0xf]
        %v10648 = vld [vmem:[#allocation10 + $0x140] sm:$0xf]
        %v10649 = vld [vmem:[#allocation10 + $0x144] sm:$0xf]
        %v10650 = vld [vmem:[#allocation10 + $0x148] sm:$0xf]
        %v10651 = vld [vmem:[#allocation10 + $0x14c] sm:$0xf]
        %v10652 = vld [vmem:[#allocation10 + $0x150] sm:$0xf]
        %v10653 = vld [vmem:[#allocation10 + $0x154] sm:$0xf]
        %v10654 = vld [vmem:[#allocation10 + $0x158] sm:$0xf]
        %v10655 = vld [vmem:[#allocation10 + $0x15c] sm:$0xf]
        %v10656 = vld [vmem:[#allocation10 + $0x160] sm:$0xf]
        %v10657 = vld [vmem:[#allocation10 + $0x164] sm:$0xf]
        %v10658 = vld [vmem:[#allocation10 + $0x168] sm:$0xf]
        %v10659 = vld [vmem:[#allocation10 + $0x16c] sm:$0xf]
        %v10660 = vld [vmem:[#allocation10 + $0x170] sm:$0xf]
        %v10661 = vld [vmem:[#allocation10 + $0x174] sm:$0xf]
        %v10662 = vld [vmem:[#allocation10 + $0x178] sm:$0xf]
        %v10663 = vld [vmem:[#allocation10 + $0x17c] sm:$0xf]
        %v10664 = vld [vmem:[#allocation10 + $0x180] sm:$0xf]
        %v10665 = vld [vmem:[#allocation10 + $0x184] sm:$0xf]
        %v10666 = vld [vmem:[#allocation10 + $0x188] sm:$0xf]
        %v10667 = vld [vmem:[#allocation10 + $0x18c] sm:$0xf]
        %v10668 = vld [vmem:[#allocation10 + $0x190] sm:$0xf]
        %v10669 = vld [vmem:[#allocation10 + $0x194] sm:$0xf]
        %v10670 = vld [vmem:[#allocation10 + $0x198] sm:$0xf]
        %v10671 = vld [vmem:[#allocation10 + $0x19c] sm:$0xf]
        %v10672 = vld [vmem:[#allocation10 + $0x1a0] sm:$0xf]
        %v10673 = vld [vmem:[#allocation10 + $0x1a4] sm:$0xf]
        %v10674 = vld [vmem:[#allocation10 + $0x1a8] sm:$0xf]
        %v10675 = vld [vmem:[#allocation10 + $0x1ac] sm:$0xf]
        %v10676 = vld [vmem:[#allocation10 + $0x1b0] sm:$0xf]
        %v10677 = vld [vmem:[#allocation10 + $0x1b4] sm:$0xf]
        %v10678 = vld [vmem:[#allocation10 + $0x1b8] sm:$0xf]
        %v10679 = vld [vmem:[#allocation10 + $0x1bc] sm:$0xf]
        %v10680 = vld [vmem:[#allocation10 + $0x1c0] sm:$0xf]
        %v10681 = vld [vmem:[#allocation10 + $0x1c4] sm:$0xf]
        %v10682 = vld [vmem:[#allocation10 + $0x1c8] sm:$0xf]
        %v10683 = vld [vmem:[#allocation10 + $0x1cc] sm:$0xf]
        %v10684 = vld [vmem:[#allocation10 + $0x1d0] sm:$0xf]
        %v10685 = vld [vmem:[#allocation10 + $0x1d4] sm:$0xf]
        %v10686 = vld [vmem:[#allocation10 + $0x1d8] sm:$0xf]
        %v10687 = vld [vmem:[#allocation10 + $0x1dc] sm:$0xf]
        %v10688 = vld [vmem:[#allocation10 + $0x1e0] sm:$0xf]
        %v10689 = vld [vmem:[#allocation10 + $0x1e4] sm:$0xf]
        %v10690 = vld [vmem:[#allocation10 + $0x1e8] sm:$0xf]
        %v10691 = vld [vmem:[#allocation10 + $0x1ec] sm:$0xf]
        %v10692 = vld [vmem:[#allocation10 + $0x1f0] sm:$0xf]
        %v10693 = vld [vmem:[#allocation10 + $0x1f4] sm:$0xf]
        %v10694 = vld [vmem:[#allocation10 + $0x1f8] sm:$0xf]
        %v10695 = vld [vmem:[#allocation10 + $0x1fc] sm:$0xf]
        %v10696 = vld [vmem:[#allocation2] sm:$0x1]
        %v10698 = vlaneseq
        %v10699 = vshrl.u32 %v10698, 7
        %v10700 = vsub.s32 0, %v10699
        %v10701 = vrot.slane %v10696, %v10700
        %10702 = vset.pattern.permute.xlu0 0
        %10703 = vperm.xlu0 %10702, %v10701
        %v10704 = vpop.permute.xlu0 %10703
        %v10834 = vunpack.c.l.b16 %v10568
        %v10835 = vunpack.c.l.b16 %v10569
        %v10836 = vunpack.c.l.b16 %v10570
        %v10837 = vunpack.c.l.b16 %v10571
        %v10838 = vunpack.c.l.b16 %v10572
        %v10839 = vunpack.c.l.b16 %v10573
        %v10840 = vunpack.c.l.b16 %v10574
        %v10841 = vunpack.c.l.b16 %v10575
        %v10842 = vunpack.c.l.b16 %v10576
        %v10843 = vunpack.c.l.b16 %v10577
        %v10844 = vunpack.c.l.b16 %v10578
        %v10845 = vunpack.c.l.b16 %v10579
        %v10846 = vunpack.c.l.b16 %v10580
        %v10847 = vunpack.c.l.b16 %v10581
        %v10848 = vunpack.c.l.b16 %v10582
        %v10849 = vunpack.c.l.b16 %v10583
        %v10850 = vunpack.c.l.b16 %v10584
        %v10851 = vunpack.c.l.b16 %v10585
        %v10852 = vunpack.c.l.b16 %v10586
        %v10853 = vunpack.c.l.b16 %v10587
        %v10854 = vunpack.c.l.b16 %v10588
        %v10855 = vunpack.c.l.b16 %v10589
        %v10856 = vunpack.c.l.b16 %v10590
        %v10857 = vunpack.c.l.b16 %v10591
        %v10858 = vunpack.c.l.b16 %v10592
        %v10859 = vunpack.c.l.b16 %v10593
        %v10860 = vunpack.c.l.b16 %v10594
        %v10861 = vunpack.c.l.b16 %v10595
        %v10862 = vunpack.c.l.b16 %v10596
        %v10863 = vunpack.c.l.b16 %v10597
        %v10864 = vunpack.c.l.b16 %v10598
        %v10865 = vunpack.c.l.b16 %v10599
        %v10866 = vunpack.c.l.b16 %v10600
        %v10867 = vunpack.c.l.b16 %v10601
        %v10868 = vunpack.c.l.b16 %v10602
        %v10869 = vunpack.c.l.b16 %v10603
        %v10870 = vunpack.c.l.b16 %v10604
        %v10871 = vunpack.c.l.b16 %v10605
        %v10872 = vunpack.c.l.b16 %v10606
        %v10873 = vunpack.c.l.b16 %v10607
        %v10874 = vunpack.c.l.b16 %v10608
        %v10875 = vunpack.c.l.b16 %v10609
        %v10876 = vunpack.c.l.b16 %v10610
        %v10877 = vunpack.c.l.b16 %v10611
        %v10878 = vunpack.c.l.b16 %v10612
        %v10879 = vunpack.c.l.b16 %v10613
        %v10880 = vunpack.c.l.b16 %v10614
        %v10881 = vunpack.c.l.b16 %v10615
        %v10882 = vunpack.c.l.b16 %v10616
        %v10883 = vunpack.c.l.b16 %v10617
        %v10884 = vunpack.c.l.b16 %v10618
        %v10885 = vunpack.c.l.b16 %v10619
        %v10886 = vunpack.c.l.b16 %v10620
        %v10887 = vunpack.c.l.b16 %v10621
        %v10888 = vunpack.c.l.b16 %v10622
        %v10889 = vunpack.c.l.b16 %v10623
        %v10890 = vunpack.c.l.b16 %v10624
        %v10891 = vunpack.c.l.b16 %v10625
        %v10892 = vunpack.c.l.b16 %v10626
        %v10893 = vunpack.c.l.b16 %v10627
        %v10894 = vunpack.c.l.b16 %v10628
        %v10895 = vunpack.c.l.b16 %v10629
        %v10896 = vunpack.c.l.b16 %v10630
        %v10897 = vunpack.c.l.b16 %v10631
        %v10898 = vunpack.c.l.b16 %v10632
        %v10899 = vunpack.c.l.b16 %v10633
        %v10900 = vunpack.c.l.b16 %v10634
        %v10901 = vunpack.c.l.b16 %v10635
        %v10902 = vunpack.c.l.b16 %v10636
        %v10903 = vunpack.c.l.b16 %v10637
        %v10904 = vunpack.c.l.b16 %v10638
        %v10905 = vunpack.c.l.b16 %v10639
        %v10906 = vunpack.c.l.b16 %v10640
        %v10907 = vunpack.c.l.b16 %v10641
        %v10908 = vunpack.c.l.b16 %v10642
        %v10909 = vunpack.c.l.b16 %v10643
        %v10910 = vunpack.c.l.b16 %v10644
        %v10911 = vunpack.c.l.b16 %v10645
        %v10912 = vunpack.c.l.b16 %v10646
        %v10913 = vunpack.c.l.b16 %v10647
        %v10914 = vunpack.c.l.b16 %v10648
        %v10915 = vunpack.c.l.b16 %v10649
        %v10916 = vunpack.c.l.b16 %v10650
        %v10917 = vunpack.c.l.b16 %v10651
        %v10918 = vunpack.c.l.b16 %v10652
        %v10919 = vunpack.c.l.b16 %v10653
        %v10920 = vunpack.c.l.b16 %v10654
        %v10921 = vunpack.c.l.b16 %v10655
        %v10922 = vunpack.c.l.b16 %v10656
        %v10923 = vunpack.c.l.b16 %v10657
        %v10924 = vunpack.c.l.b16 %v10658
        %v10925 = vunpack.c.l.b16 %v10659
        %v10926 = vunpack.c.l.b16 %v10660
        %v10927 = vunpack.c.l.b16 %v10661
        %v10928 = vunpack.c.l.b16 %v10662
        %v10929 = vunpack.c.l.b16 %v10663
        %v10930 = vunpack.c.l.b16 %v10664
        %v10931 = vunpack.c.l.b16 %v10665
        %v10932 = vunpack.c.l.b16 %v10666
        %v10933 = vunpack.c.l.b16 %v10667
        %v10934 = vunpack.c.l.b16 %v10668
        %v10935 = vunpack.c.l.b16 %v10669
        %v10936 = vunpack.c.l.b16 %v10670
        %v10937 = vunpack.c.l.b16 %v10671
        %v10938 = vunpack.c.l.b16 %v10672
        %v10939 = vunpack.c.l.b16 %v10673
        %v10940 = vunpack.c.l.b16 %v10674
        %v10941 = vunpack.c.l.b16 %v10675
        %v10942 = vunpack.c.l.b16 %v10676
        %v10943 = vunpack.c.l.b16 %v10677
        %v10944 = vunpack.c.l.b16 %v10678
        %v10945 = vunpack.c.l.b16 %v10679
        %v10946 = vunpack.c.l.b16 %v10680
        %v10947 = vunpack.c.l.b16 %v10681
        %v10948 = vunpack.c.l.b16 %v10682
        %v10949 = vunpack.c.l.b16 %v10683
        %v10950 = vunpack.c.l.b16 %v10684
        %v10951 = vunpack.c.l.b16 %v10685
        %v10952 = vunpack.c.l.b16 %v10686
        %v10953 = vunpack.c.l.b16 %v10687
        %v10954 = vunpack.c.l.b16 %v10688
        %v10955 = vunpack.c.l.b16 %v10689
        %v10956 = vunpack.c.l.b16 %v10690
        %v10957 = vunpack.c.l.b16 %v10691
        %v10958 = vunpack.c.l.b16 %v10692
        %v10959 = vunpack.c.l.b16 %v10693
        %v10960 = vunpack.c.l.b16 %v10694
        %v10961 = vunpack.c.l.b16 %v10695
        %v10962 = vpack.c.b16 %v10835, %v10834
        %v10963 = vpack.c.b16 %v10837, %v10836
        %v10964 = vpack.c.b16 %v10839, %v10838
        %v10965 = vpack.c.b16 %v10841, %v10840
        %v10966 = vpack.c.b16 %v10843, %v10842
        %v10967 = vpack.c.b16 %v10845, %v10844
        %v10968 = vpack.c.b16 %v10847, %v10846
        %v10969 = vpack.c.b16 %v10849, %v10848
        %v10970 = vpack.c.b16 %v10851, %v10850
        %v10971 = vpack.c.b16 %v10853, %v10852
        %v10972 = vpack.c.b16 %v10855, %v10854
        %v10973 = vpack.c.b16 %v10857, %v10856
        %v10974 = vpack.c.b16 %v10859, %v10858
        %v10975 = vpack.c.b16 %v10861, %v10860
        %v10976 = vpack.c.b16 %v10863, %v10862
        %v10977 = vpack.c.b16 %v10865, %v10864
        %v10978 = vpack.c.b16 %v10867, %v10866
        %v10979 = vpack.c.b16 %v10869, %v10868
        %v10980 = vpack.c.b16 %v10871, %v10870
        %v10981 = vpack.c.b16 %v10873, %v10872
        %v10982 = vpack.c.b16 %v10875, %v10874
        %v10983 = vpack.c.b16 %v10877, %v10876
        %v10984 = vpack.c.b16 %v10879, %v10878
        %v10985 = vpack.c.b16 %v10881, %v10880
        %v10986 = vpack.c.b16 %v10883, %v10882
        %v10987 = vpack.c.b16 %v10885, %v10884
        %v10988 = vpack.c.b16 %v10887, %v10886
        %v10989 = vpack.c.b16 %v10889, %v10888
        %v10990 = vpack.c.b16 %v10891, %v10890
        %v10991 = vpack.c.b16 %v10893, %v10892
        %v10992 = vpack.c.b16 %v10895, %v10894
        %v10993 = vpack.c.b16 %v10897, %v10896
        %v10994 = vpack.c.b16 %v10899, %v10898
        %v10995 = vpack.c.b16 %v10901, %v10900
        %v10996 = vpack.c.b16 %v10903, %v10902
        %v10997 = vpack.c.b16 %v10905, %v10904
        %v10998 = vpack.c.b16 %v10907, %v10906
        %v10999 = vpack.c.b16 %v10909, %v10908
        %v11000 = vpack.c.b16 %v10911, %v10910
        %v11001 = vpack.c.b16 %v10913, %v10912
        %v11002 = vpack.c.b16 %v10915, %v10914
        %v11003 = vpack.c.b16 %v10917, %v10916
        %v11004 = vpack.c.b16 %v10919, %v10918
        %v11005 = vpack.c.b16 %v10921, %v10920
        %v11006 = vpack.c.b16 %v10923, %v10922
        %v11007 = vpack.c.b16 %v10925, %v10924
        %v11008 = vpack.c.b16 %v10927, %v10926
        %v11009 = vpack.c.b16 %v10929, %v10928
        %v11010 = vpack.c.b16 %v10931, %v10930
        %v11011 = vpack.c.b16 %v10933, %v10932
        %v11012 = vpack.c.b16 %v10935, %v10934
        %v11013 = vpack.c.b16 %v10937, %v10936
        %v11014 = vpack.c.b16 %v10939, %v10938
        %v11015 = vpack.c.b16 %v10941, %v10940
        %v11016 = vpack.c.b16 %v10943, %v10942
        %v11017 = vpack.c.b16 %v10945, %v10944
        %v11018 = vpack.c.b16 %v10947, %v10946
        %v11019 = vpack.c.b16 %v10949, %v10948
        %v11020 = vpack.c.b16 %v10951, %v10950
        %v11021 = vpack.c.b16 %v10953, %v10952
        %v11022 = vpack.c.b16 %v10955, %v10954
        %v11023 = vpack.c.b16 %v10957, %v10956
        %v11024 = vpack.c.b16 %v10959, %v10958
        %v11025 = vpack.c.b16 %v10961, %v10960
        %11090 = vmatprep.subr.bf16.mxu0 0
        %11091 = vmatpush1.bf16.msra.mxu0 %v10962
        %11092 = vmatprep.subr.bf16.mxu0 0
        %11093 = vmatpush1.bf16.msra.mxu0 %v10963
        %11094 = vmatprep.subr.bf16.mxu0 0
        %11095 = vmatpush1.bf16.msra.mxu0 %v10964
        %11096 = vmatprep.subr.bf16.mxu0 0
        %11097 = vmatpush1.bf16.msra.mxu0 %v10965
        %11098 = vmatprep.subr.bf16.mxu0 0
        %11099 = vmatpush1.bf16.msra.mxu0 %v10966
        %11100 = vmatprep.subr.bf16.mxu0 0
        %11101 = vmatpush1.bf16.msra.mxu0 %v10967
        %11102 = vmatprep.subr.bf16.mxu0 0
        %11103 = vmatpush1.bf16.msra.mxu0 %v10968
        %11104 = vmatprep.subr.bf16.mxu0 0
        %11105 = vmatpush1.bf16.msra.mxu0 %v10969
        %11106 = vmatprep.subr.bf16.mxu0 0
        %11107 = vmatpush1.bf16.msra.mxu0 %v10970
        %11108 = vmatprep.subr.bf16.mxu0 0
        %11109 = vmatpush1.bf16.msra.mxu0 %v10971
        %11110 = vmatprep.subr.bf16.mxu0 0
        %11111 = vmatpush1.bf16.msra.mxu0 %v10972
        %11112 = vmatprep.subr.bf16.mxu0 0
        %11113 = vmatpush1.bf16.msra.mxu0 %v10973
        %11114 = vmatprep.subr.bf16.mxu0 0
        %11115 = vmatpush1.bf16.msra.mxu0 %v10974
        %11116 = vmatprep.subr.bf16.mxu0 0
        %11117 = vmatpush1.bf16.msra.mxu0 %v10975
        %11118 = vmatprep.subr.bf16.mxu0 0
        %11119 = vmatpush1.bf16.msra.mxu0 %v10976
        %11120 = vmatprep.subr.bf16.mxu0 0
        %11121 = vmatpush1.bf16.msra.mxu0 %v10977
        %11122 = vmatprep.mubr.bf16.mxu0 %v10441
        %11123 = vmatmul.mubr.bf16.gmra.mrb[0].mxu0 %v10440
        %v11124 = vpop.f32.mrb[0].mxu0
        %v11125 = vadd.f32 %v10704, %v11124
        %v11126 = vpop.f32.mrb[0].mxu0
        %v11127 = vpop.f32.mrb[0].mxu0
        %v11128 = vadd.f32 %v10704, %v11127
        %v11129 = vpop.f32.mrb[0].mxu0
        %11130 = vmatprep.mubr.bf16.mxu0 %v10449
        %11131 = vmatmul.mubr.bf16.gmra.mrb[0].mxu0 %v10448
        %v11132 = vpop.f32.mrb[0].mxu0
        %v11133 = vadd.f32 %v10704, %v11132
        %v11134 = vpop.f32.mrb[0].mxu0
        %v11135 = vpop.f32.mrb[0].mxu0
        %v11136 = vadd.f32 %v10704, %v11135
        %v11137 = vpop.f32.mrb[0].mxu0
        %11138 = vmatprep.mubr.bf16.mxu0 %v10457
        %11139 = vmatmul.mubr.bf16.gmra.mrb[0].mxu0 %v10456
        %v11140 = vpop.f32.mrb[0].mxu0
        %v11141 = vadd.f32 %v10704, %v11140
        %v11142 = vpop.f32.mrb[0].mxu0
        %v11143 = vpop.f32.mrb[0].mxu0
        %v11144 = vadd.f32 %v10704, %v11143
        %v11145 = vpop.f32.mrb[0].mxu0
        %11146 = vmatprep.mubr.bf16.mxu0 %v10465
        %11147 = vmatmul.mubr.bf16.gmra.mrb[0].mxu0 %v10464
        %v11148 = vpop.f32.mrb[0].mxu0
        %v11149 = vadd.f32 %v10704, %v11148
        %v11150 = vpop.f32.mrb[0].mxu0
        %v11151 = vpop.f32.mrb[0].mxu0
        %v11152 = vadd.f32 %v10704, %v11151
        %v11153 = vpop.f32.mrb[0].mxu0
        %11154 = vmatprep.mubr.bf16.mxu0 %v10473
        %11155 = vmatmul.mubr.bf16.gmra.mrb[0].mxu0 %v10472
        %v11156 = vpop.f32.mrb[0].mxu0
        %v11157 = vadd.f32 %v10704, %v11156
        %v11158 = vpop.f32.mrb[0].mxu0
        %v11159 = vpop.f32.mrb[0].mxu0
        %v11160 = vadd.f32 %v10704, %v11159
        %v11161 = vpop.f32.mrb[0].mxu0
        %11162 = vmatprep.mubr.bf16.mxu0 %v10481
        %11163 = vmatmul.mubr.bf16.gmra.mrb[0].mxu0 %v10480
        %v11164 = vpop.f32.mrb[0].mxu0
        %v11165 = vadd.f32 %v10704, %v11164
        %v11166 = vpop.f32.mrb[0].mxu0
        %v11167 = vpop.f32.mrb[0].mxu0
        %v11168 = vadd.f32 %v10704, %v11167
        %v11169 = vpop.f32.mrb[0].mxu0
        %11170 = vmatprep.mubr.bf16.mxu0 %v10489
        %11171 = vmatmul.mubr.bf16.gmra.mrb[0].mxu0 %v10488
        %v11172 = vpop.f32.mrb[0].mxu0
        %v11173 = vadd.f32 %v10704, %v11172
        %v11174 = vpop.f32.mrb[0].mxu0
        %v11175 = vpop.f32.mrb[0].mxu0
        %v11176 = vadd.f32 %v10704, %v11175
        %v11177 = vpop.f32.mrb[0].mxu0
        %11178 = vmatprep.mubr.bf16.mxu0 %v10497
        %11179 = vmatmul.mubr.bf16.gmra.mrb[0].mxu0 %v10496
        %v11180 = vpop.f32.mrb[0].mxu0
        %v11181 = vadd.f32 %v10704, %v11180
        %v11182 = vpop.f32.mrb[0].mxu0
        %v11183 = vpop.f32.mrb[0].mxu0
        %v11184 = vadd.f32 %v10704, %v11183
        %v11185 = vpop.f32.mrb[0].mxu0
        %11186 = vmatprep.mubr.bf16.mxu0 %v10505
        %11187 = vmatmul.mubr.bf16.gmra.mrb[0].mxu0 %v10504
        %v11188 = vpop.f32.mrb[0].mxu0
        %v11189 = vadd.f32 %v10704, %v11188
        %v11190 = vpop.f32.mrb[0].mxu0
        %v11191 = vpop.f32.mrb[0].mxu0
        %v11192 = vadd.f32 %v10704, %v11191
        %v11193 = vpop.f32.mrb[0].mxu0
        %11194 = vmatprep.mubr.bf16.mxu0 %v10513
        %11195 = vmatmul.mubr.bf16.gmra.mrb[0].mxu0 %v10512
        %v11196 = vpop.f32.mrb[0].mxu0
        %v11197 = vadd.f32 %v10704, %v11196
        %v11198 = vpop.f32.mrb[0].mxu0
        %v11199 = vpop.f32.mrb[0].mxu0
        %v11200 = vadd.f32 %v10704, %v11199
        %v11201 = vpop.f32.mrb[0].mxu0
        %11202 = vmatprep.mubr.bf16.mxu0 %v10521
        %11203 = vmatmul.mubr.bf16.gmra.mrb[0].mxu0 %v10520
        %v11204 = vpop.f32.mrb[0].mxu0
        %v11205 = vadd.f32 %v10704, %v11204
        %v11206 = vpop.f32.mrb[0].mxu0
        %v11207 = vpop.f32.mrb[0].mxu0
        %v11208 = vadd.f32 %v10704, %v11207
        %v11209 = vpop.f32.mrb[0].mxu0
        %11210 = vmatprep.mubr.bf16.mxu0 %v10529
        %11211 = vmatmul.mubr.bf16.gmra.mrb[0].mxu0 %v10528
        %v11212 = vpop.f32.mrb[0].mxu0
        %v11213 = vadd.f32 %v10704, %v11212
        %v11214 = vpop.f32.mrb[0].mxu0
        %v11215 = vpop.f32.mrb[0].mxu0
        %v11216 = vadd.f32 %v10704, %v11215
        %v11217 = vpop.f32.mrb[0].mxu0
        %11218 = vmatprep.mubr.bf16.mxu0 %v10537
        %11219 = vmatmul.mubr.bf16.gmra.mrb[0].mxu0 %v10536
        %v11220 = vpop.f32.mrb[0].mxu0
        %v11221 = vadd.f32 %v10704, %v11220
        %v11222 = vpop.f32.mrb[0].mxu0
        %v11223 = vpop.f32.mrb[0].mxu0
        %v11224 = vadd.f32 %v10704, %v11223
        %v11225 = vpop.f32.mrb[0].mxu0
        %11226 = vmatprep.mubr.bf16.mxu0 %v10545
        %11227 = vmatmul.mubr.bf16.gmra.mrb[0].mxu0 %v10544
        %v11228 = vpop.f32.mrb[0].mxu0
        %v11229 = vadd.f32 %v10704, %v11228
        %v11230 = vpop.f32.mrb[0].mxu0
        %v11231 = vpop.f32.mrb[0].mxu0
        %v11232 = vadd.f32 %v10704, %v11231
        %v11233 = vpop.f32.mrb[0].mxu0
        %11234 = vmatprep.mubr.bf16.mxu0 %v10553
        %11235 = vmatmul.mubr.bf16.gmra.mrb[0].mxu0 %v10552
        %v11236 = vpop.f32.mrb[0].mxu0
        %v11237 = vadd.f32 %v10704, %v11236
        %v11238 = vpop.f32.mrb[0].mxu0
        %v11239 = vpop.f32.mrb[0].mxu0
        %v11240 = vadd.f32 %v10704, %v11239
        %v11241 = vpop.f32.mrb[0].mxu0
        %11242 = vmatprep.mubr.bf16.mxu0 %v10561
        %11243 = vmatmul.mubr.bf16.gmra.mrb[0].mxu0 %v10560
        %v11244 = vpop.f32.mrb[0].mxu0
        %v11245 = vadd.f32 %v10704, %v11244
        %v11246 = vpop.f32.mrb[0].mxu0
        %v11247 = vpop.f32.mrb[0].mxu0
        %v11248 = vadd.f32 %v10704, %v11247
        %v11249 = vpop.f32.mrb[0].mxu0
        %11250 = vdwg.mxu0
        %11251 = vmatprep.subr.bf16.mxu0 0
        %11252 = vmatpush1.bf16.msra.mxu0 %v10978
        %11253 = vmatprep.subr.bf16.mxu0 0
        %11254 = vmatpush1.bf16.msra.mxu0 %v10979
        %11255 = vmatprep.subr.bf16.mxu0 0
        %11256 = vmatpush1.bf16.msra.mxu0 %v10980
        %11257 = vmatprep.subr.bf16.mxu0 0
        %11258 = vmatpush1.bf16.msra.mxu0 %v10981
        %11259 = vmatprep.subr.bf16.mxu0 0
        %11260 = vmatpush1.bf16.msra.mxu0 %v10982
        %11261 = vmatprep.subr.bf16.mxu0 0
        %11262 = vmatpush1.bf16.msra.mxu0 %v10983
        %11263 = vmatprep.subr.bf16.mxu0 0
        %11264 = vmatpush1.bf16.msra.mxu0 %v10984
        %11265 = vmatprep.subr.bf16.mxu0 0
        %11266 = vmatpush1.bf16.msra.mxu0 %v10985
        %11267 = vmatprep.subr.bf16.mxu0 0
        %11268 = vmatpush1.bf16.msra.mxu0 %v10986
        %11269 = vmatprep.subr.bf16.mxu0 0
        %11270 = vmatpush1.bf16.msra.mxu0 %v10987
        %11271 = vmatprep.subr.bf16.mxu0 0
        %11272 = vmatpush1.bf16.msra.mxu0 %v10988
        %11273 = vmatprep.subr.bf16.mxu0 0
        %11274 = vmatpush1.bf16.msra.mxu0 %v10989
        %11275 = vmatprep.subr.bf16.mxu0 0
        %11276 = vmatpush1.bf16.msra.mxu0 %v10990
        %11277 = vmatprep.subr.bf16.mxu0 0
        %11278 = vmatpush1.bf16.msra.mxu0 %v10991
        %11279 = vmatprep.subr.bf16.mxu0 0
        %11280 = vmatpush1.bf16.msra.mxu0 %v10992
        %11281 = vmatprep.subr.bf16.mxu0 0
        %11282 = vmatpush1.bf16.msra.mxu0 %v10993
        %11283 = vmatprep.mubr.bf16.mxu0 %v10443
        %11284 = vmatmul.mubr.bf16.gmra.mrb[0].mxu0 %v10442
        %v11285 = vpop.f32.mrb[0].mxu0
        %v11286 = vadd.f32 %v11125, %v11285
        %v11287 = vpop.f32.mrb[0].mxu0
        %v11288 = vpop.f32.mrb[0].mxu0
        %v11289 = vadd.f32 %v11128, %v11288
        %v11290 = vpop.f32.mrb[0].mxu0
        %11291 = vmatprep.mubr.bf16.mxu0 %v10451
        %11292 = vmatmul.mubr.bf16.gmra.mrb[0].mxu0 %v10450
        %v11293 = vpop.f32.mrb[0].mxu0
        %v11294 = vadd.f32 %v11133, %v11293
        %v11295 = vpop.f32.mrb[0].mxu0
        %v11296 = vpop.f32.mrb[0].mxu0
        %v11297 = vadd.f32 %v11136, %v11296
        %v11298 = vpop.f32.mrb[0].mxu0
        %11299 = vmatprep.mubr.bf16.mxu0 %v10459
        %11300 = vmatmul.mubr.bf16.gmra.mrb[0].mxu0 %v10458
        %v11301 = vpop.f32.mrb[0].mxu0
        %v11302 = vadd.f32 %v11141, %v11301
        %v11303 = vpop.f32.mrb[0].mxu0
        %v11304 = vpop.f32.mrb[0].mxu0
        %v11305 = vadd.f32 %v11144, %v11304
        %v11306 = vpop.f32.mrb[0].mxu0
        %11307 = vmatprep.mubr.bf16.mxu0 %v10467
        %11308 = vmatmul.mubr.bf16.gmra.mrb[0].mxu0 %v10466
        %v11309 = vpop.f32.mrb[0].mxu0
        %v11310 = vadd.f32 %v11149, %v11309
        %v11311 = vpop.f32.mrb[0].mxu0
        %v11312 = vpop.f32.mrb[0].mxu0
        %v11313 = vadd.f32 %v11152, %v11312
        %v11314 = vpop.f32.mrb[0].mxu0
        %11315 = vmatprep.mubr.bf16.mxu0 %v10475
        %11316 = vmatmul.mubr.bf16.gmra.mrb[0].mxu0 %v10474
        %v11317 = vpop.f32.mrb[0].mxu0
        %v11318 = vadd.f32 %v11157, %v11317
        %v11319 = vpop.f32.mrb[0].mxu0
        %v11320 = vpop.f32.mrb[0].mxu0
        %v11321 = vadd.f32 %v11160, %v11320
        %v11322 = vpop.f32.mrb[0].mxu0
        %11323 = vmatprep.mubr.bf16.mxu0 %v10483
        %11324 = vmatmul.mubr.bf16.gmra.mrb[0].mxu0 %v10482
        %v11325 = vpop.f32.mrb[0].mxu0
        %v11326 = vadd.f32 %v11165, %v11325
        %v11327 = vpop.f32.mrb[0].mxu0
        %v11328 = vpop.f32.mrb[0].mxu0
        %v11329 = vadd.f32 %v11168, %v11328
        %v11330 = vpop.f32.mrb[0].mxu0
        %11331 = vmatprep.mubr.bf16.mxu0 %v10491
        %11332 = vmatmul.mubr.bf16.gmra.mrb[0].mxu0 %v10490
        %v11333 = vpop.f32.mrb[0].mxu0
        %v11334 = vadd.f32 %v11173, %v11333
        %v11335 = vpop.f32.mrb[0].mxu0
        %v11336 = vpop.f32.mrb[0].mxu0
        %v11337 = vadd.f32 %v11176, %v11336
        %v11338 = vpop.f32.mrb[0].mxu0
        %11339 = vmatprep.mubr.bf16.mxu0 %v10499
        %11340 = vmatmul.mubr.bf16.gmra.mrb[0].mxu0 %v10498
        %v11341 = vpop.f32.mrb[0].mxu0
        %v11342 = vadd.f32 %v11181, %v11341
        %v11343 = vpop.f32.mrb[0].mxu0
        %v11344 = vpop.f32.mrb[0].mxu0
        %v11345 = vadd.f32 %v11184, %v11344
        %v11346 = vpop.f32.mrb[0].mxu0
        %11347 = vmatprep.mubr.bf16.mxu0 %v10507
        %11348 = vmatmul.mubr.bf16.gmra.mrb[0].mxu0 %v10506
        %v11349 = vpop.f32.mrb[0].mxu0
        %v11350 = vadd.f32 %v11189, %v11349
        %v11351 = vpop.f32.mrb[0].mxu0
        %v11352 = vpop.f32.mrb[0].mxu0
        %v11353 = vadd.f32 %v11192, %v11352
        %v11354 = vpop.f32.mrb[0].mxu0
        %11355 = vmatprep.mubr.bf16.mxu0 %v10515
        %11356 = vmatmul.mubr.bf16.gmra.mrb[0].mxu0 %v10514
        %v11357 = vpop.f32.mrb[0].mxu0
        %v11358 = vadd.f32 %v11197, %v11357
        %v11359 = vpop.f32.mrb[0].mxu0
        %v11360 = vpop.f32.mrb[0].mxu0
        %v11361 = vadd.f32 %v11200, %v11360
        %v11362 = vpop.f32.mrb[0].mxu0
        %11363 = vmatprep.mubr.bf16.mxu0 %v10523
        %11364 = vmatmul.mubr.bf16.gmra.mrb[0].mxu0 %v10522
        %v11365 = vpop.f32.mrb[0].mxu0
        %v11366 = vadd.f32 %v11205, %v11365
        %v11367 = vpop.f32.mrb[0].mxu0
        %v11368 = vpop.f32.mrb[0].mxu0
        %v11369 = vadd.f32 %v11208, %v11368
        %v11370 = vpop.f32.mrb[0].mxu0
        %11371 = vmatprep.mubr.bf16.mxu0 %v10531
        %11372 = vmatmul.mubr.bf16.gmra.mrb[0].mxu0 %v10530
        %v11373 = vpop.f32.mrb[0].mxu0
        %v11374 = vadd.f32 %v11213, %v11373
        %v11375 = vpop.f32.mrb[0].mxu0
        %v11376 = vpop.f32.mrb[0].mxu0
        %v11377 = vadd.f32 %v11216, %v11376
        %v11378 = vpop.f32.mrb[0].mxu0
        %11379 = vmatprep.mubr.bf16.mxu0 %v10539
        %11380 = vmatmul.mubr.bf16.gmra.mrb[0].mxu0 %v10538
        %v11381 = vpop.f32.mrb[0].mxu0
        %v11382 = vadd.f32 %v11221, %v11381
        %v11383 = vpop.f32.mrb[0].mxu0
        %v11384 = vpop.f32.mrb[0].mxu0
        %v11385 = vadd.f32 %v11224, %v11384
        %v11386 = vpop.f32.mrb[0].mxu0
        %11387 = vmatprep.mubr.bf16.mxu0 %v10547
        %11388 = vmatmul.mubr.bf16.gmra.mrb[0].mxu0 %v10546
        %v11389 = vpop.f32.mrb[0].mxu0
        %v11390 = vadd.f32 %v11229, %v11389
        %v11391 = vpop.f32.mrb[0].mxu0
        %v11392 = vpop.f32.mrb[0].mxu0
        %v11393 = vadd.f32 %v11232, %v11392
        %v11394 = vpop.f32.mrb[0].mxu0
        %11395 = vmatprep.mubr.bf16.mxu0 %v10555
        %11396 = vmatmul.mubr.bf16.gmra.mrb[0].mxu0 %v10554
        %v11397 = vpop.f32.mrb[0].mxu0
        %v11398 = vadd.f32 %v11237, %v11397
        %v11399 = vpop.f32.mrb[0].mxu0
        %v11400 = vpop.f32.mrb[0].mxu0
        %v11401 = vadd.f32 %v11240, %v11400
        %v11402 = vpop.f32.mrb[0].mxu0
        %11403 = vmatprep.mubr.bf16.mxu0 %v10563
        %11404 = vmatmul.mubr.bf16.gmra.mrb[0].mxu0 %v10562
        %v11405 = vpop.f32.mrb[0].mxu0
        %v11406 = vadd.f32 %v11245, %v11405
        %v11407 = vpop.f32.mrb[0].mxu0
        %v11408 = vpop.f32.mrb[0].mxu0
        %v11409 = vadd.f32 %v11248, %v11408
        %v11410 = vpop.f32.mrb[0].mxu0
        %11411 = vdwg.mxu0
        %11412 = vmatprep.subr.bf16.mxu0 0
        %11413 = vmatpush1.bf16.msra.mxu0 %v10994
        %11414 = vmatprep.subr.bf16.mxu0 0
        %11415 = vmatpush1.bf16.msra.mxu0 %v10995
        %11416 = vmatprep.subr.bf16.mxu0 0
        %11417 = vmatpush1.bf16.msra.mxu0 %v10996
        %11418 = vmatprep.subr.bf16.mxu0 0
        %11419 = vmatpush1.bf16.msra.mxu0 %v10997
        %11420 = vmatprep.subr.bf16.mxu0 0
        %11421 = vmatpush1.bf16.msra.mxu0 %v10998
        %11422 = vmatprep.subr.bf16.mxu0 0
        %11423 = vmatpush1.bf16.msra.mxu0 %v10999
        %11424 = vmatprep.subr.bf16.mxu0 0
        %11425 = vmatpush1.bf16.msra.mxu0 %v11000
        %11426 = vmatprep.subr.bf16.mxu0 0
        %11427 = vmatpush1.bf16.msra.mxu0 %v11001
        %11428 = vmatprep.subr.bf16.mxu0 0
        %11429 = vmatpush1.bf16.msra.mxu0 %v11002
        %11430 = vmatprep.subr.bf16.mxu0 0
        %11431 = vmatpush1.bf16.msra.mxu0 %v11003
        %11432 = vmatprep.subr.bf16.mxu0 0
        %11433 = vmatpush1.bf16.msra.mxu0 %v11004
        %11434 = vmatprep.subr.bf16.mxu0 0
        %11435 = vmatpush1.bf16.msra.mxu0 %v11005
        %11436 = vmatprep.subr.bf16.mxu0 0
        %11437 = vmatpush1.bf16.msra.mxu0 %v11006
        %11438 = vmatprep.subr.bf16.mxu0 0
        %11439 = vmatpush1.bf16.msra.mxu0 %v11007
        %11440 = vmatprep.subr.bf16.mxu0 0
        %11441 = vmatpush1.bf16.msra.mxu0 %v11008
        %11442 = vmatprep.subr.bf16.mxu0 0
        %11443 = vmatpush1.bf16.msra.mxu0 %v11009
        %11444 = vmatprep.mubr.bf16.mxu0 %v10445
        %11445 = vmatmul.mubr.bf16.gmra.mrb[0].mxu0 %v10444
        %v11446 = vpop.f32.mrb[0].mxu0
        %v11447 = vadd.f32 %v11286, %v11446
        %v11448 = vpop.f32.mrb[0].mxu0
        %v11449 = vpop.f32.mrb[0].mxu0
        %v11450 = vadd.f32 %v11289, %v11449
        %v11451 = vpop.f32.mrb[0].mxu0
        %11452 = vmatprep.mubr.bf16.mxu0 %v10453
        %11453 = vmatmul.mubr.bf16.gmra.mrb[0].mxu0 %v10452
        %v11454 = vpop.f32.mrb[0].mxu0
        %v11455 = vadd.f32 %v11294, %v11454
        %v11456 = vpop.f32.mrb[0].mxu0
        %v11457 = vpop.f32.mrb[0].mxu0
        %v11458 = vadd.f32 %v11297, %v11457
        %v11459 = vpop.f32.mrb[0].mxu0
        %11460 = vmatprep.mubr.bf16.mxu0 %v10461
        %11461 = vmatmul.mubr.bf16.gmra.mrb[0].mxu0 %v10460
        %v11462 = vpop.f32.mrb[0].mxu0
        %v11463 = vadd.f32 %v11302, %v11462
        %v11464 = vpop.f32.mrb[0].mxu0
        %v11465 = vpop.f32.mrb[0].mxu0
        %v11466 = vadd.f32 %v11305, %v11465
        %v11467 = vpop.f32.mrb[0].mxu0
        %11468 = vmatprep.mubr.bf16.mxu0 %v10469
        %11469 = vmatmul.mubr.bf16.gmra.mrb[0].mxu0 %v10468
        %v11470 = vpop.f32.mrb[0].mxu0
        %v11471 = vadd.f32 %v11310, %v11470
        %v11472 = vpop.f32.mrb[0].mxu0
        %v11473 = vpop.f32.mrb[0].mxu0
        %v11474 = vadd.f32 %v11313, %v11473
        %v11475 = vpop.f32.mrb[0].mxu0
        %11476 = vmatprep.mubr.bf16.mxu0 %v10477
        %11477 = vmatmul.mubr.bf16.gmra.mrb[0].mxu0 %v10476
        %v11478 = vpop.f32.mrb[0].mxu0
        %v11479 = vadd.f32 %v11318, %v11478
        %v11480 = vpop.f32.mrb[0].mxu0
        %v11481 = vpop.f32.mrb[0].mxu0
        %v11482 = vadd.f32 %v11321, %v11481
        %v11483 = vpop.f32.mrb[0].mxu0
        %11484 = vmatprep.mubr.bf16.mxu0 %v10485
        %11485 = vmatmul.mubr.bf16.gmra.mrb[0].mxu0 %v10484
        %v11486 = vpop.f32.mrb[0].mxu0
        %v11487 = vadd.f32 %v11326, %v11486
        %v11488 = vpop.f32.mrb[0].mxu0
        %v11489 = vpop.f32.mrb[0].mxu0
        %v11490 = vadd.f32 %v11329, %v11489
        %v11491 = vpop.f32.mrb[0].mxu0
        %11492 = vmatprep.mubr.bf16.mxu0 %v10493
        %11493 = vmatmul.mubr.bf16.gmra.mrb[0].mxu0 %v10492
        %v11494 = vpop.f32.mrb[0].mxu0
        %v11495 = vadd.f32 %v11334, %v11494
        %v11496 = vpop.f32.mrb[0].mxu0
        %v11497 = vpop.f32.mrb[0].mxu0
        %v11498 = vadd.f32 %v11337, %v11497
        %v11499 = vpop.f32.mrb[0].mxu0
        %11500 = vmatprep.mubr.bf16.mxu0 %v10501
        %11501 = vmatmul.mubr.bf16.gmra.mrb[0].mxu0 %v10500
        %v11502 = vpop.f32.mrb[0].mxu0
        %v11503 = vadd.f32 %v11342, %v11502
        %v11504 = vpop.f32.mrb[0].mxu0
        %v11505 = vpop.f32.mrb[0].mxu0
        %v11506 = vadd.f32 %v11345, %v11505
        %v11507 = vpop.f32.mrb[0].mxu0
        %11508 = vmatprep.mubr.bf16.mxu0 %v10509
        %11509 = vmatmul.mubr.bf16.gmra.mrb[0].mxu0 %v10508
        %v11510 = vpop.f32.mrb[0].mxu0
        %v11511 = vadd.f32 %v11350, %v11510
        %v11512 = vpop.f32.mrb[0].mxu0
        %v11513 = vpop.f32.mrb[0].mxu0
        %v11514 = vadd.f32 %v11353, %v11513
        %v11515 = vpop.f32.mrb[0].mxu0
        %11516 = vmatprep.mubr.bf16.mxu0 %v10517
        %11517 = vmatmul.mubr.bf16.gmra.mrb[0].mxu0 %v10516
        %v11518 = vpop.f32.mrb[0].mxu0
        %v11519 = vadd.f32 %v11358, %v11518
        %v11520 = vpop.f32.mrb[0].mxu0
        %v11521 = vpop.f32.mrb[0].mxu0
        %v11522 = vadd.f32 %v11361, %v11521
        %v11523 = vpop.f32.mrb[0].mxu0
        %11524 = vmatprep.mubr.bf16.mxu0 %v10525
        %11525 = vmatmul.mubr.bf16.gmra.mrb[0].mxu0 %v10524
        %v11526 = vpop.f32.mrb[0].mxu0
        %v11527 = vadd.f32 %v11366, %v11526
        %v11528 = vpop.f32.mrb[0].mxu0
        %v11529 = vpop.f32.mrb[0].mxu0
        %v11530 = vadd.f32 %v11369, %v11529
        %v11531 = vpop.f32.mrb[0].mxu0
        %11532 = vmatprep.mubr.bf16.mxu0 %v10533
        %11533 = vmatmul.mubr.bf16.gmra.mrb[0].mxu0 %v10532
        %v11534 = vpop.f32.mrb[0].mxu0
        %v11535 = vadd.f32 %v11374, %v11534
        %v11536 = vpop.f32.mrb[0].mxu0
        %v11537 = vpop.f32.mrb[0].mxu0
        %v11538 = vadd.f32 %v11377, %v11537
        %v11539 = vpop.f32.mrb[0].mxu0
        %11540 = vmatprep.mubr.bf16.mxu0 %v10541
        %11541 = vmatmul.mubr.bf16.gmra.mrb[0].mxu0 %v10540
        %v11542 = vpop.f32.mrb[0].mxu0
        %v11543 = vadd.f32 %v11382, %v11542
        %v11544 = vpop.f32.mrb[0].mxu0
        %v11545 = vpop.f32.mrb[0].mxu0
        %v11546 = vadd.f32 %v11385, %v11545
        %v11547 = vpop.f32.mrb[0].mxu0
        %11548 = vmatprep.mubr.bf16.mxu0 %v10549
        %11549 = vmatmul.mubr.bf16.gmra.mrb[0].mxu0 %v10548
        %v11550 = vpop.f32.mrb[0].mxu0
        %v11551 = vadd.f32 %v11390, %v11550
        %v11552 = vpop.f32.mrb[0].mxu0
        %v11553 = vpop.f32.mrb[0].mxu0
        %v11554 = vadd.f32 %v11393, %v11553
        %v11555 = vpop.f32.mrb[0].mxu0
        %11556 = vmatprep.mubr.bf16.mxu0 %v10557
        %11557 = vmatmul.mubr.bf16.gmra.mrb[0].mxu0 %v10556
        %v11558 = vpop.f32.mrb[0].mxu0
        %v11559 = vadd.f32 %v11398, %v11558
        %v11560 = vpop.f32.mrb[0].mxu0
        %v11561 = vpop.f32.mrb[0].mxu0
        %v11562 = vadd.f32 %v11401, %v11561
        %v11563 = vpop.f32.mrb[0].mxu0
        %11564 = vmatprep.mubr.bf16.mxu0 %v10565
        %11565 = vmatmul.mubr.bf16.gmra.mrb[0].mxu0 %v10564
        %v11566 = vpop.f32.mrb[0].mxu0
        %v11567 = vadd.f32 %v11406, %v11566
        %v11568 = vpop.f32.mrb[0].mxu0
        %v11569 = vpop.f32.mrb[0].mxu0
        %v11570 = vadd.f32 %v11409, %v11569
        %v11571 = vpop.f32.mrb[0].mxu0
        %11572 = vdwg.mxu0
        %11573 = vmatprep.subr.bf16.mxu0 0
        %11574 = vmatpush1.bf16.msra.mxu0 %v11010
        %11575 = vmatprep.subr.bf16.mxu0 0
        %11576 = vmatpush1.bf16.msra.mxu0 %v11011
        %11577 = vmatprep.subr.bf16.mxu0 0
        %11578 = vmatpush1.bf16.msra.mxu0 %v11012
        %11579 = vmatprep.subr.bf16.mxu0 0
        %11580 = vmatpush1.bf16.msra.mxu0 %v11013
        %11581 = vmatprep.subr.bf16.mxu0 0
        %11582 = vmatpush1.bf16.msra.mxu0 %v11014
        %11583 = vmatprep.subr.bf16.mxu0 0
        %11584 = vmatpush1.bf16.msra.mxu0 %v11015
        %11585 = vmatprep.subr.bf16.mxu0 0
        %11586 = vmatpush1.bf16.msra.mxu0 %v11016
        %11587 = vmatprep.subr.bf16.mxu0 0
        %11588 = vmatpush1.bf16.msra.mxu0 %v11017
        %11589 = vmatprep.subr.bf16.mxu0 0
        %11590 = vmatpush1.bf16.msra.mxu0 %v11018
        %11591 = vmatprep.subr.bf16.mxu0 0
        %11592 = vmatpush1.bf16.msra.mxu0 %v11019
        %11593 = vmatprep.subr.bf16.mxu0 0
        %11594 = vmatpush1.bf16.msra.mxu0 %v11020
        %11595 = vmatprep.subr.bf16.mxu0 0
        %11596 = vmatpush1.bf16.msra.mxu0 %v11021
        %11597 = vmatprep.subr.bf16.mxu0 0
        %11598 = vmatpush1.bf16.msra.mxu0 %v11022
        %11599 = vmatprep.subr.bf16.mxu0 0
        %11600 = vmatpush1.bf16.msra.mxu0 %v11023
        %11601 = vmatprep.subr.bf16.mxu0 0
        %11602 = vmatpush1.bf16.msra.mxu0 %v11024
        %11603 = vmatprep.subr.bf16.mxu0 0
        %11604 = vmatpush1.bf16.msra.mxu0 %v11025
        %11605 = vmatprep.mubr.bf16.mxu0 %v10447
        %11606 = vmatmul.mubr.bf16.gmra.mrb[0].mxu0 %v10446
        %v11607 = vpop.f32.mrb[0].mxu0
        %v11608 = vadd.f32 %v11447, %v11607
        %v11609 = vpop.f32.mrb[0].mxu0
        %v11610 = vpop.f32.mrb[0].mxu0
        %v11611 = vadd.f32 %v11450, %v11610
        %v11612 = vpop.f32.mrb[0].mxu0
        %11613 = vmatprep.mubr.bf16.mxu0 %v10455
        %11614 = vmatmul.mubr.bf16.gmra.mrb[0].mxu0 %v10454
        %v11615 = vpop.f32.mrb[0].mxu0
        %v11616 = vadd.f32 %v11455, %v11615
        %v11617 = vpop.f32.mrb[0].mxu0
        %v11618 = vpop.f32.mrb[0].mxu0
        %v11619 = vadd.f32 %v11458, %v11618
        %v11620 = vpop.f32.mrb[0].mxu0
        %11621 = vmatprep.mubr.bf16.mxu0 %v10463
        %11622 = vmatmul.mubr.bf16.gmra.mrb[0].mxu0 %v10462
        %v11623 = vpop.f32.mrb[0].mxu0
        %v11624 = vadd.f32 %v11463, %v11623
        %v11625 = vpop.f32.mrb[0].mxu0
        %v11626 = vpop.f32.mrb[0].mxu0
        %v11627 = vadd.f32 %v11466, %v11626
        %v11628 = vpop.f32.mrb[0].mxu0
        %11629 = vmatprep.mubr.bf16.mxu0 %v10471
        %11630 = vmatmul.mubr.bf16.gmra.mrb[0].mxu0 %v10470
        %v11631 = vpop.f32.mrb[0].mxu0
        %v11632 = vadd.f32 %v11471, %v11631
        %v11633 = vpop.f32.mrb[0].mxu0
        %v11634 = vpop.f32.mrb[0].mxu0
        %v11635 = vadd.f32 %v11474, %v11634
        %v11636 = vpop.f32.mrb[0].mxu0
        %11637 = vmatprep.mubr.bf16.mxu0 %v10479
        %11638 = vmatmul.mubr.bf16.gmra.mrb[0].mxu0 %v10478
        %v11639 = vpop.f32.mrb[0].mxu0
        %v11640 = vadd.f32 %v11479, %v11639
        %v11641 = vpop.f32.mrb[0].mxu0
        %v11642 = vpop.f32.mrb[0].mxu0
        %v11643 = vadd.f32 %v11482, %v11642
        %v11644 = vpop.f32.mrb[0].mxu0
        %11645 = vmatprep.mubr.bf16.mxu0 %v10487
        %11646 = vmatmul.mubr.bf16.gmra.mrb[0].mxu0 %v10486
        %v11647 = vpop.f32.mrb[0].mxu0
        %v11648 = vadd.f32 %v11487, %v11647
        %v11649 = vpop.f32.mrb[0].mxu0
        %v11650 = vpop.f32.mrb[0].mxu0
        %v11651 = vadd.f32 %v11490, %v11650
        %v11652 = vpop.f32.mrb[0].mxu0
        %11653 = vmatprep.mubr.bf16.mxu0 %v10495
        %11654 = vmatmul.mubr.bf16.gmra.mrb[0].mxu0 %v10494
        %v11655 = vpop.f32.mrb[0].mxu0
        %v11656 = vadd.f32 %v11495, %v11655
        %v11657 = vpop.f32.mrb[0].mxu0
        %v11658 = vpop.f32.mrb[0].mxu0
        %v11659 = vadd.f32 %v11498, %v11658
        %v11660 = vpop.f32.mrb[0].mxu0
        %11661 = vmatprep.mubr.bf16.mxu0 %v10503
        %11662 = vmatmul.mubr.bf16.gmra.mrb[0].mxu0 %v10502
        %v11663 = vpop.f32.mrb[0].mxu0
        %v11664 = vadd.f32 %v11503, %v11663
        %v11665 = vpop.f32.mrb[0].mxu0
        %v11666 = vpop.f32.mrb[0].mxu0
        %v11667 = vadd.f32 %v11506, %v11666
        %v11668 = vpop.f32.mrb[0].mxu0
        %11669 = vmatprep.mubr.bf16.mxu0 %v10511
        %11670 = vmatmul.mubr.bf16.gmra.mrb[0].mxu0 %v10510
        %v11671 = vpop.f32.mrb[0].mxu0
        %v11672 = vadd.f32 %v11511, %v11671
        %v11673 = vpop.f32.mrb[0].mxu0
        %v11674 = vpop.f32.mrb[0].mxu0
        %v11675 = vadd.f32 %v11514, %v11674
        %v11676 = vpop.f32.mrb[0].mxu0
        %11677 = vmatprep.mubr.bf16.mxu0 %v10519
        %11678 = vmatmul.mubr.bf16.gmra.mrb[0].mxu0 %v10518
        %v11679 = vpop.f32.mrb[0].mxu0
        %v11680 = vadd.f32 %v11519, %v11679
        %v11681 = vpop.f32.mrb[0].mxu0
        %v11682 = vpop.f32.mrb[0].mxu0
        %v11683 = vadd.f32 %v11522, %v11682
        %v11684 = vpop.f32.mrb[0].mxu0
        %11685 = vmatprep.mubr.bf16.mxu0 %v10527
        %11686 = vmatmul.mubr.bf16.gmra.mrb[0].mxu0 %v10526
        %v11687 = vpop.f32.mrb[0].mxu0
        %v11688 = vadd.f32 %v11527, %v11687
        %v11689 = vpop.f32.mrb[0].mxu0
        %v11690 = vpop.f32.mrb[0].mxu0
        %v11691 = vadd.f32 %v11530, %v11690
        %v11692 = vpop.f32.mrb[0].mxu0
        %11693 = vmatprep.mubr.bf16.mxu0 %v10535
        %11694 = vmatmul.mubr.bf16.gmra.mrb[0].mxu0 %v10534
        %v11695 = vpop.f32.mrb[0].mxu0
        %v11696 = vadd.f32 %v11535, %v11695
        %v11697 = vpop.f32.mrb[0].mxu0
        %v11698 = vpop.f32.mrb[0].mxu0
        %v11699 = vadd.f32 %v11538, %v11698
        %v11700 = vpop.f32.mrb[0].mxu0
        %11701 = vmatprep.mubr.bf16.mxu0 %v10543
        %11702 = vmatmul.mubr.bf16.gmra.mrb[0].mxu0 %v10542
        %v11703 = vpop.f32.mrb[0].mxu0
        %v11704 = vadd.f32 %v11543, %v11703
        %v11705 = vpop.f32.mrb[0].mxu0
        %v11706 = vpop.f32.mrb[0].mxu0
        %v11707 = vadd.f32 %v11546, %v11706
        %v11708 = vpop.f32.mrb[0].mxu0
        %11709 = vmatprep.mubr.bf16.mxu0 %v10551
        %11710 = vmatmul.mubr.bf16.gmra.mrb[0].mxu0 %v10550
        %v11711 = vpop.f32.mrb[0].mxu0
        %v11712 = vadd.f32 %v11551, %v11711
        %v11713 = vpop.f32.mrb[0].mxu0
        %v11714 = vpop.f32.mrb[0].mxu0
        %v11715 = vadd.f32 %v11554, %v11714
        %v11716 = vpop.f32.mrb[0].mxu0
        %11717 = vmatprep.mubr.bf16.mxu0 %v10559
        %11718 = vmatmul.mubr.bf16.gmra.mrb[0].mxu0 %v10558
        %v11719 = vpop.f32.mrb[0].mxu0
        %v11720 = vadd.f32 %v11559, %v11719
        %v11721 = vpop.f32.mrb[0].mxu0
        %v11722 = vpop.f32.mrb[0].mxu0
        %v11723 = vadd.f32 %v11562, %v11722
        %v11724 = vpop.f32.mrb[0].mxu0
        %11725 = vmatprep.mubr.bf16.mxu0 %v10567
        %11726 = vmatmul.mubr.bf16.gmra.mrb[0].mxu0 %v10566
        %v11727 = vpop.f32.mrb[0].mxu0
        %v11728 = vadd.f32 %v11567, %v11727
        %v11729 = vpop.f32.mrb[0].mxu0
        %v11730 = vpop.f32.mrb[0].mxu0
        %v11731 = vadd.f32 %v11570, %v11730
        %v11732 = vpop.f32.mrb[0].mxu0
        %11733 = vdwg.mxu0
        %v11734 = vmul.f32 %v11608, 0.5
        %v11735 = vmul.f32 %v11611, 0.5
        %v11736 = vmul.f32 %v11616, 0.5
        %v11737 = vmul.f32 %v11619, 0.5
        %v11738 = vmul.f32 %v11624, 0.5
        %v11739 = vmul.f32 %v11627, 0.5
        %v11740 = vmul.f32 %v11632, 0.5
        %v11741 = vmul.f32 %v11635, 0.5
        %v11742 = vmul.f32 %v11640, 0.5
        %v11743 = vmul.f32 %v11643, 0.5
        %v11744 = vmul.f32 %v11648, 0.5
        %v11745 = vmul.f32 %v11651, 0.5
        %v11746 = vmul.f32 %v11656, 0.5
        %v11747 = vmul.f32 %v11659, 0.5
        %v11748 = vmul.f32 %v11664, 0.5
        %v11749 = vmul.f32 %v11667, 0.5
        %v11750 = vmul.f32 %v11672, 0.5
        %v11751 = vmul.f32 %v11675, 0.5
        %v11752 = vmul.f32 %v11680, 0.5
        %v11753 = vmul.f32 %v11683, 0.5
        %v11754 = vmul.f32 %v11688, 0.5
        %v11755 = vmul.f32 %v11691, 0.5
        %v11756 = vmul.f32 %v11696, 0.5
        %v11757 = vmul.f32 %v11699, 0.5
        %v11758 = vmul.f32 %v11704, 0.5
        %v11759 = vmul.f32 %v11707, 0.5
        %v11760 = vmul.f32 %v11712, 0.5
        %v11761 = vmul.f32 %v11715, 0.5
        %v11762 = vmul.f32 %v11720, 0.5
        %v11763 = vmul.f32 %v11723, 0.5
        %v11764 = vmul.f32 %v11728, 0.5
        %v11765 = vmul.f32 %v11731, 0.5
        %v11766 = vtanh.pop %v11734
        %v11767 = vtanh.pop %v11735
        %v11768 = vtanh.pop %v11736
        %v11769 = vtanh.pop %v11737
        %v11770 = vtanh.pop %v11738
        %v11771 = vtanh.pop %v11739
        %v11772 = vtanh.pop %v11740
        %v11773 = vtanh.pop %v11741
        %v11774 = vtanh.pop %v11742
        %v11775 = vtanh.pop %v11743
        %v11776 = vtanh.pop %v11744
        %v11777 = vtanh.pop %v11745
        %v11778 = vtanh.pop %v11746
        %v11779 = vtanh.pop %v11747
        %v11780 = vtanh.pop %v11748
        %v11781 = vtanh.pop %v11749
        %v11782 = vtanh.pop %v11750
        %v11783 = vtanh.pop %v11751
        %v11784 = vtanh.pop %v11752
        %v11785 = vtanh.pop %v11753
        %v11786 = vtanh.pop %v11754
        %v11787 = vtanh.pop %v11755
        %v11788 = vtanh.pop %v11756
        %v11789 = vtanh.pop %v11757
        %v11790 = vtanh.pop %v11758
        %v11791 = vtanh.pop %v11759
        %v11792 = vtanh.pop %v11760
        %v11793 = vtanh.pop %v11761
        %v11794 = vtanh.pop %v11762
        %v11795 = vtanh.pop %v11763
        %v11796 = vtanh.pop %v11764
        %v11797 = vtanh.pop %v11765
        %v11798 = vmul.f32 %v11766, 0.5
        %v11799 = vmul.f32 %v11767, 0.5
        %v11800 = vmul.f32 %v11768, 0.5
        %v11801 = vmul.f32 %v11769, 0.5
        %v11802 = vmul.f32 %v11770, 0.5
        %v11803 = vmul.f32 %v11771, 0.5
        %v11804 = vmul.f32 %v11772, 0.5
        %v11805 = vmul.f32 %v11773, 0.5
        %v11806 = vmul.f32 %v11774, 0.5
        %v11807 = vmul.f32 %v11775, 0.5
        %v11808 = vmul.f32 %v11776, 0.5
        %v11809 = vmul.f32 %v11777, 0.5
        %v11810 = vmul.f32 %v11778, 0.5
        %v11811 = vmul.f32 %v11779, 0.5
        %v11812 = vmul.f32 %v11780, 0.5
        %v11813 = vmul.f32 %v11781, 0.5
        %v11814 = vmul.f32 %v11782, 0.5
        %v11815 = vmul.f32 %v11783, 0.5
        %v11816 = vmul.f32 %v11784, 0.5
        %v11817 = vmul.f32 %v11785, 0.5
        %v11818 = vmul.f32 %v11786, 0.5
        %v11819 = vmul.f32 %v11787, 0.5
        %v11820 = vmul.f32 %v11788, 0.5
        %v11821 = vmul.f32 %v11789, 0.5
        %v11822 = vmul.f32 %v11790, 0.5
        %v11823 = vmul.f32 %v11791, 0.5
        %v11824 = vmul.f32 %v11792, 0.5
        %v11825 = vmul.f32 %v11793, 0.5
        %v11826 = vmul.f32 %v11794, 0.5
        %v11827 = vmul.f32 %v11795, 0.5
        %v11828 = vmul.f32 %v11796, 0.5
        %v11829 = vmul.f32 %v11797, 0.5
        %v11830 = vadd.f32 %v11798, 0.5
        %v11831 = vadd.f32 %v11799, 0.5
        %v11832 = vadd.f32 %v11800, 0.5
        %v11833 = vadd.f32 %v11801, 0.5
        %v11834 = vadd.f32 %v11802, 0.5
        %v11835 = vadd.f32 %v11803, 0.5
        %v11836 = vadd.f32 %v11804, 0.5
        %v11837 = vadd.f32 %v11805, 0.5
        %v11838 = vadd.f32 %v11806, 0.5
        %v11839 = vadd.f32 %v11807, 0.5
        %v11840 = vadd.f32 %v11808, 0.5
        %v11841 = vadd.f32 %v11809, 0.5
        %v11842 = vadd.f32 %v11810, 0.5
        %v11843 = vadd.f32 %v11811, 0.5
        %v11844 = vadd.f32 %v11812, 0.5
        %v11845 = vadd.f32 %v11813, 0.5
        %v11846 = vadd.f32 %v11814, 0.5
        %v11847 = vadd.f32 %v11815, 0.5
        %v11848 = vadd.f32 %v11816, 0.5
        %v11849 = vadd.f32 %v11817, 0.5
        %v11850 = vadd.f32 %v11818, 0.5
        %v11851 = vadd.f32 %v11819, 0.5
        %v11852 = vadd.f32 %v11820, 0.5
        %v11853 = vadd.f32 %v11821, 0.5
        %v11854 = vadd.f32 %v11822, 0.5
        %v11855 = vadd.f32 %v11823, 0.5
        %v11856 = vadd.f32 %v11824, 0.5
        %v11857 = vadd.f32 %v11825, 0.5
        %v11858 = vadd.f32 %v11826, 0.5
        %v11859 = vadd.f32 %v11827, 0.5
        %v11860 = vadd.f32 %v11828, 0.5
        %v11861 = vadd.f32 %v11829, 0.5
        %11862 = vst [vmem:[%s356] sm:$0xff] %v11830
        %11863 = vst [vmem:[%s356 + $0x8] sm:$0xff] %v11831
        %11864 = vst [vmem:[%s356 + $0x10] sm:$0xff] %v11832
        %11865 = vst [vmem:[%s356 + $0x18] sm:$0xff] %v11833
        %11866 = vst [vmem:[%s356 + $0x20] sm:$0xff] %v11834
        %11867 = vst [vmem:[%s356 + $0x28] sm:$0xff] %v11835
        %11868 = vst [vmem:[%s356 + $0x30] sm:$0xff] %v11836
        %11869 = vst [vmem:[%s356 + $0x38] sm:$0xff] %v11837
        %11870 = vst [vmem:[%s356 + $0x40] sm:$0xff] %v11838
        %11871 = vst [vmem:[%s356 + $0x48] sm:$0xff] %v11839
        %11872 = vst [vmem:[%s356 + $0x50] sm:$0xff] %v11840
        %11873 = vst [vmem:[%s356 + $0x58] sm:$0xff] %v11841
        %11874 = vst [vmem:[%s356 + $0x60] sm:$0xff] %v11842
        %11875 = vst [vmem:[%s356 + $0x68] sm:$0xff] %v11843
        %11876 = vst [vmem:[%s356 + $0x70] sm:$0xff] %v11844
        %11877 = vst [vmem:[%s356 + $0x78] sm:$0xff] %v11845
        %11878 = vst [vmem:[%s356 + $0x80] sm:$0xff] %v11846
        %11879 = vst [vmem:[%s356 + $0x88] sm:$0xff] %v11847
        %11880 = vst [vmem:[%s356 + $0x90] sm:$0xff] %v11848
        %11881 = vst [vmem:[%s356 + $0x98] sm:$0xff] %v11849
        %11882 = vst [vmem:[%s356 + $0xa0] sm:$0xff] %v11850
        %11883 = vst [vmem:[%s356 + $0xa8] sm:$0xff] %v11851
        %11884 = vst [vmem:[%s356 + $0xb0] sm:$0xff] %v11852
        %11885 = vst [vmem:[%s356 + $0xb8] sm:$0xff] %v11853
        %11886 = vst [vmem:[%s356 + $0xc0] sm:$0xff] %v11854
        %11887 = vst [vmem:[%s356 + $0xc8] sm:$0xff] %v11855
        %11888 = vst [vmem:[%s356 + $0xd0] sm:$0xff] %v11856
        %11889 = vst [vmem:[%s356 + $0xd8] sm:$0xff] %v11857
        %11890 = vst [vmem:[%s356 + $0xe0] sm:$0xff] %v11858
        %11891 = vst [vmem:[%s356 + $0xe8] sm:$0xff] %v11859
        %11892 = vst [vmem:[%s356 + $0xf0] sm:$0xff] %v11860
        %11893 = vst [vmem:[%s356 + $0xf8] sm:$0xff] %v11861
        %s11894 = sand.u32 %s183, 1
        %s11895 = sand.u32 %s183, 1
        %s11896 = smul.addr %s11895, 256
        %s11897 = scalar_lea.vmem [#allocation11], %s11896
        // Predicated region
        $region69: #{supervised_neuro_struct.1} parent=47 // pred_check
          %p11898 = pneg %p193
        $region70: #{supervised_neuro_struct.1} parent=47 // pred_check_branch
          %11900 = sbr.rel (%p11898) target = $region72
        $region71: #{supervised_neuro_struct.1} parent=47 // pred_region
          %s11901 = smul.u32 32, %s23
          %s11902 = ssub.s32 48, %s11901
          %p11903 = scmp.lt.s32.totalorder %s11902, 32
          %s11904 = scalar_select %p11903, %s11902, 32
          %s11905 = smul.u32 128, %s11904
          %p11906 = scmp.ne.s32.totalorder 0, %s11905
          %s11907 = smul.addr %s11901, 8
          %s11908 = scalar_lea.vmem %s7, %s11907
          // Predicated region
          $region73: #{supervised_neuro_struct.1} parent=71 // pred_check
            %p11909 = pneg %p11906
          $region74: #{supervised_neuro_struct.1} parent=71 // pred_check_branch
            %11911 = sbr.rel (%p11909) target = $region76
          $region75: #{supervised_neuro_struct.1} parent=71 // pred_region
            // Predicated region
            $region77: #{supervised_neuro_struct.1} parent=75 // pred_check
              _
            $region78: #{supervised_neuro_struct.1} parent=75 // pred_check_branch
              %11913 = sbr.rel (0) target = $region80
            $region79: #{supervised_neuro_struct.1} parent=75 // pred_region
              // Predicated region
              $region99: #{supervised_neuro_struct.1} parent=79 // pred_check
                _
              $region100: #{supervised_neuro_struct.1} parent=79 // pred_check_branch
                %12024 = sbr.rel (0) target = $region102
              $region101: #{supervised_neuro_struct.1} parent=79 // pred_region
                %s12025 = sshrl.u32 %s11904, 5
                // While loop
                $region103: #{supervised_neuro_struct.1} parent=101 // loop_pre_header
                  _
                $region104: #{supervised_neuro_struct.1} parent=101 // loop_header
                  %s12027 = sphi 0, %s12029
                  %p12028 = scmp.ge.s32.totalorder %s12027, %s12025
                  %s12032 = sphi 0, %s12101
                  %s12033 = sphi %s11897, %s12104
                  %s12034 = sphi %s11908, %s12105
                $region105: #{supervised_neuro_struct.1} parent=101 // loop_header_branch
                  %12031 = sbr.rel (%p12028) target = $region109
                $region106: #{supervised_neuro_struct.1} parent=101 // loop_body
                  %v12035 = vld [vmem:[%s12033] sm:$0xff]
                  %12036 = vst [vmem:[%s12034] sm:$0xff] %v12035
                  %v12037 = vld [vmem:[%s12033 + $0x8] sm:$0xff]
                  %12038 = vst [vmem:[%s12034 + $0x8] sm:$0xff] %v12037
                  %v12039 = vld [vmem:[%s12033 + $0x10] sm:$0xff]
                  %12040 = vst [vmem:[%s12034 + $0x10] sm:$0xff] %v12039
                  %v12041 = vld [vmem:[%s12033 + $0x18] sm:$0xff]
                  %12042 = vst [vmem:[%s12034 + $0x18] sm:$0xff] %v12041
                  %v12043 = vld [vmem:[%s12033 + $0x20] sm:$0xff]
                  %12044 = vst [vmem:[%s12034 + $0x20] sm:$0xff] %v12043
                  %v12045 = vld [vmem:[%s12033 + $0x28] sm:$0xff]
                  %12046 = vst [vmem:[%s12034 + $0x28] sm:$0xff] %v12045
                  %v12047 = vld [vmem:[%s12033 + $0x30] sm:$0xff]
                  %12048 = vst [vmem:[%s12034 + $0x30] sm:$0xff] %v12047
                  %v12049 = vld [vmem:[%s12033 + $0x38] sm:$0xff]
                  %12050 = vst [vmem:[%s12034 + $0x38] sm:$0xff] %v12049
                  %v12051 = vld [vmem:[%s12033 + $0x40] sm:$0xff]
                  %12052 = vst [vmem:[%s12034 + $0x40] sm:$0xff] %v12051
                  %v12053 = vld [vmem:[%s12033 + $0x48] sm:$0xff]
                  %12054 = vst [vmem:[%s12034 + $0x48] sm:$0xff] %v12053
                  %v12055 = vld [vmem:[%s12033 + $0x50] sm:$0xff]
                  %12056 = vst [vmem:[%s12034 + $0x50] sm:$0xff] %v12055
                  %v12057 = vld [vmem:[%s12033 + $0x58] sm:$0xff]
                  %12058 = vst [vmem:[%s12034 + $0x58] sm:$0xff] %v12057
                  %v12059 = vld [vmem:[%s12033 + $0x60] sm:$0xff]
                  %12060 = vst [vmem:[%s12034 + $0x60] sm:$0xff] %v12059
                  %v12061 = vld [vmem:[%s12033 + $0x68] sm:$0xff]
                  %12062 = vst [vmem:[%s12034 + $0x68] sm:$0xff] %v12061
                  %v12063 = vld [vmem:[%s12033 + $0x70] sm:$0xff]
                  %12064 = vst [vmem:[%s12034 + $0x70] sm:$0xff] %v12063
                  %v12065 = vld [vmem:[%s12033 + $0x78] sm:$0xff]
                  %12066 = vst [vmem:[%s12034 + $0x78] sm:$0xff] %v12065
                  %v12067 = vld [vmem:[%s12033 + $0x80] sm:$0xff]
                  %12068 = vst [vmem:[%s12034 + $0x80] sm:$0xff] %v12067
                  %v12069 = vld [vmem:[%s12033 + $0x88] sm:$0xff]
                  %12070 = vst [vmem:[%s12034 + $0x88] sm:$0xff] %v12069
                  %v12071 = vld [vmem:[%s12033 + $0x90] sm:$0xff]
                  %12072 = vst [vmem:[%s12034 + $0x90] sm:$0xff] %v12071
                  %v12073 = vld [vmem:[%s12033 + $0x98] sm:$0xff]
                  %12074 = vst [vmem:[%s12034 + $0x98] sm:$0xff] %v12073
                  %v12075 = vld [vmem:[%s12033 + $0xa0] sm:$0xff]
                  %12076 = vst [vmem:[%s12034 + $0xa0] sm:$0xff] %v12075
                  %v12077 = vld [vmem:[%s12033 + $0xa8] sm:$0xff]
                  %12078 = vst [vmem:[%s12034 + $0xa8] sm:$0xff] %v12077
                  %v12079 = vld [vmem:[%s12033 + $0xb0] sm:$0xff]
                  %12080 = vst [vmem:[%s12034 + $0xb0] sm:$0xff] %v12079
                  %v12081 = vld [vmem:[%s12033 + $0xb8] sm:$0xff]
                  %12082 = vst [vmem:[%s12034 + $0xb8] sm:$0xff] %v12081
                  %v12083 = vld [vmem:[%s12033 + $0xc0] sm:$0xff]
                  %12084 = vst [vmem:[%s12034 + $0xc0] sm:$0xff] %v12083
                  %v12085 = vld [vmem:[%s12033 + $0xc8] sm:$0xff]
                  %12086 = vst [vmem:[%s12034 + $0xc8] sm:$0xff] %v12085
                  %v12087 = vld [vmem:[%s12033 + $0xd0] sm:$0xff]
                  %12088 = vst [vmem:[%s12034 + $0xd0] sm:$0xff] %v12087
                  %v12089 = vld [vmem:[%s12033 + $0xd8] sm:$0xff]
                  %12090 = vst [vmem:[%s12034 + $0xd8] sm:$0xff] %v12089
                  %v12091 = vld [vmem:[%s12033 + $0xe0] sm:$0xff]
                  %12092 = vst [vmem:[%s12034 + $0xe0] sm:$0xff] %v12091
                  %v12093 = vld [vmem:[%s12033 + $0xe8] sm:$0xff]
                  %12094 = vst [vmem:[%s12034 + $0xe8] sm:$0xff] %v12093
                  %v12095 = vld [vmem:[%s12033 + $0xf0] sm:$0xff]
                  %12096 = vst [vmem:[%s12034 + $0xf0] sm:$0xff] %v12095
                  %v12097 = vld [vmem:[%s12033 + $0xf8] sm:$0xff]
                  %12098 = vst [vmem:[%s12034 + $0xf8] sm:$0xff] %v12097
                  %s12099 = sadd.s32 1, %s12032
                  %p12100 = scmp.ge.s32.totalorder %s12099, %s12025
                  %s12101 = scalar_select %p12100, 0, %s12099
                  %s12102 = smul.u32 %s12101, 256
                  %s12103 = smul.u32 %s12101, 256
                  %s12104 = scalar_lea.vmem %s11897, %s12102 [#allocation11]
                  %s12105 = scalar_lea.vmem %s11908, %s12103
                $region107: #{supervised_neuro_struct.1} parent=101 // loop_footer
                  %s12029 = sadd.s32 %s12027, 1
                $region108: #{supervised_neuro_struct.1} parent=101 // loop_footer_branch
                  %12026 = sbr.rel target = $region104
                $region109: #{supervised_neuro_struct.1} parent=101 // loop_exit
                  _
                %s12106 = sshrl.u32 %s11904, 5
                %s12107 = sand.u32 %s11904, 31
                %s12108 = smul.u32 %s12106, 32
                %s12109 = smul.u32 8, %s12108
                %s12110 = scalar_lea.vmem %s11897, %s12109 [#allocation11]
                %s12111 = smul.u32 8, %s12108
                %s12112 = scalar_lea.vmem %s11908, %s12111
                // While loop
                $region110: #{supervised_neuro_struct.1} parent=101 // loop_pre_header
                  _
                $region111: #{supervised_neuro_struct.1} parent=101 // loop_header
                  %s12114 = sphi 0, %s12116
                  %p12115 = scmp.ge.s32.totalorder %s12114, %s12107
                  %s12119 = sphi 0, %s12126
                  %s12120 = sphi %s12110, %s12129
                  %s12121 = sphi %s12112, %s12130
                $region112: #{supervised_neuro_struct.1} parent=101 // loop_header_branch
                  %12118 = sbr.rel (%p12115) target = $region116
                $region113: #{supervised_neuro_struct.1} parent=101 // loop_body
                  %v12122 = vld [vmem:[%s12120] sm:$0xff]
                  %12123 = vst [vmem:[%s12121] sm:$0xff] %v12122
                  %s12124 = sadd.s32 1, %s12119
                  %p12125 = scmp.ge.s32.totalorder %s12124, %s12107
                  %s12126 = scalar_select %p12125, 0, %s12124
                  %s12127 = smul.u32 %s12126, 8
                  %s12128 = smul.u32 %s12126, 8
                  %s12129 = scalar_lea.vmem %s12110, %s12127 [#allocation11]
                  %s12130 = scalar_lea.vmem %s12112, %s12128
                $region114: #{supervised_neuro_struct.1} parent=101 // loop_footer
                  %s12116 = sadd.s32 %s12114, 1
                $region115: #{supervised_neuro_struct.1} parent=101 // loop_footer_branch
                  %12113 = sbr.rel target = $region111
                $region116: #{supervised_neuro_struct.1} parent=101 // loop_exit
                  _
              $region102: #{supervised_neuro_struct.1} parent=79 // pred_fallthru
                _
              // Predicated region
              $region117: #{supervised_neuro_struct.1} parent=79 // pred_check
                _
              $region118: #{supervised_neuro_struct.1} parent=79 // pred_check_branch
                %12132 = sbr.rel target = $region120
              $region119: #{supervised_neuro_struct.1} parent=79 // pred_region
                _
              $region120: #{supervised_neuro_struct.1} parent=79 // pred_fallthru
                _
            $region80: #{supervised_neuro_struct.1} parent=75 // pred_fallthru
              _
            // Predicated region
            $region81: #{supervised_neuro_struct.1} parent=75 // pred_check
              _
            $region82: #{supervised_neuro_struct.1} parent=75 // pred_check_branch
              %11915 = sbr.rel target = $region84
            $region83: #{supervised_neuro_struct.1} parent=75 // pred_region
              %s11917 = sshrl.u32 %s11904, 5
              // While loop
              $region85: #{supervised_neuro_struct.1} parent=83 // loop_pre_header
                _
              $region86: #{supervised_neuro_struct.1} parent=83 // loop_header
                %s11919 = sphi 0, %s11921
                %p11920 = scmp.ge.s32.totalorder %s11919, %s11917
                %s11924 = sphi 0, %s11993
                %s11925 = sphi %s11897, %s11996
                %s11926 = sphi %s11908, %s11997
              $region87: #{supervised_neuro_struct.1} parent=83 // loop_header_branch
                %11923 = sbr.rel (%p11920) target = $region91
              $region88: #{supervised_neuro_struct.1} parent=83 // loop_body
                %v11927 = vld [vmem:[%s11925] sm:$0xff]
                %11928 = vst [vmem:[%s11926] sm:$0xff] %v11927
                %v11929 = vld [vmem:[%s11925 + $0x8] sm:$0xff]
                %11930 = vst [vmem:[%s11926 + $0x8] sm:$0xff] %v11929
                %v11931 = vld [vmem:[%s11925 + $0x10] sm:$0xff]
                %11932 = vst [vmem:[%s11926 + $0x10] sm:$0xff] %v11931
                %v11933 = vld [vmem:[%s11925 + $0x18] sm:$0xff]
                %11934 = vst [vmem:[%s11926 + $0x18] sm:$0xff] %v11933
                %v11935 = vld [vmem:[%s11925 + $0x20] sm:$0xff]
                %11936 = vst [vmem:[%s11926 + $0x20] sm:$0xff] %v11935
                %v11937 = vld [vmem:[%s11925 + $0x28] sm:$0xff]
                %11938 = vst [vmem:[%s11926 + $0x28] sm:$0xff] %v11937
                %v11939 = vld [vmem:[%s11925 + $0x30] sm:$0xff]
                %11940 = vst [vmem:[%s11926 + $0x30] sm:$0xff] %v11939
                %v11941 = vld [vmem:[%s11925 + $0x38] sm:$0xff]
                %11942 = vst [vmem:[%s11926 + $0x38] sm:$0xff] %v11941
                %v11943 = vld [vmem:[%s11925 + $0x40] sm:$0xff]
                %11944 = vst [vmem:[%s11926 + $0x40] sm:$0xff] %v11943
                %v11945 = vld [vmem:[%s11925 + $0x48] sm:$0xff]
                %11946 = vst [vmem:[%s11926 + $0x48] sm:$0xff] %v11945
                %v11947 = vld [vmem:[%s11925 + $0x50] sm:$0xff]
                %11948 = vst [vmem:[%s11926 + $0x50] sm:$0xff] %v11947
                %v11949 = vld [vmem:[%s11925 + $0x58] sm:$0xff]
                %11950 = vst [vmem:[%s11926 + $0x58] sm:$0xff] %v11949
                %v11951 = vld [vmem:[%s11925 + $0x60] sm:$0xff]
                %11952 = vst [vmem:[%s11926 + $0x60] sm:$0xff] %v11951
                %v11953 = vld [vmem:[%s11925 + $0x68] sm:$0xff]
                %11954 = vst [vmem:[%s11926 + $0x68] sm:$0xff] %v11953
                %v11955 = vld [vmem:[%s11925 + $0x70] sm:$0xff]
                %11956 = vst [vmem:[%s11926 + $0x70] sm:$0xff] %v11955
                %v11957 = vld [vmem:[%s11925 + $0x78] sm:$0xff]
                %11958 = vst [vmem:[%s11926 + $0x78] sm:$0xff] %v11957
                %v11959 = vld [vmem:[%s11925 + $0x80] sm:$0xff]
                %11960 = vst [vmem:[%s11926 + $0x80] sm:$0xff] %v11959
                %v11961 = vld [vmem:[%s11925 + $0x88] sm:$0xff]
                %11962 = vst [vmem:[%s11926 + $0x88] sm:$0xff] %v11961
                %v11963 = vld [vmem:[%s11925 + $0x90] sm:$0xff]
                %11964 = vst [vmem:[%s11926 + $0x90] sm:$0xff] %v11963
                %v11965 = vld [vmem:[%s11925 + $0x98] sm:$0xff]
                %11966 = vst [vmem:[%s11926 + $0x98] sm:$0xff] %v11965
                %v11967 = vld [vmem:[%s11925 + $0xa0] sm:$0xff]
                %11968 = vst [vmem:[%s11926 + $0xa0] sm:$0xff] %v11967
                %v11969 = vld [vmem:[%s11925 + $0xa8] sm:$0xff]
                %11970 = vst [vmem:[%s11926 + $0xa8] sm:$0xff] %v11969
                %v11971 = vld [vmem:[%s11925 + $0xb0] sm:$0xff]
                %11972 = vst [vmem:[%s11926 + $0xb0] sm:$0xff] %v11971
                %v11973 = vld [vmem:[%s11925 + $0xb8] sm:$0xff]
                %11974 = vst [vmem:[%s11926 + $0xb8] sm:$0xff] %v11973
                %v11975 = vld [vmem:[%s11925 + $0xc0] sm:$0xff]
                %11976 = vst [vmem:[%s11926 + $0xc0] sm:$0xff] %v11975
                %v11977 = vld [vmem:[%s11925 + $0xc8] sm:$0xff]
                %11978 = vst [vmem:[%s11926 + $0xc8] sm:$0xff] %v11977
                %v11979 = vld [vmem:[%s11925 + $0xd0] sm:$0xff]
                %11980 = vst [vmem:[%s11926 + $0xd0] sm:$0xff] %v11979
                %v11981 = vld [vmem:[%s11925 + $0xd8] sm:$0xff]
                %11982 = vst [vmem:[%s11926 + $0xd8] sm:$0xff] %v11981
                %v11983 = vld [vmem:[%s11925 + $0xe0] sm:$0xff]
                %11984 = vst [vmem:[%s11926 + $0xe0] sm:$0xff] %v11983
                %v11985 = vld [vmem:[%s11925 + $0xe8] sm:$0xff]
                %11986 = vst [vmem:[%s11926 + $0xe8] sm:$0xff] %v11985
                %v11987 = vld [vmem:[%s11925 + $0xf0] sm:$0xff]
                %11988 = vst [vmem:[%s11926 + $0xf0] sm:$0xff] %v11987
                %v11989 = vld [vmem:[%s11925 + $0xf8] sm:$0xff]
                %11990 = vst [vmem:[%s11926 + $0xf8] sm:$0xff] %v11989
                %s11991 = sadd.s32 1, %s11924
                %p11992 = scmp.ge.s32.totalorder %s11991, %s11917
                %s11993 = scalar_select %p11992, 0, %s11991
                %s11994 = smul.u32 %s11993, 256
                %s11995 = smul.u32 %s11993, 256
                %s11996 = scalar_lea.vmem %s11897, %s11994 [#allocation11]
                %s11997 = scalar_lea.vmem %s11908, %s11995
              $region89: #{supervised_neuro_struct.1} parent=83 // loop_footer
                %s11921 = sadd.s32 %s11919, 1
              $region90: #{supervised_neuro_struct.1} parent=83 // loop_footer_branch
                %11918 = sbr.rel target = $region86
              $region91: #{supervised_neuro_struct.1} parent=83 // loop_exit
                _
              %s11998 = sshrl.u32 %s11904, 5
              %s11999 = sand.u32 %s11904, 31
              %s12000 = smul.u32 %s11998, 32
              %s12001 = smul.u32 8, %s12000
              %s12002 = scalar_lea.vmem %s11897, %s12001 [#allocation11]
              %s12003 = smul.u32 8, %s12000
              %s12004 = scalar_lea.vmem %s11908, %s12003
              // While loop
              $region92: #{supervised_neuro_struct.1} parent=83 // loop_pre_header
                _
              $region93: #{supervised_neuro_struct.1} parent=83 // loop_header
                %s12006 = sphi 0, %s12008
                %p12007 = scmp.ge.s32.totalorder %s12006, %s11999
                %s12011 = sphi 0, %s12018
                %s12012 = sphi %s12002, %s12021
                %s12013 = sphi %s12004, %s12022
              $region94: #{supervised_neuro_struct.1} parent=83 // loop_header_branch
                %12010 = sbr.rel (%p12007) target = $region98
              $region95: #{supervised_neuro_struct.1} parent=83 // loop_body
                %v12014 = vld [vmem:[%s12012] sm:$0xff]
                %12015 = vst [vmem:[%s12013] sm:$0xff] %v12014
                %s12016 = sadd.s32 1, %s12011
                %p12017 = scmp.ge.s32.totalorder %s12016, %s11999
                %s12018 = scalar_select %p12017, 0, %s12016
                %s12019 = smul.u32 %s12018, 8
                %s12020 = smul.u32 %s12018, 8
                %s12021 = scalar_lea.vmem %s12002, %s12019 [#allocation11]
                %s12022 = scalar_lea.vmem %s12004, %s12020
              $region96: #{supervised_neuro_struct.1} parent=83 // loop_footer
                %s12008 = sadd.s32 %s12006, 1
              $region97: #{supervised_neuro_struct.1} parent=83 // loop_footer_branch
                %12005 = sbr.rel target = $region93
              $region98: #{supervised_neuro_struct.1} parent=83 // loop_exit
                _
            $region84: #{supervised_neuro_struct.1} parent=75 // pred_fallthru
              _
          $region76: #{supervised_neuro_struct.1} parent=71 // pred_fallthru
            _
          %12133 = vnop
        $region72: #{supervised_neuro_struct.1} parent=47 // pred_fallthru
          _
      $region48: #{supervised_neuro_struct.1} parent=5 // pred_fallthru
        _
      %p12134 = scmp.le.s32.totalorder 2, %s18
      // Predicated region
      $region121: #{supervised_neuro_struct.1} parent=5 // pred_check
        %p12135 = pneg %p12134
      $region122: #{supervised_neuro_struct.1} parent=5 // pred_check_branch
        %12137 = sbr.rel (%p12135) target = $region124
      $region123: #{supervised_neuro_struct.1} parent=5 // pred_region
        %s12138 = ssub.s32 %s18, 2
        // Predicated region
        $region125: #{supervised_neuro_struct.1} parent=123 // pred_check
          %p12139 = pneg %p199
        $region126: #{supervised_neuro_struct.1} parent=123 // pred_check_branch
          %12141 = sbr.rel (%p12139) target = $region128
        $region127: #{supervised_neuro_struct.1} parent=123 // pred_region
          %s12142 = sand.u32 %s184, 1
          %s12143 = sand.u32 %s184, 1
          %s12144 = smul.addr %s12143, 256
          %s12145 = scalar_lea.vmem [#allocation11], %s12144
        $region128: #{supervised_neuro_struct.1} parent=123 // pred_fallthru
          _
      $region124: #{supervised_neuro_struct.1} parent=5 // pred_fallthru
        _
    $region6: #{supervised_neuro_struct.1} parent=1 // loop_footer
      %s22 = sadd.s32 1, %s18
    $region7: #{supervised_neuro_struct.1} parent=1 // loop_footer_branch
      %17 = sbr.rel target = $region3
    $region8: #{supervised_neuro_struct.1} parent=1 // loop_exit
      _
    %12146 = vsyncpa [#allocation4], 1
    %s12147 = scalar_lea.sflag [#allocation4], 1
    %12148 = vsyncpa %s12147, 1
    %12149 = vsyncpa [#allocation6], 1
    %12150 = vsyncpa [#allocation9], 1

</llo_original>
